<compile_context>
chip_gen: v7x
topology: tpu7x:2x2x1
jax: 0.10.0
libtpu: 0.0.40
codegen_flags: <defaults>
</compile_context>

<pallas_src>
import functools

import jax
import jax.numpy as jnp
from jax.experimental import pallas as pl
from jax.experimental.pallas import tpu as pltpu

BN_EPS = 1e-5


# ----------------------------- Pallas kernels ------------------------------ #

def conv1_skip_bn_relu_kernel(col_ref, xc_ref, w1_ref, b1_ref, ws_ref, bs_ref,
                              g_ref, be_ref, h_ref, id_ref):
    # conv1 as GEMM on the im2col matrix: [M, K1] @ [K1, Cout] + b1
    pre = jnp.dot(col_ref[...], w1_ref[...],
                  preferred_element_type=jnp.float32) + b1_ref[...]

    # 1x1 skip conv on the (stride-aligned) input rows, fused into the same launch.
    id_ref[...] = jnp.dot(xc_ref[...], ws_ref[...],
                          preferred_element_type=jnp.float32) + bs_ref[...]

    # BatchNorm with batch statistics (biased var, two-pass for numerics) + ReLU,
    # all while `pre` is still resident in VMEM.
    m = pre.shape[0]
    mean = jnp.sum(pre, axis=0, keepdims=True) * (1.0 / m)
    cent = pre - mean
    var = jnp.sum(cent * cent, axis=0, keepdims=True) * (1.0 / m)
    inv = jax.lax.rsqrt(var + BN_EPS)
    h_ref[...] = jnp.maximum(cent * (g_ref[...] * inv) + be_ref[...], 0.0)


def conv2_bn_add_relu_kernel(col_ref, w_ref, b_ref, g_ref, be_ref, id_ref, o_ref):
    # conv2 as GEMM: [M, K2] @ [K2, Cout] + b2
    pre = jnp.dot(col_ref[...], w_ref[...],
                  preferred_element_type=jnp.float32) + b_ref[...]
    # BatchNorm (batch stats) + residual add + ReLU, fused.
    m = pre.shape[0]
    mean = jnp.sum(pre, axis=0, keepdims=True) * (1.0 / m)
    cent = pre - mean
    var = jnp.sum(cent * cent, axis=0, keepdims=True) * (1.0 / m)
    inv = jax.lax.rsqrt(var + BN_EPS)
    o_ref[...] = jnp.maximum(
        cent * (g_ref[...] * inv) + be_ref[...] + id_ref[...], 0.0)


# --------------------------- Pallas call wrappers --------------------------- #

def _full(shape):
    """Whole-array block (grid has a single step)."""
    nd = len(shape)
    return pl.BlockSpec(shape, lambda i: (0,) * nd)


def fused_conv1_skip_bn_relu(col1, x_rows, w1m, b1, wsm, bs, g1, be1):
    M, K1 = col1.shape
    Cout = w1m.shape[1]
    Cin = x_rows.shape[1]
    return pl.pallas_call(
        conv1_skip_bn_relu_kernel,
        out_shape=(jax.ShapeDtypeStruct((M, Cout), jnp.float32),   # h (post-ReLU)
                   jax.ShapeDtypeStruct((M, Cout), jnp.float32)),  # identity
        grid_spec=pltpu.PrefetchScalarGridSpec(
            num_scalar_prefetch=0,
            grid=(1,),
            in_specs=[
                _full((M, K1)),
                _full((M, Cin)),
                _full((K1, Cout)),
                _full((1, Cout)),
                _full((Cin, Cout)),
                _full((1, Cout)),
                _full((1, Cout)),
                _full((1, Cout)),
            ],
            out_specs=(_full((M, Cout)), _full((M, Cout))),
        ),
        compiler_params=pltpu.CompilerParams(dimension_semantics=("arbitrary",)),
    )(col1, x_rows, w1m, b1.reshape(1, -1), wsm, bs.reshape(1, -1),
      g1.reshape(1, -1), be1.reshape(1, -1))


def fused_conv2_bn_add_relu(col2, w2m, b2, g2, be2, identity):
    M, K2 = col2.shape
    Cout = w2m.shape[1]
    return pl.pallas_call(
        conv2_bn_add_relu_kernel,
        out_shape=jax.ShapeDtypeStruct((M, Cout), jnp.float32),
        grid_spec=pltpu.PrefetchScalarGridSpec(
            num_scalar_prefetch=0,
            grid=(1,),
            in_specs=[
                _full((M, K2)),
                _full((K2, Cout)),
                _full((1, Cout)),
                _full((1, Cout)),
                _full((1, Cout)),
                _full((M, Cout)),
            ],
            out_specs=_full((M, Cout)),
        ),
        compiler_params=pltpu.CompilerParams(dimension_semantics=("arbitrary",)),
    )(col2, w2m, b2.reshape(1, -1), g2.reshape(1, -1), be2.reshape(1, -1), identity)


# ------------------------------ JAX glue ----------------------------------- #

def im2col_3d_ndhwc(x, k=3, dilation=2, pad=2, stride=1):
    """im2col for 3-D conv on NDHWC input.  Returns [N*Do*Ho*Wo, C*k^3] with column
    ordering (c_in, kd, kh, kw) — identical to PyTorch's Conv3d weight flattening."""
    N, D, H, W, C = x.shape
    xp = jnp.pad(x, ((0, 0), (pad, pad), (pad, pad), (pad, pad), (0, 0)))
    Do = (D + 2 * pad - dilation * (k - 1) - 1) // stride + 1
    Ho = (H + 2 * pad - dilation * (k - 1) - 1) // stride + 1
    Wo = (W + 2 * pad - dilation * (k - 1) - 1) // stride + 1
    patches = []
    for kd in range(k):
        for kh in range(k):
            for kw in range(k):
                sl = xp[
                    :,
                    kd * dilation: kd * dilation + (Do - 1) * stride + 1: stride,
                    kh * dilation: kh * dilation + (Ho - 1) * stride + 1: stride,
                    kw * dilation: kw * dilation + (Wo - 1) * stride + 1: stride,
                    :,
                ]
                patches.append(sl)                       # [N, Do, Ho, Wo, C]
    col = jnp.stack(patches, axis=-1)                    # [N, Do, Ho, Wo, C, 27]
    return col.reshape(N * Do * Ho * Wo, C * k * k * k), (Do, Ho, Wo)


@functools.partial(jax.jit, static_argnames=("stride", "pad1", "pad2"))
def residual_block_3d(x, params, stride=1, pad1=2, pad2=2):
    """Pallas implementation of ResidualBlock3D.forward (BN in batch-stats mode)."""
    N, Cin, D, H, W = x.shape
    Cout = params["w1"].shape[0]

    x_ndhwc = jnp.transpose(x, (0, 2, 3, 4, 1))          # NDHWC

    # --- conv1 im2col (k=3, dilation=2) ---
    col1, (Do, Ho, Wo) = im2col_3d_ndhwc(x_ndhwc, k=3, dilation=2,
                                         pad=pad1, stride=stride)

    # --- skip path inputs: the stride-aligned input voxels (1x1 conv reads these) ---
    x_skip = x_ndhwc[:, ::stride, ::stride, ::stride, :]
    assert x_skip.shape[1:4] == (Do, Ho, Wo), \
        "skip / conv1 output grids must match (module requires pad1 == dilation)"
    x_rows = x_skip.reshape(N * Do * Ho * Wo, Cin)

    w1m = params["w1"].reshape(Cout, Cin * 27).T          # [Cin*27, Cout]
    if params.get("wskip") is not None:
        wsm = params["wskip"].reshape(Cout, Cin).T        # [Cin, Cout]
        bs = params["bskip"]
    else:                                                 # Identity skip (Cin == Cout)
        wsm = jnp.eye(Cin, dtype=jnp.float32)
        bs = jnp.zeros((Cout,), jnp.float32)

    # --- fused kernel A: conv1 GEMM + skip GEMM + BN1(batch stats) + ReLU ---
    h, identity = fused_conv1_skip_bn_relu(
        col1, x_rows, w1m, params["b1"], wsm, bs, params["g1"], params["be1"])

    # --- conv2 im2col (k=3, dilation=2, stride 1) ---
    h_ndhwc = h.reshape(N, Do, Ho, Wo, Cout)
    col2, (Do2, Ho2, Wo2) = im2col_3d_ndhwc(h_ndhwc, k=3, dilation=2,
                                            pad=pad2, stride=1)
    w2m = params["w2"].reshape(Cout, Cout * 27).T         # [Cout*27, Cout]

    # --- fused kernel B: conv2 GEMM + BN2(batch stats) + residual add + ReLU ---
    out = fused_conv2_bn_add_relu(
        col2, w2m, params["b2"], params["g2"], params["be2"], identity)

    return jnp.transpose(out.reshape(N, Do2, Ho2, Wo2, Cout), (0, 4, 1, 2, 3))


# --------------------------- pure-JAX reference ----------------------------- #

def _ref_forward(x, params, stride=1, pad1=2, pad2=2, eps=BN_EPS):
    def conv3d(x, w, b, stride, pad, dil):
        y = jax.lax.conv_general_dilated(
            x, w, window_strides=(stride,) * 3, padding=[(pad, pad)] * 3,
            rhs_dilation=(dil,) * 3,
            dimension_numbers=("NCDHW", "OIDHW", "NCDHW"))
        return y + b.reshape(1, -1, 1, 1, 1)

    def bn(x, g, b):
        mean = x.mean(axis=(0, 2, 3, 4), keepdims=True)
        var = x.var(axis=(0, 2, 3, 4), keepdims=True)
        return ((x - mean) / jnp.sqrt(var + eps)) * g.reshape(1, -1, 1, 1, 1) \
            + b.reshape(1, -1, 1, 1, 1)

    identity = conv3d(x, params["wskip"], params["bskip"], stride, 0, 1)
    out = jax.nn.relu(bn(conv3d(x, params["w1"], params["b1"], stride, pad1, 2),
                         params["g1"], params["be1"]))
    out = bn(conv3d(out, params["w2"], params["b2"], 1, pad2, 2),
             params["g2"], params["be2"])
    return jax.nn.relu(out + identity)


# ---------------------------------- main ------------------------------------ #

if __name__ == "__main__":
    key = jax.random.PRNGKey(0)
    N, Cin, Cout, D, H, W = 2, 4, 8, 8, 8, 8  # M = N*D*H*W = 1024

    ks = jax.random.split(key, 8)
    params = {
        "w1": 0.1 * jax.random.normal(ks[0], (Cout, Cin, 3, 3, 3), jnp.float32),
        "b1": 0.1 * jax.random.normal(ks[1], (Cout,), jnp.float32),
        "w2": 0.1 * jax.random.normal(ks[2], (Cout, Cout, 3, 3, 3), jnp.float32),
        "b2": 0.1 * jax.random.normal(ks[3], (Cout,), jnp.float32),
        "wskip": 0.1 * jax.random.normal(ks[4], (Cout, Cin, 1, 1, 1), jnp.float32),
        "bskip": 0.1 * jax.random.normal(ks[5], (Cout,), jnp.float32),
        "g1": jnp.ones((Cout,), jnp.float32),   # PyTorch BatchNorm default init
        "be1": jnp.zeros((Cout,), jnp.float32),
        "g2": jnp.ones((Cout,), jnp.float32),
        "be2": jnp.zeros((Cout,), jnp.float32),
    }
    x = jax.random.normal(ks[6], (N, Cin, D, H, W), jnp.float32)

    out = residual_block_3d(x, params)
    out = jax.block_until_ready(out)

    ref = jax.block_until_ready(_ref_forward(x, params))
    assert out.shape == ref.shape == (N, Cout, D, H, W)
    assert jnp.allclose(out, ref, rtol=1e-4, atol=1e-4), \
        f"max abs err {jnp.max(jnp.abs(out - ref))}"

    print("KERNEL_OK")
</pallas_src>

<mosaic_0001>
module attributes {stable_mosaic.version = 11 : i64} {
  func.func @conv1_skip_bn_relu_kernel(%arg0: i32, %arg1: memref<1024x108xf32, #tpu.memory_space<vmem>>, %arg2: memref<1024x4xf32, #tpu.memory_space<vmem>>, %arg3: memref<108x8xf32, #tpu.memory_space<vmem>>, %arg4: memref<1x8xf32, #tpu.memory_space<vmem>>, %arg5: memref<4x8xf32, #tpu.memory_space<vmem>>, %arg6: memref<1x8xf32, #tpu.memory_space<vmem>>, %arg7: memref<1x8xf32, #tpu.memory_space<vmem>>, %arg8: memref<1x8xf32, #tpu.memory_space<vmem>>, %arg9: memref<1024x8xf32, #tpu.memory_space<vmem>>, %arg10: memref<1024x8xf32, #tpu.memory_space<vmem>>) attributes {dimension_semantics = [#tpu.dimension_semantics<arbitrary>], iteration_bounds = array<i64: 1>, scalar_prefetch = 0 : i64, scratch_operands = 0 : i64, tpu.core_type = #tpu.core_type<tc>, window_params = [{pipeline_mode = #tpu.pipeline_mode<synchronous>, transform_indices = @transform_0, window_bounds = array<i64: 1024, 108>}, {pipeline_mode = #tpu.pipeline_mode<synchronous>, transform_indices = @transform_1, window_bounds = array<i64: 1024, 4>}, {pipeline_mode = #tpu.pipeline_mode<synchronous>, transform_indices = @transform_2, window_bounds = array<i64: 108, 8>}, {pipeline_mode = #tpu.pipeline_mode<synchronous>, transform_indices = @transform_3, window_bounds = array<i64: 1, 8>}, {pipeline_mode = #tpu.pipeline_mode<synchronous>, transform_indices = @transform_4, window_bounds = array<i64: 4, 8>}, {pipeline_mode = #tpu.pipeline_mode<synchronous>, transform_indices = @transform_5, window_bounds = array<i64: 1, 8>}, {pipeline_mode = #tpu.pipeline_mode<synchronous>, transform_indices = @transform_6, window_bounds = array<i64: 1, 8>}, {pipeline_mode = #tpu.pipeline_mode<synchronous>, transform_indices = @transform_7, window_bounds = array<i64: 1, 8>}, {pipeline_mode = #tpu.pipeline_mode<synchronous>, transform_indices = @transform_8, window_bounds = array<i64: 1024, 8>}, {pipeline_mode = #tpu.pipeline_mode<synchronous>, transform_indices = @transform_9, window_bounds = array<i64: 1024, 8>}]} {
    %c0 = arith.constant 0 : index
    %c0_0 = arith.constant 0 : index
    %0 = vector.load %arg1[%c0, %c0_0] : memref<1024x108xf32, #tpu.memory_space<vmem>>, vector<1024x108xf32>
    %c0_1 = arith.constant 0 : index
    %c0_2 = arith.constant 0 : index
    %1 = vector.load %arg3[%c0_1, %c0_2] : memref<108x8xf32, #tpu.memory_space<vmem>>, vector<108x8xf32>
    %cst = arith.constant dense<0.000000e+00> : vector<1024x8xf32>
    %2 = tpu.matmul %0, %1, %cst {dimension_numbers = #tpu.dot_dimension_numbers<[1], [0], [0], [1], [0, 0, 1, 1], [], []>} : vector<1024x108xf32>, vector<108x8xf32>, vector<1024x8xf32> -> vector<1024x8xf32>
    %c0_3 = arith.constant 0 : index
    %c0_4 = arith.constant 0 : index
    %3 = vector.load %arg4[%c0_3, %c0_4] : memref<1x8xf32, #tpu.memory_space<vmem>>, vector<1x8xf32>
    %4 = vector.broadcast %3 : vector<1x8xf32> to vector<1024x8xf32>
    %5 = arith.addf %2, %4 : vector<1024x8xf32>
    %c0_5 = arith.constant 0 : index
    %c0_6 = arith.constant 0 : index
    %6 = vector.load %arg2[%c0_5, %c0_6] : memref<1024x4xf32, #tpu.memory_space<vmem>>, vector<1024x4xf32>
    %c0_7 = arith.constant 0 : index
    %c0_8 = arith.constant 0 : index
    %7 = vector.load %arg5[%c0_7, %c0_8] : memref<4x8xf32, #tpu.memory_space<vmem>>, vector<4x8xf32>
    %cst_9 = arith.constant dense<0.000000e+00> : vector<1024x8xf32>
    %8 = tpu.matmul %6, %7, %cst_9 {dimension_numbers = #tpu.dot_dimension_numbers<[1], [0], [0], [1], [0, 0, 1, 1], [], []>} : vector<1024x4xf32>, vector<4x8xf32>, vector<1024x8xf32> -> vector<1024x8xf32>
    %c0_10 = arith.constant 0 : index
    %c0_11 = arith.constant 0 : index
    %9 = vector.load %arg6[%c0_10, %c0_11] : memref<1x8xf32, #tpu.memory_space<vmem>>, vector<1x8xf32>
    %10 = vector.broadcast %9 : vector<1x8xf32> to vector<1024x8xf32>
    %11 = arith.addf %8, %10 : vector<1024x8xf32>
    %c0_12 = arith.constant 0 : index
    %c0_13 = arith.constant 0 : index
    %12 = vector.load %arg10[%c0_12, %c0_13] : memref<1024x8xf32, #tpu.memory_space<vmem>>, vector<1024x8xf32>
    tpu.vector_store %arg10[%c0_12, %c0_13], %11 {strides = array<i32>} : memref<1024x8xf32, #tpu.memory_space<vmem>>, vector<1024x8xf32>,
    %cst_14 = arith.constant dense<0.000000e+00> : vector<8xf32>
    %13 = vector.multi_reduction <add>, %5, %cst_14 [0] : vector<1024x8xf32> to vector<8xf32>
    %14 = vector.shape_cast %13 : vector<8xf32> to vector<1x8xf32>
    %cst_15 = arith.constant 9.765625E-4 : f32
    %15 = vector.broadcast %cst_15 : f32 to vector<1x8xf32>
    %16 = arith.mulf %14, %15 : vector<1x8xf32>
    %17 = vector.broadcast %16 : vector<1x8xf32> to vector<1024x8xf32>
    %18 = arith.subf %5, %17 : vector<1024x8xf32>
    %19 = arith.mulf %18, %18 : vector<1024x8xf32>
    %cst_16 = arith.constant dense<0.000000e+00> : vector<8xf32>
    %20 = vector.multi_reduction <add>, %19, %cst_16 [0] : vector<1024x8xf32> to vector<8xf32>
    %21 = vector.shape_cast %20 : vector<8xf32> to vector<1x8xf32>
    %cst_17 = arith.constant 9.765625E-4 : f32
    %22 = vector.broadcast %cst_17 : f32 to vector<1x8xf32>
    %23 = arith.mulf %21, %22 : vector<1x8xf32>
    %cst_18 = arith.constant 9.99999974E-6 : f32
    %24 = vector.broadcast %cst_18 : f32 to vector<1x8xf32>
    %25 = arith.addf %23, %24 : vector<1x8xf32>
    %26 = math.rsqrt %25 : vector<1x8xf32>
    %c0_19 = arith.constant 0 : index
    %c0_20 = arith.constant 0 : index
    %27 = vector.load %arg7[%c0_19, %c0_20] : memref<1x8xf32, #tpu.memory_space<vmem>>, vector<1x8xf32>
    %28 = arith.mulf %27, %26 : vector<1x8xf32>
    %29 = vector.broadcast %28 : vector<1x8xf32> to vector<1024x8xf32>
    %30 = arith.mulf %18, %29 : vector<1024x8xf32>
    %c0_21 = arith.constant 0 : index
    %c0_22 = arith.constant 0 : index
    %31 = vector.load %arg8[%c0_21, %c0_22] : memref<1x8xf32, #tpu.memory_space<vmem>>, vector<1x8xf32>
    %32 = vector.broadcast %31 : vector<1x8xf32> to vector<1024x8xf32>
    %33 = arith.addf %30, %32 : vector<1024x8xf32>
    %cst_23 = arith.constant 0.000000e+00 : f32
    %34 = vector.broadcast %cst_23 : f32 to vector<1024x8xf32>
    %35 = arith.maximumf %33, %34 : vector<1024x8xf32>
    %c0_24 = arith.constant 0 : index
    %c0_25 = arith.constant 0 : index
    %36 = vector.load %arg9[%c0_24, %c0_25] : memref<1024x8xf32, #tpu.memory_space<vmem>>, vector<1024x8xf32>
    tpu.vector_store %arg9[%c0_24, %c0_25], %35 {strides = array<i32>} : memref<1024x8xf32, #tpu.memory_space<vmem>>, vector<1024x8xf32>,
    return
  }
  func.func @transform_0(%arg0: i32) -> (i32, i32) {
    %c0_i32 = arith.constant 0 : i32
    %c0_i32_0 = arith.constant 0 : i32
    %c0_i32_1 = arith.constant 0 : i32
    return %c0_i32, %c0_i32_0 : i32, i32
  }
  func.func @transform_1(%arg0: i32) -> (i32, i32) {
    %c0_i32 = arith.constant 0 : i32
    %c0_i32_0 = arith.constant 0 : i32
    %c0_i32_1 = arith.constant 0 : i32
    return %c0_i32, %c0_i32_0 : i32, i32
  }
  func.func @transform_2(%arg0: i32) -> (i32, i32) {
    %c0_i32 = arith.constant 0 : i32
    %c0_i32_0 = arith.constant 0 : i32
    %c0_i32_1 = arith.constant 0 : i32
    return %c0_i32, %c0_i32_0 : i32, i32
  }
  func.func @transform_3(%arg0: i32) -> (i32, i32) {
    %c0_i32 = arith.constant 0 : i32
    %c0_i32_0 = arith.constant 0 : i32
    %c0_i32_1 = arith.constant 0 : i32
    return %c0_i32, %c0_i32_0 : i32, i32
  }
  func.func @transform_4(%arg0: i32) -> (i32, i32) {
    %c0_i32 = arith.constant 0 : i32
    %c0_i32_0 = arith.constant 0 : i32
    %c0_i32_1 = arith.constant 0 : i32
    return %c0_i32, %c0_i32_0 : i32, i32
  }
  func.func @transform_5(%arg0: i32) -> (i32, i32) {
    %c0_i32 = arith.constant 0 : i32
    %c0_i32_0 = arith.constant 0 : i32
    %c0_i32_1 = arith.constant 0 : i32
    return %c0_i32, %c0_i32_0 : i32, i32
  }
  func.func @transform_6(%arg0: i32) -> (i32, i32) {
    %c0_i32 = arith.constant 0 : i32
    %c0_i32_0 = arith.constant 0 : i32
    %c0_i32_1 = arith.constant 0 : i32
    return %c0_i32, %c0_i32_0 : i32, i32
  }
  func.func @transform_7(%arg0: i32) -> (i32, i32) {
    %c0_i32 = arith.constant 0 : i32
    %c0_i32_0 = arith.constant 0 : i32
    %c0_i32_1 = arith.constant 0 : i32
    return %c0_i32, %c0_i32_0 : i32, i32
  }
  func.func @transform_8(%arg0: i32) -> (i32, i32) {
    %c0_i32 = arith.constant 0 : i32
    %c0_i32_0 = arith.constant 0 : i32
    %c0_i32_1 = arith.constant 0 : i32
    return %c0_i32, %c0_i32_0 : i32, i32
  }
  func.func @transform_9(%arg0: i32) -> (i32, i32) {
    %c0_i32 = arith.constant 0 : i32
    %c0_i32_0 = arith.constant 0 : i32
    %c0_i32_1 = arith.constant 0 : i32
    return %c0_i32, %c0_i32_0 : i32, i32
  }
}

module attributes {stable_mosaic.version = 11 : i64} {
  func.func @conv2_bn_add_relu_kernel(%arg0: i32, %arg1: memref<1024x216xf32, #tpu.memory_space<vmem>>, %arg2: memref<216x8xf32, #tpu.memory_space<vmem>>, %arg3: memref<1x8xf32, #tpu.memory_space<vmem>>, %arg4: memref<1x8xf32, #tpu.memory_space<vmem>>, %arg5: memref<1x8xf32, #tpu.memory_space<vmem>>, %arg6: memref<1024x8xf32, #tpu.memory_space<vmem>>, %arg7: memref<1024x8xf32, #tpu.memory_space<vmem>>) attributes {dimension_semantics = [#tpu.dimension_semantics<arbitrary>], iteration_bounds = array<i64: 1>, scalar_prefetch = 0 : i64, scratch_operands = 0 : i64, tpu.core_type = #tpu.core_type<tc>, window_params = [{pipeline_mode = #tpu.pipeline_mode<synchronous>, transform_indices = @transform_0, window_bounds = array<i64: 1024, 216>}, {pipeline_mode = #tpu.pipeline_mode<synchronous>, transform_indices = @transform_1, window_bounds = array<i64: 216, 8>}, {pipeline_mode = #tpu.pipeline_mode<synchronous>, transform_indices = @transform_2, window_bounds = array<i64: 1, 8>}, {pipeline_mode = #tpu.pipeline_mode<synchronous>, transform_indices = @transform_3, window_bounds = array<i64: 1, 8>}, {pipeline_mode = #tpu.pipeline_mode<synchronous>, transform_indices = @transform_4, window_bounds = array<i64: 1, 8>}, {pipeline_mode = #tpu.pipeline_mode<synchronous>, transform_indices = @transform_5, window_bounds = array<i64: 1024, 8>}, {pipeline_mode = #tpu.pipeline_mode<synchronous>, transform_indices = @transform_6, window_bounds = array<i64: 1024, 8>}]} {
    %c0 = arith.constant 0 : index
    %c0_0 = arith.constant 0 : index
    %0 = vector.load %arg1[%c0, %c0_0] : memref<1024x216xf32, #tpu.memory_space<vmem>>, vector<1024x216xf32>
    %c0_1 = arith.constant 0 : index
    %c0_2 = arith.constant 0 : index
    %1 = vector.load %arg2[%c0_1, %c0_2] : memref<216x8xf32, #tpu.memory_space<vmem>>, vector<216x8xf32>
    %cst = arith.constant dense<0.000000e+00> : vector<1024x8xf32>
    %2 = tpu.matmul %0, %1, %cst {dimension_numbers = #tpu.dot_dimension_numbers<[1], [0], [0], [1], [0, 0, 1, 1], [], []>} : vector<1024x216xf32>, vector<216x8xf32>, vector<1024x8xf32> -> vector<1024x8xf32>
    %c0_3 = arith.constant 0 : index
    %c0_4 = arith.constant 0 : index
    %3 = vector.load %arg3[%c0_3, %c0_4] : memref<1x8xf32, #tpu.memory_space<vmem>>, vector<1x8xf32>
    %4 = vector.broadcast %3 : vector<1x8xf32> to vector<1024x8xf32>
    %5 = arith.addf %2, %4 : vector<1024x8xf32>
    %cst_5 = arith.constant dense<0.000000e+00> : vector<8xf32>
    %6 = vector.multi_reduction <add>, %5, %cst_5 [0] : vector<1024x8xf32> to vector<8xf32>
    %7 = vector.shape_cast %6 : vector<8xf32> to vector<1x8xf32>
    %cst_6 = arith.constant 9.765625E-4 : f32
    %8 = vector.broadcast %cst_6 : f32 to vector<1x8xf32>
    %9 = arith.mulf %7, %8 : vector<1x8xf32>
    %10 = vector.broadcast %9 : vector<1x8xf32> to vector<1024x8xf32>
    %11 = arith.subf %5, %10 : vector<1024x8xf32>
    %12 = arith.mulf %11, %11 : vector<1024x8xf32>
    %cst_7 = arith.constant dense<0.000000e+00> : vector<8xf32>
    %13 = vector.multi_reduction <add>, %12, %cst_7 [0] : vector<1024x8xf32> to vector<8xf32>
    %14 = vector.shape_cast %13 : vector<8xf32> to vector<1x8xf32>
    %cst_8 = arith.constant 9.765625E-4 : f32
    %15 = vector.broadcast %cst_8 : f32 to vector<1x8xf32>
    %16 = arith.mulf %14, %15 : vector<1x8xf32>
    %cst_9 = arith.constant 9.99999974E-6 : f32
    %17 = vector.broadcast %cst_9 : f32 to vector<1x8xf32>
    %18 = arith.addf %16, %17 : vector<1x8xf32>
    %19 = math.rsqrt %18 : vector<1x8xf32>
    %c0_10 = arith.constant 0 : index
    %c0_11 = arith.constant 0 : index
    %20 = vector.load %arg4[%c0_10, %c0_11] : memref<1x8xf32, #tpu.memory_space<vmem>>, vector<1x8xf32>
    %21 = arith.mulf %20, %19 : vector<1x8xf32>
    %22 = vector.broadcast %21 : vector<1x8xf32> to vector<1024x8xf32>
    %23 = arith.mulf %11, %22 : vector<1024x8xf32>
    %c0_12 = arith.constant 0 : index
    %c0_13 = arith.constant 0 : index
    %24 = vector.load %arg5[%c0_12, %c0_13] : memref<1x8xf32, #tpu.memory_space<vmem>>, vector<1x8xf32>
    %25 = vector.broadcast %24 : vector<1x8xf32> to vector<1024x8xf32>
    %26 = arith.addf %23, %25 : vector<1024x8xf32>
    %c0_14 = arith.constant 0 : index
    %c0_15 = arith.constant 0 : index
    %27 = vector.load %arg6[%c0_14, %c0_15] : memref<1024x8xf32, #tpu.memory_space<vmem>>, vector<1024x8xf32>
    %28 = arith.addf %26, %27 : vector<1024x8xf32>
    %cst_16 = arith.constant 0.000000e+00 : f32
    %29 = vector.broadcast %cst_16 : f32 to vector<1024x8xf32>
    %30 = arith.maximumf %28, %29 : vector<1024x8xf32>
    %c0_17 = arith.constant 0 : index
    %c0_18 = arith.constant 0 : index
    %31 = vector.load %arg7[%c0_17, %c0_18] : memref<1024x8xf32, #tpu.memory_space<vmem>>, vector<1024x8xf32>
    tpu.vector_store %arg7[%c0_17, %c0_18], %30 {strides = array<i32>} : memref<1024x8xf32, #tpu.memory_space<vmem>>, vector<1024x8xf32>,
    return
  }
  func.func @transform_0(%arg0: i32) -> (i32, i32) {
    %c0_i32 = arith.constant 0 : i32
    %c0_i32_0 = arith.constant 0 : i32
    %c0_i32_1 = arith.constant 0 : i32
    return %c0_i32, %c0_i32_0 : i32, i32
  }
  func.func @transform_1(%arg0: i32) -> (i32, i32) {
    %c0_i32 = arith.constant 0 : i32
    %c0_i32_0 = arith.constant 0 : i32
    %c0_i32_1 = arith.constant 0 : i32
    return %c0_i32, %c0_i32_0 : i32, i32
  }
  func.func @transform_2(%arg0: i32) -> (i32, i32) {
    %c0_i32 = arith.constant 0 : i32
    %c0_i32_0 = arith.constant 0 : i32
    %c0_i32_1 = arith.constant 0 : i32
    return %c0_i32, %c0_i32_0 : i32, i32
  }
  func.func @transform_3(%arg0: i32) -> (i32, i32) {
    %c0_i32 = arith.constant 0 : i32
    %c0_i32_0 = arith.constant 0 : i32
    %c0_i32_1 = arith.constant 0 : i32
    return %c0_i32, %c0_i32_0 : i32, i32
  }
  func.func @transform_4(%arg0: i32) -> (i32, i32) {
    %c0_i32 = arith.constant 0 : i32
    %c0_i32_0 = arith.constant 0 : i32
    %c0_i32_1 = arith.constant 0 : i32
    return %c0_i32, %c0_i32_0 : i32, i32
  }
  func.func @transform_5(%arg0: i32) -> (i32, i32) {
    %c0_i32 = arith.constant 0 : i32
    %c0_i32_0 = arith.constant 0 : i32
    %c0_i32_1 = arith.constant 0 : i32
    return %c0_i32, %c0_i32_0 : i32, i32
  }
  func.func @transform_6(%arg0: i32) -> (i32, i32) {
    %c0_i32 = arith.constant 0 : i32
    %c0_i32_0 = arith.constant 0 : i32
    %c0_i32_1 = arith.constant 0 : i32
    return %c0_i32, %c0_i32_0 : i32, i32
  }
}

</mosaic_0001>

<llo_original>
// kernel: residual_block_3d.2
$region0: #{residual_block_3d.2}
  #allocation0 [shape = 'u32[]', space=smem, size = 0x4, offset = 0x4, fixed_abs, tag = 'smem constant byte address 0x4 - core index']
  #allocation1 [shape = 'u32[144,128]{1,0:T(1,128)}', space=vmem, size = 0x12000, scoped, tag = 'internal scratch']
  %s0 = inlined_call_operand.vmem [shape: f32[1024,108], index: 0, kind: input, shape index: {}]
  %s1 = inlined_call_operand.vmem [shape: f32[1024,4], index: 1, kind: input, shape index: {}]
  %s2 = inlined_call_operand.vmem [shape: f32[108,8], index: 2, kind: input, shape index: {}]
  %s3 = inlined_call_operand.vmem [shape: f32[1,8], index: 3, kind: input, shape index: {}]
  %s4 = inlined_call_operand.vmem [shape: f32[4,8], index: 4, kind: input, shape index: {}]
  %s5 = inlined_call_operand.vmem [shape: f32[1,8], index: 5, kind: input, shape index: {}]
  %s6 = inlined_call_operand.vmem [shape: f32[1,8], index: 6, kind: input, shape index: {}]
  %s7 = inlined_call_operand.vmem [shape: f32[1,8], index: 7, kind: input, shape index: {}]
  %s8 = inlined_call_operand.vmem [shape: f32[1024,8], index: 8, kind: output, shape index: {0}]
  %s9 = inlined_call_operand.hbm [shape: f32[1024,8], index: 9, kind: output, shape index: {1}]
  %10 = xla_tuple %s8, %s9
  %s11 = sld [smem:[#allocation0]]
  $region50: #{residual_block_3d.2} parent=0
    _
  %s13 = ssub.s32 1, %s11
  %s14 = scalar_select 0, %s13, %s11
  $region1: #{residual_block_3d.2} parent=0
    #allocation2 [shape = 'u8[524288]{0}', space=vmem, size = 0x80000, scoped, tag = 'output window, operand 1, single buffered']
    #allocation3 [shape = 's32[1]{0}', space=sflag, size = 0x4, scoped, tag = 'scoped memory for residual_block_3d.2']
    %15 = vsyncpa [#allocation3], 0
    // Predicated region
    $region2: #{residual_block_3d.2} parent=1 // pred_check
      _
    $region3: #{residual_block_3d.2} parent=1 // pred_check_branch
      %17 = sbr.rel (0) target = $region5
    $region4: #{residual_block_3d.2} parent=1 // pred_region
      _
    $region5: #{residual_block_3d.2} parent=1 // pred_fallthru
      _
    // Predicated region
    $region6: #{residual_block_3d.2} parent=1 // pred_check
      _
    $region7: #{residual_block_3d.2} parent=1 // pred_check_branch
      %19 = sbr.rel (0) target = $region9
    $region8: #{residual_block_3d.2} parent=1 // pred_region
      _
    $region9: #{residual_block_3d.2} parent=1 // pred_fallthru
      _
    // Predicated region
    $region10: #{residual_block_3d.2} parent=1 // pred_check
      _
    $region11: #{residual_block_3d.2} parent=1 // pred_check_branch
      %21 = sbr.rel (0) target = $region13
    $region12: #{residual_block_3d.2} parent=1 // pred_region
      _
    $region13: #{residual_block_3d.2} parent=1 // pred_fallthru
      _
    // Predicated region
    $region14: #{residual_block_3d.2} parent=1 // pred_check
      _
    $region15: #{residual_block_3d.2} parent=1 // pred_check_branch
      %23 = sbr.rel (0) target = $region17
    $region16: #{residual_block_3d.2} parent=1 // pred_region
      _
    $region17: #{residual_block_3d.2} parent=1 // pred_fallthru
      _
    // Predicated region
    $region18: #{residual_block_3d.2} parent=1 // pred_check
      _
    $region19: #{residual_block_3d.2} parent=1 // pred_check_branch
      %25 = sbr.rel (0) target = $region21
    $region20: #{residual_block_3d.2} parent=1 // pred_region
      _
    $region21: #{residual_block_3d.2} parent=1 // pred_fallthru
      _
    // Predicated region
    $region22: #{residual_block_3d.2} parent=1 // pred_check
      _
    $region23: #{residual_block_3d.2} parent=1 // pred_check_branch
      %27 = sbr.rel (0) target = $region25
    $region24: #{residual_block_3d.2} parent=1 // pred_region
      _
    $region25: #{residual_block_3d.2} parent=1 // pred_fallthru
      _
    // Predicated region
    $region26: #{residual_block_3d.2} parent=1 // pred_check
      _
    $region27: #{residual_block_3d.2} parent=1 // pred_check_branch
      %29 = sbr.rel (0) target = $region29
    $region28: #{residual_block_3d.2} parent=1 // pred_region
      _
    $region29: #{residual_block_3d.2} parent=1 // pred_fallthru
      _
    // Predicated region
    $region30: #{residual_block_3d.2} parent=1 // pred_check
      _
    $region31: #{residual_block_3d.2} parent=1 // pred_check_branch
      %31 = sbr.rel (0) target = $region33
    $region32: #{residual_block_3d.2} parent=1 // pred_region
      _
    $region33: #{residual_block_3d.2} parent=1 // pred_fallthru
      _
    %v32 = vld [vmem:[%s0] sm:$0xff]
    %v33 = vld [vmem:[%s0 + $0x8] sm:$0xff]
    %v34 = vld [vmem:[%s0 + $0x10] sm:$0xff]
    %v35 = vld [vmem:[%s0 + $0x18] sm:$0xff]
    %v36 = vld [vmem:[%s0 + $0x20] sm:$0xff]
    %v37 = vld [vmem:[%s0 + $0x28] sm:$0xff]
    %v38 = vld [vmem:[%s0 + $0x30] sm:$0xff]
    %v39 = vld [vmem:[%s0 + $0x38] sm:$0xff]
    %v40 = vld [vmem:[%s0 + $0x40] sm:$0xff]
    %v41 = vld [vmem:[%s0 + $0x48] sm:$0xff]
    %v42 = vld [vmem:[%s0 + $0x50] sm:$0xff]
    %v43 = vld [vmem:[%s0 + $0x58] sm:$0xff]
    %v44 = vld [vmem:[%s0 + $0x60] sm:$0xff]
    %v45 = vld [vmem:[%s0 + $0x68] sm:$0xff]
    %v46 = vld [vmem:[%s0 + $0x70] sm:$0xff]
    %v47 = vld [vmem:[%s0 + $0x78] sm:$0xff]
    %v48 = vld [vmem:[%s0 + $0x80] sm:$0xff]
    %v49 = vld [vmem:[%s0 + $0x88] sm:$0xff]
    %v50 = vld [vmem:[%s0 + $0x90] sm:$0xff]
    %v51 = vld [vmem:[%s0 + $0x98] sm:$0xff]
    %v52 = vld [vmem:[%s0 + $0xa0] sm:$0xff]
    %v53 = vld [vmem:[%s0 + $0xa8] sm:$0xff]
    %v54 = vld [vmem:[%s0 + $0xb0] sm:$0xff]
    %v55 = vld [vmem:[%s0 + $0xb8] sm:$0xff]
    %v56 = vld [vmem:[%s0 + $0xc0] sm:$0xff]
    %v57 = vld [vmem:[%s0 + $0xc8] sm:$0xff]
    %v58 = vld [vmem:[%s0 + $0xd0] sm:$0xff]
    %v59 = vld [vmem:[%s0 + $0xd8] sm:$0xff]
    %v60 = vld [vmem:[%s0 + $0xe0] sm:$0xff]
    %v61 = vld [vmem:[%s0 + $0xe8] sm:$0xff]
    %v62 = vld [vmem:[%s0 + $0xf0] sm:$0xff]
    %v63 = vld [vmem:[%s0 + $0xf8] sm:$0xff]
    %v64 = vld [vmem:[%s0 + $0x100] sm:$0xff]
    %v65 = vld [vmem:[%s0 + $0x108] sm:$0xff]
    %v66 = vld [vmem:[%s0 + $0x110] sm:$0xff]
    %v67 = vld [vmem:[%s0 + $0x118] sm:$0xff]
    %v68 = vld [vmem:[%s0 + $0x120] sm:$0xff]
    %v69 = vld [vmem:[%s0 + $0x128] sm:$0xff]
    %v70 = vld [vmem:[%s0 + $0x130] sm:$0xff]
    %v71 = vld [vmem:[%s0 + $0x138] sm:$0xff]
    %v72 = vld [vmem:[%s0 + $0x140] sm:$0xff]
    %v73 = vld [vmem:[%s0 + $0x148] sm:$0xff]
    %v74 = vld [vmem:[%s0 + $0x150] sm:$0xff]
    %v75 = vld [vmem:[%s0 + $0x158] sm:$0xff]
    %v76 = vld [vmem:[%s0 + $0x160] sm:$0xff]
    %v77 = vld [vmem:[%s0 + $0x168] sm:$0xff]
    %v78 = vld [vmem:[%s0 + $0x170] sm:$0xff]
    %v79 = vld [vmem:[%s0 + $0x178] sm:$0xff]
    %v80 = vld [vmem:[%s0 + $0x180] sm:$0xff]
    %v81 = vld [vmem:[%s0 + $0x188] sm:$0xff]
    %v82 = vld [vmem:[%s0 + $0x190] sm:$0xff]
    %v83 = vld [vmem:[%s0 + $0x198] sm:$0xff]
    %v84 = vld [vmem:[%s0 + $0x1a0] sm:$0xff]
    %v85 = vld [vmem:[%s0 + $0x1a8] sm:$0xff]
    %v86 = vld [vmem:[%s0 + $0x1b0] sm:$0xff]
    %v87 = vld [vmem:[%s0 + $0x1b8] sm:$0xff]
    %v88 = vld [vmem:[%s0 + $0x1c0] sm:$0xff]
    %v89 = vld [vmem:[%s0 + $0x1c8] sm:$0xff]
    %v90 = vld [vmem:[%s0 + $0x1d0] sm:$0xff]
    %v91 = vld [vmem:[%s0 + $0x1d8] sm:$0xff]
    %v92 = vld [vmem:[%s0 + $0x1e0] sm:$0xff]
    %v93 = vld [vmem:[%s0 + $0x1e8] sm:$0xff]
    %v94 = vld [vmem:[%s0 + $0x1f0] sm:$0xff]
    %v95 = vld [vmem:[%s0 + $0x1f8] sm:$0xff]
    %v96 = vld [vmem:[%s0 + $0x200] sm:$0xff]
    %v97 = vld [vmem:[%s0 + $0x208] sm:$0xff]
    %v98 = vld [vmem:[%s0 + $0x210] sm:$0xff]
    %v99 = vld [vmem:[%s0 + $0x218] sm:$0xff]
    %v100 = vld [vmem:[%s0 + $0x220] sm:$0xff]
    %v101 = vld [vmem:[%s0 + $0x228] sm:$0xff]
    %v102 = vld [vmem:[%s0 + $0x230] sm:$0xff]
    %v103 = vld [vmem:[%s0 + $0x238] sm:$0xff]
    %v104 = vld [vmem:[%s0 + $0x240] sm:$0xff]
    %v105 = vld [vmem:[%s0 + $0x248] sm:$0xff]
    %v106 = vld [vmem:[%s0 + $0x250] sm:$0xff]
    %v107 = vld [vmem:[%s0 + $0x258] sm:$0xff]
    %v108 = vld [vmem:[%s0 + $0x260] sm:$0xff]
    %v109 = vld [vmem:[%s0 + $0x268] sm:$0xff]
    %v110 = vld [vmem:[%s0 + $0x270] sm:$0xff]
    %v111 = vld [vmem:[%s0 + $0x278] sm:$0xff]
    %v112 = vld [vmem:[%s0 + $0x280] sm:$0xff]
    %v113 = vld [vmem:[%s0 + $0x288] sm:$0xff]
    %v114 = vld [vmem:[%s0 + $0x290] sm:$0xff]
    %v115 = vld [vmem:[%s0 + $0x298] sm:$0xff]
    %v116 = vld [vmem:[%s0 + $0x2a0] sm:$0xff]
    %v117 = vld [vmem:[%s0 + $0x2a8] sm:$0xff]
    %v118 = vld [vmem:[%s0 + $0x2b0] sm:$0xff]
    %v119 = vld [vmem:[%s0 + $0x2b8] sm:$0xff]
    %v120 = vld [vmem:[%s0 + $0x2c0] sm:$0xff]
    %v121 = vld [vmem:[%s0 + $0x2c8] sm:$0xff]
    %v122 = vld [vmem:[%s0 + $0x2d0] sm:$0xff]
    %v123 = vld [vmem:[%s0 + $0x2d8] sm:$0xff]
    %v124 = vld [vmem:[%s0 + $0x2e0] sm:$0xff]
    %v125 = vld [vmem:[%s0 + $0x2e8] sm:$0xff]
    %v126 = vld [vmem:[%s0 + $0x2f0] sm:$0xff]
    %v127 = vld [vmem:[%s0 + $0x2f8] sm:$0xff]
    %v128 = vld [vmem:[%s0 + $0x300] sm:$0xff]
    %v129 = vld [vmem:[%s0 + $0x308] sm:$0xff]
    %v130 = vld [vmem:[%s0 + $0x310] sm:$0xff]
    %v131 = vld [vmem:[%s0 + $0x318] sm:$0xff]
    %v132 = vld [vmem:[%s0 + $0x320] sm:$0xff]
    %v133 = vld [vmem:[%s0 + $0x328] sm:$0xff]
    %v134 = vld [vmem:[%s0 + $0x330] sm:$0xff]
    %v135 = vld [vmem:[%s0 + $0x338] sm:$0xff]
    %v136 = vld [vmem:[%s0 + $0x340] sm:$0xff]
    %v137 = vld [vmem:[%s0 + $0x348] sm:$0xff]
    %v138 = vld [vmem:[%s0 + $0x350] sm:$0xff]
    %v139 = vld [vmem:[%s0 + $0x358] sm:$0xff]
    %v140 = vld [vmem:[%s0 + $0x360] sm:$0xff]
    %v141 = vld [vmem:[%s0 + $0x368] sm:$0xff]
    %v142 = vld [vmem:[%s0 + $0x370] sm:$0xff]
    %v143 = vld [vmem:[%s0 + $0x378] sm:$0xff]
    %v144 = vld [vmem:[%s0 + $0x380] sm:$0xff]
    %v145 = vld [vmem:[%s0 + $0x388] sm:$0xff]
    %v146 = vld [vmem:[%s0 + $0x390] sm:$0xff]
    %v147 = vld [vmem:[%s0 + $0x398] sm:$0xff]
    %v148 = vld [vmem:[%s0 + $0x3a0] sm:$0xff]
    %v149 = vld [vmem:[%s0 + $0x3a8] sm:$0xff]
    %v150 = vld [vmem:[%s0 + $0x3b0] sm:$0xff]
    %v151 = vld [vmem:[%s0 + $0x3b8] sm:$0xff]
    %v152 = vld [vmem:[%s0 + $0x3c0] sm:$0xff]
    %v153 = vld [vmem:[%s0 + $0x3c8] sm:$0xff]
    %v154 = vld [vmem:[%s0 + $0x3d0] sm:$0xff]
    %v155 = vld [vmem:[%s0 + $0x3d8] sm:$0xff]
    %v156 = vld [vmem:[%s0 + $0x3e0] sm:$0xff]
    %v157 = vld [vmem:[%s0 + $0x3e8] sm:$0xff]
    %v158 = vld [vmem:[%s0 + $0x3f0] sm:$0xff]
    %v159 = vld [vmem:[%s0 + $0x3f8] sm:$0xff]
    %v160 = vld [vmem:[%s2] sm:$0xff]
    %v161 = vld [vmem:[%s2 + $0x8] sm:$0xff]
    %v162 = vld [vmem:[%s2 + $0x10] sm:$0xff]
    %v163 = vld [vmem:[%s2 + $0x18] sm:$0xff]
    %v164 = vld [vmem:[%s2 + $0x20] sm:$0xff]
    %v165 = vld [vmem:[%s2 + $0x28] sm:$0xff]
    %v166 = vld [vmem:[%s2 + $0x30] sm:$0xff]
    %v167 = vld [vmem:[%s2 + $0x38] sm:$0xff]
    %v168 = vld [vmem:[%s2 + $0x40] sm:$0xff]
    %v169 = vld [vmem:[%s2 + $0x48] sm:$0xff]
    %v170 = vld [vmem:[%s2 + $0x50] sm:$0xff]
    %v171 = vld [vmem:[%s2 + $0x58] sm:$0xff]
    %v172 = vld [vmem:[%s2 + $0x60] sm:$0xff]
    %v173 = vld [vmem:[%s2 + $0x68] sm:$0xf]
    %v174 = vld [vmem:[%s3] sm:$0x1]
    %v176 = vlaneseq
    %v177 = vshrl.u32 %v176, 7
    %v178 = vsub.s32 0, %v177
    %v179 = vrot.slane %v174, %v178
    %vm181 = vcmask 883712
    %v183 = vsel %vm181, %v32, 0
    %v186 = vsel %vm181, %v33, 0
    %v189 = vsel %vm181, %v34, 0
    %v192 = vsel %vm181, %v35, 0
    %v195 = vsel %vm181, %v36, 0
    %v198 = vsel %vm181, %v37, 0
    %v201 = vsel %vm181, %v38, 0
    %v204 = vsel %vm181, %v39, 0
    %v207 = vsel %vm181, %v40, 0
    %v210 = vsel %vm181, %v41, 0
    %v213 = vsel %vm181, %v42, 0
    %v216 = vsel %vm181, %v43, 0
    %v219 = vsel %vm181, %v44, 0
    %v222 = vsel %vm181, %v45, 0
    %v225 = vsel %vm181, %v46, 0
    %v228 = vsel %vm181, %v47, 0
    %v231 = vsel %vm181, %v48, 0
    %v234 = vsel %vm181, %v49, 0
    %v237 = vsel %vm181, %v50, 0
    %v240 = vsel %vm181, %v51, 0
    %v243 = vsel %vm181, %v52, 0
    %v246 = vsel %vm181, %v53, 0
    %v249 = vsel %vm181, %v54, 0
    %v252 = vsel %vm181, %v55, 0
    %v255 = vsel %vm181, %v56, 0
    %v258 = vsel %vm181, %v57, 0
    %v261 = vsel %vm181, %v58, 0
    %v264 = vsel %vm181, %v59, 0
    %v267 = vsel %vm181, %v60, 0
    %v270 = vsel %vm181, %v61, 0
    %v273 = vsel %vm181, %v62, 0
    %v276 = vsel %vm181, %v63, 0
    %v279 = vsel %vm181, %v64, 0
    %v282 = vsel %vm181, %v65, 0
    %v285 = vsel %vm181, %v66, 0
    %v288 = vsel %vm181, %v67, 0
    %v291 = vsel %vm181, %v68, 0
    %v294 = vsel %vm181, %v69, 0
    %v297 = vsel %vm181, %v70, 0
    %v300 = vsel %vm181, %v71, 0
    %v303 = vsel %vm181, %v72, 0
    %v306 = vsel %vm181, %v73, 0
    %v309 = vsel %vm181, %v74, 0
    %v312 = vsel %vm181, %v75, 0
    %v315 = vsel %vm181, %v76, 0
    %v318 = vsel %vm181, %v77, 0
    %v321 = vsel %vm181, %v78, 0
    %v324 = vsel %vm181, %v79, 0
    %v327 = vsel %vm181, %v80, 0
    %v330 = vsel %vm181, %v81, 0
    %v333 = vsel %vm181, %v82, 0
    %v336 = vsel %vm181, %v83, 0
    %v339 = vsel %vm181, %v84, 0
    %v342 = vsel %vm181, %v85, 0
    %v345 = vsel %vm181, %v86, 0
    %v348 = vsel %vm181, %v87, 0
    %v351 = vsel %vm181, %v88, 0
    %v354 = vsel %vm181, %v89, 0
    %v357 = vsel %vm181, %v90, 0
    %v360 = vsel %vm181, %v91, 0
    %v363 = vsel %vm181, %v92, 0
    %v366 = vsel %vm181, %v93, 0
    %v369 = vsel %vm181, %v94, 0
    %v372 = vsel %vm181, %v95, 0
    %v375 = vsel %vm181, %v96, 0
    %v378 = vsel %vm181, %v97, 0
    %v381 = vsel %vm181, %v98, 0
    %v384 = vsel %vm181, %v99, 0
    %v387 = vsel %vm181, %v100, 0
    %v390 = vsel %vm181, %v101, 0
    %v393 = vsel %vm181, %v102, 0
    %v396 = vsel %vm181, %v103, 0
    %v399 = vsel %vm181, %v104, 0
    %v402 = vsel %vm181, %v105, 0
    %v405 = vsel %vm181, %v106, 0
    %v408 = vsel %vm181, %v107, 0
    %v411 = vsel %vm181, %v108, 0
    %v414 = vsel %vm181, %v109, 0
    %v417 = vsel %vm181, %v110, 0
    %v420 = vsel %vm181, %v111, 0
    %v423 = vsel %vm181, %v112, 0
    %v426 = vsel %vm181, %v113, 0
    %v429 = vsel %vm181, %v114, 0
    %v432 = vsel %vm181, %v115, 0
    %v435 = vsel %vm181, %v116, 0
    %v438 = vsel %vm181, %v117, 0
    %v441 = vsel %vm181, %v118, 0
    %v444 = vsel %vm181, %v119, 0
    %v447 = vsel %vm181, %v120, 0
    %v450 = vsel %vm181, %v121, 0
    %v453 = vsel %vm181, %v122, 0
    %v456 = vsel %vm181, %v123, 0
    %v459 = vsel %vm181, %v124, 0
    %v462 = vsel %vm181, %v125, 0
    %v465 = vsel %vm181, %v126, 0
    %v468 = vsel %vm181, %v127, 0
    %v471 = vsel %vm181, %v128, 0
    %v474 = vsel %vm181, %v129, 0
    %v477 = vsel %vm181, %v130, 0
    %v480 = vsel %vm181, %v131, 0
    %v483 = vsel %vm181, %v132, 0
    %v486 = vsel %vm181, %v133, 0
    %v489 = vsel %vm181, %v134, 0
    %v492 = vsel %vm181, %v135, 0
    %v495 = vsel %vm181, %v136, 0
    %v498 = vsel %vm181, %v137, 0
    %v501 = vsel %vm181, %v138, 0
    %v504 = vsel %vm181, %v139, 0
    %v507 = vsel %vm181, %v140, 0
    %v510 = vsel %vm181, %v141, 0
    %v513 = vsel %vm181, %v142, 0
    %v516 = vsel %vm181, %v143, 0
    %v519 = vsel %vm181, %v144, 0
    %v522 = vsel %vm181, %v145, 0
    %v525 = vsel %vm181, %v146, 0
    %v528 = vsel %vm181, %v147, 0
    %v531 = vsel %vm181, %v148, 0
    %v534 = vsel %vm181, %v149, 0
    %v537 = vsel %vm181, %v150, 0
    %v540 = vsel %vm181, %v151, 0
    %v543 = vsel %vm181, %v152, 0
    %v546 = vsel %vm181, %v153, 0
    %v549 = vsel %vm181, %v154, 0
    %v552 = vsel %vm181, %v155, 0
    %v555 = vsel %vm181, %v156, 0
    %v558 = vsel %vm181, %v157, 0
    %v561 = vsel %vm181, %v158, 0
    %v564 = vsel %vm181, %v159, 0
    %vm566 = vcmask 1043456
    %v568 = vsel %vm566, %v173, 0
    %570 = vmatprep.subr.mxu0 0.0
    %571 = vmatpush1.msra.mxu0 %v160
    %572 = vmatprep.subr.mxu0 0.0
    %573 = vmatpush1.msra.mxu0 %v161
    %574 = vmatprep.subr.mxu0 0.0
    %575 = vmatpush1.msra.mxu0 %v162
    %576 = vmatprep.subr.mxu0 0.0
    %577 = vmatpush1.msra.mxu0 %v163
    %578 = vmatprep.subr.mxu0 0.0
    %579 = vmatpush1.msra.mxu0 %v164
    %580 = vmatprep.subr.mxu0 0.0
    %581 = vmatpush1.msra.mxu0 %v165
    %582 = vmatprep.subr.mxu0 0.0
    %583 = vmatpush1.msra.mxu0 %v166
    %584 = vmatprep.subr.mxu0 0.0
    %585 = vmatpush1.msra.mxu0 %v167
    %586 = vmatprep.subr.mxu0 0.0
    %587 = vmatpush1.msra.mxu0 %v168
    %588 = vmatprep.subr.mxu0 0.0
    %589 = vmatpush1.msra.mxu0 %v169
    %590 = vmatprep.subr.mxu0 0.0
    %591 = vmatpush1.msra.mxu0 %v170
    %592 = vmatprep.subr.mxu0 0.0
    %593 = vmatpush1.msra.mxu0 %v171
    %594 = vmatprep.subr.mxu0 0.0
    %595 = vmatpush1.msra.mxu0 %v172
    %596 = vmatprep.subr.mxu0 0.0
    %597 = vmatpush1.msra.mxu0 %v568
    %598 = vmatprep.subr.mxu0 0.0
    %599 = vmatpush1.msra.mxu0 0.0
    %600 = vmatprep.subr.mxu0 0.0
    %601 = vmatpush1.msra.mxu0 0.0
    %602 = vmatprep.subr.mxu0 0.0
    %603 = vmatpush1.msra.mxu0 0.0
    %604 = vmatprep.subr.mxu0 0.0
    %605 = vmatpush1.msra.mxu0 0.0
    %606 = vmatprep.subr.mxu0 0.0
    %607 = vmatpush1.msra.mxu0 0.0
    %608 = vmatprep.subr.mxu0 0.0
    %609 = vmatpush1.msra.mxu0 0.0
    %610 = vmatprep.subr.mxu0 0.0
    %611 = vmatpush1.msra.mxu0 0.0
    %612 = vmatprep.subr.mxu0 0.0
    %613 = vmatpush1.msra.mxu0 0.0
    %614 = vmatprep.subr.mxu0 0.0
    %615 = vmatpush1.msra.mxu0 0.0
    %616 = vmatprep.subr.mxu0 0.0
    %617 = vmatpush1.msra.mxu0 0.0
    %618 = vmatprep.subr.mxu0 0.0
    %619 = vmatpush1.msra.mxu0 0.0
    %620 = vmatprep.subr.mxu0 0.0
    %621 = vmatpush1.msra.mxu0 0.0
    %622 = vmatprep.subr.mxu0 0.0
    %623 = vmatpush1.msra.mxu0 0.0
    %624 = vmatprep.subr.mxu0 0.0
    %625 = vmatpush1.msra.mxu0 0.0
    %626 = vmatprep.subr.mxu0 0.0
    %627 = vmatpush1.msra.mxu0 0.0
    %628 = vmatprep.subr.mxu0 0.0
    %629 = vmatpush1.msra.mxu0 0.0
    %630 = vmatprep.subr.mxu0 0.0
    %631 = vmatpush1.msra.mxu0 0.0
    %632 = vmatprep.subr.mxu0 0.0
    %633 = vmatpush1.msra.mxu0 0.0
    %634 = vmatprep.mubr.f32.mxu0 0.0
    %635 = vmatmul.mubr.f32.gmra.mrb[0].mxu0 %v183
    %v636 = vpop.f32.mrb[0].mxu0
    %v637 = vadd.f32 %v179, %v636
    %v638 = vpop.f32.mrb[0].mxu0
    %639 = vmatprep.mubr.f32.mxu0 0.0
    %640 = vmatmul.mubr.f32.gmra.mrb[0].mxu0 %v186
    %v641 = vpop.f32.mrb[0].mxu0
    %v642 = vadd.f32 %v179, %v641
    %v643 = vpop.f32.mrb[0].mxu0
    %644 = vmatprep.mubr.f32.mxu0 0.0
    %645 = vmatmul.mubr.f32.gmra.mrb[0].mxu0 %v189
    %v646 = vpop.f32.mrb[0].mxu0
    %v647 = vadd.f32 %v179, %v646
    %v648 = vpop.f32.mrb[0].mxu0
    %649 = vmatprep.mubr.f32.mxu0 0.0
    %650 = vmatmul.mubr.f32.gmra.mrb[0].mxu0 %v192
    %v651 = vpop.f32.mrb[0].mxu0
    %v652 = vadd.f32 %v179, %v651
    %v653 = vpop.f32.mrb[0].mxu0
    %654 = vmatprep.mubr.f32.mxu0 0.0
    %655 = vmatmul.mubr.f32.gmra.mrb[0].mxu0 %v195
    %v656 = vpop.f32.mrb[0].mxu0
    %v657 = vadd.f32 %v179, %v656
    %v658 = vpop.f32.mrb[0].mxu0
    %659 = vmatprep.mubr.f32.mxu0 0.0
    %660 = vmatmul.mubr.f32.gmra.mrb[0].mxu0 %v198
    %v661 = vpop.f32.mrb[0].mxu0
    %v662 = vadd.f32 %v179, %v661
    %v663 = vpop.f32.mrb[0].mxu0
    %664 = vmatprep.mubr.f32.mxu0 0.0
    %665 = vmatmul.mubr.f32.gmra.mrb[0].mxu0 %v201
    %v666 = vpop.f32.mrb[0].mxu0
    %v667 = vadd.f32 %v179, %v666
    %v668 = vpop.f32.mrb[0].mxu0
    %669 = vmatprep.mubr.f32.mxu0 0.0
    %670 = vmatmul.mubr.f32.gmra.mrb[0].mxu0 %v204
    %v671 = vpop.f32.mrb[0].mxu0
    %v672 = vadd.f32 %v179, %v671
    %v673 = vpop.f32.mrb[0].mxu0
    %674 = vmatprep.mubr.f32.mxu0 0.0
    %675 = vmatmul.mubr.f32.gmra.mrb[0].mxu0 %v207
    %v676 = vpop.f32.mrb[0].mxu0
    %v677 = vadd.f32 %v179, %v676
    %v678 = vpop.f32.mrb[0].mxu0
    %679 = vmatprep.mubr.f32.mxu0 0.0
    %680 = vmatmul.mubr.f32.gmra.mrb[0].mxu0 %v210
    %v681 = vpop.f32.mrb[0].mxu0
    %v682 = vadd.f32 %v179, %v681
    %v683 = vpop.f32.mrb[0].mxu0
    %684 = vmatprep.mubr.f32.mxu0 0.0
    %685 = vmatmul.mubr.f32.gmra.mrb[0].mxu0 %v213
    %v686 = vpop.f32.mrb[0].mxu0
    %v687 = vadd.f32 %v179, %v686
    %v688 = vpop.f32.mrb[0].mxu0
    %689 = vmatprep.mubr.f32.mxu0 0.0
    %690 = vmatmul.mubr.f32.gmra.mrb[0].mxu0 %v216
    %v691 = vpop.f32.mrb[0].mxu0
    %v692 = vadd.f32 %v179, %v691
    %v693 = vpop.f32.mrb[0].mxu0
    %694 = vmatprep.mubr.f32.mxu0 0.0
    %695 = vmatmul.mubr.f32.gmra.mrb[0].mxu0 %v219
    %v696 = vpop.f32.mrb[0].mxu0
    %v697 = vadd.f32 %v179, %v696
    %v698 = vpop.f32.mrb[0].mxu0
    %699 = vmatprep.mubr.f32.mxu0 0.0
    %700 = vmatmul.mubr.f32.gmra.mrb[0].mxu0 %v222
    %v701 = vpop.f32.mrb[0].mxu0
    %v702 = vadd.f32 %v179, %v701
    %v703 = vpop.f32.mrb[0].mxu0
    %704 = vmatprep.mubr.f32.mxu0 0.0
    %705 = vmatmul.mubr.f32.gmra.mrb[0].mxu0 %v225
    %v706 = vpop.f32.mrb[0].mxu0
    %v707 = vadd.f32 %v179, %v706
    %v708 = vpop.f32.mrb[0].mxu0
    %709 = vmatprep.mubr.f32.mxu0 0.0
    %710 = vmatmul.mubr.f32.gmra.mrb[0].mxu0 %v228
    %v711 = vpop.f32.mrb[0].mxu0
    %v712 = vadd.f32 %v179, %v711
    %v713 = vpop.f32.mrb[0].mxu0
    %714 = vmatprep.mubr.f32.mxu0 0.0
    %715 = vmatmul.mubr.f32.gmra.mrb[0].mxu0 %v231
    %v716 = vpop.f32.mrb[0].mxu0
    %v717 = vadd.f32 %v179, %v716
    %v718 = vpop.f32.mrb[0].mxu0
    %719 = vmatprep.mubr.f32.mxu0 0.0
    %720 = vmatmul.mubr.f32.gmra.mrb[0].mxu0 %v234
    %v721 = vpop.f32.mrb[0].mxu0
    %v722 = vadd.f32 %v179, %v721
    %v723 = vpop.f32.mrb[0].mxu0
    %724 = vmatprep.mubr.f32.mxu0 0.0
    %725 = vmatmul.mubr.f32.gmra.mrb[0].mxu0 %v237
    %v726 = vpop.f32.mrb[0].mxu0
    %v727 = vadd.f32 %v179, %v726
    %v728 = vpop.f32.mrb[0].mxu0
    %729 = vmatprep.mubr.f32.mxu0 0.0
    %730 = vmatmul.mubr.f32.gmra.mrb[0].mxu0 %v240
    %v731 = vpop.f32.mrb[0].mxu0
    %v732 = vadd.f32 %v179, %v731
    %v733 = vpop.f32.mrb[0].mxu0
    %734 = vmatprep.mubr.f32.mxu0 0.0
    %735 = vmatmul.mubr.f32.gmra.mrb[0].mxu0 %v243
    %v736 = vpop.f32.mrb[0].mxu0
    %v737 = vadd.f32 %v179, %v736
    %v738 = vpop.f32.mrb[0].mxu0
    %739 = vmatprep.mubr.f32.mxu0 0.0
    %740 = vmatmul.mubr.f32.gmra.mrb[0].mxu0 %v246
    %v741 = vpop.f32.mrb[0].mxu0
    %v742 = vadd.f32 %v179, %v741
    %v743 = vpop.f32.mrb[0].mxu0
    %744 = vmatprep.mubr.f32.mxu0 0.0
    %745 = vmatmul.mubr.f32.gmra.mrb[0].mxu0 %v249
    %v746 = vpop.f32.mrb[0].mxu0
    %v747 = vadd.f32 %v179, %v746
    %v748 = vpop.f32.mrb[0].mxu0
    %749 = vmatprep.mubr.f32.mxu0 0.0
    %750 = vmatmul.mubr.f32.gmra.mrb[0].mxu0 %v252
    %v751 = vpop.f32.mrb[0].mxu0
    %v752 = vadd.f32 %v179, %v751
    %v753 = vpop.f32.mrb[0].mxu0
    %754 = vmatprep.mubr.f32.mxu0 0.0
    %755 = vmatmul.mubr.f32.gmra.mrb[0].mxu0 %v255
    %v756 = vpop.f32.mrb[0].mxu0
    %v757 = vadd.f32 %v179, %v756
    %v758 = vpop.f32.mrb[0].mxu0
    %759 = vmatprep.mubr.f32.mxu0 0.0
    %760 = vmatmul.mubr.f32.gmra.mrb[0].mxu0 %v258
    %v761 = vpop.f32.mrb[0].mxu0
    %v762 = vadd.f32 %v179, %v761
    %v763 = vpop.f32.mrb[0].mxu0
    %764 = vmatprep.mubr.f32.mxu0 0.0
    %765 = vmatmul.mubr.f32.gmra.mrb[0].mxu0 %v261
    %v766 = vpop.f32.mrb[0].mxu0
    %v767 = vadd.f32 %v179, %v766
    %v768 = vpop.f32.mrb[0].mxu0
    %769 = vmatprep.mubr.f32.mxu0 0.0
    %770 = vmatmul.mubr.f32.gmra.mrb[0].mxu0 %v264
    %v771 = vpop.f32.mrb[0].mxu0
    %v772 = vadd.f32 %v179, %v771
    %v773 = vpop.f32.mrb[0].mxu0
    %774 = vmatprep.mubr.f32.mxu0 0.0
    %775 = vmatmul.mubr.f32.gmra.mrb[0].mxu0 %v267
    %v776 = vpop.f32.mrb[0].mxu0
    %v777 = vadd.f32 %v179, %v776
    %v778 = vpop.f32.mrb[0].mxu0
    %779 = vmatprep.mubr.f32.mxu0 0.0
    %780 = vmatmul.mubr.f32.gmra.mrb[0].mxu0 %v270
    %v781 = vpop.f32.mrb[0].mxu0
    %v782 = vadd.f32 %v179, %v781
    %v783 = vpop.f32.mrb[0].mxu0
    %784 = vmatprep.mubr.f32.mxu0 0.0
    %785 = vmatmul.mubr.f32.gmra.mrb[0].mxu0 %v273
    %v786 = vpop.f32.mrb[0].mxu0
    %v787 = vadd.f32 %v179, %v786
    %v788 = vpop.f32.mrb[0].mxu0
    %789 = vmatprep.mubr.f32.mxu0 0.0
    %790 = vmatmul.mubr.f32.gmra.mrb[0].mxu0 %v276
    %v791 = vpop.f32.mrb[0].mxu0
    %v792 = vadd.f32 %v179, %v791
    %v793 = vpop.f32.mrb[0].mxu0
    %794 = vmatprep.mubr.f32.mxu0 0.0
    %795 = vmatmul.mubr.f32.gmra.mrb[0].mxu0 %v279
    %v796 = vpop.f32.mrb[0].mxu0
    %v797 = vadd.f32 %v179, %v796
    %v798 = vpop.f32.mrb[0].mxu0
    %799 = vmatprep.mubr.f32.mxu0 0.0
    %800 = vmatmul.mubr.f32.gmra.mrb[0].mxu0 %v282
    %v801 = vpop.f32.mrb[0].mxu0
    %v802 = vadd.f32 %v179, %v801
    %v803 = vpop.f32.mrb[0].mxu0
    %804 = vmatprep.mubr.f32.mxu0 0.0
    %805 = vmatmul.mubr.f32.gmra.mrb[0].mxu0 %v285
    %v806 = vpop.f32.mrb[0].mxu0
    %v807 = vadd.f32 %v179, %v806
    %v808 = vpop.f32.mrb[0].mxu0
    %809 = vmatprep.mubr.f32.mxu0 0.0
    %810 = vmatmul.mubr.f32.gmra.mrb[0].mxu0 %v288
    %v811 = vpop.f32.mrb[0].mxu0
    %v812 = vadd.f32 %v179, %v811
    %v813 = vpop.f32.mrb[0].mxu0
    %814 = vmatprep.mubr.f32.mxu0 0.0
    %815 = vmatmul.mubr.f32.gmra.mrb[0].mxu0 %v291
    %v816 = vpop.f32.mrb[0].mxu0
    %v817 = vadd.f32 %v179, %v816
    %v818 = vpop.f32.mrb[0].mxu0
    %819 = vmatprep.mubr.f32.mxu0 0.0
    %820 = vmatmul.mubr.f32.gmra.mrb[0].mxu0 %v294
    %v821 = vpop.f32.mrb[0].mxu0
    %v822 = vadd.f32 %v179, %v821
    %v823 = vpop.f32.mrb[0].mxu0
    %824 = vmatprep.mubr.f32.mxu0 0.0
    %825 = vmatmul.mubr.f32.gmra.mrb[0].mxu0 %v297
    %v826 = vpop.f32.mrb[0].mxu0
    %v827 = vadd.f32 %v179, %v826
    %v828 = vpop.f32.mrb[0].mxu0
    %829 = vmatprep.mubr.f32.mxu0 0.0
    %830 = vmatmul.mubr.f32.gmra.mrb[0].mxu0 %v300
    %v831 = vpop.f32.mrb[0].mxu0
    %v832 = vadd.f32 %v179, %v831
    %v833 = vpop.f32.mrb[0].mxu0
    %834 = vmatprep.mubr.f32.mxu0 0.0
    %835 = vmatmul.mubr.f32.gmra.mrb[0].mxu0 %v303
    %v836 = vpop.f32.mrb[0].mxu0
    %v837 = vadd.f32 %v179, %v836
    %v838 = vpop.f32.mrb[0].mxu0
    %839 = vmatprep.mubr.f32.mxu0 0.0
    %840 = vmatmul.mubr.f32.gmra.mrb[0].mxu0 %v306
    %v841 = vpop.f32.mrb[0].mxu0
    %v842 = vadd.f32 %v179, %v841
    %v843 = vpop.f32.mrb[0].mxu0
    %844 = vmatprep.mubr.f32.mxu0 0.0
    %845 = vmatmul.mubr.f32.gmra.mrb[0].mxu0 %v309
    %v846 = vpop.f32.mrb[0].mxu0
    %v847 = vadd.f32 %v179, %v846
    %v848 = vpop.f32.mrb[0].mxu0
    %849 = vmatprep.mubr.f32.mxu0 0.0
    %850 = vmatmul.mubr.f32.gmra.mrb[0].mxu0 %v312
    %v851 = vpop.f32.mrb[0].mxu0
    %v852 = vadd.f32 %v179, %v851
    %v853 = vpop.f32.mrb[0].mxu0
    %854 = vmatprep.mubr.f32.mxu0 0.0
    %855 = vmatmul.mubr.f32.gmra.mrb[0].mxu0 %v315
    %v856 = vpop.f32.mrb[0].mxu0
    %v857 = vadd.f32 %v179, %v856
    %v858 = vpop.f32.mrb[0].mxu0
    %859 = vmatprep.mubr.f32.mxu0 0.0
    %860 = vmatmul.mubr.f32.gmra.mrb[0].mxu0 %v318
    %v861 = vpop.f32.mrb[0].mxu0
    %v862 = vadd.f32 %v179, %v861
    %v863 = vpop.f32.mrb[0].mxu0
    %864 = vmatprep.mubr.f32.mxu0 0.0
    %865 = vmatmul.mubr.f32.gmra.mrb[0].mxu0 %v321
    %v866 = vpop.f32.mrb[0].mxu0
    %v867 = vadd.f32 %v179, %v866
    %v868 = vpop.f32.mrb[0].mxu0
    %869 = vmatprep.mubr.f32.mxu0 0.0
    %870 = vmatmul.mubr.f32.gmra.mrb[0].mxu0 %v324
    %v871 = vpop.f32.mrb[0].mxu0
    %v872 = vadd.f32 %v179, %v871
    %v873 = vpop.f32.mrb[0].mxu0
    %874 = vmatprep.mubr.f32.mxu0 0.0
    %875 = vmatmul.mubr.f32.gmra.mrb[0].mxu0 %v327
    %v876 = vpop.f32.mrb[0].mxu0
    %v877 = vadd.f32 %v179, %v876
    %v878 = vpop.f32.mrb[0].mxu0
    %879 = vmatprep.mubr.f32.mxu0 0.0
    %880 = vmatmul.mubr.f32.gmra.mrb[0].mxu0 %v330
    %v881 = vpop.f32.mrb[0].mxu0
    %v882 = vadd.f32 %v179, %v881
    %v883 = vpop.f32.mrb[0].mxu0
    %884 = vmatprep.mubr.f32.mxu0 0.0
    %885 = vmatmul.mubr.f32.gmra.mrb[0].mxu0 %v333
    %v886 = vpop.f32.mrb[0].mxu0
    %v887 = vadd.f32 %v179, %v886
    %v888 = vpop.f32.mrb[0].mxu0
    %889 = vmatprep.mubr.f32.mxu0 0.0
    %890 = vmatmul.mubr.f32.gmra.mrb[0].mxu0 %v336
    %v891 = vpop.f32.mrb[0].mxu0
    %v892 = vadd.f32 %v179, %v891
    %v893 = vpop.f32.mrb[0].mxu0
    %894 = vmatprep.mubr.f32.mxu0 0.0
    %895 = vmatmul.mubr.f32.gmra.mrb[0].mxu0 %v339
    %v896 = vpop.f32.mrb[0].mxu0
    %v897 = vadd.f32 %v179, %v896
    %v898 = vpop.f32.mrb[0].mxu0
    %899 = vmatprep.mubr.f32.mxu0 0.0
    %900 = vmatmul.mubr.f32.gmra.mrb[0].mxu0 %v342
    %v901 = vpop.f32.mrb[0].mxu0
    %v902 = vadd.f32 %v179, %v901
    %v903 = vpop.f32.mrb[0].mxu0
    %904 = vmatprep.mubr.f32.mxu0 0.0
    %905 = vmatmul.mubr.f32.gmra.mrb[0].mxu0 %v345
    %v906 = vpop.f32.mrb[0].mxu0
    %v907 = vadd.f32 %v179, %v906
    %v908 = vpop.f32.mrb[0].mxu0
    %909 = vmatprep.mubr.f32.mxu0 0.0
    %910 = vmatmul.mubr.f32.gmra.mrb[0].mxu0 %v348
    %v911 = vpop.f32.mrb[0].mxu0
    %v912 = vadd.f32 %v179, %v911
    %v913 = vpop.f32.mrb[0].mxu0
    %914 = vmatprep.mubr.f32.mxu0 0.0
    %915 = vmatmul.mubr.f32.gmra.mrb[0].mxu0 %v351
    %v916 = vpop.f32.mrb[0].mxu0
    %v917 = vadd.f32 %v179, %v916
    %v918 = vpop.f32.mrb[0].mxu0
    %919 = vmatprep.mubr.f32.mxu0 0.0
    %920 = vmatmul.mubr.f32.gmra.mrb[0].mxu0 %v354
    %v921 = vpop.f32.mrb[0].mxu0
    %v922 = vadd.f32 %v179, %v921
    %v923 = vpop.f32.mrb[0].mxu0
    %924 = vmatprep.mubr.f32.mxu0 0.0
    %925 = vmatmul.mubr.f32.gmra.mrb[0].mxu0 %v357
    %v926 = vpop.f32.mrb[0].mxu0
    %v927 = vadd.f32 %v179, %v926
    %v928 = vpop.f32.mrb[0].mxu0
    %929 = vmatprep.mubr.f32.mxu0 0.0
    %930 = vmatmul.mubr.f32.gmra.mrb[0].mxu0 %v360
    %v931 = vpop.f32.mrb[0].mxu0
    %v932 = vadd.f32 %v179, %v931
    %v933 = vpop.f32.mrb[0].mxu0
    %934 = vmatprep.mubr.f32.mxu0 0.0
    %935 = vmatmul.mubr.f32.gmra.mrb[0].mxu0 %v363
    %v936 = vpop.f32.mrb[0].mxu0
    %v937 = vadd.f32 %v179, %v936
    %v938 = vpop.f32.mrb[0].mxu0
    %939 = vmatprep.mubr.f32.mxu0 0.0
    %940 = vmatmul.mubr.f32.gmra.mrb[0].mxu0 %v366
    %v941 = vpop.f32.mrb[0].mxu0
    %v942 = vadd.f32 %v179, %v941
    %v943 = vpop.f32.mrb[0].mxu0
    %944 = vmatprep.mubr.f32.mxu0 0.0
    %945 = vmatmul.mubr.f32.gmra.mrb[0].mxu0 %v369
    %v946 = vpop.f32.mrb[0].mxu0
    %v947 = vadd.f32 %v179, %v946
    %v948 = vpop.f32.mrb[0].mxu0
    %949 = vmatprep.mubr.f32.mxu0 0.0
    %950 = vmatmul.mubr.f32.gmra.mrb[0].mxu0 %v372
    %v951 = vpop.f32.mrb[0].mxu0
    %v952 = vadd.f32 %v179, %v951
    %v953 = vpop.f32.mrb[0].mxu0
    %954 = vmatprep.mubr.f32.mxu0 0.0
    %955 = vmatmul.mubr.f32.gmra.mrb[0].mxu0 %v375
    %v956 = vpop.f32.mrb[0].mxu0
    %v957 = vadd.f32 %v179, %v956
    %v958 = vpop.f32.mrb[0].mxu0
    %959 = vmatprep.mubr.f32.mxu0 0.0
    %960 = vmatmul.mubr.f32.gmra.mrb[0].mxu0 %v378
    %v961 = vpop.f32.mrb[0].mxu0
    %v962 = vadd.f32 %v179, %v961
    %v963 = vpop.f32.mrb[0].mxu0
    %964 = vmatprep.mubr.f32.mxu0 0.0
    %965 = vmatmul.mubr.f32.gmra.mrb[0].mxu0 %v381
    %v966 = vpop.f32.mrb[0].mxu0
    %v967 = vadd.f32 %v179, %v966
    %v968 = vpop.f32.mrb[0].mxu0
    %969 = vmatprep.mubr.f32.mxu0 0.0
    %970 = vmatmul.mubr.f32.gmra.mrb[0].mxu0 %v384
    %v971 = vpop.f32.mrb[0].mxu0
    %v972 = vadd.f32 %v179, %v971
    %v973 = vpop.f32.mrb[0].mxu0
    %974 = vmatprep.mubr.f32.mxu0 0.0
    %975 = vmatmul.mubr.f32.gmra.mrb[0].mxu0 %v387
    %v976 = vpop.f32.mrb[0].mxu0
    %v977 = vadd.f32 %v179, %v976
    %v978 = vpop.f32.mrb[0].mxu0
    %979 = vmatprep.mubr.f32.mxu0 0.0
    %980 = vmatmul.mubr.f32.gmra.mrb[0].mxu0 %v390
    %v981 = vpop.f32.mrb[0].mxu0
    %v982 = vadd.f32 %v179, %v981
    %v983 = vpop.f32.mrb[0].mxu0
    %984 = vmatprep.mubr.f32.mxu0 0.0
    %985 = vmatmul.mubr.f32.gmra.mrb[0].mxu0 %v393
    %v986 = vpop.f32.mrb[0].mxu0
    %v987 = vadd.f32 %v179, %v986
    %v988 = vpop.f32.mrb[0].mxu0
    %989 = vmatprep.mubr.f32.mxu0 0.0
    %990 = vmatmul.mubr.f32.gmra.mrb[0].mxu0 %v396
    %v991 = vpop.f32.mrb[0].mxu0
    %v992 = vadd.f32 %v179, %v991
    %v993 = vpop.f32.mrb[0].mxu0
    %994 = vmatprep.mubr.f32.mxu0 0.0
    %995 = vmatmul.mubr.f32.gmra.mrb[0].mxu0 %v399
    %v996 = vpop.f32.mrb[0].mxu0
    %v997 = vadd.f32 %v179, %v996
    %v998 = vpop.f32.mrb[0].mxu0
    %999 = vmatprep.mubr.f32.mxu0 0.0
    %1000 = vmatmul.mubr.f32.gmra.mrb[0].mxu0 %v402
    %v1001 = vpop.f32.mrb[0].mxu0
    %v1002 = vadd.f32 %v179, %v1001
    %v1003 = vpop.f32.mrb[0].mxu0
    %1004 = vmatprep.mubr.f32.mxu0 0.0
    %1005 = vmatmul.mubr.f32.gmra.mrb[0].mxu0 %v405
    %v1006 = vpop.f32.mrb[0].mxu0
    %v1007 = vadd.f32 %v179, %v1006
    %v1008 = vpop.f32.mrb[0].mxu0
    %1009 = vmatprep.mubr.f32.mxu0 0.0
    %1010 = vmatmul.mubr.f32.gmra.mrb[0].mxu0 %v408
    %v1011 = vpop.f32.mrb[0].mxu0
    %v1012 = vadd.f32 %v179, %v1011
    %v1013 = vpop.f32.mrb[0].mxu0
    %1014 = vmatprep.mubr.f32.mxu0 0.0
    %1015 = vmatmul.mubr.f32.gmra.mrb[0].mxu0 %v411
    %v1016 = vpop.f32.mrb[0].mxu0
    %v1017 = vadd.f32 %v179, %v1016
    %v1018 = vpop.f32.mrb[0].mxu0
    %1019 = vmatprep.mubr.f32.mxu0 0.0
    %1020 = vmatmul.mubr.f32.gmra.mrb[0].mxu0 %v414
    %v1021 = vpop.f32.mrb[0].mxu0
    %v1022 = vadd.f32 %v179, %v1021
    %v1023 = vpop.f32.mrb[0].mxu0
    %1024 = vmatprep.mubr.f32.mxu0 0.0
    %1025 = vmatmul.mubr.f32.gmra.mrb[0].mxu0 %v417
    %v1026 = vpop.f32.mrb[0].mxu0
    %v1027 = vadd.f32 %v179, %v1026
    %v1028 = vpop.f32.mrb[0].mxu0
    %1029 = vmatprep.mubr.f32.mxu0 0.0
    %1030 = vmatmul.mubr.f32.gmra.mrb[0].mxu0 %v420
    %v1031 = vpop.f32.mrb[0].mxu0
    %v1032 = vadd.f32 %v179, %v1031
    %v1033 = vpop.f32.mrb[0].mxu0
    %1034 = vmatprep.mubr.f32.mxu0 0.0
    %1035 = vmatmul.mubr.f32.gmra.mrb[0].mxu0 %v423
    %v1036 = vpop.f32.mrb[0].mxu0
    %v1037 = vadd.f32 %v179, %v1036
    %v1038 = vpop.f32.mrb[0].mxu0
    %1039 = vmatprep.mubr.f32.mxu0 0.0
    %1040 = vmatmul.mubr.f32.gmra.mrb[0].mxu0 %v426
    %v1041 = vpop.f32.mrb[0].mxu0
    %v1042 = vadd.f32 %v179, %v1041
    %v1043 = vpop.f32.mrb[0].mxu0
    %1044 = vmatprep.mubr.f32.mxu0 0.0
    %1045 = vmatmul.mubr.f32.gmra.mrb[0].mxu0 %v429
    %v1046 = vpop.f32.mrb[0].mxu0
    %v1047 = vadd.f32 %v179, %v1046
    %v1048 = vpop.f32.mrb[0].mxu0
    %1049 = vmatprep.mubr.f32.mxu0 0.0
    %1050 = vmatmul.mubr.f32.gmra.mrb[0].mxu0 %v432
    %v1051 = vpop.f32.mrb[0].mxu0
    %v1052 = vadd.f32 %v179, %v1051
    %v1053 = vpop.f32.mrb[0].mxu0
    %1054 = vmatprep.mubr.f32.mxu0 0.0
    %1055 = vmatmul.mubr.f32.gmra.mrb[0].mxu0 %v435
    %v1056 = vpop.f32.mrb[0].mxu0
    %v1057 = vadd.f32 %v179, %v1056
    %v1058 = vpop.f32.mrb[0].mxu0
    %1059 = vmatprep.mubr.f32.mxu0 0.0
    %1060 = vmatmul.mubr.f32.gmra.mrb[0].mxu0 %v438
    %v1061 = vpop.f32.mrb[0].mxu0
    %v1062 = vadd.f32 %v179, %v1061
    %v1063 = vpop.f32.mrb[0].mxu0
    %1064 = vmatprep.mubr.f32.mxu0 0.0
    %1065 = vmatmul.mubr.f32.gmra.mrb[0].mxu0 %v441
    %v1066 = vpop.f32.mrb[0].mxu0
    %v1067 = vadd.f32 %v179, %v1066
    %v1068 = vpop.f32.mrb[0].mxu0
    %1069 = vmatprep.mubr.f32.mxu0 0.0
    %1070 = vmatmul.mubr.f32.gmra.mrb[0].mxu0 %v444
    %v1071 = vpop.f32.mrb[0].mxu0
    %v1072 = vadd.f32 %v179, %v1071
    %v1073 = vpop.f32.mrb[0].mxu0
    %1074 = vmatprep.mubr.f32.mxu0 0.0
    %1075 = vmatmul.mubr.f32.gmra.mrb[0].mxu0 %v447
    %v1076 = vpop.f32.mrb[0].mxu0
    %v1077 = vadd.f32 %v179, %v1076
    %v1078 = vpop.f32.mrb[0].mxu0
    %1079 = vmatprep.mubr.f32.mxu0 0.0
    %1080 = vmatmul.mubr.f32.gmra.mrb[0].mxu0 %v450
    %v1081 = vpop.f32.mrb[0].mxu0
    %v1082 = vadd.f32 %v179, %v1081
    %v1083 = vpop.f32.mrb[0].mxu0
    %1084 = vmatprep.mubr.f32.mxu0 0.0
    %1085 = vmatmul.mubr.f32.gmra.mrb[0].mxu0 %v453
    %v1086 = vpop.f32.mrb[0].mxu0
    %v1087 = vadd.f32 %v179, %v1086
    %v1088 = vpop.f32.mrb[0].mxu0
    %1089 = vmatprep.mubr.f32.mxu0 0.0
    %1090 = vmatmul.mubr.f32.gmra.mrb[0].mxu0 %v456
    %v1091 = vpop.f32.mrb[0].mxu0
    %v1092 = vadd.f32 %v179, %v1091
    %v1093 = vpop.f32.mrb[0].mxu0
    %1094 = vmatprep.mubr.f32.mxu0 0.0
    %1095 = vmatmul.mubr.f32.gmra.mrb[0].mxu0 %v459
    %v1096 = vpop.f32.mrb[0].mxu0
    %v1097 = vadd.f32 %v179, %v1096
    %v1098 = vpop.f32.mrb[0].mxu0
    %1099 = vmatprep.mubr.f32.mxu0 0.0
    %1100 = vmatmul.mubr.f32.gmra.mrb[0].mxu0 %v462
    %v1101 = vpop.f32.mrb[0].mxu0
    %v1102 = vadd.f32 %v179, %v1101
    %v1103 = vpop.f32.mrb[0].mxu0
    %1104 = vmatprep.mubr.f32.mxu0 0.0
    %1105 = vmatmul.mubr.f32.gmra.mrb[0].mxu0 %v465
    %v1106 = vpop.f32.mrb[0].mxu0
    %v1107 = vadd.f32 %v179, %v1106
    %v1108 = vpop.f32.mrb[0].mxu0
    %1109 = vmatprep.mubr.f32.mxu0 0.0
    %1110 = vmatmul.mubr.f32.gmra.mrb[0].mxu0 %v468
    %v1111 = vpop.f32.mrb[0].mxu0
    %v1112 = vadd.f32 %v179, %v1111
    %v1113 = vpop.f32.mrb[0].mxu0
    %1114 = vmatprep.mubr.f32.mxu0 0.0
    %1115 = vmatmul.mubr.f32.gmra.mrb[0].mxu0 %v471
    %v1116 = vpop.f32.mrb[0].mxu0
    %v1117 = vadd.f32 %v179, %v1116
    %v1118 = vpop.f32.mrb[0].mxu0
    %1119 = vmatprep.mubr.f32.mxu0 0.0
    %1120 = vmatmul.mubr.f32.gmra.mrb[0].mxu0 %v474
    %v1121 = vpop.f32.mrb[0].mxu0
    %v1122 = vadd.f32 %v179, %v1121
    %v1123 = vpop.f32.mrb[0].mxu0
    %1124 = vmatprep.mubr.f32.mxu0 0.0
    %1125 = vmatmul.mubr.f32.gmra.mrb[0].mxu0 %v477
    %v1126 = vpop.f32.mrb[0].mxu0
    %v1127 = vadd.f32 %v179, %v1126
    %v1128 = vpop.f32.mrb[0].mxu0
    %1129 = vmatprep.mubr.f32.mxu0 0.0
    %1130 = vmatmul.mubr.f32.gmra.mrb[0].mxu0 %v480
    %v1131 = vpop.f32.mrb[0].mxu0
    %v1132 = vadd.f32 %v179, %v1131
    %v1133 = vpop.f32.mrb[0].mxu0
    %1134 = vmatprep.mubr.f32.mxu0 0.0
    %1135 = vmatmul.mubr.f32.gmra.mrb[0].mxu0 %v483
    %v1136 = vpop.f32.mrb[0].mxu0
    %v1137 = vadd.f32 %v179, %v1136
    %v1138 = vpop.f32.mrb[0].mxu0
    %1139 = vmatprep.mubr.f32.mxu0 0.0
    %1140 = vmatmul.mubr.f32.gmra.mrb[0].mxu0 %v486
    %v1141 = vpop.f32.mrb[0].mxu0
    %v1142 = vadd.f32 %v179, %v1141
    %v1143 = vpop.f32.mrb[0].mxu0
    %1144 = vmatprep.mubr.f32.mxu0 0.0
    %1145 = vmatmul.mubr.f32.gmra.mrb[0].mxu0 %v489
    %v1146 = vpop.f32.mrb[0].mxu0
    %v1147 = vadd.f32 %v179, %v1146
    %v1148 = vpop.f32.mrb[0].mxu0
    %1149 = vmatprep.mubr.f32.mxu0 0.0
    %1150 = vmatmul.mubr.f32.gmra.mrb[0].mxu0 %v492
    %v1151 = vpop.f32.mrb[0].mxu0
    %v1152 = vadd.f32 %v179, %v1151
    %v1153 = vpop.f32.mrb[0].mxu0
    %1154 = vmatprep.mubr.f32.mxu0 0.0
    %1155 = vmatmul.mubr.f32.gmra.mrb[0].mxu0 %v495
    %v1156 = vpop.f32.mrb[0].mxu0
    %v1157 = vadd.f32 %v179, %v1156
    %v1158 = vpop.f32.mrb[0].mxu0
    %1159 = vmatprep.mubr.f32.mxu0 0.0
    %1160 = vmatmul.mubr.f32.gmra.mrb[0].mxu0 %v498
    %v1161 = vpop.f32.mrb[0].mxu0
    %v1162 = vadd.f32 %v179, %v1161
    %v1163 = vpop.f32.mrb[0].mxu0
    %1164 = vmatprep.mubr.f32.mxu0 0.0
    %1165 = vmatmul.mubr.f32.gmra.mrb[0].mxu0 %v501
    %v1166 = vpop.f32.mrb[0].mxu0
    %v1167 = vadd.f32 %v179, %v1166
    %v1168 = vpop.f32.mrb[0].mxu0
    %1169 = vmatprep.mubr.f32.mxu0 0.0
    %1170 = vmatmul.mubr.f32.gmra.mrb[0].mxu0 %v504
    %v1171 = vpop.f32.mrb[0].mxu0
    %v1172 = vadd.f32 %v179, %v1171
    %v1173 = vpop.f32.mrb[0].mxu0
    %1174 = vmatprep.mubr.f32.mxu0 0.0
    %1175 = vmatmul.mubr.f32.gmra.mrb[0].mxu0 %v507
    %v1176 = vpop.f32.mrb[0].mxu0
    %v1177 = vadd.f32 %v179, %v1176
    %v1178 = vpop.f32.mrb[0].mxu0
    %1179 = vmatprep.mubr.f32.mxu0 0.0
    %1180 = vmatmul.mubr.f32.gmra.mrb[0].mxu0 %v510
    %v1181 = vpop.f32.mrb[0].mxu0
    %v1182 = vadd.f32 %v179, %v1181
    %v1183 = vpop.f32.mrb[0].mxu0
    %1184 = vmatprep.mubr.f32.mxu0 0.0
    %1185 = vmatmul.mubr.f32.gmra.mrb[0].mxu0 %v513
    %v1186 = vpop.f32.mrb[0].mxu0
    %v1187 = vadd.f32 %v179, %v1186
    %v1188 = vpop.f32.mrb[0].mxu0
    %1189 = vmatprep.mubr.f32.mxu0 0.0
    %1190 = vmatmul.mubr.f32.gmra.mrb[0].mxu0 %v516
    %v1191 = vpop.f32.mrb[0].mxu0
    %v1192 = vadd.f32 %v179, %v1191
    %v1193 = vpop.f32.mrb[0].mxu0
    %1194 = vmatprep.mubr.f32.mxu0 0.0
    %1195 = vmatmul.mubr.f32.gmra.mrb[0].mxu0 %v519
    %v1196 = vpop.f32.mrb[0].mxu0
    %v1197 = vadd.f32 %v179, %v1196
    %v1198 = vpop.f32.mrb[0].mxu0
    %1199 = vmatprep.mubr.f32.mxu0 0.0
    %1200 = vmatmul.mubr.f32.gmra.mrb[0].mxu0 %v522
    %v1201 = vpop.f32.mrb[0].mxu0
    %v1202 = vadd.f32 %v179, %v1201
    %v1203 = vpop.f32.mrb[0].mxu0
    %1204 = vmatprep.mubr.f32.mxu0 0.0
    %1205 = vmatmul.mubr.f32.gmra.mrb[0].mxu0 %v525
    %v1206 = vpop.f32.mrb[0].mxu0
    %v1207 = vadd.f32 %v179, %v1206
    %v1208 = vpop.f32.mrb[0].mxu0
    %1209 = vmatprep.mubr.f32.mxu0 0.0
    %1210 = vmatmul.mubr.f32.gmra.mrb[0].mxu0 %v528
    %v1211 = vpop.f32.mrb[0].mxu0
    %v1212 = vadd.f32 %v179, %v1211
    %v1213 = vpop.f32.mrb[0].mxu0
    %1214 = vmatprep.mubr.f32.mxu0 0.0
    %1215 = vmatmul.mubr.f32.gmra.mrb[0].mxu0 %v531
    %v1216 = vpop.f32.mrb[0].mxu0
    %v1217 = vadd.f32 %v179, %v1216
    %v1218 = vpop.f32.mrb[0].mxu0
    %1219 = vmatprep.mubr.f32.mxu0 0.0
    %1220 = vmatmul.mubr.f32.gmra.mrb[0].mxu0 %v534
    %v1221 = vpop.f32.mrb[0].mxu0
    %v1222 = vadd.f32 %v179, %v1221
    %v1223 = vpop.f32.mrb[0].mxu0
    %1224 = vmatprep.mubr.f32.mxu0 0.0
    %1225 = vmatmul.mubr.f32.gmra.mrb[0].mxu0 %v537
    %v1226 = vpop.f32.mrb[0].mxu0
    %v1227 = vadd.f32 %v179, %v1226
    %v1228 = vpop.f32.mrb[0].mxu0
    %1229 = vmatprep.mubr.f32.mxu0 0.0
    %1230 = vmatmul.mubr.f32.gmra.mrb[0].mxu0 %v540
    %v1231 = vpop.f32.mrb[0].mxu0
    %v1232 = vadd.f32 %v179, %v1231
    %v1233 = vpop.f32.mrb[0].mxu0
    %1234 = vmatprep.mubr.f32.mxu0 0.0
    %1235 = vmatmul.mubr.f32.gmra.mrb[0].mxu0 %v543
    %v1236 = vpop.f32.mrb[0].mxu0
    %v1237 = vadd.f32 %v179, %v1236
    %v1238 = vpop.f32.mrb[0].mxu0
    %1239 = vmatprep.mubr.f32.mxu0 0.0
    %1240 = vmatmul.mubr.f32.gmra.mrb[0].mxu0 %v546
    %v1241 = vpop.f32.mrb[0].mxu0
    %v1242 = vadd.f32 %v179, %v1241
    %v1243 = vpop.f32.mrb[0].mxu0
    %1244 = vmatprep.mubr.f32.mxu0 0.0
    %1245 = vmatmul.mubr.f32.gmra.mrb[0].mxu0 %v549
    %v1246 = vpop.f32.mrb[0].mxu0
    %v1247 = vadd.f32 %v179, %v1246
    %v1248 = vpop.f32.mrb[0].mxu0
    %1249 = vmatprep.mubr.f32.mxu0 0.0
    %1250 = vmatmul.mubr.f32.gmra.mrb[0].mxu0 %v552
    %v1251 = vpop.f32.mrb[0].mxu0
    %v1252 = vadd.f32 %v179, %v1251
    %v1253 = vpop.f32.mrb[0].mxu0
    %1254 = vmatprep.mubr.f32.mxu0 0.0
    %1255 = vmatmul.mubr.f32.gmra.mrb[0].mxu0 %v555
    %v1256 = vpop.f32.mrb[0].mxu0
    %v1257 = vadd.f32 %v179, %v1256
    %v1258 = vpop.f32.mrb[0].mxu0
    %1259 = vmatprep.mubr.f32.mxu0 0.0
    %1260 = vmatmul.mubr.f32.gmra.mrb[0].mxu0 %v558
    %v1261 = vpop.f32.mrb[0].mxu0
    %v1262 = vadd.f32 %v179, %v1261
    %v1263 = vpop.f32.mrb[0].mxu0
    %1264 = vmatprep.mubr.f32.mxu0 0.0
    %1265 = vmatmul.mubr.f32.gmra.mrb[0].mxu0 %v561
    %v1266 = vpop.f32.mrb[0].mxu0
    %v1267 = vadd.f32 %v179, %v1266
    %v1268 = vpop.f32.mrb[0].mxu0
    %1269 = vmatprep.mubr.f32.mxu0 0.0
    %1270 = vmatmul.mubr.f32.gmra.mrb[0].mxu0 %v564
    %v1271 = vpop.f32.mrb[0].mxu0
    %v1272 = vadd.f32 %v179, %v1271
    %v1273 = vpop.f32.mrb[0].mxu0
    %1274 = vdwg.mxu0
    %v1275 = vld [vmem:[%s1] sm:$0xff]
    %v1276 = vld [vmem:[%s1 + $0x8] sm:$0xff]
    %v1277 = vld [vmem:[%s1 + $0x10] sm:$0xff]
    %v1278 = vld [vmem:[%s1 + $0x18] sm:$0xff]
    %v1279 = vld [vmem:[%s1 + $0x20] sm:$0xff]
    %v1280 = vld [vmem:[%s1 + $0x28] sm:$0xff]
    %v1281 = vld [vmem:[%s1 + $0x30] sm:$0xff]
    %v1282 = vld [vmem:[%s1 + $0x38] sm:$0xff]
    %v1283 = vld [vmem:[%s1 + $0x40] sm:$0xff]
    %v1284 = vld [vmem:[%s1 + $0x48] sm:$0xff]
    %v1285 = vld [vmem:[%s1 + $0x50] sm:$0xff]
    %v1286 = vld [vmem:[%s1 + $0x58] sm:$0xff]
    %v1287 = vld [vmem:[%s1 + $0x60] sm:$0xff]
    %v1288 = vld [vmem:[%s1 + $0x68] sm:$0xff]
    %v1289 = vld [vmem:[%s1 + $0x70] sm:$0xff]
    %v1290 = vld [vmem:[%s1 + $0x78] sm:$0xff]
    %v1291 = vld [vmem:[%s1 + $0x80] sm:$0xff]
    %v1292 = vld [vmem:[%s1 + $0x88] sm:$0xff]
    %v1293 = vld [vmem:[%s1 + $0x90] sm:$0xff]
    %v1294 = vld [vmem:[%s1 + $0x98] sm:$0xff]
    %v1295 = vld [vmem:[%s1 + $0xa0] sm:$0xff]
    %v1296 = vld [vmem:[%s1 + $0xa8] sm:$0xff]
    %v1297 = vld [vmem:[%s1 + $0xb0] sm:$0xff]
    %v1298 = vld [vmem:[%s1 + $0xb8] sm:$0xff]
    %v1299 = vld [vmem:[%s1 + $0xc0] sm:$0xff]
    %v1300 = vld [vmem:[%s1 + $0xc8] sm:$0xff]
    %v1301 = vld [vmem:[%s1 + $0xd0] sm:$0xff]
    %v1302 = vld [vmem:[%s1 + $0xd8] sm:$0xff]
    %v1303 = vld [vmem:[%s1 + $0xe0] sm:$0xff]
    %v1304 = vld [vmem:[%s1 + $0xe8] sm:$0xff]
    %v1305 = vld [vmem:[%s1 + $0xf0] sm:$0xff]
    %v1306 = vld [vmem:[%s1 + $0xf8] sm:$0xff]
    %v1307 = vld [vmem:[%s1 + $0x100] sm:$0xff]
    %v1308 = vld [vmem:[%s1 + $0x108] sm:$0xff]
    %v1309 = vld [vmem:[%s1 + $0x110] sm:$0xff]
    %v1310 = vld [vmem:[%s1 + $0x118] sm:$0xff]
    %v1311 = vld [vmem:[%s1 + $0x120] sm:$0xff]
    %v1312 = vld [vmem:[%s1 + $0x128] sm:$0xff]
    %v1313 = vld [vmem:[%s1 + $0x130] sm:$0xff]
    %v1314 = vld [vmem:[%s1 + $0x138] sm:$0xff]
    %v1315 = vld [vmem:[%s1 + $0x140] sm:$0xff]
    %v1316 = vld [vmem:[%s1 + $0x148] sm:$0xff]
    %v1317 = vld [vmem:[%s1 + $0x150] sm:$0xff]
    %v1318 = vld [vmem:[%s1 + $0x158] sm:$0xff]
    %v1319 = vld [vmem:[%s1 + $0x160] sm:$0xff]
    %v1320 = vld [vmem:[%s1 + $0x168] sm:$0xff]
    %v1321 = vld [vmem:[%s1 + $0x170] sm:$0xff]
    %v1322 = vld [vmem:[%s1 + $0x178] sm:$0xff]
    %v1323 = vld [vmem:[%s1 + $0x180] sm:$0xff]
    %v1324 = vld [vmem:[%s1 + $0x188] sm:$0xff]
    %v1325 = vld [vmem:[%s1 + $0x190] sm:$0xff]
    %v1326 = vld [vmem:[%s1 + $0x198] sm:$0xff]
    %v1327 = vld [vmem:[%s1 + $0x1a0] sm:$0xff]
    %v1328 = vld [vmem:[%s1 + $0x1a8] sm:$0xff]
    %v1329 = vld [vmem:[%s1 + $0x1b0] sm:$0xff]
    %v1330 = vld [vmem:[%s1 + $0x1b8] sm:$0xff]
    %v1331 = vld [vmem:[%s1 + $0x1c0] sm:$0xff]
    %v1332 = vld [vmem:[%s1 + $0x1c8] sm:$0xff]
    %v1333 = vld [vmem:[%s1 + $0x1d0] sm:$0xff]
    %v1334 = vld [vmem:[%s1 + $0x1d8] sm:$0xff]
    %v1335 = vld [vmem:[%s1 + $0x1e0] sm:$0xff]
    %v1336 = vld [vmem:[%s1 + $0x1e8] sm:$0xff]
    %v1337 = vld [vmem:[%s1 + $0x1f0] sm:$0xff]
    %v1338 = vld [vmem:[%s1 + $0x1f8] sm:$0xff]
    %v1339 = vld [vmem:[%s1 + $0x200] sm:$0xff]
    %v1340 = vld [vmem:[%s1 + $0x208] sm:$0xff]
    %v1341 = vld [vmem:[%s1 + $0x210] sm:$0xff]
    %v1342 = vld [vmem:[%s1 + $0x218] sm:$0xff]
    %v1343 = vld [vmem:[%s1 + $0x220] sm:$0xff]
    %v1344 = vld [vmem:[%s1 + $0x228] sm:$0xff]
    %v1345 = vld [vmem:[%s1 + $0x230] sm:$0xff]
    %v1346 = vld [vmem:[%s1 + $0x238] sm:$0xff]
    %v1347 = vld [vmem:[%s1 + $0x240] sm:$0xff]
    %v1348 = vld [vmem:[%s1 + $0x248] sm:$0xff]
    %v1349 = vld [vmem:[%s1 + $0x250] sm:$0xff]
    %v1350 = vld [vmem:[%s1 + $0x258] sm:$0xff]
    %v1351 = vld [vmem:[%s1 + $0x260] sm:$0xff]
    %v1352 = vld [vmem:[%s1 + $0x268] sm:$0xff]
    %v1353 = vld [vmem:[%s1 + $0x270] sm:$0xff]
    %v1354 = vld [vmem:[%s1 + $0x278] sm:$0xff]
    %v1355 = vld [vmem:[%s1 + $0x280] sm:$0xff]
    %v1356 = vld [vmem:[%s1 + $0x288] sm:$0xff]
    %v1357 = vld [vmem:[%s1 + $0x290] sm:$0xff]
    %v1358 = vld [vmem:[%s1 + $0x298] sm:$0xff]
    %v1359 = vld [vmem:[%s1 + $0x2a0] sm:$0xff]
    %v1360 = vld [vmem:[%s1 + $0x2a8] sm:$0xff]
    %v1361 = vld [vmem:[%s1 + $0x2b0] sm:$0xff]
    %v1362 = vld [vmem:[%s1 + $0x2b8] sm:$0xff]
    %v1363 = vld [vmem:[%s1 + $0x2c0] sm:$0xff]
    %v1364 = vld [vmem:[%s1 + $0x2c8] sm:$0xff]
    %v1365 = vld [vmem:[%s1 + $0x2d0] sm:$0xff]
    %v1366 = vld [vmem:[%s1 + $0x2d8] sm:$0xff]
    %v1367 = vld [vmem:[%s1 + $0x2e0] sm:$0xff]
    %v1368 = vld [vmem:[%s1 + $0x2e8] sm:$0xff]
    %v1369 = vld [vmem:[%s1 + $0x2f0] sm:$0xff]
    %v1370 = vld [vmem:[%s1 + $0x2f8] sm:$0xff]
    %v1371 = vld [vmem:[%s1 + $0x300] sm:$0xff]
    %v1372 = vld [vmem:[%s1 + $0x308] sm:$0xff]
    %v1373 = vld [vmem:[%s1 + $0x310] sm:$0xff]
    %v1374 = vld [vmem:[%s1 + $0x318] sm:$0xff]
    %v1375 = vld [vmem:[%s1 + $0x320] sm:$0xff]
    %v1376 = vld [vmem:[%s1 + $0x328] sm:$0xff]
    %v1377 = vld [vmem:[%s1 + $0x330] sm:$0xff]
    %v1378 = vld [vmem:[%s1 + $0x338] sm:$0xff]
    %v1379 = vld [vmem:[%s1 + $0x340] sm:$0xff]
    %v1380 = vld [vmem:[%s1 + $0x348] sm:$0xff]
    %v1381 = vld [vmem:[%s1 + $0x350] sm:$0xff]
    %v1382 = vld [vmem:[%s1 + $0x358] sm:$0xff]
    %v1383 = vld [vmem:[%s1 + $0x360] sm:$0xff]
    %v1384 = vld [vmem:[%s1 + $0x368] sm:$0xff]
    %v1385 = vld [vmem:[%s1 + $0x370] sm:$0xff]
    %v1386 = vld [vmem:[%s1 + $0x378] sm:$0xff]
    %v1387 = vld [vmem:[%s1 + $0x380] sm:$0xff]
    %v1388 = vld [vmem:[%s1 + $0x388] sm:$0xff]
    %v1389 = vld [vmem:[%s1 + $0x390] sm:$0xff]
    %v1390 = vld [vmem:[%s1 + $0x398] sm:$0xff]
    %v1391 = vld [vmem:[%s1 + $0x3a0] sm:$0xff]
    %v1392 = vld [vmem:[%s1 + $0x3a8] sm:$0xff]
    %v1393 = vld [vmem:[%s1 + $0x3b0] sm:$0xff]
    %v1394 = vld [vmem:[%s1 + $0x3b8] sm:$0xff]
    %v1395 = vld [vmem:[%s1 + $0x3c0] sm:$0xff]
    %v1396 = vld [vmem:[%s1 + $0x3c8] sm:$0xff]
    %v1397 = vld [vmem:[%s1 + $0x3d0] sm:$0xff]
    %v1398 = vld [vmem:[%s1 + $0x3d8] sm:$0xff]
    %v1399 = vld [vmem:[%s1 + $0x3e0] sm:$0xff]
    %v1400 = vld [vmem:[%s1 + $0x3e8] sm:$0xff]
    %v1401 = vld [vmem:[%s1 + $0x3f0] sm:$0xff]
    %v1402 = vld [vmem:[%s1 + $0x3f8] sm:$0xff]
    %v1403 = vld [vmem:[%s4] sm:$0xf]
    %v1404 = vld [vmem:[%s5] sm:$0x1]
    %v1406 = vlaneseq
    %v1407 = vshrl.u32 %v1406, 7
    %v1408 = vsub.s32 0, %v1407
    %v1409 = vrot.slane %v1404, %v1408
    %vm1411 = vcmask 31744
    %v1413 = vsel %vm1411, %v1275, 0
    %v1416 = vsel %vm1411, %v1276, 0
    %v1419 = vsel %vm1411, %v1277, 0
    %v1422 = vsel %vm1411, %v1278, 0
    %v1425 = vsel %vm1411, %v1279, 0
    %v1428 = vsel %vm1411, %v1280, 0
    %v1431 = vsel %vm1411, %v1281, 0
    %v1434 = vsel %vm1411, %v1282, 0
    %v1437 = vsel %vm1411, %v1283, 0
    %v1440 = vsel %vm1411, %v1284, 0
    %v1443 = vsel %vm1411, %v1285, 0
    %v1446 = vsel %vm1411, %v1286, 0
    %v1449 = vsel %vm1411, %v1287, 0
    %v1452 = vsel %vm1411, %v1288, 0
    %v1455 = vsel %vm1411, %v1289, 0
    %v1458 = vsel %vm1411, %v1290, 0
    %v1461 = vsel %vm1411, %v1291, 0
    %v1464 = vsel %vm1411, %v1292, 0
    %v1467 = vsel %vm1411, %v1293, 0
    %v1470 = vsel %vm1411, %v1294, 0
    %v1473 = vsel %vm1411, %v1295, 0
    %v1476 = vsel %vm1411, %v1296, 0
    %v1479 = vsel %vm1411, %v1297, 0
    %v1482 = vsel %vm1411, %v1298, 0
    %v1485 = vsel %vm1411, %v1299, 0
    %v1488 = vsel %vm1411, %v1300, 0
    %v1491 = vsel %vm1411, %v1301, 0
    %v1494 = vsel %vm1411, %v1302, 0
    %v1497 = vsel %vm1411, %v1303, 0
    %v1500 = vsel %vm1411, %v1304, 0
    %v1503 = vsel %vm1411, %v1305, 0
    %v1506 = vsel %vm1411, %v1306, 0
    %v1509 = vsel %vm1411, %v1307, 0
    %v1512 = vsel %vm1411, %v1308, 0
    %v1515 = vsel %vm1411, %v1309, 0
    %v1518 = vsel %vm1411, %v1310, 0
    %v1521 = vsel %vm1411, %v1311, 0
    %v1524 = vsel %vm1411, %v1312, 0
    %v1527 = vsel %vm1411, %v1313, 0
    %v1530 = vsel %vm1411, %v1314, 0
    %v1533 = vsel %vm1411, %v1315, 0
    %v1536 = vsel %vm1411, %v1316, 0
    %v1539 = vsel %vm1411, %v1317, 0
    %v1542 = vsel %vm1411, %v1318, 0
    %v1545 = vsel %vm1411, %v1319, 0
    %v1548 = vsel %vm1411, %v1320, 0
    %v1551 = vsel %vm1411, %v1321, 0
    %v1554 = vsel %vm1411, %v1322, 0
    %v1557 = vsel %vm1411, %v1323, 0
    %v1560 = vsel %vm1411, %v1324, 0
    %v1563 = vsel %vm1411, %v1325, 0
    %v1566 = vsel %vm1411, %v1326, 0
    %v1569 = vsel %vm1411, %v1327, 0
    %v1572 = vsel %vm1411, %v1328, 0
    %v1575 = vsel %vm1411, %v1329, 0
    %v1578 = vsel %vm1411, %v1330, 0
    %v1581 = vsel %vm1411, %v1331, 0
    %v1584 = vsel %vm1411, %v1332, 0
    %v1587 = vsel %vm1411, %v1333, 0
    %v1590 = vsel %vm1411, %v1334, 0
    %v1593 = vsel %vm1411, %v1335, 0
    %v1596 = vsel %vm1411, %v1336, 0
    %v1599 = vsel %vm1411, %v1337, 0
    %v1602 = vsel %vm1411, %v1338, 0
    %v1605 = vsel %vm1411, %v1339, 0
    %v1608 = vsel %vm1411, %v1340, 0
    %v1611 = vsel %vm1411, %v1341, 0
    %v1614 = vsel %vm1411, %v1342, 0
    %v1617 = vsel %vm1411, %v1343, 0
    %v1620 = vsel %vm1411, %v1344, 0
    %v1623 = vsel %vm1411, %v1345, 0
    %v1626 = vsel %vm1411, %v1346, 0
    %v1629 = vsel %vm1411, %v1347, 0
    %v1632 = vsel %vm1411, %v1348, 0
    %v1635 = vsel %vm1411, %v1349, 0
    %v1638 = vsel %vm1411, %v1350, 0
    %v1641 = vsel %vm1411, %v1351, 0
    %v1644 = vsel %vm1411, %v1352, 0
    %v1647 = vsel %vm1411, %v1353, 0
    %v1650 = vsel %vm1411, %v1354, 0
    %v1653 = vsel %vm1411, %v1355, 0
    %v1656 = vsel %vm1411, %v1356, 0
    %v1659 = vsel %vm1411, %v1357, 0
    %v1662 = vsel %vm1411, %v1358, 0
    %v1665 = vsel %vm1411, %v1359, 0
    %v1668 = vsel %vm1411, %v1360, 0
    %v1671 = vsel %vm1411, %v1361, 0
    %v1674 = vsel %vm1411, %v1362, 0
    %v1677 = vsel %vm1411, %v1363, 0
    %v1680 = vsel %vm1411, %v1364, 0
    %v1683 = vsel %vm1411, %v1365, 0
    %v1686 = vsel %vm1411, %v1366, 0
    %v1689 = vsel %vm1411, %v1367, 0
    %v1692 = vsel %vm1411, %v1368, 0
    %v1695 = vsel %vm1411, %v1369, 0
    %v1698 = vsel %vm1411, %v1370, 0
    %v1701 = vsel %vm1411, %v1371, 0
    %v1704 = vsel %vm1411, %v1372, 0
    %v1707 = vsel %vm1411, %v1373, 0
    %v1710 = vsel %vm1411, %v1374, 0
    %v1713 = vsel %vm1411, %v1375, 0
    %v1716 = vsel %vm1411, %v1376, 0
    %v1719 = vsel %vm1411, %v1377, 0
    %v1722 = vsel %vm1411, %v1378, 0
    %v1725 = vsel %vm1411, %v1379, 0
    %v1728 = vsel %vm1411, %v1380, 0
    %v1731 = vsel %vm1411, %v1381, 0
    %v1734 = vsel %vm1411, %v1382, 0
    %v1737 = vsel %vm1411, %v1383, 0
    %v1740 = vsel %vm1411, %v1384, 0
    %v1743 = vsel %vm1411, %v1385, 0
    %v1746 = vsel %vm1411, %v1386, 0
    %v1749 = vsel %vm1411, %v1387, 0
    %v1752 = vsel %vm1411, %v1388, 0
    %v1755 = vsel %vm1411, %v1389, 0
    %v1758 = vsel %vm1411, %v1390, 0
    %v1761 = vsel %vm1411, %v1391, 0
    %v1764 = vsel %vm1411, %v1392, 0
    %v1767 = vsel %vm1411, %v1393, 0
    %v1770 = vsel %vm1411, %v1394, 0
    %v1773 = vsel %vm1411, %v1395, 0
    %v1776 = vsel %vm1411, %v1396, 0
    %v1779 = vsel %vm1411, %v1397, 0
    %v1782 = vsel %vm1411, %v1398, 0
    %v1785 = vsel %vm1411, %v1399, 0
    %v1788 = vsel %vm1411, %v1400, 0
    %v1791 = vsel %vm1411, %v1401, 0
    %v1794 = vsel %vm1411, %v1402, 0
    %v1797 = vsel %vm566, %v1403, 0
    %1799 = vmatprep.subr.mxu0 0.0
    %1800 = vmatpush1.msra.mxu0 %v1797
    %1801 = vmatprep.subr.mxu0 0.0
    %1802 = vmatpush1.msra.mxu0 0.0
    %1803 = vmatprep.subr.mxu0 0.0
    %1804 = vmatpush1.msra.mxu0 0.0
    %1805 = vmatprep.subr.mxu0 0.0
    %1806 = vmatpush1.msra.mxu0 0.0
    %1807 = vmatprep.subr.mxu0 0.0
    %1808 = vmatpush1.msra.mxu0 0.0
    %1809 = vmatprep.subr.mxu0 0.0
    %1810 = vmatpush1.msra.mxu0 0.0
    %1811 = vmatprep.subr.mxu0 0.0
    %1812 = vmatpush1.msra.mxu0 0.0
    %1813 = vmatprep.subr.mxu0 0.0
    %1814 = vmatpush1.msra.mxu0 0.0
    %1815 = vmatprep.subr.mxu0 0.0
    %1816 = vmatpush1.msra.mxu0 0.0
    %1817 = vmatprep.subr.mxu0 0.0
    %1818 = vmatpush1.msra.mxu0 0.0
    %1819 = vmatprep.subr.mxu0 0.0
    %1820 = vmatpush1.msra.mxu0 0.0
    %1821 = vmatprep.subr.mxu0 0.0
    %1822 = vmatpush1.msra.mxu0 0.0
    %1823 = vmatprep.subr.mxu0 0.0
    %1824 = vmatpush1.msra.mxu0 0.0
    %1825 = vmatprep.subr.mxu0 0.0
    %1826 = vmatpush1.msra.mxu0 0.0
    %1827 = vmatprep.subr.mxu0 0.0
    %1828 = vmatpush1.msra.mxu0 0.0
    %1829 = vmatprep.subr.mxu0 0.0
    %1830 = vmatpush1.msra.mxu0 0.0
    %1831 = vmatprep.subr.mxu0 0.0
    %1832 = vmatpush1.msra.mxu0 0.0
    %1833 = vmatprep.subr.mxu0 0.0
    %1834 = vmatpush1.msra.mxu0 0.0
    %1835 = vmatprep.subr.mxu0 0.0
    %1836 = vmatpush1.msra.mxu0 0.0
    %1837 = vmatprep.subr.mxu0 0.0
    %1838 = vmatpush1.msra.mxu0 0.0
    %1839 = vmatprep.subr.mxu0 0.0
    %1840 = vmatpush1.msra.mxu0 0.0
    %1841 = vmatprep.subr.mxu0 0.0
    %1842 = vmatpush1.msra.mxu0 0.0
    %1843 = vmatprep.subr.mxu0 0.0
    %1844 = vmatpush1.msra.mxu0 0.0
    %1845 = vmatprep.subr.mxu0 0.0
    %1846 = vmatpush1.msra.mxu0 0.0
    %1847 = vmatprep.subr.mxu0 0.0
    %1848 = vmatpush1.msra.mxu0 0.0
    %1849 = vmatprep.subr.mxu0 0.0
    %1850 = vmatpush1.msra.mxu0 0.0
    %1851 = vmatprep.subr.mxu0 0.0
    %1852 = vmatpush1.msra.mxu0 0.0
    %1853 = vmatprep.subr.mxu0 0.0
    %1854 = vmatpush1.msra.mxu0 0.0
    %1855 = vmatprep.subr.mxu0 0.0
    %1856 = vmatpush1.msra.mxu0 0.0
    %1857 = vmatprep.subr.mxu0 0.0
    %1858 = vmatpush1.msra.mxu0 0.0
    %1859 = vmatprep.subr.mxu0 0.0
    %1860 = vmatpush1.msra.mxu0 0.0
    %1861 = vmatprep.subr.mxu0 0.0
    %1862 = vmatpush1.msra.mxu0 0.0
    %1863 = vmatprep.mubr.f32.mxu0 0.0
    %1864 = vmatmul.mubr.f32.gmra.mrb[0].mxu0 %v1413
    %v1865 = vpop.f32.mrb[0].mxu0
    %v1866 = vadd.f32 %v1409, %v1865
    %v1867 = vpop.f32.mrb[0].mxu0
    %1868 = vmatprep.mubr.f32.mxu0 0.0
    %1869 = vmatmul.mubr.f32.gmra.mrb[0].mxu0 %v1416
    %v1870 = vpop.f32.mrb[0].mxu0
    %v1871 = vadd.f32 %v1409, %v1870
    %v1872 = vpop.f32.mrb[0].mxu0
    %1873 = vmatprep.mubr.f32.mxu0 0.0
    %1874 = vmatmul.mubr.f32.gmra.mrb[0].mxu0 %v1419
    %v1875 = vpop.f32.mrb[0].mxu0
    %v1876 = vadd.f32 %v1409, %v1875
    %v1877 = vpop.f32.mrb[0].mxu0
    %1878 = vmatprep.mubr.f32.mxu0 0.0
    %1879 = vmatmul.mubr.f32.gmra.mrb[0].mxu0 %v1422
    %v1880 = vpop.f32.mrb[0].mxu0
    %v1881 = vadd.f32 %v1409, %v1880
    %v1882 = vpop.f32.mrb[0].mxu0
    %1883 = vmatprep.mubr.f32.mxu0 0.0
    %1884 = vmatmul.mubr.f32.gmra.mrb[0].mxu0 %v1425
    %v1885 = vpop.f32.mrb[0].mxu0
    %v1886 = vadd.f32 %v1409, %v1885
    %v1887 = vpop.f32.mrb[0].mxu0
    %1888 = vmatprep.mubr.f32.mxu0 0.0
    %1889 = vmatmul.mubr.f32.gmra.mrb[0].mxu0 %v1428
    %v1890 = vpop.f32.mrb[0].mxu0
    %v1891 = vadd.f32 %v1409, %v1890
    %v1892 = vpop.f32.mrb[0].mxu0
    %1893 = vmatprep.mubr.f32.mxu0 0.0
    %1894 = vmatmul.mubr.f32.gmra.mrb[0].mxu0 %v1431
    %v1895 = vpop.f32.mrb[0].mxu0
    %v1896 = vadd.f32 %v1409, %v1895
    %v1897 = vpop.f32.mrb[0].mxu0
    %1898 = vmatprep.mubr.f32.mxu0 0.0
    %1899 = vmatmul.mubr.f32.gmra.mrb[0].mxu0 %v1434
    %v1900 = vpop.f32.mrb[0].mxu0
    %v1901 = vadd.f32 %v1409, %v1900
    %v1902 = vpop.f32.mrb[0].mxu0
    %1903 = vmatprep.mubr.f32.mxu0 0.0
    %1904 = vmatmul.mubr.f32.gmra.mrb[0].mxu0 %v1437
    %v1905 = vpop.f32.mrb[0].mxu0
    %v1906 = vadd.f32 %v1409, %v1905
    %v1907 = vpop.f32.mrb[0].mxu0
    %1908 = vmatprep.mubr.f32.mxu0 0.0
    %1909 = vmatmul.mubr.f32.gmra.mrb[0].mxu0 %v1440
    %v1910 = vpop.f32.mrb[0].mxu0
    %v1911 = vadd.f32 %v1409, %v1910
    %v1912 = vpop.f32.mrb[0].mxu0
    %1913 = vmatprep.mubr.f32.mxu0 0.0
    %1914 = vmatmul.mubr.f32.gmra.mrb[0].mxu0 %v1443
    %v1915 = vpop.f32.mrb[0].mxu0
    %v1916 = vadd.f32 %v1409, %v1915
    %v1917 = vpop.f32.mrb[0].mxu0
    %1918 = vmatprep.mubr.f32.mxu0 0.0
    %1919 = vmatmul.mubr.f32.gmra.mrb[0].mxu0 %v1446
    %v1920 = vpop.f32.mrb[0].mxu0
    %v1921 = vadd.f32 %v1409, %v1920
    %v1922 = vpop.f32.mrb[0].mxu0
    %1923 = vmatprep.mubr.f32.mxu0 0.0
    %1924 = vmatmul.mubr.f32.gmra.mrb[0].mxu0 %v1449
    %v1925 = vpop.f32.mrb[0].mxu0
    %v1926 = vadd.f32 %v1409, %v1925
    %v1927 = vpop.f32.mrb[0].mxu0
    %1928 = vmatprep.mubr.f32.mxu0 0.0
    %1929 = vmatmul.mubr.f32.gmra.mrb[0].mxu0 %v1452
    %v1930 = vpop.f32.mrb[0].mxu0
    %v1931 = vadd.f32 %v1409, %v1930
    %v1932 = vpop.f32.mrb[0].mxu0
    %1933 = vmatprep.mubr.f32.mxu0 0.0
    %1934 = vmatmul.mubr.f32.gmra.mrb[0].mxu0 %v1455
    %v1935 = vpop.f32.mrb[0].mxu0
    %v1936 = vadd.f32 %v1409, %v1935
    %v1937 = vpop.f32.mrb[0].mxu0
    %1938 = vmatprep.mubr.f32.mxu0 0.0
    %1939 = vmatmul.mubr.f32.gmra.mrb[0].mxu0 %v1458
    %v1940 = vpop.f32.mrb[0].mxu0
    %v1941 = vadd.f32 %v1409, %v1940
    %v1942 = vpop.f32.mrb[0].mxu0
    %1943 = vmatprep.mubr.f32.mxu0 0.0
    %1944 = vmatmul.mubr.f32.gmra.mrb[0].mxu0 %v1461
    %v1945 = vpop.f32.mrb[0].mxu0
    %v1946 = vadd.f32 %v1409, %v1945
    %v1947 = vpop.f32.mrb[0].mxu0
    %1948 = vmatprep.mubr.f32.mxu0 0.0
    %1949 = vmatmul.mubr.f32.gmra.mrb[0].mxu0 %v1464
    %v1950 = vpop.f32.mrb[0].mxu0
    %v1951 = vadd.f32 %v1409, %v1950
    %v1952 = vpop.f32.mrb[0].mxu0
    %1953 = vmatprep.mubr.f32.mxu0 0.0
    %1954 = vmatmul.mubr.f32.gmra.mrb[0].mxu0 %v1467
    %v1955 = vpop.f32.mrb[0].mxu0
    %v1956 = vadd.f32 %v1409, %v1955
    %v1957 = vpop.f32.mrb[0].mxu0
    %1958 = vmatprep.mubr.f32.mxu0 0.0
    %1959 = vmatmul.mubr.f32.gmra.mrb[0].mxu0 %v1470
    %v1960 = vpop.f32.mrb[0].mxu0
    %v1961 = vadd.f32 %v1409, %v1960
    %v1962 = vpop.f32.mrb[0].mxu0
    %1963 = vmatprep.mubr.f32.mxu0 0.0
    %1964 = vmatmul.mubr.f32.gmra.mrb[0].mxu0 %v1473
    %v1965 = vpop.f32.mrb[0].mxu0
    %v1966 = vadd.f32 %v1409, %v1965
    %v1967 = vpop.f32.mrb[0].mxu0
    %1968 = vmatprep.mubr.f32.mxu0 0.0
    %1969 = vmatmul.mubr.f32.gmra.mrb[0].mxu0 %v1476
    %v1970 = vpop.f32.mrb[0].mxu0
    %v1971 = vadd.f32 %v1409, %v1970
    %v1972 = vpop.f32.mrb[0].mxu0
    %1973 = vmatprep.mubr.f32.mxu0 0.0
    %1974 = vmatmul.mubr.f32.gmra.mrb[0].mxu0 %v1479
    %v1975 = vpop.f32.mrb[0].mxu0
    %v1976 = vadd.f32 %v1409, %v1975
    %v1977 = vpop.f32.mrb[0].mxu0
    %1978 = vmatprep.mubr.f32.mxu0 0.0
    %1979 = vmatmul.mubr.f32.gmra.mrb[0].mxu0 %v1482
    %v1980 = vpop.f32.mrb[0].mxu0
    %v1981 = vadd.f32 %v1409, %v1980
    %v1982 = vpop.f32.mrb[0].mxu0
    %1983 = vmatprep.mubr.f32.mxu0 0.0
    %1984 = vmatmul.mubr.f32.gmra.mrb[0].mxu0 %v1485
    %v1985 = vpop.f32.mrb[0].mxu0
    %v1986 = vadd.f32 %v1409, %v1985
    %v1987 = vpop.f32.mrb[0].mxu0
    %1988 = vmatprep.mubr.f32.mxu0 0.0
    %1989 = vmatmul.mubr.f32.gmra.mrb[0].mxu0 %v1488
    %v1990 = vpop.f32.mrb[0].mxu0
    %v1991 = vadd.f32 %v1409, %v1990
    %v1992 = vpop.f32.mrb[0].mxu0
    %1993 = vmatprep.mubr.f32.mxu0 0.0
    %1994 = vmatmul.mubr.f32.gmra.mrb[0].mxu0 %v1491
    %v1995 = vpop.f32.mrb[0].mxu0
    %v1996 = vadd.f32 %v1409, %v1995
    %v1997 = vpop.f32.mrb[0].mxu0
    %1998 = vmatprep.mubr.f32.mxu0 0.0
    %1999 = vmatmul.mubr.f32.gmra.mrb[0].mxu0 %v1494
    %v2000 = vpop.f32.mrb[0].mxu0
    %v2001 = vadd.f32 %v1409, %v2000
    %v2002 = vpop.f32.mrb[0].mxu0
    %2003 = vmatprep.mubr.f32.mxu0 0.0
    %2004 = vmatmul.mubr.f32.gmra.mrb[0].mxu0 %v1497
    %v2005 = vpop.f32.mrb[0].mxu0
    %v2006 = vadd.f32 %v1409, %v2005
    %v2007 = vpop.f32.mrb[0].mxu0
    %2008 = vmatprep.mubr.f32.mxu0 0.0
    %2009 = vmatmul.mubr.f32.gmra.mrb[0].mxu0 %v1500
    %v2010 = vpop.f32.mrb[0].mxu0
    %v2011 = vadd.f32 %v1409, %v2010
    %v2012 = vpop.f32.mrb[0].mxu0
    %2013 = vmatprep.mubr.f32.mxu0 0.0
    %2014 = vmatmul.mubr.f32.gmra.mrb[0].mxu0 %v1503
    %v2015 = vpop.f32.mrb[0].mxu0
    %v2016 = vadd.f32 %v1409, %v2015
    %v2017 = vpop.f32.mrb[0].mxu0
    %2018 = vmatprep.mubr.f32.mxu0 0.0
    %2019 = vmatmul.mubr.f32.gmra.mrb[0].mxu0 %v1506
    %v2020 = vpop.f32.mrb[0].mxu0
    %v2021 = vadd.f32 %v1409, %v2020
    %v2022 = vpop.f32.mrb[0].mxu0
    %2023 = vmatprep.mubr.f32.mxu0 0.0
    %2024 = vmatmul.mubr.f32.gmra.mrb[0].mxu0 %v1509
    %v2025 = vpop.f32.mrb[0].mxu0
    %v2026 = vadd.f32 %v1409, %v2025
    %v2027 = vpop.f32.mrb[0].mxu0
    %2028 = vmatprep.mubr.f32.mxu0 0.0
    %2029 = vmatmul.mubr.f32.gmra.mrb[0].mxu0 %v1512
    %v2030 = vpop.f32.mrb[0].mxu0
    %v2031 = vadd.f32 %v1409, %v2030
    %v2032 = vpop.f32.mrb[0].mxu0
    %2033 = vmatprep.mubr.f32.mxu0 0.0
    %2034 = vmatmul.mubr.f32.gmra.mrb[0].mxu0 %v1515
    %v2035 = vpop.f32.mrb[0].mxu0
    %v2036 = vadd.f32 %v1409, %v2035
    %v2037 = vpop.f32.mrb[0].mxu0
    %2038 = vmatprep.mubr.f32.mxu0 0.0
    %2039 = vmatmul.mubr.f32.gmra.mrb[0].mxu0 %v1518
    %v2040 = vpop.f32.mrb[0].mxu0
    %v2041 = vadd.f32 %v1409, %v2040
    %v2042 = vpop.f32.mrb[0].mxu0
    %2043 = vmatprep.mubr.f32.mxu0 0.0
    %2044 = vmatmul.mubr.f32.gmra.mrb[0].mxu0 %v1521
    %v2045 = vpop.f32.mrb[0].mxu0
    %v2046 = vadd.f32 %v1409, %v2045
    %v2047 = vpop.f32.mrb[0].mxu0
    %2048 = vmatprep.mubr.f32.mxu0 0.0
    %2049 = vmatmul.mubr.f32.gmra.mrb[0].mxu0 %v1524
    %v2050 = vpop.f32.mrb[0].mxu0
    %v2051 = vadd.f32 %v1409, %v2050
    %v2052 = vpop.f32.mrb[0].mxu0
    %2053 = vmatprep.mubr.f32.mxu0 0.0
    %2054 = vmatmul.mubr.f32.gmra.mrb[0].mxu0 %v1527
    %v2055 = vpop.f32.mrb[0].mxu0
    %v2056 = vadd.f32 %v1409, %v2055
    %v2057 = vpop.f32.mrb[0].mxu0
    %2058 = vmatprep.mubr.f32.mxu0 0.0
    %2059 = vmatmul.mubr.f32.gmra.mrb[0].mxu0 %v1530
    %v2060 = vpop.f32.mrb[0].mxu0
    %v2061 = vadd.f32 %v1409, %v2060
    %v2062 = vpop.f32.mrb[0].mxu0
    %2063 = vmatprep.mubr.f32.mxu0 0.0
    %2064 = vmatmul.mubr.f32.gmra.mrb[0].mxu0 %v1533
    %v2065 = vpop.f32.mrb[0].mxu0
    %v2066 = vadd.f32 %v1409, %v2065
    %v2067 = vpop.f32.mrb[0].mxu0
    %2068 = vmatprep.mubr.f32.mxu0 0.0
    %2069 = vmatmul.mubr.f32.gmra.mrb[0].mxu0 %v1536
    %v2070 = vpop.f32.mrb[0].mxu0
    %v2071 = vadd.f32 %v1409, %v2070
    %v2072 = vpop.f32.mrb[0].mxu0
    %2073 = vmatprep.mubr.f32.mxu0 0.0
    %2074 = vmatmul.mubr.f32.gmra.mrb[0].mxu0 %v1539
    %v2075 = vpop.f32.mrb[0].mxu0
    %v2076 = vadd.f32 %v1409, %v2075
    %v2077 = vpop.f32.mrb[0].mxu0
    %2078 = vmatprep.mubr.f32.mxu0 0.0
    %2079 = vmatmul.mubr.f32.gmra.mrb[0].mxu0 %v1542
    %v2080 = vpop.f32.mrb[0].mxu0
    %v2081 = vadd.f32 %v1409, %v2080
    %v2082 = vpop.f32.mrb[0].mxu0
    %2083 = vmatprep.mubr.f32.mxu0 0.0
    %2084 = vmatmul.mubr.f32.gmra.mrb[0].mxu0 %v1545
    %v2085 = vpop.f32.mrb[0].mxu0
    %v2086 = vadd.f32 %v1409, %v2085
    %v2087 = vpop.f32.mrb[0].mxu0
    %2088 = vmatprep.mubr.f32.mxu0 0.0
    %2089 = vmatmul.mubr.f32.gmra.mrb[0].mxu0 %v1548
    %v2090 = vpop.f32.mrb[0].mxu0
    %v2091 = vadd.f32 %v1409, %v2090
    %v2092 = vpop.f32.mrb[0].mxu0
    %2093 = vmatprep.mubr.f32.mxu0 0.0
    %2094 = vmatmul.mubr.f32.gmra.mrb[0].mxu0 %v1551
    %v2095 = vpop.f32.mrb[0].mxu0
    %v2096 = vadd.f32 %v1409, %v2095
    %v2097 = vpop.f32.mrb[0].mxu0
    %2098 = vmatprep.mubr.f32.mxu0 0.0
    %2099 = vmatmul.mubr.f32.gmra.mrb[0].mxu0 %v1554
    %v2100 = vpop.f32.mrb[0].mxu0
    %v2101 = vadd.f32 %v1409, %v2100
    %v2102 = vpop.f32.mrb[0].mxu0
    %2103 = vmatprep.mubr.f32.mxu0 0.0
    %2104 = vmatmul.mubr.f32.gmra.mrb[0].mxu0 %v1557
    %v2105 = vpop.f32.mrb[0].mxu0
    %v2106 = vadd.f32 %v1409, %v2105
    %v2107 = vpop.f32.mrb[0].mxu0
    %2108 = vmatprep.mubr.f32.mxu0 0.0
    %2109 = vmatmul.mubr.f32.gmra.mrb[0].mxu0 %v1560
    %v2110 = vpop.f32.mrb[0].mxu0
    %v2111 = vadd.f32 %v1409, %v2110
    %v2112 = vpop.f32.mrb[0].mxu0
    %2113 = vmatprep.mubr.f32.mxu0 0.0
    %2114 = vmatmul.mubr.f32.gmra.mrb[0].mxu0 %v1563
    %v2115 = vpop.f32.mrb[0].mxu0
    %v2116 = vadd.f32 %v1409, %v2115
    %v2117 = vpop.f32.mrb[0].mxu0
    %2118 = vmatprep.mubr.f32.mxu0 0.0
    %2119 = vmatmul.mubr.f32.gmra.mrb[0].mxu0 %v1566
    %v2120 = vpop.f32.mrb[0].mxu0
    %v2121 = vadd.f32 %v1409, %v2120
    %v2122 = vpop.f32.mrb[0].mxu0
    %2123 = vmatprep.mubr.f32.mxu0 0.0
    %2124 = vmatmul.mubr.f32.gmra.mrb[0].mxu0 %v1569
    %v2125 = vpop.f32.mrb[0].mxu0
    %v2126 = vadd.f32 %v1409, %v2125
    %v2127 = vpop.f32.mrb[0].mxu0
    %2128 = vmatprep.mubr.f32.mxu0 0.0
    %2129 = vmatmul.mubr.f32.gmra.mrb[0].mxu0 %v1572
    %v2130 = vpop.f32.mrb[0].mxu0
    %v2131 = vadd.f32 %v1409, %v2130
    %v2132 = vpop.f32.mrb[0].mxu0
    %2133 = vmatprep.mubr.f32.mxu0 0.0
    %2134 = vmatmul.mubr.f32.gmra.mrb[0].mxu0 %v1575
    %v2135 = vpop.f32.mrb[0].mxu0
    %v2136 = vadd.f32 %v1409, %v2135
    %v2137 = vpop.f32.mrb[0].mxu0
    %2138 = vmatprep.mubr.f32.mxu0 0.0
    %2139 = vmatmul.mubr.f32.gmra.mrb[0].mxu0 %v1578
    %v2140 = vpop.f32.mrb[0].mxu0
    %v2141 = vadd.f32 %v1409, %v2140
    %v2142 = vpop.f32.mrb[0].mxu0
    %2143 = vmatprep.mubr.f32.mxu0 0.0
    %2144 = vmatmul.mubr.f32.gmra.mrb[0].mxu0 %v1581
    %v2145 = vpop.f32.mrb[0].mxu0
    %v2146 = vadd.f32 %v1409, %v2145
    %v2147 = vpop.f32.mrb[0].mxu0
    %2148 = vmatprep.mubr.f32.mxu0 0.0
    %2149 = vmatmul.mubr.f32.gmra.mrb[0].mxu0 %v1584
    %v2150 = vpop.f32.mrb[0].mxu0
    %v2151 = vadd.f32 %v1409, %v2150
    %v2152 = vpop.f32.mrb[0].mxu0
    %2153 = vmatprep.mubr.f32.mxu0 0.0
    %2154 = vmatmul.mubr.f32.gmra.mrb[0].mxu0 %v1587
    %v2155 = vpop.f32.mrb[0].mxu0
    %v2156 = vadd.f32 %v1409, %v2155
    %v2157 = vpop.f32.mrb[0].mxu0
    %2158 = vmatprep.mubr.f32.mxu0 0.0
    %2159 = vmatmul.mubr.f32.gmra.mrb[0].mxu0 %v1590
    %v2160 = vpop.f32.mrb[0].mxu0
    %v2161 = vadd.f32 %v1409, %v2160
    %v2162 = vpop.f32.mrb[0].mxu0
    %2163 = vmatprep.mubr.f32.mxu0 0.0
    %2164 = vmatmul.mubr.f32.gmra.mrb[0].mxu0 %v1593
    %v2165 = vpop.f32.mrb[0].mxu0
    %v2166 = vadd.f32 %v1409, %v2165
    %v2167 = vpop.f32.mrb[0].mxu0
    %2168 = vmatprep.mubr.f32.mxu0 0.0
    %2169 = vmatmul.mubr.f32.gmra.mrb[0].mxu0 %v1596
    %v2170 = vpop.f32.mrb[0].mxu0
    %v2171 = vadd.f32 %v1409, %v2170
    %v2172 = vpop.f32.mrb[0].mxu0
    %2173 = vmatprep.mubr.f32.mxu0 0.0
    %2174 = vmatmul.mubr.f32.gmra.mrb[0].mxu0 %v1599
    %v2175 = vpop.f32.mrb[0].mxu0
    %v2176 = vadd.f32 %v1409, %v2175
    %v2177 = vpop.f32.mrb[0].mxu0
    %2178 = vmatprep.mubr.f32.mxu0 0.0
    %2179 = vmatmul.mubr.f32.gmra.mrb[0].mxu0 %v1602
    %v2180 = vpop.f32.mrb[0].mxu0
    %v2181 = vadd.f32 %v1409, %v2180
    %v2182 = vpop.f32.mrb[0].mxu0
    %2183 = vmatprep.mubr.f32.mxu0 0.0
    %2184 = vmatmul.mubr.f32.gmra.mrb[0].mxu0 %v1605
    %v2185 = vpop.f32.mrb[0].mxu0
    %v2186 = vadd.f32 %v1409, %v2185
    %v2187 = vpop.f32.mrb[0].mxu0
    %2188 = vmatprep.mubr.f32.mxu0 0.0
    %2189 = vmatmul.mubr.f32.gmra.mrb[0].mxu0 %v1608
    %v2190 = vpop.f32.mrb[0].mxu0
    %v2191 = vadd.f32 %v1409, %v2190
    %v2192 = vpop.f32.mrb[0].mxu0
    %2193 = vmatprep.mubr.f32.mxu0 0.0
    %2194 = vmatmul.mubr.f32.gmra.mrb[0].mxu0 %v1611
    %v2195 = vpop.f32.mrb[0].mxu0
    %v2196 = vadd.f32 %v1409, %v2195
    %v2197 = vpop.f32.mrb[0].mxu0
    %2198 = vmatprep.mubr.f32.mxu0 0.0
    %2199 = vmatmul.mubr.f32.gmra.mrb[0].mxu0 %v1614
    %v2200 = vpop.f32.mrb[0].mxu0
    %v2201 = vadd.f32 %v1409, %v2200
    %v2202 = vpop.f32.mrb[0].mxu0
    %2203 = vmatprep.mubr.f32.mxu0 0.0
    %2204 = vmatmul.mubr.f32.gmra.mrb[0].mxu0 %v1617
    %v2205 = vpop.f32.mrb[0].mxu0
    %v2206 = vadd.f32 %v1409, %v2205
    %v2207 = vpop.f32.mrb[0].mxu0
    %2208 = vmatprep.mubr.f32.mxu0 0.0
    %2209 = vmatmul.mubr.f32.gmra.mrb[0].mxu0 %v1620
    %v2210 = vpop.f32.mrb[0].mxu0
    %v2211 = vadd.f32 %v1409, %v2210
    %v2212 = vpop.f32.mrb[0].mxu0
    %2213 = vmatprep.mubr.f32.mxu0 0.0
    %2214 = vmatmul.mubr.f32.gmra.mrb[0].mxu0 %v1623
    %v2215 = vpop.f32.mrb[0].mxu0
    %v2216 = vadd.f32 %v1409, %v2215
    %v2217 = vpop.f32.mrb[0].mxu0
    %2218 = vmatprep.mubr.f32.mxu0 0.0
    %2219 = vmatmul.mubr.f32.gmra.mrb[0].mxu0 %v1626
    %v2220 = vpop.f32.mrb[0].mxu0
    %v2221 = vadd.f32 %v1409, %v2220
    %v2222 = vpop.f32.mrb[0].mxu0
    %2223 = vmatprep.mubr.f32.mxu0 0.0
    %2224 = vmatmul.mubr.f32.gmra.mrb[0].mxu0 %v1629
    %v2225 = vpop.f32.mrb[0].mxu0
    %v2226 = vadd.f32 %v1409, %v2225
    %v2227 = vpop.f32.mrb[0].mxu0
    %2228 = vmatprep.mubr.f32.mxu0 0.0
    %2229 = vmatmul.mubr.f32.gmra.mrb[0].mxu0 %v1632
    %v2230 = vpop.f32.mrb[0].mxu0
    %v2231 = vadd.f32 %v1409, %v2230
    %v2232 = vpop.f32.mrb[0].mxu0
    %2233 = vmatprep.mubr.f32.mxu0 0.0
    %2234 = vmatmul.mubr.f32.gmra.mrb[0].mxu0 %v1635
    %v2235 = vpop.f32.mrb[0].mxu0
    %v2236 = vadd.f32 %v1409, %v2235
    %v2237 = vpop.f32.mrb[0].mxu0
    %2238 = vmatprep.mubr.f32.mxu0 0.0
    %2239 = vmatmul.mubr.f32.gmra.mrb[0].mxu0 %v1638
    %v2240 = vpop.f32.mrb[0].mxu0
    %v2241 = vadd.f32 %v1409, %v2240
    %v2242 = vpop.f32.mrb[0].mxu0
    %2243 = vmatprep.mubr.f32.mxu0 0.0
    %2244 = vmatmul.mubr.f32.gmra.mrb[0].mxu0 %v1641
    %v2245 = vpop.f32.mrb[0].mxu0
    %v2246 = vadd.f32 %v1409, %v2245
    %v2247 = vpop.f32.mrb[0].mxu0
    %2248 = vmatprep.mubr.f32.mxu0 0.0
    %2249 = vmatmul.mubr.f32.gmra.mrb[0].mxu0 %v1644
    %v2250 = vpop.f32.mrb[0].mxu0
    %v2251 = vadd.f32 %v1409, %v2250
    %v2252 = vpop.f32.mrb[0].mxu0
    %2253 = vmatprep.mubr.f32.mxu0 0.0
    %2254 = vmatmul.mubr.f32.gmra.mrb[0].mxu0 %v1647
    %v2255 = vpop.f32.mrb[0].mxu0
    %v2256 = vadd.f32 %v1409, %v2255
    %v2257 = vpop.f32.mrb[0].mxu0
    %2258 = vmatprep.mubr.f32.mxu0 0.0
    %2259 = vmatmul.mubr.f32.gmra.mrb[0].mxu0 %v1650
    %v2260 = vpop.f32.mrb[0].mxu0
    %v2261 = vadd.f32 %v1409, %v2260
    %v2262 = vpop.f32.mrb[0].mxu0
    %2263 = vmatprep.mubr.f32.mxu0 0.0
    %2264 = vmatmul.mubr.f32.gmra.mrb[0].mxu0 %v1653
    %v2265 = vpop.f32.mrb[0].mxu0
    %v2266 = vadd.f32 %v1409, %v2265
    %v2267 = vpop.f32.mrb[0].mxu0
    %2268 = vmatprep.mubr.f32.mxu0 0.0
    %2269 = vmatmul.mubr.f32.gmra.mrb[0].mxu0 %v1656
    %v2270 = vpop.f32.mrb[0].mxu0
    %v2271 = vadd.f32 %v1409, %v2270
    %v2272 = vpop.f32.mrb[0].mxu0
    %2273 = vmatprep.mubr.f32.mxu0 0.0
    %2274 = vmatmul.mubr.f32.gmra.mrb[0].mxu0 %v1659
    %v2275 = vpop.f32.mrb[0].mxu0
    %v2276 = vadd.f32 %v1409, %v2275
    %v2277 = vpop.f32.mrb[0].mxu0
    %2278 = vmatprep.mubr.f32.mxu0 0.0
    %2279 = vmatmul.mubr.f32.gmra.mrb[0].mxu0 %v1662
    %v2280 = vpop.f32.mrb[0].mxu0
    %v2281 = vadd.f32 %v1409, %v2280
    %v2282 = vpop.f32.mrb[0].mxu0
    %2283 = vmatprep.mubr.f32.mxu0 0.0
    %2284 = vmatmul.mubr.f32.gmra.mrb[0].mxu0 %v1665
    %v2285 = vpop.f32.mrb[0].mxu0
    %v2286 = vadd.f32 %v1409, %v2285
    %v2287 = vpop.f32.mrb[0].mxu0
    %2288 = vmatprep.mubr.f32.mxu0 0.0
    %2289 = vmatmul.mubr.f32.gmra.mrb[0].mxu0 %v1668
    %v2290 = vpop.f32.mrb[0].mxu0
    %v2291 = vadd.f32 %v1409, %v2290
    %v2292 = vpop.f32.mrb[0].mxu0
    %2293 = vmatprep.mubr.f32.mxu0 0.0
    %2294 = vmatmul.mubr.f32.gmra.mrb[0].mxu0 %v1671
    %v2295 = vpop.f32.mrb[0].mxu0
    %v2296 = vadd.f32 %v1409, %v2295
    %v2297 = vpop.f32.mrb[0].mxu0
    %2298 = vmatprep.mubr.f32.mxu0 0.0
    %2299 = vmatmul.mubr.f32.gmra.mrb[0].mxu0 %v1674
    %v2300 = vpop.f32.mrb[0].mxu0
    %v2301 = vadd.f32 %v1409, %v2300
    %v2302 = vpop.f32.mrb[0].mxu0
    %2303 = vmatprep.mubr.f32.mxu0 0.0
    %2304 = vmatmul.mubr.f32.gmra.mrb[0].mxu0 %v1677
    %v2305 = vpop.f32.mrb[0].mxu0
    %v2306 = vadd.f32 %v1409, %v2305
    %v2307 = vpop.f32.mrb[0].mxu0
    %2308 = vmatprep.mubr.f32.mxu0 0.0
    %2309 = vmatmul.mubr.f32.gmra.mrb[0].mxu0 %v1680
    %v2310 = vpop.f32.mrb[0].mxu0
    %v2311 = vadd.f32 %v1409, %v2310
    %v2312 = vpop.f32.mrb[0].mxu0
    %2313 = vmatprep.mubr.f32.mxu0 0.0
    %2314 = vmatmul.mubr.f32.gmra.mrb[0].mxu0 %v1683
    %v2315 = vpop.f32.mrb[0].mxu0
    %v2316 = vadd.f32 %v1409, %v2315
    %v2317 = vpop.f32.mrb[0].mxu0
    %2318 = vmatprep.mubr.f32.mxu0 0.0
    %2319 = vmatmul.mubr.f32.gmra.mrb[0].mxu0 %v1686
    %v2320 = vpop.f32.mrb[0].mxu0
    %v2321 = vadd.f32 %v1409, %v2320
    %v2322 = vpop.f32.mrb[0].mxu0
    %2323 = vmatprep.mubr.f32.mxu0 0.0
    %2324 = vmatmul.mubr.f32.gmra.mrb[0].mxu0 %v1689
    %v2325 = vpop.f32.mrb[0].mxu0
    %v2326 = vadd.f32 %v1409, %v2325
    %v2327 = vpop.f32.mrb[0].mxu0
    %2328 = vmatprep.mubr.f32.mxu0 0.0
    %2329 = vmatmul.mubr.f32.gmra.mrb[0].mxu0 %v1692
    %v2330 = vpop.f32.mrb[0].mxu0
    %v2331 = vadd.f32 %v1409, %v2330
    %v2332 = vpop.f32.mrb[0].mxu0
    %2333 = vmatprep.mubr.f32.mxu0 0.0
    %2334 = vmatmul.mubr.f32.gmra.mrb[0].mxu0 %v1695
    %v2335 = vpop.f32.mrb[0].mxu0
    %v2336 = vadd.f32 %v1409, %v2335
    %v2337 = vpop.f32.mrb[0].mxu0
    %2338 = vmatprep.mubr.f32.mxu0 0.0
    %2339 = vmatmul.mubr.f32.gmra.mrb[0].mxu0 %v1698
    %v2340 = vpop.f32.mrb[0].mxu0
    %v2341 = vadd.f32 %v1409, %v2340
    %v2342 = vpop.f32.mrb[0].mxu0
    %2343 = vmatprep.mubr.f32.mxu0 0.0
    %2344 = vmatmul.mubr.f32.gmra.mrb[0].mxu0 %v1701
    %v2345 = vpop.f32.mrb[0].mxu0
    %v2346 = vadd.f32 %v1409, %v2345
    %v2347 = vpop.f32.mrb[0].mxu0
    %2348 = vmatprep.mubr.f32.mxu0 0.0
    %2349 = vmatmul.mubr.f32.gmra.mrb[0].mxu0 %v1704
    %v2350 = vpop.f32.mrb[0].mxu0
    %v2351 = vadd.f32 %v1409, %v2350
    %v2352 = vpop.f32.mrb[0].mxu0
    %2353 = vmatprep.mubr.f32.mxu0 0.0
    %2354 = vmatmul.mubr.f32.gmra.mrb[0].mxu0 %v1707
    %v2355 = vpop.f32.mrb[0].mxu0
    %v2356 = vadd.f32 %v1409, %v2355
    %v2357 = vpop.f32.mrb[0].mxu0
    %2358 = vmatprep.mubr.f32.mxu0 0.0
    %2359 = vmatmul.mubr.f32.gmra.mrb[0].mxu0 %v1710
    %v2360 = vpop.f32.mrb[0].mxu0
    %v2361 = vadd.f32 %v1409, %v2360
    %v2362 = vpop.f32.mrb[0].mxu0
    %2363 = vmatprep.mubr.f32.mxu0 0.0
    %2364 = vmatmul.mubr.f32.gmra.mrb[0].mxu0 %v1713
    %v2365 = vpop.f32.mrb[0].mxu0
    %v2366 = vadd.f32 %v1409, %v2365
    %v2367 = vpop.f32.mrb[0].mxu0
    %2368 = vmatprep.mubr.f32.mxu0 0.0
    %2369 = vmatmul.mubr.f32.gmra.mrb[0].mxu0 %v1716
    %v2370 = vpop.f32.mrb[0].mxu0
    %v2371 = vadd.f32 %v1409, %v2370
    %v2372 = vpop.f32.mrb[0].mxu0
    %2373 = vmatprep.mubr.f32.mxu0 0.0
    %2374 = vmatmul.mubr.f32.gmra.mrb[0].mxu0 %v1719
    %v2375 = vpop.f32.mrb[0].mxu0
    %v2376 = vadd.f32 %v1409, %v2375
    %v2377 = vpop.f32.mrb[0].mxu0
    %2378 = vmatprep.mubr.f32.mxu0 0.0
    %2379 = vmatmul.mubr.f32.gmra.mrb[0].mxu0 %v1722
    %v2380 = vpop.f32.mrb[0].mxu0
    %v2381 = vadd.f32 %v1409, %v2380
    %v2382 = vpop.f32.mrb[0].mxu0
    %2383 = vmatprep.mubr.f32.mxu0 0.0
    %2384 = vmatmul.mubr.f32.gmra.mrb[0].mxu0 %v1725
    %v2385 = vpop.f32.mrb[0].mxu0
    %v2386 = vadd.f32 %v1409, %v2385
    %v2387 = vpop.f32.mrb[0].mxu0
    %2388 = vmatprep.mubr.f32.mxu0 0.0
    %2389 = vmatmul.mubr.f32.gmra.mrb[0].mxu0 %v1728
    %v2390 = vpop.f32.mrb[0].mxu0
    %v2391 = vadd.f32 %v1409, %v2390
    %v2392 = vpop.f32.mrb[0].mxu0
    %2393 = vmatprep.mubr.f32.mxu0 0.0
    %2394 = vmatmul.mubr.f32.gmra.mrb[0].mxu0 %v1731
    %v2395 = vpop.f32.mrb[0].mxu0
    %v2396 = vadd.f32 %v1409, %v2395
    %v2397 = vpop.f32.mrb[0].mxu0
    %2398 = vmatprep.mubr.f32.mxu0 0.0
    %2399 = vmatmul.mubr.f32.gmra.mrb[0].mxu0 %v1734
    %v2400 = vpop.f32.mrb[0].mxu0
    %v2401 = vadd.f32 %v1409, %v2400
    %v2402 = vpop.f32.mrb[0].mxu0
    %2403 = vmatprep.mubr.f32.mxu0 0.0
    %2404 = vmatmul.mubr.f32.gmra.mrb[0].mxu0 %v1737
    %v2405 = vpop.f32.mrb[0].mxu0
    %v2406 = vadd.f32 %v1409, %v2405
    %v2407 = vpop.f32.mrb[0].mxu0
    %2408 = vmatprep.mubr.f32.mxu0 0.0
    %2409 = vmatmul.mubr.f32.gmra.mrb[0].mxu0 %v1740
    %v2410 = vpop.f32.mrb[0].mxu0
    %v2411 = vadd.f32 %v1409, %v2410
    %v2412 = vpop.f32.mrb[0].mxu0
    %2413 = vmatprep.mubr.f32.mxu0 0.0
    %2414 = vmatmul.mubr.f32.gmra.mrb[0].mxu0 %v1743
    %v2415 = vpop.f32.mrb[0].mxu0
    %v2416 = vadd.f32 %v1409, %v2415
    %v2417 = vpop.f32.mrb[0].mxu0
    %2418 = vmatprep.mubr.f32.mxu0 0.0
    %2419 = vmatmul.mubr.f32.gmra.mrb[0].mxu0 %v1746
    %v2420 = vpop.f32.mrb[0].mxu0
    %v2421 = vadd.f32 %v1409, %v2420
    %v2422 = vpop.f32.mrb[0].mxu0
    %2423 = vmatprep.mubr.f32.mxu0 0.0
    %2424 = vmatmul.mubr.f32.gmra.mrb[0].mxu0 %v1749
    %v2425 = vpop.f32.mrb[0].mxu0
    %v2426 = vadd.f32 %v1409, %v2425
    %v2427 = vpop.f32.mrb[0].mxu0
    %2428 = vmatprep.mubr.f32.mxu0 0.0
    %2429 = vmatmul.mubr.f32.gmra.mrb[0].mxu0 %v1752
    %v2430 = vpop.f32.mrb[0].mxu0
    %v2431 = vadd.f32 %v1409, %v2430
    %v2432 = vpop.f32.mrb[0].mxu0
    %2433 = vmatprep.mubr.f32.mxu0 0.0
    %2434 = vmatmul.mubr.f32.gmra.mrb[0].mxu0 %v1755
    %v2435 = vpop.f32.mrb[0].mxu0
    %v2436 = vadd.f32 %v1409, %v2435
    %v2437 = vpop.f32.mrb[0].mxu0
    %2438 = vmatprep.mubr.f32.mxu0 0.0
    %2439 = vmatmul.mubr.f32.gmra.mrb[0].mxu0 %v1758
    %v2440 = vpop.f32.mrb[0].mxu0
    %v2441 = vadd.f32 %v1409, %v2440
    %v2442 = vpop.f32.mrb[0].mxu0
    %2443 = vmatprep.mubr.f32.mxu0 0.0
    %2444 = vmatmul.mubr.f32.gmra.mrb[0].mxu0 %v1761
    %v2445 = vpop.f32.mrb[0].mxu0
    %v2446 = vadd.f32 %v1409, %v2445
    %v2447 = vpop.f32.mrb[0].mxu0
    %2448 = vmatprep.mubr.f32.mxu0 0.0
    %2449 = vmatmul.mubr.f32.gmra.mrb[0].mxu0 %v1764
    %v2450 = vpop.f32.mrb[0].mxu0
    %v2451 = vadd.f32 %v1409, %v2450
    %v2452 = vpop.f32.mrb[0].mxu0
    %2453 = vmatprep.mubr.f32.mxu0 0.0
    %2454 = vmatmul.mubr.f32.gmra.mrb[0].mxu0 %v1767
    %v2455 = vpop.f32.mrb[0].mxu0
    %v2456 = vadd.f32 %v1409, %v2455
    %v2457 = vpop.f32.mrb[0].mxu0
    %2458 = vmatprep.mubr.f32.mxu0 0.0
    %2459 = vmatmul.mubr.f32.gmra.mrb[0].mxu0 %v1770
    %v2460 = vpop.f32.mrb[0].mxu0
    %v2461 = vadd.f32 %v1409, %v2460
    %v2462 = vpop.f32.mrb[0].mxu0
    %2463 = vmatprep.mubr.f32.mxu0 0.0
    %2464 = vmatmul.mubr.f32.gmra.mrb[0].mxu0 %v1773
    %v2465 = vpop.f32.mrb[0].mxu0
    %v2466 = vadd.f32 %v1409, %v2465
    %v2467 = vpop.f32.mrb[0].mxu0
    %2468 = vmatprep.mubr.f32.mxu0 0.0
    %2469 = vmatmul.mubr.f32.gmra.mrb[0].mxu0 %v1776
    %v2470 = vpop.f32.mrb[0].mxu0
    %v2471 = vadd.f32 %v1409, %v2470
    %v2472 = vpop.f32.mrb[0].mxu0
    %2473 = vmatprep.mubr.f32.mxu0 0.0
    %2474 = vmatmul.mubr.f32.gmra.mrb[0].mxu0 %v1779
    %v2475 = vpop.f32.mrb[0].mxu0
    %v2476 = vadd.f32 %v1409, %v2475
    %v2477 = vpop.f32.mrb[0].mxu0
    %2478 = vmatprep.mubr.f32.mxu0 0.0
    %2479 = vmatmul.mubr.f32.gmra.mrb[0].mxu0 %v1782
    %v2480 = vpop.f32.mrb[0].mxu0
    %v2481 = vadd.f32 %v1409, %v2480
    %v2482 = vpop.f32.mrb[0].mxu0
    %2483 = vmatprep.mubr.f32.mxu0 0.0
    %2484 = vmatmul.mubr.f32.gmra.mrb[0].mxu0 %v1785
    %v2485 = vpop.f32.mrb[0].mxu0
    %v2486 = vadd.f32 %v1409, %v2485
    %v2487 = vpop.f32.mrb[0].mxu0
    %2488 = vmatprep.mubr.f32.mxu0 0.0
    %2489 = vmatmul.mubr.f32.gmra.mrb[0].mxu0 %v1788
    %v2490 = vpop.f32.mrb[0].mxu0
    %v2491 = vadd.f32 %v1409, %v2490
    %v2492 = vpop.f32.mrb[0].mxu0
    %2493 = vmatprep.mubr.f32.mxu0 0.0
    %2494 = vmatmul.mubr.f32.gmra.mrb[0].mxu0 %v1791
    %v2495 = vpop.f32.mrb[0].mxu0
    %v2496 = vadd.f32 %v1409, %v2495
    %v2497 = vpop.f32.mrb[0].mxu0
    %2498 = vmatprep.mubr.f32.mxu0 0.0
    %2499 = vmatmul.mubr.f32.gmra.mrb[0].mxu0 %v1794
    %v2500 = vpop.f32.mrb[0].mxu0
    %v2501 = vadd.f32 %v1409, %v2500
    %v2502 = vpop.f32.mrb[0].mxu0
    %2503 = vdwg.mxu0
    %vm2504 = vcmask 64512
    %2505 = vst.msk [vmem:[#allocation2] sm:$0xff] %vm2504, %v1866
    %2506 = vst.msk [vmem:[#allocation2 + $0x8] sm:$0xff] %vm2504, %v1871
    %2507 = vst.msk [vmem:[#allocation2 + $0x10] sm:$0xff] %vm2504, %v1876
    %2508 = vst.msk [vmem:[#allocation2 + $0x18] sm:$0xff] %vm2504, %v1881
    %2509 = vst.msk [vmem:[#allocation2 + $0x20] sm:$0xff] %vm2504, %v1886
    %2510 = vst.msk [vmem:[#allocation2 + $0x28] sm:$0xff] %vm2504, %v1891
    %2511 = vst.msk [vmem:[#allocation2 + $0x30] sm:$0xff] %vm2504, %v1896
    %2512 = vst.msk [vmem:[#allocation2 + $0x38] sm:$0xff] %vm2504, %v1901
    %2513 = vst.msk [vmem:[#allocation2 + $0x40] sm:$0xff] %vm2504, %v1906
    %2514 = vst.msk [vmem:[#allocation2 + $0x48] sm:$0xff] %vm2504, %v1911
    %2515 = vst.msk [vmem:[#allocation2 + $0x50] sm:$0xff] %vm2504, %v1916
    %2516 = vst.msk [vmem:[#allocation2 + $0x58] sm:$0xff] %vm2504, %v1921
    %2517 = vst.msk [vmem:[#allocation2 + $0x60] sm:$0xff] %vm2504, %v1926
    %2518 = vst.msk [vmem:[#allocation2 + $0x68] sm:$0xff] %vm2504, %v1931
    %2519 = vst.msk [vmem:[#allocation2 + $0x70] sm:$0xff] %vm2504, %v1936
    %2520 = vst.msk [vmem:[#allocation2 + $0x78] sm:$0xff] %vm2504, %v1941
    %2521 = vst.msk [vmem:[#allocation2 + $0x80] sm:$0xff] %vm2504, %v1946
    %2522 = vst.msk [vmem:[#allocation2 + $0x88] sm:$0xff] %vm2504, %v1951
    %2523 = vst.msk [vmem:[#allocation2 + $0x90] sm:$0xff] %vm2504, %v1956
    %2524 = vst.msk [vmem:[#allocation2 + $0x98] sm:$0xff] %vm2504, %v1961
    %2525 = vst.msk [vmem:[#allocation2 + $0xa0] sm:$0xff] %vm2504, %v1966
    %2526 = vst.msk [vmem:[#allocation2 + $0xa8] sm:$0xff] %vm2504, %v1971
    %2527 = vst.msk [vmem:[#allocation2 + $0xb0] sm:$0xff] %vm2504, %v1976
    %2528 = vst.msk [vmem:[#allocation2 + $0xb8] sm:$0xff] %vm2504, %v1981
    %2529 = vst.msk [vmem:[#allocation2 + $0xc0] sm:$0xff] %vm2504, %v1986
    %2530 = vst.msk [vmem:[#allocation2 + $0xc8] sm:$0xff] %vm2504, %v1991
    %2531 = vst.msk [vmem:[#allocation2 + $0xd0] sm:$0xff] %vm2504, %v1996
    %2532 = vst.msk [vmem:[#allocation2 + $0xd8] sm:$0xff] %vm2504, %v2001
    %2533 = vst.msk [vmem:[#allocation2 + $0xe0] sm:$0xff] %vm2504, %v2006
    %2534 = vst.msk [vmem:[#allocation2 + $0xe8] sm:$0xff] %vm2504, %v2011
    %2535 = vst.msk [vmem:[#allocation2 + $0xf0] sm:$0xff] %vm2504, %v2016
    %2536 = vst.msk [vmem:[#allocation2 + $0xf8] sm:$0xff] %vm2504, %v2021
    %2537 = vst.msk [vmem:[#allocation2 + $0x100] sm:$0xff] %vm2504, %v2026
    %2538 = vst.msk [vmem:[#allocation2 + $0x108] sm:$0xff] %vm2504, %v2031
    %2539 = vst.msk [vmem:[#allocation2 + $0x110] sm:$0xff] %vm2504, %v2036
    %2540 = vst.msk [vmem:[#allocation2 + $0x118] sm:$0xff] %vm2504, %v2041
    %2541 = vst.msk [vmem:[#allocation2 + $0x120] sm:$0xff] %vm2504, %v2046
    %2542 = vst.msk [vmem:[#allocation2 + $0x128] sm:$0xff] %vm2504, %v2051
    %2543 = vst.msk [vmem:[#allocation2 + $0x130] sm:$0xff] %vm2504, %v2056
    %2544 = vst.msk [vmem:[#allocation2 + $0x138] sm:$0xff] %vm2504, %v2061
    %2545 = vst.msk [vmem:[#allocation2 + $0x140] sm:$0xff] %vm2504, %v2066
    %2546 = vst.msk [vmem:[#allocation2 + $0x148] sm:$0xff] %vm2504, %v2071
    %2547 = vst.msk [vmem:[#allocation2 + $0x150] sm:$0xff] %vm2504, %v2076
    %2548 = vst.msk [vmem:[#allocation2 + $0x158] sm:$0xff] %vm2504, %v2081
    %2549 = vst.msk [vmem:[#allocation2 + $0x160] sm:$0xff] %vm2504, %v2086
    %2550 = vst.msk [vmem:[#allocation2 + $0x168] sm:$0xff] %vm2504, %v2091
    %2551 = vst.msk [vmem:[#allocation2 + $0x170] sm:$0xff] %vm2504, %v2096
    %2552 = vst.msk [vmem:[#allocation2 + $0x178] sm:$0xff] %vm2504, %v2101
    %2553 = vst.msk [vmem:[#allocation2 + $0x180] sm:$0xff] %vm2504, %v2106
    %2554 = vst.msk [vmem:[#allocation2 + $0x188] sm:$0xff] %vm2504, %v2111
    %2555 = vst.msk [vmem:[#allocation2 + $0x190] sm:$0xff] %vm2504, %v2116
    %2556 = vst.msk [vmem:[#allocation2 + $0x198] sm:$0xff] %vm2504, %v2121
    %2557 = vst.msk [vmem:[#allocation2 + $0x1a0] sm:$0xff] %vm2504, %v2126
    %2558 = vst.msk [vmem:[#allocation2 + $0x1a8] sm:$0xff] %vm2504, %v2131
    %2559 = vst.msk [vmem:[#allocation2 + $0x1b0] sm:$0xff] %vm2504, %v2136
    %2560 = vst.msk [vmem:[#allocation2 + $0x1b8] sm:$0xff] %vm2504, %v2141
    %2561 = vst.msk [vmem:[#allocation2 + $0x1c0] sm:$0xff] %vm2504, %v2146
    %2562 = vst.msk [vmem:[#allocation2 + $0x1c8] sm:$0xff] %vm2504, %v2151
    %2563 = vst.msk [vmem:[#allocation2 + $0x1d0] sm:$0xff] %vm2504, %v2156
    %2564 = vst.msk [vmem:[#allocation2 + $0x1d8] sm:$0xff] %vm2504, %v2161
    %2565 = vst.msk [vmem:[#allocation2 + $0x1e0] sm:$0xff] %vm2504, %v2166
    %2566 = vst.msk [vmem:[#allocation2 + $0x1e8] sm:$0xff] %vm2504, %v2171
    %2567 = vst.msk [vmem:[#allocation2 + $0x1f0] sm:$0xff] %vm2504, %v2176
    %2568 = vst.msk [vmem:[#allocation2 + $0x1f8] sm:$0xff] %vm2504, %v2181
    %2569 = vst.msk [vmem:[#allocation2 + $0x200] sm:$0xff] %vm2504, %v2186
    %2570 = vst.msk [vmem:[#allocation2 + $0x208] sm:$0xff] %vm2504, %v2191
    %2571 = vst.msk [vmem:[#allocation2 + $0x210] sm:$0xff] %vm2504, %v2196
    %2572 = vst.msk [vmem:[#allocation2 + $0x218] sm:$0xff] %vm2504, %v2201
    %2573 = vst.msk [vmem:[#allocation2 + $0x220] sm:$0xff] %vm2504, %v2206
    %2574 = vst.msk [vmem:[#allocation2 + $0x228] sm:$0xff] %vm2504, %v2211
    %2575 = vst.msk [vmem:[#allocation2 + $0x230] sm:$0xff] %vm2504, %v2216
    %2576 = vst.msk [vmem:[#allocation2 + $0x238] sm:$0xff] %vm2504, %v2221
    %2577 = vst.msk [vmem:[#allocation2 + $0x240] sm:$0xff] %vm2504, %v2226
    %2578 = vst.msk [vmem:[#allocation2 + $0x248] sm:$0xff] %vm2504, %v2231
    %2579 = vst.msk [vmem:[#allocation2 + $0x250] sm:$0xff] %vm2504, %v2236
    %2580 = vst.msk [vmem:[#allocation2 + $0x258] sm:$0xff] %vm2504, %v2241
    %2581 = vst.msk [vmem:[#allocation2 + $0x260] sm:$0xff] %vm2504, %v2246
    %2582 = vst.msk [vmem:[#allocation2 + $0x268] sm:$0xff] %vm2504, %v2251
    %2583 = vst.msk [vmem:[#allocation2 + $0x270] sm:$0xff] %vm2504, %v2256
    %2584 = vst.msk [vmem:[#allocation2 + $0x278] sm:$0xff] %vm2504, %v2261
    %2585 = vst.msk [vmem:[#allocation2 + $0x280] sm:$0xff] %vm2504, %v2266
    %2586 = vst.msk [vmem:[#allocation2 + $0x288] sm:$0xff] %vm2504, %v2271
    %2587 = vst.msk [vmem:[#allocation2 + $0x290] sm:$0xff] %vm2504, %v2276
    %2588 = vst.msk [vmem:[#allocation2 + $0x298] sm:$0xff] %vm2504, %v2281
    %2589 = vst.msk [vmem:[#allocation2 + $0x2a0] sm:$0xff] %vm2504, %v2286
    %2590 = vst.msk [vmem:[#allocation2 + $0x2a8] sm:$0xff] %vm2504, %v2291
    %2591 = vst.msk [vmem:[#allocation2 + $0x2b0] sm:$0xff] %vm2504, %v2296
    %2592 = vst.msk [vmem:[#allocation2 + $0x2b8] sm:$0xff] %vm2504, %v2301
    %2593 = vst.msk [vmem:[#allocation2 + $0x2c0] sm:$0xff] %vm2504, %v2306
    %2594 = vst.msk [vmem:[#allocation2 + $0x2c8] sm:$0xff] %vm2504, %v2311
    %2595 = vst.msk [vmem:[#allocation2 + $0x2d0] sm:$0xff] %vm2504, %v2316
    %2596 = vst.msk [vmem:[#allocation2 + $0x2d8] sm:$0xff] %vm2504, %v2321
    %2597 = vst.msk [vmem:[#allocation2 + $0x2e0] sm:$0xff] %vm2504, %v2326
    %2598 = vst.msk [vmem:[#allocation2 + $0x2e8] sm:$0xff] %vm2504, %v2331
    %2599 = vst.msk [vmem:[#allocation2 + $0x2f0] sm:$0xff] %vm2504, %v2336
    %2600 = vst.msk [vmem:[#allocation2 + $0x2f8] sm:$0xff] %vm2504, %v2341
    %2601 = vst.msk [vmem:[#allocation2 + $0x300] sm:$0xff] %vm2504, %v2346
    %2602 = vst.msk [vmem:[#allocation2 + $0x308] sm:$0xff] %vm2504, %v2351
    %2603 = vst.msk [vmem:[#allocation2 + $0x310] sm:$0xff] %vm2504, %v2356
    %2604 = vst.msk [vmem:[#allocation2 + $0x318] sm:$0xff] %vm2504, %v2361
    %2605 = vst.msk [vmem:[#allocation2 + $0x320] sm:$0xff] %vm2504, %v2366
    %2606 = vst.msk [vmem:[#allocation2 + $0x328] sm:$0xff] %vm2504, %v2371
    %2607 = vst.msk [vmem:[#allocation2 + $0x330] sm:$0xff] %vm2504, %v2376
    %2608 = vst.msk [vmem:[#allocation2 + $0x338] sm:$0xff] %vm2504, %v2381
    %2609 = vst.msk [vmem:[#allocation2 + $0x340] sm:$0xff] %vm2504, %v2386
    %2610 = vst.msk [vmem:[#allocation2 + $0x348] sm:$0xff] %vm2504, %v2391
    %2611 = vst.msk [vmem:[#allocation2 + $0x350] sm:$0xff] %vm2504, %v2396
    %2612 = vst.msk [vmem:[#allocation2 + $0x358] sm:$0xff] %vm2504, %v2401
    %2613 = vst.msk [vmem:[#allocation2 + $0x360] sm:$0xff] %vm2504, %v2406
    %2614 = vst.msk [vmem:[#allocation2 + $0x368] sm:$0xff] %vm2504, %v2411
    %2615 = vst.msk [vmem:[#allocation2 + $0x370] sm:$0xff] %vm2504, %v2416
    %2616 = vst.msk [vmem:[#allocation2 + $0x378] sm:$0xff] %vm2504, %v2421
    %2617 = vst.msk [vmem:[#allocation2 + $0x380] sm:$0xff] %vm2504, %v2426
    %2618 = vst.msk [vmem:[#allocation2 + $0x388] sm:$0xff] %vm2504, %v2431
    %2619 = vst.msk [vmem:[#allocation2 + $0x390] sm:$0xff] %vm2504, %v2436
    %2620 = vst.msk [vmem:[#allocation2 + $0x398] sm:$0xff] %vm2504, %v2441
    %2621 = vst.msk [vmem:[#allocation2 + $0x3a0] sm:$0xff] %vm2504, %v2446
    %2622 = vst.msk [vmem:[#allocation2 + $0x3a8] sm:$0xff] %vm2504, %v2451
    %2623 = vst.msk [vmem:[#allocation2 + $0x3b0] sm:$0xff] %vm2504, %v2456
    %2624 = vst.msk [vmem:[#allocation2 + $0x3b8] sm:$0xff] %vm2504, %v2461
    %2625 = vst.msk [vmem:[#allocation2 + $0x3c0] sm:$0xff] %vm2504, %v2466
    %2626 = vst.msk [vmem:[#allocation2 + $0x3c8] sm:$0xff] %vm2504, %v2471
    %2627 = vst.msk [vmem:[#allocation2 + $0x3d0] sm:$0xff] %vm2504, %v2476
    %2628 = vst.msk [vmem:[#allocation2 + $0x3d8] sm:$0xff] %vm2504, %v2481
    %2629 = vst.msk [vmem:[#allocation2 + $0x3e0] sm:$0xff] %vm2504, %v2486
    %2630 = vst.msk [vmem:[#allocation2 + $0x3e8] sm:$0xff] %vm2504, %v2491
    %2631 = vst.msk [vmem:[#allocation2 + $0x3f0] sm:$0xff] %vm2504, %v2496
    %2632 = vst.msk [vmem:[#allocation2 + $0x3f8] sm:$0xff] %vm2504, %v2501
    %v2633 = vsel %vm2504, %v637, 0.0
    %v2634 = vsel %vm2504, %v642, 0.0
    %v2635 = vadd.f32 %v2633, %v2634
    %v2636 = vsel %vm2504, %v647, 0.0
    %v2637 = vadd.f32 %v2635, %v2636
    %v2638 = vsel %vm2504, %v652, 0.0
    %v2639 = vadd.f32 %v2637, %v2638
    %v2640 = vsel %vm2504, %v657, 0.0
    %v2641 = vadd.f32 %v2639, %v2640
    %v2642 = vsel %vm2504, %v662, 0.0
    %v2643 = vadd.f32 %v2641, %v2642
    %v2644 = vsel %vm2504, %v667, 0.0
    %v2645 = vadd.f32 %v2643, %v2644
    %v2646 = vsel %vm2504, %v672, 0.0
    %v2647 = vadd.f32 %v2645, %v2646
    %v2648 = vsel %vm2504, %v677, 0.0
    %v2649 = vadd.f32 %v2647, %v2648
    %v2650 = vsel %vm2504, %v682, 0.0
    %v2651 = vadd.f32 %v2649, %v2650
    %v2652 = vsel %vm2504, %v687, 0.0
    %v2653 = vadd.f32 %v2651, %v2652
    %v2654 = vsel %vm2504, %v692, 0.0
    %v2655 = vadd.f32 %v2653, %v2654
    %v2656 = vsel %vm2504, %v697, 0.0
    %v2657 = vadd.f32 %v2655, %v2656
    %v2658 = vsel %vm2504, %v702, 0.0
    %v2659 = vadd.f32 %v2657, %v2658
    %v2660 = vsel %vm2504, %v707, 0.0
    %v2661 = vadd.f32 %v2659, %v2660
    %v2662 = vsel %vm2504, %v712, 0.0
    %v2663 = vadd.f32 %v2661, %v2662
    %v2664 = vsel %vm2504, %v717, 0.0
    %v2665 = vadd.f32 %v2663, %v2664
    %v2666 = vsel %vm2504, %v722, 0.0
    %v2667 = vadd.f32 %v2665, %v2666
    %v2668 = vsel %vm2504, %v727, 0.0
    %v2669 = vadd.f32 %v2667, %v2668
    %v2670 = vsel %vm2504, %v732, 0.0
    %v2671 = vadd.f32 %v2669, %v2670
    %v2672 = vsel %vm2504, %v737, 0.0
    %v2673 = vadd.f32 %v2671, %v2672
    %v2674 = vsel %vm2504, %v742, 0.0
    %v2675 = vadd.f32 %v2673, %v2674
    %v2676 = vsel %vm2504, %v747, 0.0
    %v2677 = vadd.f32 %v2675, %v2676
    %v2678 = vsel %vm2504, %v752, 0.0
    %v2679 = vadd.f32 %v2677, %v2678
    %v2680 = vsel %vm2504, %v757, 0.0
    %v2681 = vadd.f32 %v2679, %v2680
    %v2682 = vsel %vm2504, %v762, 0.0
    %v2683 = vadd.f32 %v2681, %v2682
    %v2684 = vsel %vm2504, %v767, 0.0
    %v2685 = vadd.f32 %v2683, %v2684
    %v2686 = vsel %vm2504, %v772, 0.0
    %v2687 = vadd.f32 %v2685, %v2686
    %v2688 = vsel %vm2504, %v777, 0.0
    %v2689 = vadd.f32 %v2687, %v2688
    %v2690 = vsel %vm2504, %v782, 0.0
    %v2691 = vadd.f32 %v2689, %v2690
    %v2692 = vsel %vm2504, %v787, 0.0
    %v2693 = vadd.f32 %v2691, %v2692
    %v2694 = vsel %vm2504, %v792, 0.0
    %v2695 = vadd.f32 %v2693, %v2694
    %v2696 = vsel %vm2504, %v797, 0.0
    %v2697 = vadd.f32 %v2695, %v2696
    %v2698 = vsel %vm2504, %v802, 0.0
    %v2699 = vadd.f32 %v2697, %v2698
    %v2700 = vsel %vm2504, %v807, 0.0
    %v2701 = vadd.f32 %v2699, %v2700
    %v2702 = vsel %vm2504, %v812, 0.0
    %v2703 = vadd.f32 %v2701, %v2702
    %v2704 = vsel %vm2504, %v817, 0.0
    %v2705 = vadd.f32 %v2703, %v2704
    %v2706 = vsel %vm2504, %v822, 0.0
    %v2707 = vadd.f32 %v2705, %v2706
    %v2708 = vsel %vm2504, %v827, 0.0
    %v2709 = vadd.f32 %v2707, %v2708
    %v2710 = vsel %vm2504, %v832, 0.0
    %v2711 = vadd.f32 %v2709, %v2710
    %v2712 = vsel %vm2504, %v837, 0.0
    %v2713 = vadd.f32 %v2711, %v2712
    %v2714 = vsel %vm2504, %v842, 0.0
    %v2715 = vadd.f32 %v2713, %v2714
    %v2716 = vsel %vm2504, %v847, 0.0
    %v2717 = vadd.f32 %v2715, %v2716
    %v2718 = vsel %vm2504, %v852, 0.0
    %v2719 = vadd.f32 %v2717, %v2718
    %v2720 = vsel %vm2504, %v857, 0.0
    %v2721 = vadd.f32 %v2719, %v2720
    %v2722 = vsel %vm2504, %v862, 0.0
    %v2723 = vadd.f32 %v2721, %v2722
    %v2724 = vsel %vm2504, %v867, 0.0
    %v2725 = vadd.f32 %v2723, %v2724
    %v2726 = vsel %vm2504, %v872, 0.0
    %v2727 = vadd.f32 %v2725, %v2726
    %v2728 = vsel %vm2504, %v877, 0.0
    %v2729 = vadd.f32 %v2727, %v2728
    %v2730 = vsel %vm2504, %v882, 0.0
    %v2731 = vadd.f32 %v2729, %v2730
    %v2732 = vsel %vm2504, %v887, 0.0
    %v2733 = vadd.f32 %v2731, %v2732
    %v2734 = vsel %vm2504, %v892, 0.0
    %v2735 = vadd.f32 %v2733, %v2734
    %v2736 = vsel %vm2504, %v897, 0.0
    %v2737 = vadd.f32 %v2735, %v2736
    %v2738 = vsel %vm2504, %v902, 0.0
    %v2739 = vadd.f32 %v2737, %v2738
    %v2740 = vsel %vm2504, %v907, 0.0
    %v2741 = vadd.f32 %v2739, %v2740
    %v2742 = vsel %vm2504, %v912, 0.0
    %v2743 = vadd.f32 %v2741, %v2742
    %v2744 = vsel %vm2504, %v917, 0.0
    %v2745 = vadd.f32 %v2743, %v2744
    %v2746 = vsel %vm2504, %v922, 0.0
    %v2747 = vadd.f32 %v2745, %v2746
    %v2748 = vsel %vm2504, %v927, 0.0
    %v2749 = vadd.f32 %v2747, %v2748
    %v2750 = vsel %vm2504, %v932, 0.0
    %v2751 = vadd.f32 %v2749, %v2750
    %v2752 = vsel %vm2504, %v937, 0.0
    %v2753 = vadd.f32 %v2751, %v2752
    %v2754 = vsel %vm2504, %v942, 0.0
    %v2755 = vadd.f32 %v2753, %v2754
    %v2756 = vsel %vm2504, %v947, 0.0
    %v2757 = vadd.f32 %v2755, %v2756
    %v2758 = vsel %vm2504, %v952, 0.0
    %v2759 = vadd.f32 %v2757, %v2758
    %v2760 = vsel %vm2504, %v957, 0.0
    %v2761 = vadd.f32 %v2759, %v2760
    %v2762 = vsel %vm2504, %v962, 0.0
    %v2763 = vadd.f32 %v2761, %v2762
    %v2764 = vsel %vm2504, %v967, 0.0
    %v2765 = vadd.f32 %v2763, %v2764
    %v2766 = vsel %vm2504, %v972, 0.0
    %v2767 = vadd.f32 %v2765, %v2766
    %v2768 = vsel %vm2504, %v977, 0.0
    %v2769 = vadd.f32 %v2767, %v2768
    %v2770 = vsel %vm2504, %v982, 0.0
    %v2771 = vadd.f32 %v2769, %v2770
    %v2772 = vsel %vm2504, %v987, 0.0
    %v2773 = vadd.f32 %v2771, %v2772
    %v2774 = vsel %vm2504, %v992, 0.0
    %v2775 = vadd.f32 %v2773, %v2774
    %v2776 = vsel %vm2504, %v997, 0.0
    %v2777 = vadd.f32 %v2775, %v2776
    %v2778 = vsel %vm2504, %v1002, 0.0
    %v2779 = vadd.f32 %v2777, %v2778
    %v2780 = vsel %vm2504, %v1007, 0.0
    %v2781 = vadd.f32 %v2779, %v2780
    %v2782 = vsel %vm2504, %v1012, 0.0
    %v2783 = vadd.f32 %v2781, %v2782
    %v2784 = vsel %vm2504, %v1017, 0.0
    %v2785 = vadd.f32 %v2783, %v2784
    %v2786 = vsel %vm2504, %v1022, 0.0
    %v2787 = vadd.f32 %v2785, %v2786
    %v2788 = vsel %vm2504, %v1027, 0.0
    %v2789 = vadd.f32 %v2787, %v2788
    %v2790 = vsel %vm2504, %v1032, 0.0
    %v2791 = vadd.f32 %v2789, %v2790
    %v2792 = vsel %vm2504, %v1037, 0.0
    %v2793 = vadd.f32 %v2791, %v2792
    %v2794 = vsel %vm2504, %v1042, 0.0
    %v2795 = vadd.f32 %v2793, %v2794
    %v2796 = vsel %vm2504, %v1047, 0.0
    %v2797 = vadd.f32 %v2795, %v2796
    %v2798 = vsel %vm2504, %v1052, 0.0
    %v2799 = vadd.f32 %v2797, %v2798
    %v2800 = vsel %vm2504, %v1057, 0.0
    %v2801 = vadd.f32 %v2799, %v2800
    %v2802 = vsel %vm2504, %v1062, 0.0
    %v2803 = vadd.f32 %v2801, %v2802
    %v2804 = vsel %vm2504, %v1067, 0.0
    %v2805 = vadd.f32 %v2803, %v2804
    %v2806 = vsel %vm2504, %v1072, 0.0
    %v2807 = vadd.f32 %v2805, %v2806
    %v2808 = vsel %vm2504, %v1077, 0.0
    %v2809 = vadd.f32 %v2807, %v2808
    %v2810 = vsel %vm2504, %v1082, 0.0
    %v2811 = vadd.f32 %v2809, %v2810
    %v2812 = vsel %vm2504, %v1087, 0.0
    %v2813 = vadd.f32 %v2811, %v2812
    %v2814 = vsel %vm2504, %v1092, 0.0
    %v2815 = vadd.f32 %v2813, %v2814
    %v2816 = vsel %vm2504, %v1097, 0.0
    %v2817 = vadd.f32 %v2815, %v2816
    %v2818 = vsel %vm2504, %v1102, 0.0
    %v2819 = vadd.f32 %v2817, %v2818
    %v2820 = vsel %vm2504, %v1107, 0.0
    %v2821 = vadd.f32 %v2819, %v2820
    %v2822 = vsel %vm2504, %v1112, 0.0
    %v2823 = vadd.f32 %v2821, %v2822
    %v2824 = vsel %vm2504, %v1117, 0.0
    %v2825 = vadd.f32 %v2823, %v2824
    %v2826 = vsel %vm2504, %v1122, 0.0
    %v2827 = vadd.f32 %v2825, %v2826
    %v2828 = vsel %vm2504, %v1127, 0.0
    %v2829 = vadd.f32 %v2827, %v2828
    %v2830 = vsel %vm2504, %v1132, 0.0
    %v2831 = vadd.f32 %v2829, %v2830
    %v2832 = vsel %vm2504, %v1137, 0.0
    %v2833 = vadd.f32 %v2831, %v2832
    %v2834 = vsel %vm2504, %v1142, 0.0
    %v2835 = vadd.f32 %v2833, %v2834
    %v2836 = vsel %vm2504, %v1147, 0.0
    %v2837 = vadd.f32 %v2835, %v2836
    %v2838 = vsel %vm2504, %v1152, 0.0
    %v2839 = vadd.f32 %v2837, %v2838
    %v2840 = vsel %vm2504, %v1157, 0.0
    %v2841 = vadd.f32 %v2839, %v2840
    %v2842 = vsel %vm2504, %v1162, 0.0
    %v2843 = vadd.f32 %v2841, %v2842
    %v2844 = vsel %vm2504, %v1167, 0.0
    %v2845 = vadd.f32 %v2843, %v2844
    %v2846 = vsel %vm2504, %v1172, 0.0
    %v2847 = vadd.f32 %v2845, %v2846
    %v2848 = vsel %vm2504, %v1177, 0.0
    %v2849 = vadd.f32 %v2847, %v2848
    %v2850 = vsel %vm2504, %v1182, 0.0
    %v2851 = vadd.f32 %v2849, %v2850
    %v2852 = vsel %vm2504, %v1187, 0.0
    %v2853 = vadd.f32 %v2851, %v2852
    %v2854 = vsel %vm2504, %v1192, 0.0
    %v2855 = vadd.f32 %v2853, %v2854
    %v2856 = vsel %vm2504, %v1197, 0.0
    %v2857 = vadd.f32 %v2855, %v2856
    %v2858 = vsel %vm2504, %v1202, 0.0
    %v2859 = vadd.f32 %v2857, %v2858
    %v2860 = vsel %vm2504, %v1207, 0.0
    %v2861 = vadd.f32 %v2859, %v2860
    %v2862 = vsel %vm2504, %v1212, 0.0
    %v2863 = vadd.f32 %v2861, %v2862
    %v2864 = vsel %vm2504, %v1217, 0.0
    %v2865 = vadd.f32 %v2863, %v2864
    %v2866 = vsel %vm2504, %v1222, 0.0
    %v2867 = vadd.f32 %v2865, %v2866
    %v2868 = vsel %vm2504, %v1227, 0.0
    %v2869 = vadd.f32 %v2867, %v2868
    %v2870 = vsel %vm2504, %v1232, 0.0
    %v2871 = vadd.f32 %v2869, %v2870
    %v2872 = vsel %vm2504, %v1237, 0.0
    %v2873 = vadd.f32 %v2871, %v2872
    %v2874 = vsel %vm2504, %v1242, 0.0
    %v2875 = vadd.f32 %v2873, %v2874
    %v2876 = vsel %vm2504, %v1247, 0.0
    %v2877 = vadd.f32 %v2875, %v2876
    %v2878 = vsel %vm2504, %v1252, 0.0
    %v2879 = vadd.f32 %v2877, %v2878
    %v2880 = vsel %vm2504, %v1257, 0.0
    %v2881 = vadd.f32 %v2879, %v2880
    %v2882 = vsel %vm2504, %v1262, 0.0
    %v2883 = vadd.f32 %v2881, %v2882
    %v2884 = vsel %vm2504, %v1267, 0.0
    %v2885 = vadd.f32 %v2883, %v2884
    %v2886 = vsel %vm2504, %v1272, 0.0
    %v2887 = vadd.f32 %v2885, %v2886
    %v2888 = vrot.slane %v2887, 4
    %v2889 = vadd.f32 %v2887, %v2888
    %v2890 = vrot.slane %v2889, 2
    %v2891 = vadd.f32 %v2889, %v2890
    %v2892 = vrot.slane %v2891, 1
    %v2893 = vadd.f32 %v2891, %v2892
    %v2894 = vmul.f32 %v2893, 0.0009765625
    %v2895 = vsub.f32 %v637, %v2894
    %v2896 = vsub.f32 %v642, %v2894
    %v2897 = vsub.f32 %v647, %v2894
    %v2898 = vsub.f32 %v652, %v2894
    %v2899 = vsub.f32 %v657, %v2894
    %v2900 = vsub.f32 %v662, %v2894
    %v2901 = vsub.f32 %v667, %v2894
    %v2902 = vsub.f32 %v672, %v2894
    %v2903 = vsub.f32 %v677, %v2894
    %v2904 = vsub.f32 %v682, %v2894
    %v2905 = vsub.f32 %v687, %v2894
    %v2906 = vsub.f32 %v692, %v2894
    %v2907 = vsub.f32 %v697, %v2894
    %v2908 = vsub.f32 %v702, %v2894
    %v2909 = vsub.f32 %v707, %v2894
    %v2910 = vsub.f32 %v712, %v2894
    %v2911 = vsub.f32 %v717, %v2894
    %v2912 = vsub.f32 %v722, %v2894
    %v2913 = vsub.f32 %v727, %v2894
    %v2914 = vsub.f32 %v732, %v2894
    %v2915 = vsub.f32 %v737, %v2894
    %v2916 = vsub.f32 %v742, %v2894
    %v2917 = vsub.f32 %v747, %v2894
    %v2918 = vsub.f32 %v752, %v2894
    %v2919 = vsub.f32 %v757, %v2894
    %v2920 = vsub.f32 %v762, %v2894
    %v2921 = vsub.f32 %v767, %v2894
    %v2922 = vsub.f32 %v772, %v2894
    %v2923 = vsub.f32 %v777, %v2894
    %v2924 = vsub.f32 %v782, %v2894
    %v2925 = vsub.f32 %v787, %v2894
    %v2926 = vsub.f32 %v792, %v2894
    %v2927 = vsub.f32 %v797, %v2894
    %v2928 = vsub.f32 %v802, %v2894
    %v2929 = vsub.f32 %v807, %v2894
    %v2930 = vsub.f32 %v812, %v2894
    %v2931 = vsub.f32 %v817, %v2894
    %v2932 = vsub.f32 %v822, %v2894
    %v2933 = vsub.f32 %v827, %v2894
    %v2934 = vsub.f32 %v832, %v2894
    %v2935 = vsub.f32 %v837, %v2894
    %v2936 = vsub.f32 %v842, %v2894
    %v2937 = vsub.f32 %v847, %v2894
    %v2938 = vsub.f32 %v852, %v2894
    %v2939 = vsub.f32 %v857, %v2894
    %v2940 = vsub.f32 %v862, %v2894
    %v2941 = vsub.f32 %v867, %v2894
    %v2942 = vsub.f32 %v872, %v2894
    %v2943 = vsub.f32 %v877, %v2894
    %v2944 = vsub.f32 %v882, %v2894
    %v2945 = vsub.f32 %v887, %v2894
    %v2946 = vsub.f32 %v892, %v2894
    %v2947 = vsub.f32 %v897, %v2894
    %v2948 = vsub.f32 %v902, %v2894
    %v2949 = vsub.f32 %v907, %v2894
    %v2950 = vsub.f32 %v912, %v2894
    %v2951 = vsub.f32 %v917, %v2894
    %v2952 = vsub.f32 %v922, %v2894
    %v2953 = vsub.f32 %v927, %v2894
    %v2954 = vsub.f32 %v932, %v2894
    %v2955 = vsub.f32 %v937, %v2894
    %v2956 = vsub.f32 %v942, %v2894
    %v2957 = vsub.f32 %v947, %v2894
    %v2958 = vsub.f32 %v952, %v2894
    %v2959 = vsub.f32 %v957, %v2894
    %v2960 = vsub.f32 %v962, %v2894
    %v2961 = vsub.f32 %v967, %v2894
    %v2962 = vsub.f32 %v972, %v2894
    %v2963 = vsub.f32 %v977, %v2894
    %v2964 = vsub.f32 %v982, %v2894
    %v2965 = vsub.f32 %v987, %v2894
    %v2966 = vsub.f32 %v992, %v2894
    %v2967 = vsub.f32 %v997, %v2894
    %v2968 = vsub.f32 %v1002, %v2894
    %v2969 = vsub.f32 %v1007, %v2894
    %v2970 = vsub.f32 %v1012, %v2894
    %v2971 = vsub.f32 %v1017, %v2894
    %v2972 = vsub.f32 %v1022, %v2894
    %v2973 = vsub.f32 %v1027, %v2894
    %v2974 = vsub.f32 %v1032, %v2894
    %v2975 = vsub.f32 %v1037, %v2894
    %v2976 = vsub.f32 %v1042, %v2894
    %v2977 = vsub.f32 %v1047, %v2894
    %v2978 = vsub.f32 %v1052, %v2894
    %v2979 = vsub.f32 %v1057, %v2894
    %v2980 = vsub.f32 %v1062, %v2894
    %v2981 = vsub.f32 %v1067, %v2894
    %v2982 = vsub.f32 %v1072, %v2894
    %v2983 = vsub.f32 %v1077, %v2894
    %v2984 = vsub.f32 %v1082, %v2894
    %v2985 = vsub.f32 %v1087, %v2894
    %v2986 = vsub.f32 %v1092, %v2894
    %v2987 = vsub.f32 %v1097, %v2894
    %v2988 = vsub.f32 %v1102, %v2894
    %v2989 = vsub.f32 %v1107, %v2894
    %v2990 = vsub.f32 %v1112, %v2894
    %v2991 = vsub.f32 %v1117, %v2894
    %v2992 = vsub.f32 %v1122, %v2894
    %v2993 = vsub.f32 %v1127, %v2894
    %v2994 = vsub.f32 %v1132, %v2894
    %v2995 = vsub.f32 %v1137, %v2894
    %v2996 = vsub.f32 %v1142, %v2894
    %v2997 = vsub.f32 %v1147, %v2894
    %v2998 = vsub.f32 %v1152, %v2894
    %v2999 = vsub.f32 %v1157, %v2894
    %v3000 = vsub.f32 %v1162, %v2894
    %v3001 = vsub.f32 %v1167, %v2894
    %v3002 = vsub.f32 %v1172, %v2894
    %v3003 = vsub.f32 %v1177, %v2894
    %v3004 = vsub.f32 %v1182, %v2894
    %v3005 = vsub.f32 %v1187, %v2894
    %v3006 = vsub.f32 %v1192, %v2894
    %v3007 = vsub.f32 %v1197, %v2894
    %v3008 = vsub.f32 %v1202, %v2894
    %v3009 = vsub.f32 %v1207, %v2894
    %v3010 = vsub.f32 %v1212, %v2894
    %v3011 = vsub.f32 %v1217, %v2894
    %v3012 = vsub.f32 %v1222, %v2894
    %v3013 = vsub.f32 %v1227, %v2894
    %v3014 = vsub.f32 %v1232, %v2894
    %v3015 = vsub.f32 %v1237, %v2894
    %v3016 = vsub.f32 %v1242, %v2894
    %v3017 = vsub.f32 %v1247, %v2894
    %v3018 = vsub.f32 %v1252, %v2894
    %v3019 = vsub.f32 %v1257, %v2894
    %v3020 = vsub.f32 %v1262, %v2894
    %v3021 = vsub.f32 %v1267, %v2894
    %v3022 = vsub.f32 %v1272, %v2894
    %v3023 = vmul.f32 %v2895, %v2895
    %v3024 = vmul.f32 %v2896, %v2896
    %v3025 = vmul.f32 %v2897, %v2897
    %v3026 = vmul.f32 %v2898, %v2898
    %v3027 = vmul.f32 %v2899, %v2899
    %v3028 = vmul.f32 %v2900, %v2900
    %v3029 = vmul.f32 %v2901, %v2901
    %v3030 = vmul.f32 %v2902, %v2902
    %v3031 = vmul.f32 %v2903, %v2903
    %v3032 = vmul.f32 %v2904, %v2904
    %v3033 = vmul.f32 %v2905, %v2905
    %v3034 = vmul.f32 %v2906, %v2906
    %v3035 = vmul.f32 %v2907, %v2907
    %v3036 = vmul.f32 %v2908, %v2908
    %v3037 = vmul.f32 %v2909, %v2909
    %v3038 = vmul.f32 %v2910, %v2910
    %v3039 = vmul.f32 %v2911, %v2911
    %v3040 = vmul.f32 %v2912, %v2912
    %v3041 = vmul.f32 %v2913, %v2913
    %v3042 = vmul.f32 %v2914, %v2914
    %v3043 = vmul.f32 %v2915, %v2915
    %v3044 = vmul.f32 %v2916, %v2916
    %v3045 = vmul.f32 %v2917, %v2917
    %v3046 = vmul.f32 %v2918, %v2918
    %v3047 = vmul.f32 %v2919, %v2919
    %v3048 = vmul.f32 %v2920, %v2920
    %v3049 = vmul.f32 %v2921, %v2921
    %v3050 = vmul.f32 %v2922, %v2922
    %v3051 = vmul.f32 %v2923, %v2923
    %v3052 = vmul.f32 %v2924, %v2924
    %v3053 = vmul.f32 %v2925, %v2925
    %v3054 = vmul.f32 %v2926, %v2926
    %v3055 = vmul.f32 %v2927, %v2927
    %v3056 = vmul.f32 %v2928, %v2928
    %v3057 = vmul.f32 %v2929, %v2929
    %v3058 = vmul.f32 %v2930, %v2930
    %v3059 = vmul.f32 %v2931, %v2931
    %v3060 = vmul.f32 %v2932, %v2932
    %v3061 = vmul.f32 %v2933, %v2933
    %v3062 = vmul.f32 %v2934, %v2934
    %v3063 = vmul.f32 %v2935, %v2935
    %v3064 = vmul.f32 %v2936, %v2936
    %v3065 = vmul.f32 %v2937, %v2937
    %v3066 = vmul.f32 %v2938, %v2938
    %v3067 = vmul.f32 %v2939, %v2939
    %v3068 = vmul.f32 %v2940, %v2940
    %v3069 = vmul.f32 %v2941, %v2941
    %v3070 = vmul.f32 %v2942, %v2942
    %v3071 = vmul.f32 %v2943, %v2943
    %v3072 = vmul.f32 %v2944, %v2944
    %v3073 = vmul.f32 %v2945, %v2945
    %v3074 = vmul.f32 %v2946, %v2946
    %v3075 = vmul.f32 %v2947, %v2947
    %v3076 = vmul.f32 %v2948, %v2948
    %v3077 = vmul.f32 %v2949, %v2949
    %v3078 = vmul.f32 %v2950, %v2950
    %v3079 = vmul.f32 %v2951, %v2951
    %v3080 = vmul.f32 %v2952, %v2952
    %v3081 = vmul.f32 %v2953, %v2953
    %v3082 = vmul.f32 %v2954, %v2954
    %v3083 = vmul.f32 %v2955, %v2955
    %v3084 = vmul.f32 %v2956, %v2956
    %v3085 = vmul.f32 %v2957, %v2957
    %v3086 = vmul.f32 %v2958, %v2958
    %v3087 = vmul.f32 %v2959, %v2959
    %v3088 = vmul.f32 %v2960, %v2960
    %v3089 = vmul.f32 %v2961, %v2961
    %v3090 = vmul.f32 %v2962, %v2962
    %v3091 = vmul.f32 %v2963, %v2963
    %v3092 = vmul.f32 %v2964, %v2964
    %v3093 = vmul.f32 %v2965, %v2965
    %v3094 = vmul.f32 %v2966, %v2966
    %v3095 = vmul.f32 %v2967, %v2967
    %v3096 = vmul.f32 %v2968, %v2968
    %v3097 = vmul.f32 %v2969, %v2969
    %v3098 = vmul.f32 %v2970, %v2970
    %v3099 = vmul.f32 %v2971, %v2971
    %v3100 = vmul.f32 %v2972, %v2972
    %v3101 = vmul.f32 %v2973, %v2973
    %v3102 = vmul.f32 %v2974, %v2974
    %v3103 = vmul.f32 %v2975, %v2975
    %v3104 = vmul.f32 %v2976, %v2976
    %v3105 = vmul.f32 %v2977, %v2977
    %v3106 = vmul.f32 %v2978, %v2978
    %v3107 = vmul.f32 %v2979, %v2979
    %v3108 = vmul.f32 %v2980, %v2980
    %v3109 = vmul.f32 %v2981, %v2981
    %v3110 = vmul.f32 %v2982, %v2982
    %v3111 = vmul.f32 %v2983, %v2983
    %v3112 = vmul.f32 %v2984, %v2984
    %v3113 = vmul.f32 %v2985, %v2985
    %v3114 = vmul.f32 %v2986, %v2986
    %v3115 = vmul.f32 %v2987, %v2987
    %v3116 = vmul.f32 %v2988, %v2988
    %v3117 = vmul.f32 %v2989, %v2989
    %v3118 = vmul.f32 %v2990, %v2990
    %v3119 = vmul.f32 %v2991, %v2991
    %v3120 = vmul.f32 %v2992, %v2992
    %v3121 = vmul.f32 %v2993, %v2993
    %v3122 = vmul.f32 %v2994, %v2994
    %v3123 = vmul.f32 %v2995, %v2995
    %v3124 = vmul.f32 %v2996, %v2996
    %v3125 = vmul.f32 %v2997, %v2997
    %v3126 = vmul.f32 %v2998, %v2998
    %v3127 = vmul.f32 %v2999, %v2999
    %v3128 = vmul.f32 %v3000, %v3000
    %v3129 = vmul.f32 %v3001, %v3001
    %v3130 = vmul.f32 %v3002, %v3002
    %v3131 = vmul.f32 %v3003, %v3003
    %v3132 = vmul.f32 %v3004, %v3004
    %v3133 = vmul.f32 %v3005, %v3005
    %v3134 = vmul.f32 %v3006, %v3006
    %v3135 = vmul.f32 %v3007, %v3007
    %v3136 = vmul.f32 %v3008, %v3008
    %v3137 = vmul.f32 %v3009, %v3009
    %v3138 = vmul.f32 %v3010, %v3010
    %v3139 = vmul.f32 %v3011, %v3011
    %v3140 = vmul.f32 %v3012, %v3012
    %v3141 = vmul.f32 %v3013, %v3013
    %v3142 = vmul.f32 %v3014, %v3014
    %v3143 = vmul.f32 %v3015, %v3015
    %v3144 = vmul.f32 %v3016, %v3016
    %v3145 = vmul.f32 %v3017, %v3017
    %v3146 = vmul.f32 %v3018, %v3018
    %v3147 = vmul.f32 %v3019, %v3019
    %v3148 = vmul.f32 %v3020, %v3020
    %v3149 = vmul.f32 %v3021, %v3021
    %v3150 = vmul.f32 %v3022, %v3022
    %v3151 = vsel %vm2504, %v3023, 0.0
    %v3152 = vsel %vm2504, %v3024, 0.0
    %v3153 = vadd.f32 %v3151, %v3152
    %v3154 = vsel %vm2504, %v3025, 0.0
    %v3155 = vadd.f32 %v3153, %v3154
    %v3156 = vsel %vm2504, %v3026, 0.0
    %v3157 = vadd.f32 %v3155, %v3156
    %v3158 = vsel %vm2504, %v3027, 0.0
    %v3159 = vadd.f32 %v3157, %v3158
    %v3160 = vsel %vm2504, %v3028, 0.0
    %v3161 = vadd.f32 %v3159, %v3160
    %v3162 = vsel %vm2504, %v3029, 0.0
    %v3163 = vadd.f32 %v3161, %v3162
    %v3164 = vsel %vm2504, %v3030, 0.0
    %v3165 = vadd.f32 %v3163, %v3164
    %v3166 = vsel %vm2504, %v3031, 0.0
    %v3167 = vadd.f32 %v3165, %v3166
    %v3168 = vsel %vm2504, %v3032, 0.0
    %v3169 = vadd.f32 %v3167, %v3168
    %v3170 = vsel %vm2504, %v3033, 0.0
    %v3171 = vadd.f32 %v3169, %v3170
    %v3172 = vsel %vm2504, %v3034, 0.0
    %v3173 = vadd.f32 %v3171, %v3172
    %v3174 = vsel %vm2504, %v3035, 0.0
    %v3175 = vadd.f32 %v3173, %v3174
    %v3176 = vsel %vm2504, %v3036, 0.0
    %v3177 = vadd.f32 %v3175, %v3176
    %v3178 = vsel %vm2504, %v3037, 0.0
    %v3179 = vadd.f32 %v3177, %v3178
    %v3180 = vsel %vm2504, %v3038, 0.0
    %v3181 = vadd.f32 %v3179, %v3180
    %v3182 = vsel %vm2504, %v3039, 0.0
    %v3183 = vadd.f32 %v3181, %v3182
    %v3184 = vsel %vm2504, %v3040, 0.0
    %v3185 = vadd.f32 %v3183, %v3184
    %v3186 = vsel %vm2504, %v3041, 0.0
    %v3187 = vadd.f32 %v3185, %v3186
    %v3188 = vsel %vm2504, %v3042, 0.0
    %v3189 = vadd.f32 %v3187, %v3188
    %v3190 = vsel %vm2504, %v3043, 0.0
    %v3191 = vadd.f32 %v3189, %v3190
    %v3192 = vsel %vm2504, %v3044, 0.0
    %v3193 = vadd.f32 %v3191, %v3192
    %v3194 = vsel %vm2504, %v3045, 0.0
    %v3195 = vadd.f32 %v3193, %v3194
    %v3196 = vsel %vm2504, %v3046, 0.0
    %v3197 = vadd.f32 %v3195, %v3196
    %v3198 = vsel %vm2504, %v3047, 0.0
    %v3199 = vadd.f32 %v3197, %v3198
    %v3200 = vsel %vm2504, %v3048, 0.0
    %v3201 = vadd.f32 %v3199, %v3200
    %v3202 = vsel %vm2504, %v3049, 0.0
    %v3203 = vadd.f32 %v3201, %v3202
    %v3204 = vsel %vm2504, %v3050, 0.0
    %v3205 = vadd.f32 %v3203, %v3204
    %v3206 = vsel %vm2504, %v3051, 0.0
    %v3207 = vadd.f32 %v3205, %v3206
    %v3208 = vsel %vm2504, %v3052, 0.0
    %v3209 = vadd.f32 %v3207, %v3208
    %v3210 = vsel %vm2504, %v3053, 0.0
    %v3211 = vadd.f32 %v3209, %v3210
    %v3212 = vsel %vm2504, %v3054, 0.0
    %v3213 = vadd.f32 %v3211, %v3212
    %v3214 = vsel %vm2504, %v3055, 0.0
    %v3215 = vadd.f32 %v3213, %v3214
    %v3216 = vsel %vm2504, %v3056, 0.0
    %v3217 = vadd.f32 %v3215, %v3216
    %v3218 = vsel %vm2504, %v3057, 0.0
    %v3219 = vadd.f32 %v3217, %v3218
    %v3220 = vsel %vm2504, %v3058, 0.0
    %v3221 = vadd.f32 %v3219, %v3220
    %v3222 = vsel %vm2504, %v3059, 0.0
    %v3223 = vadd.f32 %v3221, %v3222
    %v3224 = vsel %vm2504, %v3060, 0.0
    %v3225 = vadd.f32 %v3223, %v3224
    %v3226 = vsel %vm2504, %v3061, 0.0
    %v3227 = vadd.f32 %v3225, %v3226
    %v3228 = vsel %vm2504, %v3062, 0.0
    %v3229 = vadd.f32 %v3227, %v3228
    %v3230 = vsel %vm2504, %v3063, 0.0
    %v3231 = vadd.f32 %v3229, %v3230
    %v3232 = vsel %vm2504, %v3064, 0.0
    %v3233 = vadd.f32 %v3231, %v3232
    %v3234 = vsel %vm2504, %v3065, 0.0
    %v3235 = vadd.f32 %v3233, %v3234
    %v3236 = vsel %vm2504, %v3066, 0.0
    %v3237 = vadd.f32 %v3235, %v3236
    %v3238 = vsel %vm2504, %v3067, 0.0
    %v3239 = vadd.f32 %v3237, %v3238
    %v3240 = vsel %vm2504, %v3068, 0.0
    %v3241 = vadd.f32 %v3239, %v3240
    %v3242 = vsel %vm2504, %v3069, 0.0
    %v3243 = vadd.f32 %v3241, %v3242
    %v3244 = vsel %vm2504, %v3070, 0.0
    %v3245 = vadd.f32 %v3243, %v3244
    %v3246 = vsel %vm2504, %v3071, 0.0
    %v3247 = vadd.f32 %v3245, %v3246
    %v3248 = vsel %vm2504, %v3072, 0.0
    %v3249 = vadd.f32 %v3247, %v3248
    %v3250 = vsel %vm2504, %v3073, 0.0
    %v3251 = vadd.f32 %v3249, %v3250
    %v3252 = vsel %vm2504, %v3074, 0.0
    %v3253 = vadd.f32 %v3251, %v3252
    %v3254 = vsel %vm2504, %v3075, 0.0
    %v3255 = vadd.f32 %v3253, %v3254
    %v3256 = vsel %vm2504, %v3076, 0.0
    %v3257 = vadd.f32 %v3255, %v3256
    %v3258 = vsel %vm2504, %v3077, 0.0
    %v3259 = vadd.f32 %v3257, %v3258
    %v3260 = vsel %vm2504, %v3078, 0.0
    %v3261 = vadd.f32 %v3259, %v3260
    %v3262 = vsel %vm2504, %v3079, 0.0
    %v3263 = vadd.f32 %v3261, %v3262
    %v3264 = vsel %vm2504, %v3080, 0.0
    %v3265 = vadd.f32 %v3263, %v3264
    %v3266 = vsel %vm2504, %v3081, 0.0
    %v3267 = vadd.f32 %v3265, %v3266
    %v3268 = vsel %vm2504, %v3082, 0.0
    %v3269 = vadd.f32 %v3267, %v3268
    %v3270 = vsel %vm2504, %v3083, 0.0
    %v3271 = vadd.f32 %v3269, %v3270
    %v3272 = vsel %vm2504, %v3084, 0.0
    %v3273 = vadd.f32 %v3271, %v3272
    %v3274 = vsel %vm2504, %v3085, 0.0
    %v3275 = vadd.f32 %v3273, %v3274
    %v3276 = vsel %vm2504, %v3086, 0.0
    %v3277 = vadd.f32 %v3275, %v3276
    %v3278 = vsel %vm2504, %v3087, 0.0
    %v3279 = vadd.f32 %v3277, %v3278
    %v3280 = vsel %vm2504, %v3088, 0.0
    %v3281 = vadd.f32 %v3279, %v3280
    %v3282 = vsel %vm2504, %v3089, 0.0
    %v3283 = vadd.f32 %v3281, %v3282
    %v3284 = vsel %vm2504, %v3090, 0.0
    %v3285 = vadd.f32 %v3283, %v3284
    %v3286 = vsel %vm2504, %v3091, 0.0
    %v3287 = vadd.f32 %v3285, %v3286
    %v3288 = vsel %vm2504, %v3092, 0.0
    %v3289 = vadd.f32 %v3287, %v3288
    %v3290 = vsel %vm2504, %v3093, 0.0
    %v3291 = vadd.f32 %v3289, %v3290
    %v3292 = vsel %vm2504, %v3094, 0.0
    %v3293 = vadd.f32 %v3291, %v3292
    %v3294 = vsel %vm2504, %v3095, 0.0
    %v3295 = vadd.f32 %v3293, %v3294
    %v3296 = vsel %vm2504, %v3096, 0.0
    %v3297 = vadd.f32 %v3295, %v3296
    %v3298 = vsel %vm2504, %v3097, 0.0
    %v3299 = vadd.f32 %v3297, %v3298
    %v3300 = vsel %vm2504, %v3098, 0.0
    %v3301 = vadd.f32 %v3299, %v3300
    %v3302 = vsel %vm2504, %v3099, 0.0
    %v3303 = vadd.f32 %v3301, %v3302
    %v3304 = vsel %vm2504, %v3100, 0.0
    %v3305 = vadd.f32 %v3303, %v3304
    %v3306 = vsel %vm2504, %v3101, 0.0
    %v3307 = vadd.f32 %v3305, %v3306
    %v3308 = vsel %vm2504, %v3102, 0.0
    %v3309 = vadd.f32 %v3307, %v3308
    %v3310 = vsel %vm2504, %v3103, 0.0
    %v3311 = vadd.f32 %v3309, %v3310
    %v3312 = vsel %vm2504, %v3104, 0.0
    %v3313 = vadd.f32 %v3311, %v3312
    %v3314 = vsel %vm2504, %v3105, 0.0
    %v3315 = vadd.f32 %v3313, %v3314
    %v3316 = vsel %vm2504, %v3106, 0.0
    %v3317 = vadd.f32 %v3315, %v3316
    %v3318 = vsel %vm2504, %v3107, 0.0
    %v3319 = vadd.f32 %v3317, %v3318
    %v3320 = vsel %vm2504, %v3108, 0.0
    %v3321 = vadd.f32 %v3319, %v3320
    %v3322 = vsel %vm2504, %v3109, 0.0
    %v3323 = vadd.f32 %v3321, %v3322
    %v3324 = vsel %vm2504, %v3110, 0.0
    %v3325 = vadd.f32 %v3323, %v3324
    %v3326 = vsel %vm2504, %v3111, 0.0
    %v3327 = vadd.f32 %v3325, %v3326
    %v3328 = vsel %vm2504, %v3112, 0.0
    %v3329 = vadd.f32 %v3327, %v3328
    %v3330 = vsel %vm2504, %v3113, 0.0
    %v3331 = vadd.f32 %v3329, %v3330
    %v3332 = vsel %vm2504, %v3114, 0.0
    %v3333 = vadd.f32 %v3331, %v3332
    %v3334 = vsel %vm2504, %v3115, 0.0
    %v3335 = vadd.f32 %v3333, %v3334
    %v3336 = vsel %vm2504, %v3116, 0.0
    %v3337 = vadd.f32 %v3335, %v3336
    %v3338 = vsel %vm2504, %v3117, 0.0
    %v3339 = vadd.f32 %v3337, %v3338
    %v3340 = vsel %vm2504, %v3118, 0.0
    %v3341 = vadd.f32 %v3339, %v3340
    %v3342 = vsel %vm2504, %v3119, 0.0
    %v3343 = vadd.f32 %v3341, %v3342
    %v3344 = vsel %vm2504, %v3120, 0.0
    %v3345 = vadd.f32 %v3343, %v3344
    %v3346 = vsel %vm2504, %v3121, 0.0
    %v3347 = vadd.f32 %v3345, %v3346
    %v3348 = vsel %vm2504, %v3122, 0.0
    %v3349 = vadd.f32 %v3347, %v3348
    %v3350 = vsel %vm2504, %v3123, 0.0
    %v3351 = vadd.f32 %v3349, %v3350
    %v3352 = vsel %vm2504, %v3124, 0.0
    %v3353 = vadd.f32 %v3351, %v3352
    %v3354 = vsel %vm2504, %v3125, 0.0
    %v3355 = vadd.f32 %v3353, %v3354
    %v3356 = vsel %vm2504, %v3126, 0.0
    %v3357 = vadd.f32 %v3355, %v3356
    %v3358 = vsel %vm2504, %v3127, 0.0
    %v3359 = vadd.f32 %v3357, %v3358
    %v3360 = vsel %vm2504, %v3128, 0.0
    %v3361 = vadd.f32 %v3359, %v3360
    %v3362 = vsel %vm2504, %v3129, 0.0
    %v3363 = vadd.f32 %v3361, %v3362
    %v3364 = vsel %vm2504, %v3130, 0.0
    %v3365 = vadd.f32 %v3363, %v3364
    %v3366 = vsel %vm2504, %v3131, 0.0
    %v3367 = vadd.f32 %v3365, %v3366
    %v3368 = vsel %vm2504, %v3132, 0.0
    %v3369 = vadd.f32 %v3367, %v3368
    %v3370 = vsel %vm2504, %v3133, 0.0
    %v3371 = vadd.f32 %v3369, %v3370
    %v3372 = vsel %vm2504, %v3134, 0.0
    %v3373 = vadd.f32 %v3371, %v3372
    %v3374 = vsel %vm2504, %v3135, 0.0
    %v3375 = vadd.f32 %v3373, %v3374
    %v3376 = vsel %vm2504, %v3136, 0.0
    %v3377 = vadd.f32 %v3375, %v3376
    %v3378 = vsel %vm2504, %v3137, 0.0
    %v3379 = vadd.f32 %v3377, %v3378
    %v3380 = vsel %vm2504, %v3138, 0.0
    %v3381 = vadd.f32 %v3379, %v3380
    %v3382 = vsel %vm2504, %v3139, 0.0
    %v3383 = vadd.f32 %v3381, %v3382
    %v3384 = vsel %vm2504, %v3140, 0.0
    %v3385 = vadd.f32 %v3383, %v3384
    %v3386 = vsel %vm2504, %v3141, 0.0
    %v3387 = vadd.f32 %v3385, %v3386
    %v3388 = vsel %vm2504, %v3142, 0.0
    %v3389 = vadd.f32 %v3387, %v3388
    %v3390 = vsel %vm2504, %v3143, 0.0
    %v3391 = vadd.f32 %v3389, %v3390
    %v3392 = vsel %vm2504, %v3144, 0.0
    %v3393 = vadd.f32 %v3391, %v3392
    %v3394 = vsel %vm2504, %v3145, 0.0
    %v3395 = vadd.f32 %v3393, %v3394
    %v3396 = vsel %vm2504, %v3146, 0.0
    %v3397 = vadd.f32 %v3395, %v3396
    %v3398 = vsel %vm2504, %v3147, 0.0
    %v3399 = vadd.f32 %v3397, %v3398
    %v3400 = vsel %vm2504, %v3148, 0.0
    %v3401 = vadd.f32 %v3399, %v3400
    %v3402 = vsel %vm2504, %v3149, 0.0
    %v3403 = vadd.f32 %v3401, %v3402
    %v3404 = vsel %vm2504, %v3150, 0.0
    %v3405 = vadd.f32 %v3403, %v3404
    %v3406 = vrot.slane %v3405, 4
    %v3407 = vadd.f32 %v3405, %v3406
    %v3408 = vrot.slane %v3407, 2
    %v3409 = vadd.f32 %v3407, %v3408
    %v3410 = vrot.slane %v3409, 1
    %v3411 = vadd.f32 %v3409, %v3410
    %v3412 = vmul.f32 %v3411, 0.0009765625
    %v3413 = vadd.f32 %v3412, 1e-05
    %v3414 = vrsqrt.pop %v3413
    %v3415 = vld [vmem:[%s6] sm:$0x1]
    %v3416 = vmul.f32 %v3415, %v3414
    %v3418 = vlaneseq
    %v3419 = vshrl.u32 %v3418, 7
    %v3420 = vsub.s32 0, %v3419
    %v3421 = vrot.slane %v3416, %v3420
    %v3423 = vmul.f32 %v2895, %v3421
    %v3424 = vmul.f32 %v2896, %v3421
    %v3425 = vmul.f32 %v2897, %v3421
    %v3426 = vmul.f32 %v2898, %v3421
    %v3427 = vmul.f32 %v2899, %v3421
    %v3428 = vmul.f32 %v2900, %v3421
    %v3429 = vmul.f32 %v2901, %v3421
    %v3430 = vmul.f32 %v2902, %v3421
    %v3431 = vmul.f32 %v2903, %v3421
    %v3432 = vmul.f32 %v2904, %v3421
    %v3433 = vmul.f32 %v2905, %v3421
    %v3434 = vmul.f32 %v2906, %v3421
    %v3435 = vmul.f32 %v2907, %v3421
    %v3436 = vmul.f32 %v2908, %v3421
    %v3437 = vmul.f32 %v2909, %v3421
    %v3438 = vmul.f32 %v2910, %v3421
    %v3439 = vmul.f32 %v2911, %v3421
    %v3440 = vmul.f32 %v2912, %v3421
    %v3441 = vmul.f32 %v2913, %v3421
    %v3442 = vmul.f32 %v2914, %v3421
    %v3443 = vmul.f32 %v2915, %v3421
    %v3444 = vmul.f32 %v2916, %v3421
    %v3445 = vmul.f32 %v2917, %v3421
    %v3446 = vmul.f32 %v2918, %v3421
    %v3447 = vmul.f32 %v2919, %v3421
    %v3448 = vmul.f32 %v2920, %v3421
    %v3449 = vmul.f32 %v2921, %v3421
    %v3450 = vmul.f32 %v2922, %v3421
    %v3451 = vmul.f32 %v2923, %v3421
    %v3452 = vmul.f32 %v2924, %v3421
    %v3453 = vmul.f32 %v2925, %v3421
    %v3454 = vmul.f32 %v2926, %v3421
    %v3455 = vmul.f32 %v2927, %v3421
    %v3456 = vmul.f32 %v2928, %v3421
    %v3457 = vmul.f32 %v2929, %v3421
    %v3458 = vmul.f32 %v2930, %v3421
    %v3459 = vmul.f32 %v2931, %v3421
    %v3460 = vmul.f32 %v2932, %v3421
    %v3461 = vmul.f32 %v2933, %v3421
    %v3462 = vmul.f32 %v2934, %v3421
    %v3463 = vmul.f32 %v2935, %v3421
    %v3464 = vmul.f32 %v2936, %v3421
    %v3465 = vmul.f32 %v2937, %v3421
    %v3466 = vmul.f32 %v2938, %v3421
    %v3467 = vmul.f32 %v2939, %v3421
    %v3468 = vmul.f32 %v2940, %v3421
    %v3469 = vmul.f32 %v2941, %v3421
    %v3470 = vmul.f32 %v2942, %v3421
    %v3471 = vmul.f32 %v2943, %v3421
    %v3472 = vmul.f32 %v2944, %v3421
    %v3473 = vmul.f32 %v2945, %v3421
    %v3474 = vmul.f32 %v2946, %v3421
    %v3475 = vmul.f32 %v2947, %v3421
    %v3476 = vmul.f32 %v2948, %v3421
    %v3477 = vmul.f32 %v2949, %v3421
    %v3478 = vmul.f32 %v2950, %v3421
    %v3479 = vmul.f32 %v2951, %v3421
    %v3480 = vmul.f32 %v2952, %v3421
    %v3481 = vmul.f32 %v2953, %v3421
    %v3482 = vmul.f32 %v2954, %v3421
    %v3483 = vmul.f32 %v2955, %v3421
    %v3484 = vmul.f32 %v2956, %v3421
    %v3485 = vmul.f32 %v2957, %v3421
    %v3486 = vmul.f32 %v2958, %v3421
    %v3487 = vmul.f32 %v2959, %v3421
    %v3488 = vmul.f32 %v2960, %v3421
    %v3489 = vmul.f32 %v2961, %v3421
    %v3490 = vmul.f32 %v2962, %v3421
    %v3491 = vmul.f32 %v2963, %v3421
    %v3492 = vmul.f32 %v2964, %v3421
    %v3493 = vmul.f32 %v2965, %v3421
    %v3494 = vmul.f32 %v2966, %v3421
    %v3495 = vmul.f32 %v2967, %v3421
    %v3496 = vmul.f32 %v2968, %v3421
    %v3497 = vmul.f32 %v2969, %v3421
    %v3498 = vmul.f32 %v2970, %v3421
    %v3499 = vmul.f32 %v2971, %v3421
    %v3500 = vmul.f32 %v2972, %v3421
    %v3501 = vmul.f32 %v2973, %v3421
    %v3502 = vmul.f32 %v2974, %v3421
    %v3503 = vmul.f32 %v2975, %v3421
    %v3504 = vmul.f32 %v2976, %v3421
    %v3505 = vmul.f32 %v2977, %v3421
    %v3506 = vmul.f32 %v2978, %v3421
    %v3507 = vmul.f32 %v2979, %v3421
    %v3508 = vmul.f32 %v2980, %v3421
    %v3509 = vmul.f32 %v2981, %v3421
    %v3510 = vmul.f32 %v2982, %v3421
    %v3511 = vmul.f32 %v2983, %v3421
    %v3512 = vmul.f32 %v2984, %v3421
    %v3513 = vmul.f32 %v2985, %v3421
    %v3514 = vmul.f32 %v2986, %v3421
    %v3515 = vmul.f32 %v2987, %v3421
    %v3516 = vmul.f32 %v2988, %v3421
    %v3517 = vmul.f32 %v2989, %v3421
    %v3518 = vmul.f32 %v2990, %v3421
    %v3519 = vmul.f32 %v2991, %v3421
    %v3520 = vmul.f32 %v2992, %v3421
    %v3521 = vmul.f32 %v2993, %v3421
    %v3522 = vmul.f32 %v2994, %v3421
    %v3523 = vmul.f32 %v2995, %v3421
    %v3524 = vmul.f32 %v2996, %v3421
    %v3525 = vmul.f32 %v2997, %v3421
    %v3526 = vmul.f32 %v2998, %v3421
    %v3527 = vmul.f32 %v2999, %v3421
    %v3528 = vmul.f32 %v3000, %v3421
    %v3529 = vmul.f32 %v3001, %v3421
    %v3530 = vmul.f32 %v3002, %v3421
    %v3531 = vmul.f32 %v3003, %v3421
    %v3532 = vmul.f32 %v3004, %v3421
    %v3533 = vmul.f32 %v3005, %v3421
    %v3534 = vmul.f32 %v3006, %v3421
    %v3535 = vmul.f32 %v3007, %v3421
    %v3536 = vmul.f32 %v3008, %v3421
    %v3537 = vmul.f32 %v3009, %v3421
    %v3538 = vmul.f32 %v3010, %v3421
    %v3539 = vmul.f32 %v3011, %v3421
    %v3540 = vmul.f32 %v3012, %v3421
    %v3541 = vmul.f32 %v3013, %v3421
    %v3542 = vmul.f32 %v3014, %v3421
    %v3543 = vmul.f32 %v3015, %v3421
    %v3544 = vmul.f32 %v3016, %v3421
    %v3545 = vmul.f32 %v3017, %v3421
    %v3546 = vmul.f32 %v3018, %v3421
    %v3547 = vmul.f32 %v3019, %v3421
    %v3548 = vmul.f32 %v3020, %v3421
    %v3549 = vmul.f32 %v3021, %v3421
    %v3550 = vmul.f32 %v3022, %v3421
    %v3551 = vld [vmem:[%s7] sm:$0x1]
    %v3553 = vlaneseq
    %v3554 = vshrl.u32 %v3553, 7
    %v3555 = vsub.s32 0, %v3554
    %v3556 = vrot.slane %v3551, %v3555
    %v3558 = vadd.f32 %v3423, %v3556
    %v3559 = vadd.f32 %v3424, %v3556
    %v3560 = vadd.f32 %v3425, %v3556
    %v3561 = vadd.f32 %v3426, %v3556
    %v3562 = vadd.f32 %v3427, %v3556
    %v3563 = vadd.f32 %v3428, %v3556
    %v3564 = vadd.f32 %v3429, %v3556
    %v3565 = vadd.f32 %v3430, %v3556
    %v3566 = vadd.f32 %v3431, %v3556
    %v3567 = vadd.f32 %v3432, %v3556
    %v3568 = vadd.f32 %v3433, %v3556
    %v3569 = vadd.f32 %v3434, %v3556
    %v3570 = vadd.f32 %v3435, %v3556
    %v3571 = vadd.f32 %v3436, %v3556
    %v3572 = vadd.f32 %v3437, %v3556
    %v3573 = vadd.f32 %v3438, %v3556
    %v3574 = vadd.f32 %v3439, %v3556
    %v3575 = vadd.f32 %v3440, %v3556
    %v3576 = vadd.f32 %v3441, %v3556
    %v3577 = vadd.f32 %v3442, %v3556
    %v3578 = vadd.f32 %v3443, %v3556
    %v3579 = vadd.f32 %v3444, %v3556
    %v3580 = vadd.f32 %v3445, %v3556
    %v3581 = vadd.f32 %v3446, %v3556
    %v3582 = vadd.f32 %v3447, %v3556
    %v3583 = vadd.f32 %v3448, %v3556
    %v3584 = vadd.f32 %v3449, %v3556
    %v3585 = vadd.f32 %v3450, %v3556
    %v3586 = vadd.f32 %v3451, %v3556
    %v3587 = vadd.f32 %v3452, %v3556
    %v3588 = vadd.f32 %v3453, %v3556
    %v3589 = vadd.f32 %v3454, %v3556
    %v3590 = vadd.f32 %v3455, %v3556
    %v3591 = vadd.f32 %v3456, %v3556
    %v3592 = vadd.f32 %v3457, %v3556
    %v3593 = vadd.f32 %v3458, %v3556
    %v3594 = vadd.f32 %v3459, %v3556
    %v3595 = vadd.f32 %v3460, %v3556
    %v3596 = vadd.f32 %v3461, %v3556
    %v3597 = vadd.f32 %v3462, %v3556
    %v3598 = vadd.f32 %v3463, %v3556
    %v3599 = vadd.f32 %v3464, %v3556
    %v3600 = vadd.f32 %v3465, %v3556
    %v3601 = vadd.f32 %v3466, %v3556
    %v3602 = vadd.f32 %v3467, %v3556
    %v3603 = vadd.f32 %v3468, %v3556
    %v3604 = vadd.f32 %v3469, %v3556
    %v3605 = vadd.f32 %v3470, %v3556
    %v3606 = vadd.f32 %v3471, %v3556
    %v3607 = vadd.f32 %v3472, %v3556
    %v3608 = vadd.f32 %v3473, %v3556
    %v3609 = vadd.f32 %v3474, %v3556
    %v3610 = vadd.f32 %v3475, %v3556
    %v3611 = vadd.f32 %v3476, %v3556
    %v3612 = vadd.f32 %v3477, %v3556
    %v3613 = vadd.f32 %v3478, %v3556
    %v3614 = vadd.f32 %v3479, %v3556
    %v3615 = vadd.f32 %v3480, %v3556
    %v3616 = vadd.f32 %v3481, %v3556
    %v3617 = vadd.f32 %v3482, %v3556
    %v3618 = vadd.f32 %v3483, %v3556
    %v3619 = vadd.f32 %v3484, %v3556
    %v3620 = vadd.f32 %v3485, %v3556
    %v3621 = vadd.f32 %v3486, %v3556
    %v3622 = vadd.f32 %v3487, %v3556
    %v3623 = vadd.f32 %v3488, %v3556
    %v3624 = vadd.f32 %v3489, %v3556
    %v3625 = vadd.f32 %v3490, %v3556
    %v3626 = vadd.f32 %v3491, %v3556
    %v3627 = vadd.f32 %v3492, %v3556
    %v3628 = vadd.f32 %v3493, %v3556
    %v3629 = vadd.f32 %v3494, %v3556
    %v3630 = vadd.f32 %v3495, %v3556
    %v3631 = vadd.f32 %v3496, %v3556
    %v3632 = vadd.f32 %v3497, %v3556
    %v3633 = vadd.f32 %v3498, %v3556
    %v3634 = vadd.f32 %v3499, %v3556
    %v3635 = vadd.f32 %v3500, %v3556
    %v3636 = vadd.f32 %v3501, %v3556
    %v3637 = vadd.f32 %v3502, %v3556
    %v3638 = vadd.f32 %v3503, %v3556
    %v3639 = vadd.f32 %v3504, %v3556
    %v3640 = vadd.f32 %v3505, %v3556
    %v3641 = vadd.f32 %v3506, %v3556
    %v3642 = vadd.f32 %v3507, %v3556
    %v3643 = vadd.f32 %v3508, %v3556
    %v3644 = vadd.f32 %v3509, %v3556
    %v3645 = vadd.f32 %v3510, %v3556
    %v3646 = vadd.f32 %v3511, %v3556
    %v3647 = vadd.f32 %v3512, %v3556
    %v3648 = vadd.f32 %v3513, %v3556
    %v3649 = vadd.f32 %v3514, %v3556
    %v3650 = vadd.f32 %v3515, %v3556
    %v3651 = vadd.f32 %v3516, %v3556
    %v3652 = vadd.f32 %v3517, %v3556
    %v3653 = vadd.f32 %v3518, %v3556
    %v3654 = vadd.f32 %v3519, %v3556
    %v3655 = vadd.f32 %v3520, %v3556
    %v3656 = vadd.f32 %v3521, %v3556
    %v3657 = vadd.f32 %v3522, %v3556
    %v3658 = vadd.f32 %v3523, %v3556
    %v3659 = vadd.f32 %v3524, %v3556
    %v3660 = vadd.f32 %v3525, %v3556
    %v3661 = vadd.f32 %v3526, %v3556
    %v3662 = vadd.f32 %v3527, %v3556
    %v3663 = vadd.f32 %v3528, %v3556
    %v3664 = vadd.f32 %v3529, %v3556
    %v3665 = vadd.f32 %v3530, %v3556
    %v3666 = vadd.f32 %v3531, %v3556
    %v3667 = vadd.f32 %v3532, %v3556
    %v3668 = vadd.f32 %v3533, %v3556
    %v3669 = vadd.f32 %v3534, %v3556
    %v3670 = vadd.f32 %v3535, %v3556
    %v3671 = vadd.f32 %v3536, %v3556
    %v3672 = vadd.f32 %v3537, %v3556
    %v3673 = vadd.f32 %v3538, %v3556
    %v3674 = vadd.f32 %v3539, %v3556
    %v3675 = vadd.f32 %v3540, %v3556
    %v3676 = vadd.f32 %v3541, %v3556
    %v3677 = vadd.f32 %v3542, %v3556
    %v3678 = vadd.f32 %v3543, %v3556
    %v3679 = vadd.f32 %v3544, %v3556
    %v3680 = vadd.f32 %v3545, %v3556
    %v3681 = vadd.f32 %v3546, %v3556
    %v3682 = vadd.f32 %v3547, %v3556
    %v3683 = vadd.f32 %v3548, %v3556
    %v3684 = vadd.f32 %v3549, %v3556
    %v3685 = vadd.f32 %v3550, %v3556
    %v3686 = vmax.f32 %v3558, 0.0
    %v3687 = vmax.f32 %v3559, 0.0
    %v3688 = vmax.f32 %v3560, 0.0
    %v3689 = vmax.f32 %v3561, 0.0
    %v3690 = vmax.f32 %v3562, 0.0
    %v3691 = vmax.f32 %v3563, 0.0
    %v3692 = vmax.f32 %v3564, 0.0
    %v3693 = vmax.f32 %v3565, 0.0
    %v3694 = vmax.f32 %v3566, 0.0
    %v3695 = vmax.f32 %v3567, 0.0
    %v3696 = vmax.f32 %v3568, 0.0
    %v3697 = vmax.f32 %v3569, 0.0
    %v3698 = vmax.f32 %v3570, 0.0
    %v3699 = vmax.f32 %v3571, 0.0
    %v3700 = vmax.f32 %v3572, 0.0
    %v3701 = vmax.f32 %v3573, 0.0
    %v3702 = vmax.f32 %v3574, 0.0
    %v3703 = vmax.f32 %v3575, 0.0
    %v3704 = vmax.f32 %v3576, 0.0
    %v3705 = vmax.f32 %v3577, 0.0
    %v3706 = vmax.f32 %v3578, 0.0
    %v3707 = vmax.f32 %v3579, 0.0
    %v3708 = vmax.f32 %v3580, 0.0
    %v3709 = vmax.f32 %v3581, 0.0
    %v3710 = vmax.f32 %v3582, 0.0
    %v3711 = vmax.f32 %v3583, 0.0
    %v3712 = vmax.f32 %v3584, 0.0
    %v3713 = vmax.f32 %v3585, 0.0
    %v3714 = vmax.f32 %v3586, 0.0
    %v3715 = vmax.f32 %v3587, 0.0
    %v3716 = vmax.f32 %v3588, 0.0
    %v3717 = vmax.f32 %v3589, 0.0
    %v3718 = vmax.f32 %v3590, 0.0
    %v3719 = vmax.f32 %v3591, 0.0
    %v3720 = vmax.f32 %v3592, 0.0
    %v3721 = vmax.f32 %v3593, 0.0
    %v3722 = vmax.f32 %v3594, 0.0
    %v3723 = vmax.f32 %v3595, 0.0
    %v3724 = vmax.f32 %v3596, 0.0
    %v3725 = vmax.f32 %v3597, 0.0
    %v3726 = vmax.f32 %v3598, 0.0
    %v3727 = vmax.f32 %v3599, 0.0
    %v3728 = vmax.f32 %v3600, 0.0
    %v3729 = vmax.f32 %v3601, 0.0
    %v3730 = vmax.f32 %v3602, 0.0
    %v3731 = vmax.f32 %v3603, 0.0
    %v3732 = vmax.f32 %v3604, 0.0
    %v3733 = vmax.f32 %v3605, 0.0
    %v3734 = vmax.f32 %v3606, 0.0
    %v3735 = vmax.f32 %v3607, 0.0
    %v3736 = vmax.f32 %v3608, 0.0
    %v3737 = vmax.f32 %v3609, 0.0
    %v3738 = vmax.f32 %v3610, 0.0
    %v3739 = vmax.f32 %v3611, 0.0
    %v3740 = vmax.f32 %v3612, 0.0
    %v3741 = vmax.f32 %v3613, 0.0
    %v3742 = vmax.f32 %v3614, 0.0
    %v3743 = vmax.f32 %v3615, 0.0
    %v3744 = vmax.f32 %v3616, 0.0
    %v3745 = vmax.f32 %v3617, 0.0
    %v3746 = vmax.f32 %v3618, 0.0
    %v3747 = vmax.f32 %v3619, 0.0
    %v3748 = vmax.f32 %v3620, 0.0
    %v3749 = vmax.f32 %v3621, 0.0
    %v3750 = vmax.f32 %v3622, 0.0
    %v3751 = vmax.f32 %v3623, 0.0
    %v3752 = vmax.f32 %v3624, 0.0
    %v3753 = vmax.f32 %v3625, 0.0
    %v3754 = vmax.f32 %v3626, 0.0
    %v3755 = vmax.f32 %v3627, 0.0
    %v3756 = vmax.f32 %v3628, 0.0
    %v3757 = vmax.f32 %v3629, 0.0
    %v3758 = vmax.f32 %v3630, 0.0
    %v3759 = vmax.f32 %v3631, 0.0
    %v3760 = vmax.f32 %v3632, 0.0
    %v3761 = vmax.f32 %v3633, 0.0
    %v3762 = vmax.f32 %v3634, 0.0
    %v3763 = vmax.f32 %v3635, 0.0
    %v3764 = vmax.f32 %v3636, 0.0
    %v3765 = vmax.f32 %v3637, 0.0
    %v3766 = vmax.f32 %v3638, 0.0
    %v3767 = vmax.f32 %v3639, 0.0
    %v3768 = vmax.f32 %v3640, 0.0
    %v3769 = vmax.f32 %v3641, 0.0
    %v3770 = vmax.f32 %v3642, 0.0
    %v3771 = vmax.f32 %v3643, 0.0
    %v3772 = vmax.f32 %v3644, 0.0
    %v3773 = vmax.f32 %v3645, 0.0
    %v3774 = vmax.f32 %v3646, 0.0
    %v3775 = vmax.f32 %v3647, 0.0
    %v3776 = vmax.f32 %v3648, 0.0
    %v3777 = vmax.f32 %v3649, 0.0
    %v3778 = vmax.f32 %v3650, 0.0
    %v3779 = vmax.f32 %v3651, 0.0
    %v3780 = vmax.f32 %v3652, 0.0
    %v3781 = vmax.f32 %v3653, 0.0
    %v3782 = vmax.f32 %v3654, 0.0
    %v3783 = vmax.f32 %v3655, 0.0
    %v3784 = vmax.f32 %v3656, 0.0
    %v3785 = vmax.f32 %v3657, 0.0
    %v3786 = vmax.f32 %v3658, 0.0
    %v3787 = vmax.f32 %v3659, 0.0
    %v3788 = vmax.f32 %v3660, 0.0
    %v3789 = vmax.f32 %v3661, 0.0
    %v3790 = vmax.f32 %v3662, 0.0
    %v3791 = vmax.f32 %v3663, 0.0
    %v3792 = vmax.f32 %v3664, 0.0
    %v3793 = vmax.f32 %v3665, 0.0
    %v3794 = vmax.f32 %v3666, 0.0
    %v3795 = vmax.f32 %v3667, 0.0
    %v3796 = vmax.f32 %v3668, 0.0
    %v3797 = vmax.f32 %v3669, 0.0
    %v3798 = vmax.f32 %v3670, 0.0
    %v3799 = vmax.f32 %v3671, 0.0
    %v3800 = vmax.f32 %v3672, 0.0
    %v3801 = vmax.f32 %v3673, 0.0
    %v3802 = vmax.f32 %v3674, 0.0
    %v3803 = vmax.f32 %v3675, 0.0
    %v3804 = vmax.f32 %v3676, 0.0
    %v3805 = vmax.f32 %v3677, 0.0
    %v3806 = vmax.f32 %v3678, 0.0
    %v3807 = vmax.f32 %v3679, 0.0
    %v3808 = vmax.f32 %v3680, 0.0
    %v3809 = vmax.f32 %v3681, 0.0
    %v3810 = vmax.f32 %v3682, 0.0
    %v3811 = vmax.f32 %v3683, 0.0
    %v3812 = vmax.f32 %v3684, 0.0
    %v3813 = vmax.f32 %v3685, 0.0
    %3814 = vst.msk [vmem:[%s8] sm:$0xff] %vm2504, %v3686
    %3815 = vst.msk [vmem:[%s8 + $0x8] sm:$0xff] %vm2504, %v3687
    %3816 = vst.msk [vmem:[%s8 + $0x10] sm:$0xff] %vm2504, %v3688
    %3817 = vst.msk [vmem:[%s8 + $0x18] sm:$0xff] %vm2504, %v3689
    %3818 = vst.msk [vmem:[%s8 + $0x20] sm:$0xff] %vm2504, %v3690
    %3819 = vst.msk [vmem:[%s8 + $0x28] sm:$0xff] %vm2504, %v3691
    %3820 = vst.msk [vmem:[%s8 + $0x30] sm:$0xff] %vm2504, %v3692
    %3821 = vst.msk [vmem:[%s8 + $0x38] sm:$0xff] %vm2504, %v3693
    %3822 = vst.msk [vmem:[%s8 + $0x40] sm:$0xff] %vm2504, %v3694
    %3823 = vst.msk [vmem:[%s8 + $0x48] sm:$0xff] %vm2504, %v3695
    %3824 = vst.msk [vmem:[%s8 + $0x50] sm:$0xff] %vm2504, %v3696
    %3825 = vst.msk [vmem:[%s8 + $0x58] sm:$0xff] %vm2504, %v3697
    %3826 = vst.msk [vmem:[%s8 + $0x60] sm:$0xff] %vm2504, %v3698
    %3827 = vst.msk [vmem:[%s8 + $0x68] sm:$0xff] %vm2504, %v3699
    %3828 = vst.msk [vmem:[%s8 + $0x70] sm:$0xff] %vm2504, %v3700
    %3829 = vst.msk [vmem:[%s8 + $0x78] sm:$0xff] %vm2504, %v3701
    %3830 = vst.msk [vmem:[%s8 + $0x80] sm:$0xff] %vm2504, %v3702
    %3831 = vst.msk [vmem:[%s8 + $0x88] sm:$0xff] %vm2504, %v3703
    %3832 = vst.msk [vmem:[%s8 + $0x90] sm:$0xff] %vm2504, %v3704
    %3833 = vst.msk [vmem:[%s8 + $0x98] sm:$0xff] %vm2504, %v3705
    %3834 = vst.msk [vmem:[%s8 + $0xa0] sm:$0xff] %vm2504, %v3706
    %3835 = vst.msk [vmem:[%s8 + $0xa8] sm:$0xff] %vm2504, %v3707
    %3836 = vst.msk [vmem:[%s8 + $0xb0] sm:$0xff] %vm2504, %v3708
    %3837 = vst.msk [vmem:[%s8 + $0xb8] sm:$0xff] %vm2504, %v3709
    %3838 = vst.msk [vmem:[%s8 + $0xc0] sm:$0xff] %vm2504, %v3710
    %3839 = vst.msk [vmem:[%s8 + $0xc8] sm:$0xff] %vm2504, %v3711
    %3840 = vst.msk [vmem:[%s8 + $0xd0] sm:$0xff] %vm2504, %v3712
    %3841 = vst.msk [vmem:[%s8 + $0xd8] sm:$0xff] %vm2504, %v3713
    %3842 = vst.msk [vmem:[%s8 + $0xe0] sm:$0xff] %vm2504, %v3714
    %3843 = vst.msk [vmem:[%s8 + $0xe8] sm:$0xff] %vm2504, %v3715
    %3844 = vst.msk [vmem:[%s8 + $0xf0] sm:$0xff] %vm2504, %v3716
    %3845 = vst.msk [vmem:[%s8 + $0xf8] sm:$0xff] %vm2504, %v3717
    %3846 = vst.msk [vmem:[%s8 + $0x100] sm:$0xff] %vm2504, %v3718
    %3847 = vst.msk [vmem:[%s8 + $0x108] sm:$0xff] %vm2504, %v3719
    %3848 = vst.msk [vmem:[%s8 + $0x110] sm:$0xff] %vm2504, %v3720
    %3849 = vst.msk [vmem:[%s8 + $0x118] sm:$0xff] %vm2504, %v3721
    %3850 = vst.msk [vmem:[%s8 + $0x120] sm:$0xff] %vm2504, %v3722
    %3851 = vst.msk [vmem:[%s8 + $0x128] sm:$0xff] %vm2504, %v3723
    %3852 = vst.msk [vmem:[%s8 + $0x130] sm:$0xff] %vm2504, %v3724
    %3853 = vst.msk [vmem:[%s8 + $0x138] sm:$0xff] %vm2504, %v3725
    %3854 = vst.msk [vmem:[%s8 + $0x140] sm:$0xff] %vm2504, %v3726
    %3855 = vst.msk [vmem:[%s8 + $0x148] sm:$0xff] %vm2504, %v3727
    %3856 = vst.msk [vmem:[%s8 + $0x150] sm:$0xff] %vm2504, %v3728
    %3857 = vst.msk [vmem:[%s8 + $0x158] sm:$0xff] %vm2504, %v3729
    %3858 = vst.msk [vmem:[%s8 + $0x160] sm:$0xff] %vm2504, %v3730
    %3859 = vst.msk [vmem:[%s8 + $0x168] sm:$0xff] %vm2504, %v3731
    %3860 = vst.msk [vmem:[%s8 + $0x170] sm:$0xff] %vm2504, %v3732
    %3861 = vst.msk [vmem:[%s8 + $0x178] sm:$0xff] %vm2504, %v3733
    %3862 = vst.msk [vmem:[%s8 + $0x180] sm:$0xff] %vm2504, %v3734
    %3863 = vst.msk [vmem:[%s8 + $0x188] sm:$0xff] %vm2504, %v3735
    %3864 = vst.msk [vmem:[%s8 + $0x190] sm:$0xff] %vm2504, %v3736
    %3865 = vst.msk [vmem:[%s8 + $0x198] sm:$0xff] %vm2504, %v3737
    %3866 = vst.msk [vmem:[%s8 + $0x1a0] sm:$0xff] %vm2504, %v3738
    %3867 = vst.msk [vmem:[%s8 + $0x1a8] sm:$0xff] %vm2504, %v3739
    %3868 = vst.msk [vmem:[%s8 + $0x1b0] sm:$0xff] %vm2504, %v3740
    %3869 = vst.msk [vmem:[%s8 + $0x1b8] sm:$0xff] %vm2504, %v3741
    %3870 = vst.msk [vmem:[%s8 + $0x1c0] sm:$0xff] %vm2504, %v3742
    %3871 = vst.msk [vmem:[%s8 + $0x1c8] sm:$0xff] %vm2504, %v3743
    %3872 = vst.msk [vmem:[%s8 + $0x1d0] sm:$0xff] %vm2504, %v3744
    %3873 = vst.msk [vmem:[%s8 + $0x1d8] sm:$0xff] %vm2504, %v3745
    %3874 = vst.msk [vmem:[%s8 + $0x1e0] sm:$0xff] %vm2504, %v3746
    %3875 = vst.msk [vmem:[%s8 + $0x1e8] sm:$0xff] %vm2504, %v3747
    %3876 = vst.msk [vmem:[%s8 + $0x1f0] sm:$0xff] %vm2504, %v3748
    %3877 = vst.msk [vmem:[%s8 + $0x1f8] sm:$0xff] %vm2504, %v3749
    %3878 = vst.msk [vmem:[%s8 + $0x200] sm:$0xff] %vm2504, %v3750
    %3879 = vst.msk [vmem:[%s8 + $0x208] sm:$0xff] %vm2504, %v3751
    %3880 = vst.msk [vmem:[%s8 + $0x210] sm:$0xff] %vm2504, %v3752
    %3881 = vst.msk [vmem:[%s8 + $0x218] sm:$0xff] %vm2504, %v3753
    %3882 = vst.msk [vmem:[%s8 + $0x220] sm:$0xff] %vm2504, %v3754
    %3883 = vst.msk [vmem:[%s8 + $0x228] sm:$0xff] %vm2504, %v3755
    %3884 = vst.msk [vmem:[%s8 + $0x230] sm:$0xff] %vm2504, %v3756
    %3885 = vst.msk [vmem:[%s8 + $0x238] sm:$0xff] %vm2504, %v3757
    %3886 = vst.msk [vmem:[%s8 + $0x240] sm:$0xff] %vm2504, %v3758
    %3887 = vst.msk [vmem:[%s8 + $0x248] sm:$0xff] %vm2504, %v3759
    %3888 = vst.msk [vmem:[%s8 + $0x250] sm:$0xff] %vm2504, %v3760
    %3889 = vst.msk [vmem:[%s8 + $0x258] sm:$0xff] %vm2504, %v3761
    %3890 = vst.msk [vmem:[%s8 + $0x260] sm:$0xff] %vm2504, %v3762
    %3891 = vst.msk [vmem:[%s8 + $0x268] sm:$0xff] %vm2504, %v3763
    %3892 = vst.msk [vmem:[%s8 + $0x270] sm:$0xff] %vm2504, %v3764
    %3893 = vst.msk [vmem:[%s8 + $0x278] sm:$0xff] %vm2504, %v3765
    %3894 = vst.msk [vmem:[%s8 + $0x280] sm:$0xff] %vm2504, %v3766
    %3895 = vst.msk [vmem:[%s8 + $0x288] sm:$0xff] %vm2504, %v3767
    %3896 = vst.msk [vmem:[%s8 + $0x290] sm:$0xff] %vm2504, %v3768
    %3897 = vst.msk [vmem:[%s8 + $0x298] sm:$0xff] %vm2504, %v3769
    %3898 = vst.msk [vmem:[%s8 + $0x2a0] sm:$0xff] %vm2504, %v3770
    %3899 = vst.msk [vmem:[%s8 + $0x2a8] sm:$0xff] %vm2504, %v3771
    %3900 = vst.msk [vmem:[%s8 + $0x2b0] sm:$0xff] %vm2504, %v3772
    %3901 = vst.msk [vmem:[%s8 + $0x2b8] sm:$0xff] %vm2504, %v3773
    %3902 = vst.msk [vmem:[%s8 + $0x2c0] sm:$0xff] %vm2504, %v3774
    %3903 = vst.msk [vmem:[%s8 + $0x2c8] sm:$0xff] %vm2504, %v3775
    %3904 = vst.msk [vmem:[%s8 + $0x2d0] sm:$0xff] %vm2504, %v3776
    %3905 = vst.msk [vmem:[%s8 + $0x2d8] sm:$0xff] %vm2504, %v3777
    %3906 = vst.msk [vmem:[%s8 + $0x2e0] sm:$0xff] %vm2504, %v3778
    %3907 = vst.msk [vmem:[%s8 + $0x2e8] sm:$0xff] %vm2504, %v3779
    %3908 = vst.msk [vmem:[%s8 + $0x2f0] sm:$0xff] %vm2504, %v3780
    %3909 = vst.msk [vmem:[%s8 + $0x2f8] sm:$0xff] %vm2504, %v3781
    %3910 = vst.msk [vmem:[%s8 + $0x300] sm:$0xff] %vm2504, %v3782
    %3911 = vst.msk [vmem:[%s8 + $0x308] sm:$0xff] %vm2504, %v3783
    %3912 = vst.msk [vmem:[%s8 + $0x310] sm:$0xff] %vm2504, %v3784
    %3913 = vst.msk [vmem:[%s8 + $0x318] sm:$0xff] %vm2504, %v3785
    %3914 = vst.msk [vmem:[%s8 + $0x320] sm:$0xff] %vm2504, %v3786
    %3915 = vst.msk [vmem:[%s8 + $0x328] sm:$0xff] %vm2504, %v3787
    %3916 = vst.msk [vmem:[%s8 + $0x330] sm:$0xff] %vm2504, %v3788
    %3917 = vst.msk [vmem:[%s8 + $0x338] sm:$0xff] %vm2504, %v3789
    %3918 = vst.msk [vmem:[%s8 + $0x340] sm:$0xff] %vm2504, %v3790
    %3919 = vst.msk [vmem:[%s8 + $0x348] sm:$0xff] %vm2504, %v3791
    %3920 = vst.msk [vmem:[%s8 + $0x350] sm:$0xff] %vm2504, %v3792
    %3921 = vst.msk [vmem:[%s8 + $0x358] sm:$0xff] %vm2504, %v3793
    %3922 = vst.msk [vmem:[%s8 + $0x360] sm:$0xff] %vm2504, %v3794
    %3923 = vst.msk [vmem:[%s8 + $0x368] sm:$0xff] %vm2504, %v3795
    %3924 = vst.msk [vmem:[%s8 + $0x370] sm:$0xff] %vm2504, %v3796
    %3925 = vst.msk [vmem:[%s8 + $0x378] sm:$0xff] %vm2504, %v3797
    %3926 = vst.msk [vmem:[%s8 + $0x380] sm:$0xff] %vm2504, %v3798
    %3927 = vst.msk [vmem:[%s8 + $0x388] sm:$0xff] %vm2504, %v3799
    %3928 = vst.msk [vmem:[%s8 + $0x390] sm:$0xff] %vm2504, %v3800
    %3929 = vst.msk [vmem:[%s8 + $0x398] sm:$0xff] %vm2504, %v3801
    %3930 = vst.msk [vmem:[%s8 + $0x3a0] sm:$0xff] %vm2504, %v3802
    %3931 = vst.msk [vmem:[%s8 + $0x3a8] sm:$0xff] %vm2504, %v3803
    %3932 = vst.msk [vmem:[%s8 + $0x3b0] sm:$0xff] %vm2504, %v3804
    %3933 = vst.msk [vmem:[%s8 + $0x3b8] sm:$0xff] %vm2504, %v3805
    %3934 = vst.msk [vmem:[%s8 + $0x3c0] sm:$0xff] %vm2504, %v3806
    %3935 = vst.msk [vmem:[%s8 + $0x3c8] sm:$0xff] %vm2504, %v3807
    %3936 = vst.msk [vmem:[%s8 + $0x3d0] sm:$0xff] %vm2504, %v3808
    %3937 = vst.msk [vmem:[%s8 + $0x3d8] sm:$0xff] %vm2504, %v3809
    %3938 = vst.msk [vmem:[%s8 + $0x3e0] sm:$0xff] %vm2504, %v3810
    %3939 = vst.msk [vmem:[%s8 + $0x3e8] sm:$0xff] %vm2504, %v3811
    %3940 = vst.msk [vmem:[%s8 + $0x3f0] sm:$0xff] %vm2504, %v3812
    %3941 = vst.msk [vmem:[%s8 + $0x3f8] sm:$0xff] %vm2504, %v3813
    // Predicated region
    $region34: #{residual_block_3d.2} parent=1 // pred_check
      _
    $region35: #{residual_block_3d.2} parent=1 // pred_check_branch
      %3943 = sbr.rel (0) target = $region37
    $region36: #{residual_block_3d.2} parent=1 // pred_region
      _
    $region37: #{residual_block_3d.2} parent=1 // pred_fallthru
      _
    // Predicated region
    $region38: #{residual_block_3d.2} parent=1 // pred_check
      _
    $region39: #{residual_block_3d.2} parent=1 // pred_check_branch
      %3945 = sbr.rel (0) target = $region41
    $region40: #{residual_block_3d.2} parent=1 // pred_region
      %s3947 = ssub.s32 16384, 16384
      %3948 = vsyncadd [#allocation3], %s3947
      %s3949 = sshll.u32 [#allocation2], 4
      %s3950 = int_to_ptr.vmem [resolvable:$true] %s3949
      %3955 = dma.vmem_to_hbm [thread:$0]  %s3950, 16384, %s9, [#allocation3], 128, 128, 8
    $region41: #{residual_block_3d.2} parent=1 // pred_fallthru
      _
    // Predicated region
    $region42: #{residual_block_3d.2} parent=1 // pred_check
      _
    $region43: #{residual_block_3d.2} parent=1 // pred_check_branch
      %3957 = sbr.rel (0) target = $region45
    $region44: #{residual_block_3d.2} parent=1 // pred_region
      _
    $region45: #{residual_block_3d.2} parent=1 // pred_fallthru
      _
    // Predicated region
    $region46: #{residual_block_3d.2} parent=1 // pred_check
      _
    $region47: #{residual_block_3d.2} parent=1 // pred_check_branch
      %3959 = sbr.rel (0) target = $region49
    $region48: #{residual_block_3d.2} parent=1 // pred_region
      %3960 = dma.done [#allocation3], 16384
    $region49: #{residual_block_3d.2} parent=1 // pred_fallthru
      _
    %3961 = vsyncpa [#allocation3], 1

// kernel: residual_block_3d.3
$region0: #{residual_block_3d.3}
  #allocation0 [shape = 'u32[]', space=smem, size = 0x4, offset = 0x4, fixed_abs, tag = 'smem constant byte address 0x4 - core index']
  #allocation1 [shape = 'u32[144,128]{1,0:T(1,128)}', space=vmem, size = 0x12000, scoped, tag = 'internal scratch']
  %s0 = inlined_call_operand.vmem [shape: f32[1024,216], index: 0, kind: input, shape index: {}]
  %s1 = inlined_call_operand.vmem [shape: f32[216,8], index: 1, kind: input, shape index: {}]
  %s2 = inlined_call_operand.hbm [shape: f32[1,8], index: 2, kind: input, shape index: {}]
  %s3 = inlined_call_operand.hbm [shape: f32[1,8], index: 3, kind: input, shape index: {}]
  %s4 = inlined_call_operand.hbm [shape: f32[1,8], index: 4, kind: input, shape index: {}]
  %s5 = inlined_call_operand.hbm [shape: f32[1024,8], index: 5, kind: input, shape index: {}]
  %s6 = inlined_call_operand.vmem [shape: f32[1024,8], index: 6, kind: output, shape index: {}]
  %s7 = sld [smem:[#allocation0]]
  $region50: #{residual_block_3d.3} parent=0
    _
  %s9 = ssub.s32 1, %s7
  %s10 = scalar_select 0, %s9, %s7
  $region1: #{residual_block_3d.3} parent=0
    #allocation2 [shape = 'u8[512]{0}', space=vmem, size = 0x400, scoped, tag = 'input window, operand 2, single buffered']
    #allocation3 [shape = 's32[1]{0}', space=sflag, size = 0x4, scoped, tag = 'scoped memory for residual_block_3d.3']
    #allocation4 [shape = 'u8[512]{0}', space=vmem, size = 0x400, scoped, tag = 'input window, operand 3, single buffered']
    #allocation5 [shape = 's32[1]{0}', space=sflag, size = 0x4, scoped, tag = 'scoped memory for residual_block_3d.3']
    #allocation6 [shape = 'u8[512]{0}', space=vmem, size = 0x400, scoped, tag = 'input window, operand 4, single buffered']
    #allocation7 [shape = 'u8[524288]{0}', space=vmem, size = 0x80000, scoped, tag = 'input window, operand 5, single buffered']
    #allocation8 [shape = 's32[1]{0}', space=sflag, size = 0x4, scoped, tag = 'scoped memory for residual_block_3d.3']
    %11 = vsyncpa [#allocation3], 0
    %12 = vsyncpa [#allocation5], 0
    %13 = vsyncpa [#allocation8], 0
    // Predicated region
    $region2: #{residual_block_3d.3} parent=1 // pred_check
      _
    $region3: #{residual_block_3d.3} parent=1 // pred_check_branch
      %15 = sbr.rel (0) target = $region5
    $region4: #{residual_block_3d.3} parent=1 // pred_region
      _
    $region5: #{residual_block_3d.3} parent=1 // pred_fallthru
      _
    // Predicated region
    $region6: #{residual_block_3d.3} parent=1 // pred_check
      _
    $region7: #{residual_block_3d.3} parent=1 // pred_check_branch
      %17 = sbr.rel (0) target = $region9
    $region8: #{residual_block_3d.3} parent=1 // pred_region
      _
    $region9: #{residual_block_3d.3} parent=1 // pred_fallthru
      _
    // Predicated region
    $region10: #{residual_block_3d.3} parent=1 // pred_check
      _
    $region11: #{residual_block_3d.3} parent=1 // pred_check_branch
      %19 = sbr.rel (0) target = $region13
    $region12: #{residual_block_3d.3} parent=1 // pred_region
      %s21 = ssub.s32 16, 16
      %22 = vsyncadd [#allocation3], %s21
      %s24 = sshll.u32 [#allocation2], 4
      %s25 = int_to_ptr.vmem [resolvable:$true] %s24
      %27 = dma.hbm_to_vmem [thread:$0]  %s2, 16, %s25, [#allocation3]
    $region13: #{residual_block_3d.3} parent=1 // pred_fallthru
      _
    // Predicated region
    $region14: #{residual_block_3d.3} parent=1 // pred_check
      _
    $region15: #{residual_block_3d.3} parent=1 // pred_check_branch
      %29 = sbr.rel (0) target = $region17
    $region16: #{residual_block_3d.3} parent=1 // pred_region
      %s31 = ssub.s32 16, 16
      %32 = vsyncadd [#allocation5], %s31
      %s34 = sshll.u32 [#allocation4], 4
      %s35 = int_to_ptr.vmem [resolvable:$true] %s34
      %37 = dma.hbm_to_vmem [thread:$0]  %s3, 16, %s35, [#allocation5]
    $region17: #{residual_block_3d.3} parent=1 // pred_fallthru
      _
    // Predicated region
    $region18: #{residual_block_3d.3} parent=1 // pred_check
      _
    $region19: #{residual_block_3d.3} parent=1 // pred_check_branch
      %39 = sbr.rel (0) target = $region21
    $region20: #{residual_block_3d.3} parent=1 // pred_region
      %s41 = ssub.s32 16, 16
      %42 = vsyncadd [#allocation5], %s41
      %s44 = sshll.u32 [#allocation6], 4
      %s45 = int_to_ptr.vmem [resolvable:$true] %s44
      %47 = dma.hbm_to_vmem [thread:$0]  %s4, 16, %s45, [#allocation5]
    $region21: #{residual_block_3d.3} parent=1 // pred_fallthru
      _
    // Predicated region
    $region22: #{residual_block_3d.3} parent=1 // pred_check
      _
    $region23: #{residual_block_3d.3} parent=1 // pred_check_branch
      %49 = sbr.rel (0) target = $region25
    $region24: #{residual_block_3d.3} parent=1 // pred_region
      %s51 = ssub.s32 16384, 16384
      %52 = vsyncadd [#allocation8], %s51
      %s53 = sshll.u32 [#allocation7], 4
      %s54 = int_to_ptr.vmem [resolvable:$true] %s53
      %59 = dma.hbm_to_vmem [thread:$0]  %s5, 16384, %s54, [#allocation8], 128, 128, 8
    $region25: #{residual_block_3d.3} parent=1 // pred_fallthru
      _
    // Predicated region
    $region26: #{residual_block_3d.3} parent=1 // pred_check
      _
    $region27: #{residual_block_3d.3} parent=1 // pred_check_branch
      %61 = sbr.rel (0) target = $region29
    $region28: #{residual_block_3d.3} parent=1 // pred_region
      %62 = dma.done [#allocation3], 16
    $region29: #{residual_block_3d.3} parent=1 // pred_fallthru
      _
    // Predicated region
    $region30: #{residual_block_3d.3} parent=1 // pred_check
      _
    $region31: #{residual_block_3d.3} parent=1 // pred_check_branch
      %64 = sbr.rel (0) target = $region33
    $region32: #{residual_block_3d.3} parent=1 // pred_region
      %65 = dma.done [#allocation5], 16
    $region33: #{residual_block_3d.3} parent=1 // pred_fallthru
      _
    // Predicated region
    $region34: #{residual_block_3d.3} parent=1 // pred_check
      _
    $region35: #{residual_block_3d.3} parent=1 // pred_check_branch
      %67 = sbr.rel (0) target = $region37
    $region36: #{residual_block_3d.3} parent=1 // pred_region
      %68 = dma.done [#allocation5], 16
    $region37: #{residual_block_3d.3} parent=1 // pred_fallthru
      _
    // Predicated region
    $region38: #{residual_block_3d.3} parent=1 // pred_check
      _
    $region39: #{residual_block_3d.3} parent=1 // pred_check_branch
      %70 = sbr.rel (0) target = $region41
    $region40: #{residual_block_3d.3} parent=1 // pred_region
      %71 = dma.done [#allocation8], 16384
    $region41: #{residual_block_3d.3} parent=1 // pred_fallthru
      _
    %v72 = vld [vmem:[%s0] sm:$0xff]
    %v73 = vld [vmem:[%s0 + $0x8] sm:$0xff]
    %v74 = vld [vmem:[%s0 + $0x10] sm:$0xff]
    %v75 = vld [vmem:[%s0 + $0x18] sm:$0xff]
    %v76 = vld [vmem:[%s0 + $0x20] sm:$0xff]
    %v77 = vld [vmem:[%s0 + $0x28] sm:$0xff]
    %v78 = vld [vmem:[%s0 + $0x30] sm:$0xff]
    %v79 = vld [vmem:[%s0 + $0x38] sm:$0xff]
    %v80 = vld [vmem:[%s0 + $0x40] sm:$0xff]
    %v81 = vld [vmem:[%s0 + $0x48] sm:$0xff]
    %v82 = vld [vmem:[%s0 + $0x50] sm:$0xff]
    %v83 = vld [vmem:[%s0 + $0x58] sm:$0xff]
    %v84 = vld [vmem:[%s0 + $0x60] sm:$0xff]
    %v85 = vld [vmem:[%s0 + $0x68] sm:$0xff]
    %v86 = vld [vmem:[%s0 + $0x70] sm:$0xff]
    %v87 = vld [vmem:[%s0 + $0x78] sm:$0xff]
    %v88 = vld [vmem:[%s0 + $0x80] sm:$0xff]
    %v89 = vld [vmem:[%s0 + $0x88] sm:$0xff]
    %v90 = vld [vmem:[%s0 + $0x90] sm:$0xff]
    %v91 = vld [vmem:[%s0 + $0x98] sm:$0xff]
    %v92 = vld [vmem:[%s0 + $0xa0] sm:$0xff]
    %v93 = vld [vmem:[%s0 + $0xa8] sm:$0xff]
    %v94 = vld [vmem:[%s0 + $0xb0] sm:$0xff]
    %v95 = vld [vmem:[%s0 + $0xb8] sm:$0xff]
    %v96 = vld [vmem:[%s0 + $0xc0] sm:$0xff]
    %v97 = vld [vmem:[%s0 + $0xc8] sm:$0xff]
    %v98 = vld [vmem:[%s0 + $0xd0] sm:$0xff]
    %v99 = vld [vmem:[%s0 + $0xd8] sm:$0xff]
    %v100 = vld [vmem:[%s0 + $0xe0] sm:$0xff]
    %v101 = vld [vmem:[%s0 + $0xe8] sm:$0xff]
    %v102 = vld [vmem:[%s0 + $0xf0] sm:$0xff]
    %v103 = vld [vmem:[%s0 + $0xf8] sm:$0xff]
    %v104 = vld [vmem:[%s0 + $0x100] sm:$0xff]
    %v105 = vld [vmem:[%s0 + $0x108] sm:$0xff]
    %v106 = vld [vmem:[%s0 + $0x110] sm:$0xff]
    %v107 = vld [vmem:[%s0 + $0x118] sm:$0xff]
    %v108 = vld [vmem:[%s0 + $0x120] sm:$0xff]
    %v109 = vld [vmem:[%s0 + $0x128] sm:$0xff]
    %v110 = vld [vmem:[%s0 + $0x130] sm:$0xff]
    %v111 = vld [vmem:[%s0 + $0x138] sm:$0xff]
    %v112 = vld [vmem:[%s0 + $0x140] sm:$0xff]
    %v113 = vld [vmem:[%s0 + $0x148] sm:$0xff]
    %v114 = vld [vmem:[%s0 + $0x150] sm:$0xff]
    %v115 = vld [vmem:[%s0 + $0x158] sm:$0xff]
    %v116 = vld [vmem:[%s0 + $0x160] sm:$0xff]
    %v117 = vld [vmem:[%s0 + $0x168] sm:$0xff]
    %v118 = vld [vmem:[%s0 + $0x170] sm:$0xff]
    %v119 = vld [vmem:[%s0 + $0x178] sm:$0xff]
    %v120 = vld [vmem:[%s0 + $0x180] sm:$0xff]
    %v121 = vld [vmem:[%s0 + $0x188] sm:$0xff]
    %v122 = vld [vmem:[%s0 + $0x190] sm:$0xff]
    %v123 = vld [vmem:[%s0 + $0x198] sm:$0xff]
    %v124 = vld [vmem:[%s0 + $0x1a0] sm:$0xff]
    %v125 = vld [vmem:[%s0 + $0x1a8] sm:$0xff]
    %v126 = vld [vmem:[%s0 + $0x1b0] sm:$0xff]
    %v127 = vld [vmem:[%s0 + $0x1b8] sm:$0xff]
    %v128 = vld [vmem:[%s0 + $0x1c0] sm:$0xff]
    %v129 = vld [vmem:[%s0 + $0x1c8] sm:$0xff]
    %v130 = vld [vmem:[%s0 + $0x1d0] sm:$0xff]
    %v131 = vld [vmem:[%s0 + $0x1d8] sm:$0xff]
    %v132 = vld [vmem:[%s0 + $0x1e0] sm:$0xff]
    %v133 = vld [vmem:[%s0 + $0x1e8] sm:$0xff]
    %v134 = vld [vmem:[%s0 + $0x1f0] sm:$0xff]
    %v135 = vld [vmem:[%s0 + $0x1f8] sm:$0xff]
    %v136 = vld [vmem:[%s0 + $0x200] sm:$0xff]
    %v137 = vld [vmem:[%s0 + $0x208] sm:$0xff]
    %v138 = vld [vmem:[%s0 + $0x210] sm:$0xff]
    %v139 = vld [vmem:[%s0 + $0x218] sm:$0xff]
    %v140 = vld [vmem:[%s0 + $0x220] sm:$0xff]
    %v141 = vld [vmem:[%s0 + $0x228] sm:$0xff]
    %v142 = vld [vmem:[%s0 + $0x230] sm:$0xff]
    %v143 = vld [vmem:[%s0 + $0x238] sm:$0xff]
    %v144 = vld [vmem:[%s0 + $0x240] sm:$0xff]
    %v145 = vld [vmem:[%s0 + $0x248] sm:$0xff]
    %v146 = vld [vmem:[%s0 + $0x250] sm:$0xff]
    %v147 = vld [vmem:[%s0 + $0x258] sm:$0xff]
    %v148 = vld [vmem:[%s0 + $0x260] sm:$0xff]
    %v149 = vld [vmem:[%s0 + $0x268] sm:$0xff]
    %v150 = vld [vmem:[%s0 + $0x270] sm:$0xff]
    %v151 = vld [vmem:[%s0 + $0x278] sm:$0xff]
    %v152 = vld [vmem:[%s0 + $0x280] sm:$0xff]
    %v153 = vld [vmem:[%s0 + $0x288] sm:$0xff]
    %v154 = vld [vmem:[%s0 + $0x290] sm:$0xff]
    %v155 = vld [vmem:[%s0 + $0x298] sm:$0xff]
    %v156 = vld [vmem:[%s0 + $0x2a0] sm:$0xff]
    %v157 = vld [vmem:[%s0 + $0x2a8] sm:$0xff]
    %v158 = vld [vmem:[%s0 + $0x2b0] sm:$0xff]
    %v159 = vld [vmem:[%s0 + $0x2b8] sm:$0xff]
    %v160 = vld [vmem:[%s0 + $0x2c0] sm:$0xff]
    %v161 = vld [vmem:[%s0 + $0x2c8] sm:$0xff]
    %v162 = vld [vmem:[%s0 + $0x2d0] sm:$0xff]
    %v163 = vld [vmem:[%s0 + $0x2d8] sm:$0xff]
    %v164 = vld [vmem:[%s0 + $0x2e0] sm:$0xff]
    %v165 = vld [vmem:[%s0 + $0x2e8] sm:$0xff]
    %v166 = vld [vmem:[%s0 + $0x2f0] sm:$0xff]
    %v167 = vld [vmem:[%s0 + $0x2f8] sm:$0xff]
    %v168 = vld [vmem:[%s0 + $0x300] sm:$0xff]
    %v169 = vld [vmem:[%s0 + $0x308] sm:$0xff]
    %v170 = vld [vmem:[%s0 + $0x310] sm:$0xff]
    %v171 = vld [vmem:[%s0 + $0x318] sm:$0xff]
    %v172 = vld [vmem:[%s0 + $0x320] sm:$0xff]
    %v173 = vld [vmem:[%s0 + $0x328] sm:$0xff]
    %v174 = vld [vmem:[%s0 + $0x330] sm:$0xff]
    %v175 = vld [vmem:[%s0 + $0x338] sm:$0xff]
    %v176 = vld [vmem:[%s0 + $0x340] sm:$0xff]
    %v177 = vld [vmem:[%s0 + $0x348] sm:$0xff]
    %v178 = vld [vmem:[%s0 + $0x350] sm:$0xff]
    %v179 = vld [vmem:[%s0 + $0x358] sm:$0xff]
    %v180 = vld [vmem:[%s0 + $0x360] sm:$0xff]
    %v181 = vld [vmem:[%s0 + $0x368] sm:$0xff]
    %v182 = vld [vmem:[%s0 + $0x370] sm:$0xff]
    %v183 = vld [vmem:[%s0 + $0x378] sm:$0xff]
    %v184 = vld [vmem:[%s0 + $0x380] sm:$0xff]
    %v185 = vld [vmem:[%s0 + $0x388] sm:$0xff]
    %v186 = vld [vmem:[%s0 + $0x390] sm:$0xff]
    %v187 = vld [vmem:[%s0 + $0x398] sm:$0xff]
    %v188 = vld [vmem:[%s0 + $0x3a0] sm:$0xff]
    %v189 = vld [vmem:[%s0 + $0x3a8] sm:$0xff]
    %v190 = vld [vmem:[%s0 + $0x3b0] sm:$0xff]
    %v191 = vld [vmem:[%s0 + $0x3b8] sm:$0xff]
    %v192 = vld [vmem:[%s0 + $0x3c0] sm:$0xff]
    %v193 = vld [vmem:[%s0 + $0x3c8] sm:$0xff]
    %v194 = vld [vmem:[%s0 + $0x3d0] sm:$0xff]
    %v195 = vld [vmem:[%s0 + $0x3d8] sm:$0xff]
    %v196 = vld [vmem:[%s0 + $0x3e0] sm:$0xff]
    %v197 = vld [vmem:[%s0 + $0x3e8] sm:$0xff]
    %v198 = vld [vmem:[%s0 + $0x3f0] sm:$0xff]
    %v199 = vld [vmem:[%s0 + $0x3f8] sm:$0xff]
    %v200 = vld [vmem:[%s0 + $0x400] sm:$0xff]
    %v201 = vld [vmem:[%s0 + $0x408] sm:$0xff]
    %v202 = vld [vmem:[%s0 + $0x410] sm:$0xff]
    %v203 = vld [vmem:[%s0 + $0x418] sm:$0xff]
    %v204 = vld [vmem:[%s0 + $0x420] sm:$0xff]
    %v205 = vld [vmem:[%s0 + $0x428] sm:$0xff]
    %v206 = vld [vmem:[%s0 + $0x430] sm:$0xff]
    %v207 = vld [vmem:[%s0 + $0x438] sm:$0xff]
    %v208 = vld [vmem:[%s0 + $0x440] sm:$0xff]
    %v209 = vld [vmem:[%s0 + $0x448] sm:$0xff]
    %v210 = vld [vmem:[%s0 + $0x450] sm:$0xff]
    %v211 = vld [vmem:[%s0 + $0x458] sm:$0xff]
    %v212 = vld [vmem:[%s0 + $0x460] sm:$0xff]
    %v213 = vld [vmem:[%s0 + $0x468] sm:$0xff]
    %v214 = vld [vmem:[%s0 + $0x470] sm:$0xff]
    %v215 = vld [vmem:[%s0 + $0x478] sm:$0xff]
    %v216 = vld [vmem:[%s0 + $0x480] sm:$0xff]
    %v217 = vld [vmem:[%s0 + $0x488] sm:$0xff]
    %v218 = vld [vmem:[%s0 + $0x490] sm:$0xff]
    %v219 = vld [vmem:[%s0 + $0x498] sm:$0xff]
    %v220 = vld [vmem:[%s0 + $0x4a0] sm:$0xff]
    %v221 = vld [vmem:[%s0 + $0x4a8] sm:$0xff]
    %v222 = vld [vmem:[%s0 + $0x4b0] sm:$0xff]
    %v223 = vld [vmem:[%s0 + $0x4b8] sm:$0xff]
    %v224 = vld [vmem:[%s0 + $0x4c0] sm:$0xff]
    %v225 = vld [vmem:[%s0 + $0x4c8] sm:$0xff]
    %v226 = vld [vmem:[%s0 + $0x4d0] sm:$0xff]
    %v227 = vld [vmem:[%s0 + $0x4d8] sm:$0xff]
    %v228 = vld [vmem:[%s0 + $0x4e0] sm:$0xff]
    %v229 = vld [vmem:[%s0 + $0x4e8] sm:$0xff]
    %v230 = vld [vmem:[%s0 + $0x4f0] sm:$0xff]
    %v231 = vld [vmem:[%s0 + $0x4f8] sm:$0xff]
    %v232 = vld [vmem:[%s0 + $0x500] sm:$0xff]
    %v233 = vld [vmem:[%s0 + $0x508] sm:$0xff]
    %v234 = vld [vmem:[%s0 + $0x510] sm:$0xff]
    %v235 = vld [vmem:[%s0 + $0x518] sm:$0xff]
    %v236 = vld [vmem:[%s0 + $0x520] sm:$0xff]
    %v237 = vld [vmem:[%s0 + $0x528] sm:$0xff]
    %v238 = vld [vmem:[%s0 + $0x530] sm:$0xff]
    %v239 = vld [vmem:[%s0 + $0x538] sm:$0xff]
    %v240 = vld [vmem:[%s0 + $0x540] sm:$0xff]
    %v241 = vld [vmem:[%s0 + $0x548] sm:$0xff]
    %v242 = vld [vmem:[%s0 + $0x550] sm:$0xff]
    %v243 = vld [vmem:[%s0 + $0x558] sm:$0xff]
    %v244 = vld [vmem:[%s0 + $0x560] sm:$0xff]
    %v245 = vld [vmem:[%s0 + $0x568] sm:$0xff]
    %v246 = vld [vmem:[%s0 + $0x570] sm:$0xff]
    %v247 = vld [vmem:[%s0 + $0x578] sm:$0xff]
    %v248 = vld [vmem:[%s0 + $0x580] sm:$0xff]
    %v249 = vld [vmem:[%s0 + $0x588] sm:$0xff]
    %v250 = vld [vmem:[%s0 + $0x590] sm:$0xff]
    %v251 = vld [vmem:[%s0 + $0x598] sm:$0xff]
    %v252 = vld [vmem:[%s0 + $0x5a0] sm:$0xff]
    %v253 = vld [vmem:[%s0 + $0x5a8] sm:$0xff]
    %v254 = vld [vmem:[%s0 + $0x5b0] sm:$0xff]
    %v255 = vld [vmem:[%s0 + $0x5b8] sm:$0xff]
    %v256 = vld [vmem:[%s0 + $0x5c0] sm:$0xff]
    %v257 = vld [vmem:[%s0 + $0x5c8] sm:$0xff]
    %v258 = vld [vmem:[%s0 + $0x5d0] sm:$0xff]
    %v259 = vld [vmem:[%s0 + $0x5d8] sm:$0xff]
    %v260 = vld [vmem:[%s0 + $0x5e0] sm:$0xff]
    %v261 = vld [vmem:[%s0 + $0x5e8] sm:$0xff]
    %v262 = vld [vmem:[%s0 + $0x5f0] sm:$0xff]
    %v263 = vld [vmem:[%s0 + $0x5f8] sm:$0xff]
    %v264 = vld [vmem:[%s0 + $0x600] sm:$0xff]
    %v265 = vld [vmem:[%s0 + $0x608] sm:$0xff]
    %v266 = vld [vmem:[%s0 + $0x610] sm:$0xff]
    %v267 = vld [vmem:[%s0 + $0x618] sm:$0xff]
    %v268 = vld [vmem:[%s0 + $0x620] sm:$0xff]
    %v269 = vld [vmem:[%s0 + $0x628] sm:$0xff]
    %v270 = vld [vmem:[%s0 + $0x630] sm:$0xff]
    %v271 = vld [vmem:[%s0 + $0x638] sm:$0xff]
    %v272 = vld [vmem:[%s0 + $0x640] sm:$0xff]
    %v273 = vld [vmem:[%s0 + $0x648] sm:$0xff]
    %v274 = vld [vmem:[%s0 + $0x650] sm:$0xff]
    %v275 = vld [vmem:[%s0 + $0x658] sm:$0xff]
    %v276 = vld [vmem:[%s0 + $0x660] sm:$0xff]
    %v277 = vld [vmem:[%s0 + $0x668] sm:$0xff]
    %v278 = vld [vmem:[%s0 + $0x670] sm:$0xff]
    %v279 = vld [vmem:[%s0 + $0x678] sm:$0xff]
    %v280 = vld [vmem:[%s0 + $0x680] sm:$0xff]
    %v281 = vld [vmem:[%s0 + $0x688] sm:$0xff]
    %v282 = vld [vmem:[%s0 + $0x690] sm:$0xff]
    %v283 = vld [vmem:[%s0 + $0x698] sm:$0xff]
    %v284 = vld [vmem:[%s0 + $0x6a0] sm:$0xff]
    %v285 = vld [vmem:[%s0 + $0x6a8] sm:$0xff]
    %v286 = vld [vmem:[%s0 + $0x6b0] sm:$0xff]
    %v287 = vld [vmem:[%s0 + $0x6b8] sm:$0xff]
    %v288 = vld [vmem:[%s0 + $0x6c0] sm:$0xff]
    %v289 = vld [vmem:[%s0 + $0x6c8] sm:$0xff]
    %v290 = vld [vmem:[%s0 + $0x6d0] sm:$0xff]
    %v291 = vld [vmem:[%s0 + $0x6d8] sm:$0xff]
    %v292 = vld [vmem:[%s0 + $0x6e0] sm:$0xff]
    %v293 = vld [vmem:[%s0 + $0x6e8] sm:$0xff]
    %v294 = vld [vmem:[%s0 + $0x6f0] sm:$0xff]
    %v295 = vld [vmem:[%s0 + $0x6f8] sm:$0xff]
    %v296 = vld [vmem:[%s0 + $0x700] sm:$0xff]
    %v297 = vld [vmem:[%s0 + $0x708] sm:$0xff]
    %v298 = vld [vmem:[%s0 + $0x710] sm:$0xff]
    %v299 = vld [vmem:[%s0 + $0x718] sm:$0xff]
    %v300 = vld [vmem:[%s0 + $0x720] sm:$0xff]
    %v301 = vld [vmem:[%s0 + $0x728] sm:$0xff]
    %v302 = vld [vmem:[%s0 + $0x730] sm:$0xff]
    %v303 = vld [vmem:[%s0 + $0x738] sm:$0xff]
    %v304 = vld [vmem:[%s0 + $0x740] sm:$0xff]
    %v305 = vld [vmem:[%s0 + $0x748] sm:$0xff]
    %v306 = vld [vmem:[%s0 + $0x750] sm:$0xff]
    %v307 = vld [vmem:[%s0 + $0x758] sm:$0xff]
    %v308 = vld [vmem:[%s0 + $0x760] sm:$0xff]
    %v309 = vld [vmem:[%s0 + $0x768] sm:$0xff]
    %v310 = vld [vmem:[%s0 + $0x770] sm:$0xff]
    %v311 = vld [vmem:[%s0 + $0x778] sm:$0xff]
    %v312 = vld [vmem:[%s0 + $0x780] sm:$0xff]
    %v313 = vld [vmem:[%s0 + $0x788] sm:$0xff]
    %v314 = vld [vmem:[%s0 + $0x790] sm:$0xff]
    %v315 = vld [vmem:[%s0 + $0x798] sm:$0xff]
    %v316 = vld [vmem:[%s0 + $0x7a0] sm:$0xff]
    %v317 = vld [vmem:[%s0 + $0x7a8] sm:$0xff]
    %v318 = vld [vmem:[%s0 + $0x7b0] sm:$0xff]
    %v319 = vld [vmem:[%s0 + $0x7b8] sm:$0xff]
    %v320 = vld [vmem:[%s0 + $0x7c0] sm:$0xff]
    %v321 = vld [vmem:[%s0 + $0x7c8] sm:$0xff]
    %v322 = vld [vmem:[%s0 + $0x7d0] sm:$0xff]
    %v323 = vld [vmem:[%s0 + $0x7d8] sm:$0xff]
    %v324 = vld [vmem:[%s0 + $0x7e0] sm:$0xff]
    %v325 = vld [vmem:[%s0 + $0x7e8] sm:$0xff]
    %v326 = vld [vmem:[%s0 + $0x7f0] sm:$0xff]
    %v327 = vld [vmem:[%s0 + $0x7f8] sm:$0xff]
    %v328 = vld [vmem:[%s1] sm:$0xff]
    %v329 = vld [vmem:[%s1 + $0x8] sm:$0xff]
    %v330 = vld [vmem:[%s1 + $0x10] sm:$0xff]
    %v331 = vld [vmem:[%s1 + $0x18] sm:$0xff]
    %v332 = vld [vmem:[%s1 + $0x20] sm:$0xff]
    %v333 = vld [vmem:[%s1 + $0x28] sm:$0xff]
    %v334 = vld [vmem:[%s1 + $0x30] sm:$0xff]
    %v335 = vld [vmem:[%s1 + $0x38] sm:$0xff]
    %v336 = vld [vmem:[%s1 + $0x40] sm:$0xff]
    %v337 = vld [vmem:[%s1 + $0x48] sm:$0xff]
    %v338 = vld [vmem:[%s1 + $0x50] sm:$0xff]
    %v339 = vld [vmem:[%s1 + $0x58] sm:$0xff]
    %v340 = vld [vmem:[%s1 + $0x60] sm:$0xff]
    %v341 = vld [vmem:[%s1 + $0x68] sm:$0xff]
    %v342 = vld [vmem:[%s1 + $0x70] sm:$0xff]
    %v343 = vld [vmem:[%s1 + $0x78] sm:$0xff]
    %v344 = vld [vmem:[%s1 + $0x80] sm:$0xff]
    %v345 = vld [vmem:[%s1 + $0x88] sm:$0xff]
    %v346 = vld [vmem:[%s1 + $0x90] sm:$0xff]
    %v347 = vld [vmem:[%s1 + $0x98] sm:$0xff]
    %v348 = vld [vmem:[%s1 + $0xa0] sm:$0xff]
    %v349 = vld [vmem:[%s1 + $0xa8] sm:$0xff]
    %v350 = vld [vmem:[%s1 + $0xb0] sm:$0xff]
    %v351 = vld [vmem:[%s1 + $0xb8] sm:$0xff]
    %v352 = vld [vmem:[%s1 + $0xc0] sm:$0xff]
    %v353 = vld [vmem:[%s1 + $0xc8] sm:$0xff]
    %v354 = vld [vmem:[%s1 + $0xd0] sm:$0xff]
    %v355 = vld [vmem:[#allocation2] sm:$0x1]
    %v357 = vlaneseq
    %v358 = vshrl.u32 %v357, 7
    %v359 = vsub.s32 0, %v358
    %v360 = vrot.slane %v355, %v359
    %vm362 = vcmask 719872
    %v364 = vsel %vm362, %v73, 0
    %v367 = vsel %vm362, %v75, 0
    %v370 = vsel %vm362, %v77, 0
    %v373 = vsel %vm362, %v79, 0
    %v376 = vsel %vm362, %v81, 0
    %v379 = vsel %vm362, %v83, 0
    %v382 = vsel %vm362, %v85, 0
    %v385 = vsel %vm362, %v87, 0
    %v388 = vsel %vm362, %v89, 0
    %v391 = vsel %vm362, %v91, 0
    %v394 = vsel %vm362, %v93, 0
    %v397 = vsel %vm362, %v95, 0
    %v400 = vsel %vm362, %v97, 0
    %v403 = vsel %vm362, %v99, 0
    %v406 = vsel %vm362, %v101, 0
    %v409 = vsel %vm362, %v103, 0
    %v412 = vsel %vm362, %v105, 0
    %v415 = vsel %vm362, %v107, 0
    %v418 = vsel %vm362, %v109, 0
    %v421 = vsel %vm362, %v111, 0
    %v424 = vsel %vm362, %v113, 0
    %v427 = vsel %vm362, %v115, 0
    %v430 = vsel %vm362, %v117, 0
    %v433 = vsel %vm362, %v119, 0
    %v436 = vsel %vm362, %v121, 0
    %v439 = vsel %vm362, %v123, 0
    %v442 = vsel %vm362, %v125, 0
    %v445 = vsel %vm362, %v127, 0
    %v448 = vsel %vm362, %v129, 0
    %v451 = vsel %vm362, %v131, 0
    %v454 = vsel %vm362, %v133, 0
    %v457 = vsel %vm362, %v135, 0
    %v460 = vsel %vm362, %v137, 0
    %v463 = vsel %vm362, %v139, 0
    %v466 = vsel %vm362, %v141, 0
    %v469 = vsel %vm362, %v143, 0
    %v472 = vsel %vm362, %v145, 0
    %v475 = vsel %vm362, %v147, 0
    %v478 = vsel %vm362, %v149, 0
    %v481 = vsel %vm362, %v151, 0
    %v484 = vsel %vm362, %v153, 0
    %v487 = vsel %vm362, %v155, 0
    %v490 = vsel %vm362, %v157, 0
    %v493 = vsel %vm362, %v159, 0
    %v496 = vsel %vm362, %v161, 0
    %v499 = vsel %vm362, %v163, 0
    %v502 = vsel %vm362, %v165, 0
    %v505 = vsel %vm362, %v167, 0
    %v508 = vsel %vm362, %v169, 0
    %v511 = vsel %vm362, %v171, 0
    %v514 = vsel %vm362, %v173, 0
    %v517 = vsel %vm362, %v175, 0
    %v520 = vsel %vm362, %v177, 0
    %v523 = vsel %vm362, %v179, 0
    %v526 = vsel %vm362, %v181, 0
    %v529 = vsel %vm362, %v183, 0
    %v532 = vsel %vm362, %v185, 0
    %v535 = vsel %vm362, %v187, 0
    %v538 = vsel %vm362, %v189, 0
    %v541 = vsel %vm362, %v191, 0
    %v544 = vsel %vm362, %v193, 0
    %v547 = vsel %vm362, %v195, 0
    %v550 = vsel %vm362, %v197, 0
    %v553 = vsel %vm362, %v199, 0
    %v556 = vsel %vm362, %v201, 0
    %v559 = vsel %vm362, %v203, 0
    %v562 = vsel %vm362, %v205, 0
    %v565 = vsel %vm362, %v207, 0
    %v568 = vsel %vm362, %v209, 0
    %v571 = vsel %vm362, %v211, 0
    %v574 = vsel %vm362, %v213, 0
    %v577 = vsel %vm362, %v215, 0
    %v580 = vsel %vm362, %v217, 0
    %v583 = vsel %vm362, %v219, 0
    %v586 = vsel %vm362, %v221, 0
    %v589 = vsel %vm362, %v223, 0
    %v592 = vsel %vm362, %v225, 0
    %v595 = vsel %vm362, %v227, 0
    %v598 = vsel %vm362, %v229, 0
    %v601 = vsel %vm362, %v231, 0
    %v604 = vsel %vm362, %v233, 0
    %v607 = vsel %vm362, %v235, 0
    %v610 = vsel %vm362, %v237, 0
    %v613 = vsel %vm362, %v239, 0
    %v616 = vsel %vm362, %v241, 0
    %v619 = vsel %vm362, %v243, 0
    %v622 = vsel %vm362, %v245, 0
    %v625 = vsel %vm362, %v247, 0
    %v628 = vsel %vm362, %v249, 0
    %v631 = vsel %vm362, %v251, 0
    %v634 = vsel %vm362, %v253, 0
    %v637 = vsel %vm362, %v255, 0
    %v640 = vsel %vm362, %v257, 0
    %v643 = vsel %vm362, %v259, 0
    %v646 = vsel %vm362, %v261, 0
    %v649 = vsel %vm362, %v263, 0
    %v652 = vsel %vm362, %v265, 0
    %v655 = vsel %vm362, %v267, 0
    %v658 = vsel %vm362, %v269, 0
    %v661 = vsel %vm362, %v271, 0
    %v664 = vsel %vm362, %v273, 0
    %v667 = vsel %vm362, %v275, 0
    %v670 = vsel %vm362, %v277, 0
    %v673 = vsel %vm362, %v279, 0
    %v676 = vsel %vm362, %v281, 0
    %v679 = vsel %vm362, %v283, 0
    %v682 = vsel %vm362, %v285, 0
    %v685 = vsel %vm362, %v287, 0
    %v688 = vsel %vm362, %v289, 0
    %v691 = vsel %vm362, %v291, 0
    %v694 = vsel %vm362, %v293, 0
    %v697 = vsel %vm362, %v295, 0
    %v700 = vsel %vm362, %v297, 0
    %v703 = vsel %vm362, %v299, 0
    %v706 = vsel %vm362, %v301, 0
    %v709 = vsel %vm362, %v303, 0
    %v712 = vsel %vm362, %v305, 0
    %v715 = vsel %vm362, %v307, 0
    %v718 = vsel %vm362, %v309, 0
    %v721 = vsel %vm362, %v311, 0
    %v724 = vsel %vm362, %v313, 0
    %v727 = vsel %vm362, %v315, 0
    %v730 = vsel %vm362, %v317, 0
    %v733 = vsel %vm362, %v319, 0
    %v736 = vsel %vm362, %v321, 0
    %v739 = vsel %vm362, %v323, 0
    %v742 = vsel %vm362, %v325, 0
    %v745 = vsel %vm362, %v327, 0
    %747 = vmatprep.subr.mxu0 0.0
    %748 = vmatpush1.msra.mxu0 %v328
    %749 = vmatprep.subr.mxu0 0.0
    %750 = vmatpush1.msra.mxu0 %v329
    %751 = vmatprep.subr.mxu0 0.0
    %752 = vmatpush1.msra.mxu0 %v330
    %753 = vmatprep.subr.mxu0 0.0
    %754 = vmatpush1.msra.mxu0 %v331
    %755 = vmatprep.subr.mxu0 0.0
    %756 = vmatpush1.msra.mxu0 %v332
    %757 = vmatprep.subr.mxu0 0.0
    %758 = vmatpush1.msra.mxu0 %v333
    %759 = vmatprep.subr.mxu0 0.0
    %760 = vmatpush1.msra.mxu0 %v334
    %761 = vmatprep.subr.mxu0 0.0
    %762 = vmatpush1.msra.mxu0 %v335
    %763 = vmatprep.subr.mxu0 0.0
    %764 = vmatpush1.msra.mxu0 %v336
    %765 = vmatprep.subr.mxu0 0.0
    %766 = vmatpush1.msra.mxu0 %v337
    %767 = vmatprep.subr.mxu0 0.0
    %768 = vmatpush1.msra.mxu0 %v338
    %769 = vmatprep.subr.mxu0 0.0
    %770 = vmatpush1.msra.mxu0 %v339
    %771 = vmatprep.subr.mxu0 0.0
    %772 = vmatpush1.msra.mxu0 %v340
    %773 = vmatprep.subr.mxu0 0.0
    %774 = vmatpush1.msra.mxu0 %v341
    %775 = vmatprep.subr.mxu0 0.0
    %776 = vmatpush1.msra.mxu0 %v342
    %777 = vmatprep.subr.mxu0 0.0
    %778 = vmatpush1.msra.mxu0 %v343
    %779 = vmatprep.subr.mxu0 0.0
    %780 = vmatpush1.msra.mxu0 %v344
    %781 = vmatprep.subr.mxu0 0.0
    %782 = vmatpush1.msra.mxu0 %v345
    %783 = vmatprep.subr.mxu0 0.0
    %784 = vmatpush1.msra.mxu0 %v346
    %785 = vmatprep.subr.mxu0 0.0
    %786 = vmatpush1.msra.mxu0 %v347
    %787 = vmatprep.subr.mxu0 0.0
    %788 = vmatpush1.msra.mxu0 %v348
    %789 = vmatprep.subr.mxu0 0.0
    %790 = vmatpush1.msra.mxu0 %v349
    %791 = vmatprep.subr.mxu0 0.0
    %792 = vmatpush1.msra.mxu0 %v350
    %793 = vmatprep.subr.mxu0 0.0
    %794 = vmatpush1.msra.mxu0 %v351
    %795 = vmatprep.subr.mxu0 0.0
    %796 = vmatpush1.msra.mxu0 %v352
    %797 = vmatprep.subr.mxu0 0.0
    %798 = vmatpush1.msra.mxu0 %v353
    %799 = vmatprep.subr.mxu0 0.0
    %800 = vmatpush1.msra.mxu0 %v354
    %801 = vmatprep.subr.mxu0 0.0
    %802 = vmatpush1.msra.mxu0 0.0
    %803 = vmatprep.subr.mxu0 0.0
    %804 = vmatpush1.msra.mxu0 0.0
    %805 = vmatprep.subr.mxu0 0.0
    %806 = vmatpush1.msra.mxu0 0.0
    %807 = vmatprep.subr.mxu0 0.0
    %808 = vmatpush1.msra.mxu0 0.0
    %809 = vmatprep.subr.mxu0 0.0
    %810 = vmatpush1.msra.mxu0 0.0
    %811 = vmatprep.mubr.f32.mxu0 %v364
    %812 = vmatmul.mubr.f32.gmra.mrb[0].mxu0 %v72
    %v813 = vpop.f32.mrb[0].mxu0
    %v814 = vadd.f32 %v360, %v813
    %v815 = vpop.f32.mrb[0].mxu0
    %816 = vmatprep.mubr.f32.mxu0 %v367
    %817 = vmatmul.mubr.f32.gmra.mrb[0].mxu0 %v74
    %v818 = vpop.f32.mrb[0].mxu0
    %v819 = vadd.f32 %v360, %v818
    %v820 = vpop.f32.mrb[0].mxu0
    %821 = vmatprep.mubr.f32.mxu0 %v370
    %822 = vmatmul.mubr.f32.gmra.mrb[0].mxu0 %v76
    %v823 = vpop.f32.mrb[0].mxu0
    %v824 = vadd.f32 %v360, %v823
    %v825 = vpop.f32.mrb[0].mxu0
    %826 = vmatprep.mubr.f32.mxu0 %v373
    %827 = vmatmul.mubr.f32.gmra.mrb[0].mxu0 %v78
    %v828 = vpop.f32.mrb[0].mxu0
    %v829 = vadd.f32 %v360, %v828
    %v830 = vpop.f32.mrb[0].mxu0
    %831 = vmatprep.mubr.f32.mxu0 %v376
    %832 = vmatmul.mubr.f32.gmra.mrb[0].mxu0 %v80
    %v833 = vpop.f32.mrb[0].mxu0
    %v834 = vadd.f32 %v360, %v833
    %v835 = vpop.f32.mrb[0].mxu0
    %836 = vmatprep.mubr.f32.mxu0 %v379
    %837 = vmatmul.mubr.f32.gmra.mrb[0].mxu0 %v82
    %v838 = vpop.f32.mrb[0].mxu0
    %v839 = vadd.f32 %v360, %v838
    %v840 = vpop.f32.mrb[0].mxu0
    %841 = vmatprep.mubr.f32.mxu0 %v382
    %842 = vmatmul.mubr.f32.gmra.mrb[0].mxu0 %v84
    %v843 = vpop.f32.mrb[0].mxu0
    %v844 = vadd.f32 %v360, %v843
    %v845 = vpop.f32.mrb[0].mxu0
    %846 = vmatprep.mubr.f32.mxu0 %v385
    %847 = vmatmul.mubr.f32.gmra.mrb[0].mxu0 %v86
    %v848 = vpop.f32.mrb[0].mxu0
    %v849 = vadd.f32 %v360, %v848
    %v850 = vpop.f32.mrb[0].mxu0
    %851 = vmatprep.mubr.f32.mxu0 %v388
    %852 = vmatmul.mubr.f32.gmra.mrb[0].mxu0 %v88
    %v853 = vpop.f32.mrb[0].mxu0
    %v854 = vadd.f32 %v360, %v853
    %v855 = vpop.f32.mrb[0].mxu0
    %856 = vmatprep.mubr.f32.mxu0 %v391
    %857 = vmatmul.mubr.f32.gmra.mrb[0].mxu0 %v90
    %v858 = vpop.f32.mrb[0].mxu0
    %v859 = vadd.f32 %v360, %v858
    %v860 = vpop.f32.mrb[0].mxu0
    %861 = vmatprep.mubr.f32.mxu0 %v394
    %862 = vmatmul.mubr.f32.gmra.mrb[0].mxu0 %v92
    %v863 = vpop.f32.mrb[0].mxu0
    %v864 = vadd.f32 %v360, %v863
    %v865 = vpop.f32.mrb[0].mxu0
    %866 = vmatprep.mubr.f32.mxu0 %v397
    %867 = vmatmul.mubr.f32.gmra.mrb[0].mxu0 %v94
    %v868 = vpop.f32.mrb[0].mxu0
    %v869 = vadd.f32 %v360, %v868
    %v870 = vpop.f32.mrb[0].mxu0
    %871 = vmatprep.mubr.f32.mxu0 %v400
    %872 = vmatmul.mubr.f32.gmra.mrb[0].mxu0 %v96
    %v873 = vpop.f32.mrb[0].mxu0
    %v874 = vadd.f32 %v360, %v873
    %v875 = vpop.f32.mrb[0].mxu0
    %876 = vmatprep.mubr.f32.mxu0 %v403
    %877 = vmatmul.mubr.f32.gmra.mrb[0].mxu0 %v98
    %v878 = vpop.f32.mrb[0].mxu0
    %v879 = vadd.f32 %v360, %v878
    %v880 = vpop.f32.mrb[0].mxu0
    %881 = vmatprep.mubr.f32.mxu0 %v406
    %882 = vmatmul.mubr.f32.gmra.mrb[0].mxu0 %v100
    %v883 = vpop.f32.mrb[0].mxu0
    %v884 = vadd.f32 %v360, %v883
    %v885 = vpop.f32.mrb[0].mxu0
    %886 = vmatprep.mubr.f32.mxu0 %v409
    %887 = vmatmul.mubr.f32.gmra.mrb[0].mxu0 %v102
    %v888 = vpop.f32.mrb[0].mxu0
    %v889 = vadd.f32 %v360, %v888
    %v890 = vpop.f32.mrb[0].mxu0
    %891 = vmatprep.mubr.f32.mxu0 %v412
    %892 = vmatmul.mubr.f32.gmra.mrb[0].mxu0 %v104
    %v893 = vpop.f32.mrb[0].mxu0
    %v894 = vadd.f32 %v360, %v893
    %v895 = vpop.f32.mrb[0].mxu0
    %896 = vmatprep.mubr.f32.mxu0 %v415
    %897 = vmatmul.mubr.f32.gmra.mrb[0].mxu0 %v106
    %v898 = vpop.f32.mrb[0].mxu0
    %v899 = vadd.f32 %v360, %v898
    %v900 = vpop.f32.mrb[0].mxu0
    %901 = vmatprep.mubr.f32.mxu0 %v418
    %902 = vmatmul.mubr.f32.gmra.mrb[0].mxu0 %v108
    %v903 = vpop.f32.mrb[0].mxu0
    %v904 = vadd.f32 %v360, %v903
    %v905 = vpop.f32.mrb[0].mxu0
    %906 = vmatprep.mubr.f32.mxu0 %v421
    %907 = vmatmul.mubr.f32.gmra.mrb[0].mxu0 %v110
    %v908 = vpop.f32.mrb[0].mxu0
    %v909 = vadd.f32 %v360, %v908
    %v910 = vpop.f32.mrb[0].mxu0
    %911 = vmatprep.mubr.f32.mxu0 %v424
    %912 = vmatmul.mubr.f32.gmra.mrb[0].mxu0 %v112
    %v913 = vpop.f32.mrb[0].mxu0
    %v914 = vadd.f32 %v360, %v913
    %v915 = vpop.f32.mrb[0].mxu0
    %916 = vmatprep.mubr.f32.mxu0 %v427
    %917 = vmatmul.mubr.f32.gmra.mrb[0].mxu0 %v114
    %v918 = vpop.f32.mrb[0].mxu0
    %v919 = vadd.f32 %v360, %v918
    %v920 = vpop.f32.mrb[0].mxu0
    %921 = vmatprep.mubr.f32.mxu0 %v430
    %922 = vmatmul.mubr.f32.gmra.mrb[0].mxu0 %v116
    %v923 = vpop.f32.mrb[0].mxu0
    %v924 = vadd.f32 %v360, %v923
    %v925 = vpop.f32.mrb[0].mxu0
    %926 = vmatprep.mubr.f32.mxu0 %v433
    %927 = vmatmul.mubr.f32.gmra.mrb[0].mxu0 %v118
    %v928 = vpop.f32.mrb[0].mxu0
    %v929 = vadd.f32 %v360, %v928
    %v930 = vpop.f32.mrb[0].mxu0
    %931 = vmatprep.mubr.f32.mxu0 %v436
    %932 = vmatmul.mubr.f32.gmra.mrb[0].mxu0 %v120
    %v933 = vpop.f32.mrb[0].mxu0
    %v934 = vadd.f32 %v360, %v933
    %v935 = vpop.f32.mrb[0].mxu0
    %936 = vmatprep.mubr.f32.mxu0 %v439
    %937 = vmatmul.mubr.f32.gmra.mrb[0].mxu0 %v122
    %v938 = vpop.f32.mrb[0].mxu0
    %v939 = vadd.f32 %v360, %v938
    %v940 = vpop.f32.mrb[0].mxu0
    %941 = vmatprep.mubr.f32.mxu0 %v442
    %942 = vmatmul.mubr.f32.gmra.mrb[0].mxu0 %v124
    %v943 = vpop.f32.mrb[0].mxu0
    %v944 = vadd.f32 %v360, %v943
    %v945 = vpop.f32.mrb[0].mxu0
    %946 = vmatprep.mubr.f32.mxu0 %v445
    %947 = vmatmul.mubr.f32.gmra.mrb[0].mxu0 %v126
    %v948 = vpop.f32.mrb[0].mxu0
    %v949 = vadd.f32 %v360, %v948
    %v950 = vpop.f32.mrb[0].mxu0
    %951 = vmatprep.mubr.f32.mxu0 %v448
    %952 = vmatmul.mubr.f32.gmra.mrb[0].mxu0 %v128
    %v953 = vpop.f32.mrb[0].mxu0
    %v954 = vadd.f32 %v360, %v953
    %v955 = vpop.f32.mrb[0].mxu0
    %956 = vmatprep.mubr.f32.mxu0 %v451
    %957 = vmatmul.mubr.f32.gmra.mrb[0].mxu0 %v130
    %v958 = vpop.f32.mrb[0].mxu0
    %v959 = vadd.f32 %v360, %v958
    %v960 = vpop.f32.mrb[0].mxu0
    %961 = vmatprep.mubr.f32.mxu0 %v454
    %962 = vmatmul.mubr.f32.gmra.mrb[0].mxu0 %v132
    %v963 = vpop.f32.mrb[0].mxu0
    %v964 = vadd.f32 %v360, %v963
    %v965 = vpop.f32.mrb[0].mxu0
    %966 = vmatprep.mubr.f32.mxu0 %v457
    %967 = vmatmul.mubr.f32.gmra.mrb[0].mxu0 %v134
    %v968 = vpop.f32.mrb[0].mxu0
    %v969 = vadd.f32 %v360, %v968
    %v970 = vpop.f32.mrb[0].mxu0
    %971 = vmatprep.mubr.f32.mxu0 %v460
    %972 = vmatmul.mubr.f32.gmra.mrb[0].mxu0 %v136
    %v973 = vpop.f32.mrb[0].mxu0
    %v974 = vadd.f32 %v360, %v973
    %v975 = vpop.f32.mrb[0].mxu0
    %976 = vmatprep.mubr.f32.mxu0 %v463
    %977 = vmatmul.mubr.f32.gmra.mrb[0].mxu0 %v138
    %v978 = vpop.f32.mrb[0].mxu0
    %v979 = vadd.f32 %v360, %v978
    %v980 = vpop.f32.mrb[0].mxu0
    %981 = vmatprep.mubr.f32.mxu0 %v466
    %982 = vmatmul.mubr.f32.gmra.mrb[0].mxu0 %v140
    %v983 = vpop.f32.mrb[0].mxu0
    %v984 = vadd.f32 %v360, %v983
    %v985 = vpop.f32.mrb[0].mxu0
    %986 = vmatprep.mubr.f32.mxu0 %v469
    %987 = vmatmul.mubr.f32.gmra.mrb[0].mxu0 %v142
    %v988 = vpop.f32.mrb[0].mxu0
    %v989 = vadd.f32 %v360, %v988
    %v990 = vpop.f32.mrb[0].mxu0
    %991 = vmatprep.mubr.f32.mxu0 %v472
    %992 = vmatmul.mubr.f32.gmra.mrb[0].mxu0 %v144
    %v993 = vpop.f32.mrb[0].mxu0
    %v994 = vadd.f32 %v360, %v993
    %v995 = vpop.f32.mrb[0].mxu0
    %996 = vmatprep.mubr.f32.mxu0 %v475
    %997 = vmatmul.mubr.f32.gmra.mrb[0].mxu0 %v146
    %v998 = vpop.f32.mrb[0].mxu0
    %v999 = vadd.f32 %v360, %v998
    %v1000 = vpop.f32.mrb[0].mxu0
    %1001 = vmatprep.mubr.f32.mxu0 %v478
    %1002 = vmatmul.mubr.f32.gmra.mrb[0].mxu0 %v148
    %v1003 = vpop.f32.mrb[0].mxu0
    %v1004 = vadd.f32 %v360, %v1003
    %v1005 = vpop.f32.mrb[0].mxu0
    %1006 = vmatprep.mubr.f32.mxu0 %v481
    %1007 = vmatmul.mubr.f32.gmra.mrb[0].mxu0 %v150
    %v1008 = vpop.f32.mrb[0].mxu0
    %v1009 = vadd.f32 %v360, %v1008
    %v1010 = vpop.f32.mrb[0].mxu0
    %1011 = vmatprep.mubr.f32.mxu0 %v484
    %1012 = vmatmul.mubr.f32.gmra.mrb[0].mxu0 %v152
    %v1013 = vpop.f32.mrb[0].mxu0
    %v1014 = vadd.f32 %v360, %v1013
    %v1015 = vpop.f32.mrb[0].mxu0
    %1016 = vmatprep.mubr.f32.mxu0 %v487
    %1017 = vmatmul.mubr.f32.gmra.mrb[0].mxu0 %v154
    %v1018 = vpop.f32.mrb[0].mxu0
    %v1019 = vadd.f32 %v360, %v1018
    %v1020 = vpop.f32.mrb[0].mxu0
    %1021 = vmatprep.mubr.f32.mxu0 %v490
    %1022 = vmatmul.mubr.f32.gmra.mrb[0].mxu0 %v156
    %v1023 = vpop.f32.mrb[0].mxu0
    %v1024 = vadd.f32 %v360, %v1023
    %v1025 = vpop.f32.mrb[0].mxu0
    %1026 = vmatprep.mubr.f32.mxu0 %v493
    %1027 = vmatmul.mubr.f32.gmra.mrb[0].mxu0 %v158
    %v1028 = vpop.f32.mrb[0].mxu0
    %v1029 = vadd.f32 %v360, %v1028
    %v1030 = vpop.f32.mrb[0].mxu0
    %1031 = vmatprep.mubr.f32.mxu0 %v496
    %1032 = vmatmul.mubr.f32.gmra.mrb[0].mxu0 %v160
    %v1033 = vpop.f32.mrb[0].mxu0
    %v1034 = vadd.f32 %v360, %v1033
    %v1035 = vpop.f32.mrb[0].mxu0
    %1036 = vmatprep.mubr.f32.mxu0 %v499
    %1037 = vmatmul.mubr.f32.gmra.mrb[0].mxu0 %v162
    %v1038 = vpop.f32.mrb[0].mxu0
    %v1039 = vadd.f32 %v360, %v1038
    %v1040 = vpop.f32.mrb[0].mxu0
    %1041 = vmatprep.mubr.f32.mxu0 %v502
    %1042 = vmatmul.mubr.f32.gmra.mrb[0].mxu0 %v164
    %v1043 = vpop.f32.mrb[0].mxu0
    %v1044 = vadd.f32 %v360, %v1043
    %v1045 = vpop.f32.mrb[0].mxu0
    %1046 = vmatprep.mubr.f32.mxu0 %v505
    %1047 = vmatmul.mubr.f32.gmra.mrb[0].mxu0 %v166
    %v1048 = vpop.f32.mrb[0].mxu0
    %v1049 = vadd.f32 %v360, %v1048
    %v1050 = vpop.f32.mrb[0].mxu0
    %1051 = vmatprep.mubr.f32.mxu0 %v508
    %1052 = vmatmul.mubr.f32.gmra.mrb[0].mxu0 %v168
    %v1053 = vpop.f32.mrb[0].mxu0
    %v1054 = vadd.f32 %v360, %v1053
    %v1055 = vpop.f32.mrb[0].mxu0
    %1056 = vmatprep.mubr.f32.mxu0 %v511
    %1057 = vmatmul.mubr.f32.gmra.mrb[0].mxu0 %v170
    %v1058 = vpop.f32.mrb[0].mxu0
    %v1059 = vadd.f32 %v360, %v1058
    %v1060 = vpop.f32.mrb[0].mxu0
    %1061 = vmatprep.mubr.f32.mxu0 %v514
    %1062 = vmatmul.mubr.f32.gmra.mrb[0].mxu0 %v172
    %v1063 = vpop.f32.mrb[0].mxu0
    %v1064 = vadd.f32 %v360, %v1063
    %v1065 = vpop.f32.mrb[0].mxu0
    %1066 = vmatprep.mubr.f32.mxu0 %v517
    %1067 = vmatmul.mubr.f32.gmra.mrb[0].mxu0 %v174
    %v1068 = vpop.f32.mrb[0].mxu0
    %v1069 = vadd.f32 %v360, %v1068
    %v1070 = vpop.f32.mrb[0].mxu0
    %1071 = vmatprep.mubr.f32.mxu0 %v520
    %1072 = vmatmul.mubr.f32.gmra.mrb[0].mxu0 %v176
    %v1073 = vpop.f32.mrb[0].mxu0
    %v1074 = vadd.f32 %v360, %v1073
    %v1075 = vpop.f32.mrb[0].mxu0
    %1076 = vmatprep.mubr.f32.mxu0 %v523
    %1077 = vmatmul.mubr.f32.gmra.mrb[0].mxu0 %v178
    %v1078 = vpop.f32.mrb[0].mxu0
    %v1079 = vadd.f32 %v360, %v1078
    %v1080 = vpop.f32.mrb[0].mxu0
    %1081 = vmatprep.mubr.f32.mxu0 %v526
    %1082 = vmatmul.mubr.f32.gmra.mrb[0].mxu0 %v180
    %v1083 = vpop.f32.mrb[0].mxu0
    %v1084 = vadd.f32 %v360, %v1083
    %v1085 = vpop.f32.mrb[0].mxu0
    %1086 = vmatprep.mubr.f32.mxu0 %v529
    %1087 = vmatmul.mubr.f32.gmra.mrb[0].mxu0 %v182
    %v1088 = vpop.f32.mrb[0].mxu0
    %v1089 = vadd.f32 %v360, %v1088
    %v1090 = vpop.f32.mrb[0].mxu0
    %1091 = vmatprep.mubr.f32.mxu0 %v532
    %1092 = vmatmul.mubr.f32.gmra.mrb[0].mxu0 %v184
    %v1093 = vpop.f32.mrb[0].mxu0
    %v1094 = vadd.f32 %v360, %v1093
    %v1095 = vpop.f32.mrb[0].mxu0
    %1096 = vmatprep.mubr.f32.mxu0 %v535
    %1097 = vmatmul.mubr.f32.gmra.mrb[0].mxu0 %v186
    %v1098 = vpop.f32.mrb[0].mxu0
    %v1099 = vadd.f32 %v360, %v1098
    %v1100 = vpop.f32.mrb[0].mxu0
    %1101 = vmatprep.mubr.f32.mxu0 %v538
    %1102 = vmatmul.mubr.f32.gmra.mrb[0].mxu0 %v188
    %v1103 = vpop.f32.mrb[0].mxu0
    %v1104 = vadd.f32 %v360, %v1103
    %v1105 = vpop.f32.mrb[0].mxu0
    %1106 = vmatprep.mubr.f32.mxu0 %v541
    %1107 = vmatmul.mubr.f32.gmra.mrb[0].mxu0 %v190
    %v1108 = vpop.f32.mrb[0].mxu0
    %v1109 = vadd.f32 %v360, %v1108
    %v1110 = vpop.f32.mrb[0].mxu0
    %1111 = vmatprep.mubr.f32.mxu0 %v544
    %1112 = vmatmul.mubr.f32.gmra.mrb[0].mxu0 %v192
    %v1113 = vpop.f32.mrb[0].mxu0
    %v1114 = vadd.f32 %v360, %v1113
    %v1115 = vpop.f32.mrb[0].mxu0
    %1116 = vmatprep.mubr.f32.mxu0 %v547
    %1117 = vmatmul.mubr.f32.gmra.mrb[0].mxu0 %v194
    %v1118 = vpop.f32.mrb[0].mxu0
    %v1119 = vadd.f32 %v360, %v1118
    %v1120 = vpop.f32.mrb[0].mxu0
    %1121 = vmatprep.mubr.f32.mxu0 %v550
    %1122 = vmatmul.mubr.f32.gmra.mrb[0].mxu0 %v196
    %v1123 = vpop.f32.mrb[0].mxu0
    %v1124 = vadd.f32 %v360, %v1123
    %v1125 = vpop.f32.mrb[0].mxu0
    %1126 = vmatprep.mubr.f32.mxu0 %v553
    %1127 = vmatmul.mubr.f32.gmra.mrb[0].mxu0 %v198
    %v1128 = vpop.f32.mrb[0].mxu0
    %v1129 = vadd.f32 %v360, %v1128
    %v1130 = vpop.f32.mrb[0].mxu0
    %1131 = vmatprep.mubr.f32.mxu0 %v556
    %1132 = vmatmul.mubr.f32.gmra.mrb[0].mxu0 %v200
    %v1133 = vpop.f32.mrb[0].mxu0
    %v1134 = vadd.f32 %v360, %v1133
    %v1135 = vpop.f32.mrb[0].mxu0
    %1136 = vmatprep.mubr.f32.mxu0 %v559
    %1137 = vmatmul.mubr.f32.gmra.mrb[0].mxu0 %v202
    %v1138 = vpop.f32.mrb[0].mxu0
    %v1139 = vadd.f32 %v360, %v1138
    %v1140 = vpop.f32.mrb[0].mxu0
    %1141 = vmatprep.mubr.f32.mxu0 %v562
    %1142 = vmatmul.mubr.f32.gmra.mrb[0].mxu0 %v204
    %v1143 = vpop.f32.mrb[0].mxu0
    %v1144 = vadd.f32 %v360, %v1143
    %v1145 = vpop.f32.mrb[0].mxu0
    %1146 = vmatprep.mubr.f32.mxu0 %v565
    %1147 = vmatmul.mubr.f32.gmra.mrb[0].mxu0 %v206
    %v1148 = vpop.f32.mrb[0].mxu0
    %v1149 = vadd.f32 %v360, %v1148
    %v1150 = vpop.f32.mrb[0].mxu0
    %1151 = vmatprep.mubr.f32.mxu0 %v568
    %1152 = vmatmul.mubr.f32.gmra.mrb[0].mxu0 %v208
    %v1153 = vpop.f32.mrb[0].mxu0
    %v1154 = vadd.f32 %v360, %v1153
    %v1155 = vpop.f32.mrb[0].mxu0
    %1156 = vmatprep.mubr.f32.mxu0 %v571
    %1157 = vmatmul.mubr.f32.gmra.mrb[0].mxu0 %v210
    %v1158 = vpop.f32.mrb[0].mxu0
    %v1159 = vadd.f32 %v360, %v1158
    %v1160 = vpop.f32.mrb[0].mxu0
    %1161 = vmatprep.mubr.f32.mxu0 %v574
    %1162 = vmatmul.mubr.f32.gmra.mrb[0].mxu0 %v212
    %v1163 = vpop.f32.mrb[0].mxu0
    %v1164 = vadd.f32 %v360, %v1163
    %v1165 = vpop.f32.mrb[0].mxu0
    %1166 = vmatprep.mubr.f32.mxu0 %v577
    %1167 = vmatmul.mubr.f32.gmra.mrb[0].mxu0 %v214
    %v1168 = vpop.f32.mrb[0].mxu0
    %v1169 = vadd.f32 %v360, %v1168
    %v1170 = vpop.f32.mrb[0].mxu0
    %1171 = vmatprep.mubr.f32.mxu0 %v580
    %1172 = vmatmul.mubr.f32.gmra.mrb[0].mxu0 %v216
    %v1173 = vpop.f32.mrb[0].mxu0
    %v1174 = vadd.f32 %v360, %v1173
    %v1175 = vpop.f32.mrb[0].mxu0
    %1176 = vmatprep.mubr.f32.mxu0 %v583
    %1177 = vmatmul.mubr.f32.gmra.mrb[0].mxu0 %v218
    %v1178 = vpop.f32.mrb[0].mxu0
    %v1179 = vadd.f32 %v360, %v1178
    %v1180 = vpop.f32.mrb[0].mxu0
    %1181 = vmatprep.mubr.f32.mxu0 %v586
    %1182 = vmatmul.mubr.f32.gmra.mrb[0].mxu0 %v220
    %v1183 = vpop.f32.mrb[0].mxu0
    %v1184 = vadd.f32 %v360, %v1183
    %v1185 = vpop.f32.mrb[0].mxu0
    %1186 = vmatprep.mubr.f32.mxu0 %v589
    %1187 = vmatmul.mubr.f32.gmra.mrb[0].mxu0 %v222
    %v1188 = vpop.f32.mrb[0].mxu0
    %v1189 = vadd.f32 %v360, %v1188
    %v1190 = vpop.f32.mrb[0].mxu0
    %1191 = vmatprep.mubr.f32.mxu0 %v592
    %1192 = vmatmul.mubr.f32.gmra.mrb[0].mxu0 %v224
    %v1193 = vpop.f32.mrb[0].mxu0
    %v1194 = vadd.f32 %v360, %v1193
    %v1195 = vpop.f32.mrb[0].mxu0
    %1196 = vmatprep.mubr.f32.mxu0 %v595
    %1197 = vmatmul.mubr.f32.gmra.mrb[0].mxu0 %v226
    %v1198 = vpop.f32.mrb[0].mxu0
    %v1199 = vadd.f32 %v360, %v1198
    %v1200 = vpop.f32.mrb[0].mxu0
    %1201 = vmatprep.mubr.f32.mxu0 %v598
    %1202 = vmatmul.mubr.f32.gmra.mrb[0].mxu0 %v228
    %v1203 = vpop.f32.mrb[0].mxu0
    %v1204 = vadd.f32 %v360, %v1203
    %v1205 = vpop.f32.mrb[0].mxu0
    %1206 = vmatprep.mubr.f32.mxu0 %v601
    %1207 = vmatmul.mubr.f32.gmra.mrb[0].mxu0 %v230
    %v1208 = vpop.f32.mrb[0].mxu0
    %v1209 = vadd.f32 %v360, %v1208
    %v1210 = vpop.f32.mrb[0].mxu0
    %1211 = vmatprep.mubr.f32.mxu0 %v604
    %1212 = vmatmul.mubr.f32.gmra.mrb[0].mxu0 %v232
    %v1213 = vpop.f32.mrb[0].mxu0
    %v1214 = vadd.f32 %v360, %v1213
    %v1215 = vpop.f32.mrb[0].mxu0
    %1216 = vmatprep.mubr.f32.mxu0 %v607
    %1217 = vmatmul.mubr.f32.gmra.mrb[0].mxu0 %v234
    %v1218 = vpop.f32.mrb[0].mxu0
    %v1219 = vadd.f32 %v360, %v1218
    %v1220 = vpop.f32.mrb[0].mxu0
    %1221 = vmatprep.mubr.f32.mxu0 %v610
    %1222 = vmatmul.mubr.f32.gmra.mrb[0].mxu0 %v236
    %v1223 = vpop.f32.mrb[0].mxu0
    %v1224 = vadd.f32 %v360, %v1223
    %v1225 = vpop.f32.mrb[0].mxu0
    %1226 = vmatprep.mubr.f32.mxu0 %v613
    %1227 = vmatmul.mubr.f32.gmra.mrb[0].mxu0 %v238
    %v1228 = vpop.f32.mrb[0].mxu0
    %v1229 = vadd.f32 %v360, %v1228
    %v1230 = vpop.f32.mrb[0].mxu0
    %1231 = vmatprep.mubr.f32.mxu0 %v616
    %1232 = vmatmul.mubr.f32.gmra.mrb[0].mxu0 %v240
    %v1233 = vpop.f32.mrb[0].mxu0
    %v1234 = vadd.f32 %v360, %v1233
    %v1235 = vpop.f32.mrb[0].mxu0
    %1236 = vmatprep.mubr.f32.mxu0 %v619
    %1237 = vmatmul.mubr.f32.gmra.mrb[0].mxu0 %v242
    %v1238 = vpop.f32.mrb[0].mxu0
    %v1239 = vadd.f32 %v360, %v1238
    %v1240 = vpop.f32.mrb[0].mxu0
    %1241 = vmatprep.mubr.f32.mxu0 %v622
    %1242 = vmatmul.mubr.f32.gmra.mrb[0].mxu0 %v244
    %v1243 = vpop.f32.mrb[0].mxu0
    %v1244 = vadd.f32 %v360, %v1243
    %v1245 = vpop.f32.mrb[0].mxu0
    %1246 = vmatprep.mubr.f32.mxu0 %v625
    %1247 = vmatmul.mubr.f32.gmra.mrb[0].mxu0 %v246
    %v1248 = vpop.f32.mrb[0].mxu0
    %v1249 = vadd.f32 %v360, %v1248
    %v1250 = vpop.f32.mrb[0].mxu0
    %1251 = vmatprep.mubr.f32.mxu0 %v628
    %1252 = vmatmul.mubr.f32.gmra.mrb[0].mxu0 %v248
    %v1253 = vpop.f32.mrb[0].mxu0
    %v1254 = vadd.f32 %v360, %v1253
    %v1255 = vpop.f32.mrb[0].mxu0
    %1256 = vmatprep.mubr.f32.mxu0 %v631
    %1257 = vmatmul.mubr.f32.gmra.mrb[0].mxu0 %v250
    %v1258 = vpop.f32.mrb[0].mxu0
    %v1259 = vadd.f32 %v360, %v1258
    %v1260 = vpop.f32.mrb[0].mxu0
    %1261 = vmatprep.mubr.f32.mxu0 %v634
    %1262 = vmatmul.mubr.f32.gmra.mrb[0].mxu0 %v252
    %v1263 = vpop.f32.mrb[0].mxu0
    %v1264 = vadd.f32 %v360, %v1263
    %v1265 = vpop.f32.mrb[0].mxu0
    %1266 = vmatprep.mubr.f32.mxu0 %v637
    %1267 = vmatmul.mubr.f32.gmra.mrb[0].mxu0 %v254
    %v1268 = vpop.f32.mrb[0].mxu0
    %v1269 = vadd.f32 %v360, %v1268
    %v1270 = vpop.f32.mrb[0].mxu0
    %1271 = vmatprep.mubr.f32.mxu0 %v640
    %1272 = vmatmul.mubr.f32.gmra.mrb[0].mxu0 %v256
    %v1273 = vpop.f32.mrb[0].mxu0
    %v1274 = vadd.f32 %v360, %v1273
    %v1275 = vpop.f32.mrb[0].mxu0
    %1276 = vmatprep.mubr.f32.mxu0 %v643
    %1277 = vmatmul.mubr.f32.gmra.mrb[0].mxu0 %v258
    %v1278 = vpop.f32.mrb[0].mxu0
    %v1279 = vadd.f32 %v360, %v1278
    %v1280 = vpop.f32.mrb[0].mxu0
    %1281 = vmatprep.mubr.f32.mxu0 %v646
    %1282 = vmatmul.mubr.f32.gmra.mrb[0].mxu0 %v260
    %v1283 = vpop.f32.mrb[0].mxu0
    %v1284 = vadd.f32 %v360, %v1283
    %v1285 = vpop.f32.mrb[0].mxu0
    %1286 = vmatprep.mubr.f32.mxu0 %v649
    %1287 = vmatmul.mubr.f32.gmra.mrb[0].mxu0 %v262
    %v1288 = vpop.f32.mrb[0].mxu0
    %v1289 = vadd.f32 %v360, %v1288
    %v1290 = vpop.f32.mrb[0].mxu0
    %1291 = vmatprep.mubr.f32.mxu0 %v652
    %1292 = vmatmul.mubr.f32.gmra.mrb[0].mxu0 %v264
    %v1293 = vpop.f32.mrb[0].mxu0
    %v1294 = vadd.f32 %v360, %v1293
    %v1295 = vpop.f32.mrb[0].mxu0
    %1296 = vmatprep.mubr.f32.mxu0 %v655
    %1297 = vmatmul.mubr.f32.gmra.mrb[0].mxu0 %v266
    %v1298 = vpop.f32.mrb[0].mxu0
    %v1299 = vadd.f32 %v360, %v1298
    %v1300 = vpop.f32.mrb[0].mxu0
    %1301 = vmatprep.mubr.f32.mxu0 %v658
    %1302 = vmatmul.mubr.f32.gmra.mrb[0].mxu0 %v268
    %v1303 = vpop.f32.mrb[0].mxu0
    %v1304 = vadd.f32 %v360, %v1303
    %v1305 = vpop.f32.mrb[0].mxu0
    %1306 = vmatprep.mubr.f32.mxu0 %v661
    %1307 = vmatmul.mubr.f32.gmra.mrb[0].mxu0 %v270
    %v1308 = vpop.f32.mrb[0].mxu0
    %v1309 = vadd.f32 %v360, %v1308
    %v1310 = vpop.f32.mrb[0].mxu0
    %1311 = vmatprep.mubr.f32.mxu0 %v664
    %1312 = vmatmul.mubr.f32.gmra.mrb[0].mxu0 %v272
    %v1313 = vpop.f32.mrb[0].mxu0
    %v1314 = vadd.f32 %v360, %v1313
    %v1315 = vpop.f32.mrb[0].mxu0
    %1316 = vmatprep.mubr.f32.mxu0 %v667
    %1317 = vmatmul.mubr.f32.gmra.mrb[0].mxu0 %v274
    %v1318 = vpop.f32.mrb[0].mxu0
    %v1319 = vadd.f32 %v360, %v1318
    %v1320 = vpop.f32.mrb[0].mxu0
    %1321 = vmatprep.mubr.f32.mxu0 %v670
    %1322 = vmatmul.mubr.f32.gmra.mrb[0].mxu0 %v276
    %v1323 = vpop.f32.mrb[0].mxu0
    %v1324 = vadd.f32 %v360, %v1323
    %v1325 = vpop.f32.mrb[0].mxu0
    %1326 = vmatprep.mubr.f32.mxu0 %v673
    %1327 = vmatmul.mubr.f32.gmra.mrb[0].mxu0 %v278
    %v1328 = vpop.f32.mrb[0].mxu0
    %v1329 = vadd.f32 %v360, %v1328
    %v1330 = vpop.f32.mrb[0].mxu0
    %1331 = vmatprep.mubr.f32.mxu0 %v676
    %1332 = vmatmul.mubr.f32.gmra.mrb[0].mxu0 %v280
    %v1333 = vpop.f32.mrb[0].mxu0
    %v1334 = vadd.f32 %v360, %v1333
    %v1335 = vpop.f32.mrb[0].mxu0
    %1336 = vmatprep.mubr.f32.mxu0 %v679
    %1337 = vmatmul.mubr.f32.gmra.mrb[0].mxu0 %v282
    %v1338 = vpop.f32.mrb[0].mxu0
    %v1339 = vadd.f32 %v360, %v1338
    %v1340 = vpop.f32.mrb[0].mxu0
    %1341 = vmatprep.mubr.f32.mxu0 %v682
    %1342 = vmatmul.mubr.f32.gmra.mrb[0].mxu0 %v284
    %v1343 = vpop.f32.mrb[0].mxu0
    %v1344 = vadd.f32 %v360, %v1343
    %v1345 = vpop.f32.mrb[0].mxu0
    %1346 = vmatprep.mubr.f32.mxu0 %v685
    %1347 = vmatmul.mubr.f32.gmra.mrb[0].mxu0 %v286
    %v1348 = vpop.f32.mrb[0].mxu0
    %v1349 = vadd.f32 %v360, %v1348
    %v1350 = vpop.f32.mrb[0].mxu0
    %1351 = vmatprep.mubr.f32.mxu0 %v688
    %1352 = vmatmul.mubr.f32.gmra.mrb[0].mxu0 %v288
    %v1353 = vpop.f32.mrb[0].mxu0
    %v1354 = vadd.f32 %v360, %v1353
    %v1355 = vpop.f32.mrb[0].mxu0
    %1356 = vmatprep.mubr.f32.mxu0 %v691
    %1357 = vmatmul.mubr.f32.gmra.mrb[0].mxu0 %v290
    %v1358 = vpop.f32.mrb[0].mxu0
    %v1359 = vadd.f32 %v360, %v1358
    %v1360 = vpop.f32.mrb[0].mxu0
    %1361 = vmatprep.mubr.f32.mxu0 %v694
    %1362 = vmatmul.mubr.f32.gmra.mrb[0].mxu0 %v292
    %v1363 = vpop.f32.mrb[0].mxu0
    %v1364 = vadd.f32 %v360, %v1363
    %v1365 = vpop.f32.mrb[0].mxu0
    %1366 = vmatprep.mubr.f32.mxu0 %v697
    %1367 = vmatmul.mubr.f32.gmra.mrb[0].mxu0 %v294
    %v1368 = vpop.f32.mrb[0].mxu0
    %v1369 = vadd.f32 %v360, %v1368
    %v1370 = vpop.f32.mrb[0].mxu0
    %1371 = vmatprep.mubr.f32.mxu0 %v700
    %1372 = vmatmul.mubr.f32.gmra.mrb[0].mxu0 %v296
    %v1373 = vpop.f32.mrb[0].mxu0
    %v1374 = vadd.f32 %v360, %v1373
    %v1375 = vpop.f32.mrb[0].mxu0
    %1376 = vmatprep.mubr.f32.mxu0 %v703
    %1377 = vmatmul.mubr.f32.gmra.mrb[0].mxu0 %v298
    %v1378 = vpop.f32.mrb[0].mxu0
    %v1379 = vadd.f32 %v360, %v1378
    %v1380 = vpop.f32.mrb[0].mxu0
    %1381 = vmatprep.mubr.f32.mxu0 %v706
    %1382 = vmatmul.mubr.f32.gmra.mrb[0].mxu0 %v300
    %v1383 = vpop.f32.mrb[0].mxu0
    %v1384 = vadd.f32 %v360, %v1383
    %v1385 = vpop.f32.mrb[0].mxu0
    %1386 = vmatprep.mubr.f32.mxu0 %v709
    %1387 = vmatmul.mubr.f32.gmra.mrb[0].mxu0 %v302
    %v1388 = vpop.f32.mrb[0].mxu0
    %v1389 = vadd.f32 %v360, %v1388
    %v1390 = vpop.f32.mrb[0].mxu0
    %1391 = vmatprep.mubr.f32.mxu0 %v712
    %1392 = vmatmul.mubr.f32.gmra.mrb[0].mxu0 %v304
    %v1393 = vpop.f32.mrb[0].mxu0
    %v1394 = vadd.f32 %v360, %v1393
    %v1395 = vpop.f32.mrb[0].mxu0
    %1396 = vmatprep.mubr.f32.mxu0 %v715
    %1397 = vmatmul.mubr.f32.gmra.mrb[0].mxu0 %v306
    %v1398 = vpop.f32.mrb[0].mxu0
    %v1399 = vadd.f32 %v360, %v1398
    %v1400 = vpop.f32.mrb[0].mxu0
    %1401 = vmatprep.mubr.f32.mxu0 %v718
    %1402 = vmatmul.mubr.f32.gmra.mrb[0].mxu0 %v308
    %v1403 = vpop.f32.mrb[0].mxu0
    %v1404 = vadd.f32 %v360, %v1403
    %v1405 = vpop.f32.mrb[0].mxu0
    %1406 = vmatprep.mubr.f32.mxu0 %v721
    %1407 = vmatmul.mubr.f32.gmra.mrb[0].mxu0 %v310
    %v1408 = vpop.f32.mrb[0].mxu0
    %v1409 = vadd.f32 %v360, %v1408
    %v1410 = vpop.f32.mrb[0].mxu0
    %1411 = vmatprep.mubr.f32.mxu0 %v724
    %1412 = vmatmul.mubr.f32.gmra.mrb[0].mxu0 %v312
    %v1413 = vpop.f32.mrb[0].mxu0
    %v1414 = vadd.f32 %v360, %v1413
    %v1415 = vpop.f32.mrb[0].mxu0
    %1416 = vmatprep.mubr.f32.mxu0 %v727
    %1417 = vmatmul.mubr.f32.gmra.mrb[0].mxu0 %v314
    %v1418 = vpop.f32.mrb[0].mxu0
    %v1419 = vadd.f32 %v360, %v1418
    %v1420 = vpop.f32.mrb[0].mxu0
    %1421 = vmatprep.mubr.f32.mxu0 %v730
    %1422 = vmatmul.mubr.f32.gmra.mrb[0].mxu0 %v316
    %v1423 = vpop.f32.mrb[0].mxu0
    %v1424 = vadd.f32 %v360, %v1423
    %v1425 = vpop.f32.mrb[0].mxu0
    %1426 = vmatprep.mubr.f32.mxu0 %v733
    %1427 = vmatmul.mubr.f32.gmra.mrb[0].mxu0 %v318
    %v1428 = vpop.f32.mrb[0].mxu0
    %v1429 = vadd.f32 %v360, %v1428
    %v1430 = vpop.f32.mrb[0].mxu0
    %1431 = vmatprep.mubr.f32.mxu0 %v736
    %1432 = vmatmul.mubr.f32.gmra.mrb[0].mxu0 %v320
    %v1433 = vpop.f32.mrb[0].mxu0
    %v1434 = vadd.f32 %v360, %v1433
    %v1435 = vpop.f32.mrb[0].mxu0
    %1436 = vmatprep.mubr.f32.mxu0 %v739
    %1437 = vmatmul.mubr.f32.gmra.mrb[0].mxu0 %v322
    %v1438 = vpop.f32.mrb[0].mxu0
    %v1439 = vadd.f32 %v360, %v1438
    %v1440 = vpop.f32.mrb[0].mxu0
    %1441 = vmatprep.mubr.f32.mxu0 %v742
    %1442 = vmatmul.mubr.f32.gmra.mrb[0].mxu0 %v324
    %v1443 = vpop.f32.mrb[0].mxu0
    %v1444 = vadd.f32 %v360, %v1443
    %v1445 = vpop.f32.mrb[0].mxu0
    %1446 = vmatprep.mubr.f32.mxu0 %v745
    %1447 = vmatmul.mubr.f32.gmra.mrb[0].mxu0 %v326
    %v1448 = vpop.f32.mrb[0].mxu0
    %v1449 = vadd.f32 %v360, %v1448
    %v1450 = vpop.f32.mrb[0].mxu0
    %1451 = vdwg.mxu0
    %vm1452 = vcmask 64512
    %v1453 = vsel %vm1452, %v814, 0.0
    %v1454 = vsel %vm1452, %v819, 0.0
    %v1455 = vadd.f32 %v1453, %v1454
    %v1456 = vsel %vm1452, %v824, 0.0
    %v1457 = vadd.f32 %v1455, %v1456
    %v1458 = vsel %vm1452, %v829, 0.0
    %v1459 = vadd.f32 %v1457, %v1458
    %v1460 = vsel %vm1452, %v834, 0.0
    %v1461 = vadd.f32 %v1459, %v1460
    %v1462 = vsel %vm1452, %v839, 0.0
    %v1463 = vadd.f32 %v1461, %v1462
    %v1464 = vsel %vm1452, %v844, 0.0
    %v1465 = vadd.f32 %v1463, %v1464
    %v1466 = vsel %vm1452, %v849, 0.0
    %v1467 = vadd.f32 %v1465, %v1466
    %v1468 = vsel %vm1452, %v854, 0.0
    %v1469 = vadd.f32 %v1467, %v1468
    %v1470 = vsel %vm1452, %v859, 0.0
    %v1471 = vadd.f32 %v1469, %v1470
    %v1472 = vsel %vm1452, %v864, 0.0
    %v1473 = vadd.f32 %v1471, %v1472
    %v1474 = vsel %vm1452, %v869, 0.0
    %v1475 = vadd.f32 %v1473, %v1474
    %v1476 = vsel %vm1452, %v874, 0.0
    %v1477 = vadd.f32 %v1475, %v1476
    %v1478 = vsel %vm1452, %v879, 0.0
    %v1479 = vadd.f32 %v1477, %v1478
    %v1480 = vsel %vm1452, %v884, 0.0
    %v1481 = vadd.f32 %v1479, %v1480
    %v1482 = vsel %vm1452, %v889, 0.0
    %v1483 = vadd.f32 %v1481, %v1482
    %v1484 = vsel %vm1452, %v894, 0.0
    %v1485 = vadd.f32 %v1483, %v1484
    %v1486 = vsel %vm1452, %v899, 0.0
    %v1487 = vadd.f32 %v1485, %v1486
    %v1488 = vsel %vm1452, %v904, 0.0
    %v1489 = vadd.f32 %v1487, %v1488
    %v1490 = vsel %vm1452, %v909, 0.0
    %v1491 = vadd.f32 %v1489, %v1490
    %v1492 = vsel %vm1452, %v914, 0.0
    %v1493 = vadd.f32 %v1491, %v1492
    %v1494 = vsel %vm1452, %v919, 0.0
    %v1495 = vadd.f32 %v1493, %v1494
    %v1496 = vsel %vm1452, %v924, 0.0
    %v1497 = vadd.f32 %v1495, %v1496
    %v1498 = vsel %vm1452, %v929, 0.0
    %v1499 = vadd.f32 %v1497, %v1498
    %v1500 = vsel %vm1452, %v934, 0.0
    %v1501 = vadd.f32 %v1499, %v1500
    %v1502 = vsel %vm1452, %v939, 0.0
    %v1503 = vadd.f32 %v1501, %v1502
    %v1504 = vsel %vm1452, %v944, 0.0
    %v1505 = vadd.f32 %v1503, %v1504
    %v1506 = vsel %vm1452, %v949, 0.0
    %v1507 = vadd.f32 %v1505, %v1506
    %v1508 = vsel %vm1452, %v954, 0.0
    %v1509 = vadd.f32 %v1507, %v1508
    %v1510 = vsel %vm1452, %v959, 0.0
    %v1511 = vadd.f32 %v1509, %v1510
    %v1512 = vsel %vm1452, %v964, 0.0
    %v1513 = vadd.f32 %v1511, %v1512
    %v1514 = vsel %vm1452, %v969, 0.0
    %v1515 = vadd.f32 %v1513, %v1514
    %v1516 = vsel %vm1452, %v974, 0.0
    %v1517 = vadd.f32 %v1515, %v1516
    %v1518 = vsel %vm1452, %v979, 0.0
    %v1519 = vadd.f32 %v1517, %v1518
    %v1520 = vsel %vm1452, %v984, 0.0
    %v1521 = vadd.f32 %v1519, %v1520
    %v1522 = vsel %vm1452, %v989, 0.0
    %v1523 = vadd.f32 %v1521, %v1522
    %v1524 = vsel %vm1452, %v994, 0.0
    %v1525 = vadd.f32 %v1523, %v1524
    %v1526 = vsel %vm1452, %v999, 0.0
    %v1527 = vadd.f32 %v1525, %v1526
    %v1528 = vsel %vm1452, %v1004, 0.0
    %v1529 = vadd.f32 %v1527, %v1528
    %v1530 = vsel %vm1452, %v1009, 0.0
    %v1531 = vadd.f32 %v1529, %v1530
    %v1532 = vsel %vm1452, %v1014, 0.0
    %v1533 = vadd.f32 %v1531, %v1532
    %v1534 = vsel %vm1452, %v1019, 0.0
    %v1535 = vadd.f32 %v1533, %v1534
    %v1536 = vsel %vm1452, %v1024, 0.0
    %v1537 = vadd.f32 %v1535, %v1536
    %v1538 = vsel %vm1452, %v1029, 0.0
    %v1539 = vadd.f32 %v1537, %v1538
    %v1540 = vsel %vm1452, %v1034, 0.0
    %v1541 = vadd.f32 %v1539, %v1540
    %v1542 = vsel %vm1452, %v1039, 0.0
    %v1543 = vadd.f32 %v1541, %v1542
    %v1544 = vsel %vm1452, %v1044, 0.0
    %v1545 = vadd.f32 %v1543, %v1544
    %v1546 = vsel %vm1452, %v1049, 0.0
    %v1547 = vadd.f32 %v1545, %v1546
    %v1548 = vsel %vm1452, %v1054, 0.0
    %v1549 = vadd.f32 %v1547, %v1548
    %v1550 = vsel %vm1452, %v1059, 0.0
    %v1551 = vadd.f32 %v1549, %v1550
    %v1552 = vsel %vm1452, %v1064, 0.0
    %v1553 = vadd.f32 %v1551, %v1552
    %v1554 = vsel %vm1452, %v1069, 0.0
    %v1555 = vadd.f32 %v1553, %v1554
    %v1556 = vsel %vm1452, %v1074, 0.0
    %v1557 = vadd.f32 %v1555, %v1556
    %v1558 = vsel %vm1452, %v1079, 0.0
    %v1559 = vadd.f32 %v1557, %v1558
    %v1560 = vsel %vm1452, %v1084, 0.0
    %v1561 = vadd.f32 %v1559, %v1560
    %v1562 = vsel %vm1452, %v1089, 0.0
    %v1563 = vadd.f32 %v1561, %v1562
    %v1564 = vsel %vm1452, %v1094, 0.0
    %v1565 = vadd.f32 %v1563, %v1564
    %v1566 = vsel %vm1452, %v1099, 0.0
    %v1567 = vadd.f32 %v1565, %v1566
    %v1568 = vsel %vm1452, %v1104, 0.0
    %v1569 = vadd.f32 %v1567, %v1568
    %v1570 = vsel %vm1452, %v1109, 0.0
    %v1571 = vadd.f32 %v1569, %v1570
    %v1572 = vsel %vm1452, %v1114, 0.0
    %v1573 = vadd.f32 %v1571, %v1572
    %v1574 = vsel %vm1452, %v1119, 0.0
    %v1575 = vadd.f32 %v1573, %v1574
    %v1576 = vsel %vm1452, %v1124, 0.0
    %v1577 = vadd.f32 %v1575, %v1576
    %v1578 = vsel %vm1452, %v1129, 0.0
    %v1579 = vadd.f32 %v1577, %v1578
    %v1580 = vsel %vm1452, %v1134, 0.0
    %v1581 = vadd.f32 %v1579, %v1580
    %v1582 = vsel %vm1452, %v1139, 0.0
    %v1583 = vadd.f32 %v1581, %v1582
    %v1584 = vsel %vm1452, %v1144, 0.0
    %v1585 = vadd.f32 %v1583, %v1584
    %v1586 = vsel %vm1452, %v1149, 0.0
    %v1587 = vadd.f32 %v1585, %v1586
    %v1588 = vsel %vm1452, %v1154, 0.0
    %v1589 = vadd.f32 %v1587, %v1588
    %v1590 = vsel %vm1452, %v1159, 0.0
    %v1591 = vadd.f32 %v1589, %v1590
    %v1592 = vsel %vm1452, %v1164, 0.0
    %v1593 = vadd.f32 %v1591, %v1592
    %v1594 = vsel %vm1452, %v1169, 0.0
    %v1595 = vadd.f32 %v1593, %v1594
    %v1596 = vsel %vm1452, %v1174, 0.0
    %v1597 = vadd.f32 %v1595, %v1596
    %v1598 = vsel %vm1452, %v1179, 0.0
    %v1599 = vadd.f32 %v1597, %v1598
    %v1600 = vsel %vm1452, %v1184, 0.0
    %v1601 = vadd.f32 %v1599, %v1600
    %v1602 = vsel %vm1452, %v1189, 0.0
    %v1603 = vadd.f32 %v1601, %v1602
    %v1604 = vsel %vm1452, %v1194, 0.0
    %v1605 = vadd.f32 %v1603, %v1604
    %v1606 = vsel %vm1452, %v1199, 0.0
    %v1607 = vadd.f32 %v1605, %v1606
    %v1608 = vsel %vm1452, %v1204, 0.0
    %v1609 = vadd.f32 %v1607, %v1608
    %v1610 = vsel %vm1452, %v1209, 0.0
    %v1611 = vadd.f32 %v1609, %v1610
    %v1612 = vsel %vm1452, %v1214, 0.0
    %v1613 = vadd.f32 %v1611, %v1612
    %v1614 = vsel %vm1452, %v1219, 0.0
    %v1615 = vadd.f32 %v1613, %v1614
    %v1616 = vsel %vm1452, %v1224, 0.0
    %v1617 = vadd.f32 %v1615, %v1616
    %v1618 = vsel %vm1452, %v1229, 0.0
    %v1619 = vadd.f32 %v1617, %v1618
    %v1620 = vsel %vm1452, %v1234, 0.0
    %v1621 = vadd.f32 %v1619, %v1620
    %v1622 = vsel %vm1452, %v1239, 0.0
    %v1623 = vadd.f32 %v1621, %v1622
    %v1624 = vsel %vm1452, %v1244, 0.0
    %v1625 = vadd.f32 %v1623, %v1624
    %v1626 = vsel %vm1452, %v1249, 0.0
    %v1627 = vadd.f32 %v1625, %v1626
    %v1628 = vsel %vm1452, %v1254, 0.0
    %v1629 = vadd.f32 %v1627, %v1628
    %v1630 = vsel %vm1452, %v1259, 0.0
    %v1631 = vadd.f32 %v1629, %v1630
    %v1632 = vsel %vm1452, %v1264, 0.0
    %v1633 = vadd.f32 %v1631, %v1632
    %v1634 = vsel %vm1452, %v1269, 0.0
    %v1635 = vadd.f32 %v1633, %v1634
    %v1636 = vsel %vm1452, %v1274, 0.0
    %v1637 = vadd.f32 %v1635, %v1636
    %v1638 = vsel %vm1452, %v1279, 0.0
    %v1639 = vadd.f32 %v1637, %v1638
    %v1640 = vsel %vm1452, %v1284, 0.0
    %v1641 = vadd.f32 %v1639, %v1640
    %v1642 = vsel %vm1452, %v1289, 0.0
    %v1643 = vadd.f32 %v1641, %v1642
    %v1644 = vsel %vm1452, %v1294, 0.0
    %v1645 = vadd.f32 %v1643, %v1644
    %v1646 = vsel %vm1452, %v1299, 0.0
    %v1647 = vadd.f32 %v1645, %v1646
    %v1648 = vsel %vm1452, %v1304, 0.0
    %v1649 = vadd.f32 %v1647, %v1648
    %v1650 = vsel %vm1452, %v1309, 0.0
    %v1651 = vadd.f32 %v1649, %v1650
    %v1652 = vsel %vm1452, %v1314, 0.0
    %v1653 = vadd.f32 %v1651, %v1652
    %v1654 = vsel %vm1452, %v1319, 0.0
    %v1655 = vadd.f32 %v1653, %v1654
    %v1656 = vsel %vm1452, %v1324, 0.0
    %v1657 = vadd.f32 %v1655, %v1656
    %v1658 = vsel %vm1452, %v1329, 0.0
    %v1659 = vadd.f32 %v1657, %v1658
    %v1660 = vsel %vm1452, %v1334, 0.0
    %v1661 = vadd.f32 %v1659, %v1660
    %v1662 = vsel %vm1452, %v1339, 0.0
    %v1663 = vadd.f32 %v1661, %v1662
    %v1664 = vsel %vm1452, %v1344, 0.0
    %v1665 = vadd.f32 %v1663, %v1664
    %v1666 = vsel %vm1452, %v1349, 0.0
    %v1667 = vadd.f32 %v1665, %v1666
    %v1668 = vsel %vm1452, %v1354, 0.0
    %v1669 = vadd.f32 %v1667, %v1668
    %v1670 = vsel %vm1452, %v1359, 0.0
    %v1671 = vadd.f32 %v1669, %v1670
    %v1672 = vsel %vm1452, %v1364, 0.0
    %v1673 = vadd.f32 %v1671, %v1672
    %v1674 = vsel %vm1452, %v1369, 0.0
    %v1675 = vadd.f32 %v1673, %v1674
    %v1676 = vsel %vm1452, %v1374, 0.0
    %v1677 = vadd.f32 %v1675, %v1676
    %v1678 = vsel %vm1452, %v1379, 0.0
    %v1679 = vadd.f32 %v1677, %v1678
    %v1680 = vsel %vm1452, %v1384, 0.0
    %v1681 = vadd.f32 %v1679, %v1680
    %v1682 = vsel %vm1452, %v1389, 0.0
    %v1683 = vadd.f32 %v1681, %v1682
    %v1684 = vsel %vm1452, %v1394, 0.0
    %v1685 = vadd.f32 %v1683, %v1684
    %v1686 = vsel %vm1452, %v1399, 0.0
    %v1687 = vadd.f32 %v1685, %v1686
    %v1688 = vsel %vm1452, %v1404, 0.0
    %v1689 = vadd.f32 %v1687, %v1688
    %v1690 = vsel %vm1452, %v1409, 0.0
    %v1691 = vadd.f32 %v1689, %v1690
    %v1692 = vsel %vm1452, %v1414, 0.0
    %v1693 = vadd.f32 %v1691, %v1692
    %v1694 = vsel %vm1452, %v1419, 0.0
    %v1695 = vadd.f32 %v1693, %v1694
    %v1696 = vsel %vm1452, %v1424, 0.0
    %v1697 = vadd.f32 %v1695, %v1696
    %v1698 = vsel %vm1452, %v1429, 0.0
    %v1699 = vadd.f32 %v1697, %v1698
    %v1700 = vsel %vm1452, %v1434, 0.0
    %v1701 = vadd.f32 %v1699, %v1700
    %v1702 = vsel %vm1452, %v1439, 0.0
    %v1703 = vadd.f32 %v1701, %v1702
    %v1704 = vsel %vm1452, %v1444, 0.0
    %v1705 = vadd.f32 %v1703, %v1704
    %v1706 = vsel %vm1452, %v1449, 0.0
    %v1707 = vadd.f32 %v1705, %v1706
    %v1708 = vrot.slane %v1707, 4
    %v1709 = vadd.f32 %v1707, %v1708
    %v1710 = vrot.slane %v1709, 2
    %v1711 = vadd.f32 %v1709, %v1710
    %v1712 = vrot.slane %v1711, 1
    %v1713 = vadd.f32 %v1711, %v1712
    %v1714 = vmul.f32 %v1713, 0.0009765625
    %v1715 = vsub.f32 %v814, %v1714
    %v1716 = vsub.f32 %v819, %v1714
    %v1717 = vsub.f32 %v824, %v1714
    %v1718 = vsub.f32 %v829, %v1714
    %v1719 = vsub.f32 %v834, %v1714
    %v1720 = vsub.f32 %v839, %v1714
    %v1721 = vsub.f32 %v844, %v1714
    %v1722 = vsub.f32 %v849, %v1714
    %v1723 = vsub.f32 %v854, %v1714
    %v1724 = vsub.f32 %v859, %v1714
    %v1725 = vsub.f32 %v864, %v1714
    %v1726 = vsub.f32 %v869, %v1714
    %v1727 = vsub.f32 %v874, %v1714
    %v1728 = vsub.f32 %v879, %v1714
    %v1729 = vsub.f32 %v884, %v1714
    %v1730 = vsub.f32 %v889, %v1714
    %v1731 = vsub.f32 %v894, %v1714
    %v1732 = vsub.f32 %v899, %v1714
    %v1733 = vsub.f32 %v904, %v1714
    %v1734 = vsub.f32 %v909, %v1714
    %v1735 = vsub.f32 %v914, %v1714
    %v1736 = vsub.f32 %v919, %v1714
    %v1737 = vsub.f32 %v924, %v1714
    %v1738 = vsub.f32 %v929, %v1714
    %v1739 = vsub.f32 %v934, %v1714
    %v1740 = vsub.f32 %v939, %v1714
    %v1741 = vsub.f32 %v944, %v1714
    %v1742 = vsub.f32 %v949, %v1714
    %v1743 = vsub.f32 %v954, %v1714
    %v1744 = vsub.f32 %v959, %v1714
    %v1745 = vsub.f32 %v964, %v1714
    %v1746 = vsub.f32 %v969, %v1714
    %v1747 = vsub.f32 %v974, %v1714
    %v1748 = vsub.f32 %v979, %v1714
    %v1749 = vsub.f32 %v984, %v1714
    %v1750 = vsub.f32 %v989, %v1714
    %v1751 = vsub.f32 %v994, %v1714
    %v1752 = vsub.f32 %v999, %v1714
    %v1753 = vsub.f32 %v1004, %v1714
    %v1754 = vsub.f32 %v1009, %v1714
    %v1755 = vsub.f32 %v1014, %v1714
    %v1756 = vsub.f32 %v1019, %v1714
    %v1757 = vsub.f32 %v1024, %v1714
    %v1758 = vsub.f32 %v1029, %v1714
    %v1759 = vsub.f32 %v1034, %v1714
    %v1760 = vsub.f32 %v1039, %v1714
    %v1761 = vsub.f32 %v1044, %v1714
    %v1762 = vsub.f32 %v1049, %v1714
    %v1763 = vsub.f32 %v1054, %v1714
    %v1764 = vsub.f32 %v1059, %v1714
    %v1765 = vsub.f32 %v1064, %v1714
    %v1766 = vsub.f32 %v1069, %v1714
    %v1767 = vsub.f32 %v1074, %v1714
    %v1768 = vsub.f32 %v1079, %v1714
    %v1769 = vsub.f32 %v1084, %v1714
    %v1770 = vsub.f32 %v1089, %v1714
    %v1771 = vsub.f32 %v1094, %v1714
    %v1772 = vsub.f32 %v1099, %v1714
    %v1773 = vsub.f32 %v1104, %v1714
    %v1774 = vsub.f32 %v1109, %v1714
    %v1775 = vsub.f32 %v1114, %v1714
    %v1776 = vsub.f32 %v1119, %v1714
    %v1777 = vsub.f32 %v1124, %v1714
    %v1778 = vsub.f32 %v1129, %v1714
    %v1779 = vsub.f32 %v1134, %v1714
    %v1780 = vsub.f32 %v1139, %v1714
    %v1781 = vsub.f32 %v1144, %v1714
    %v1782 = vsub.f32 %v1149, %v1714
    %v1783 = vsub.f32 %v1154, %v1714
    %v1784 = vsub.f32 %v1159, %v1714
    %v1785 = vsub.f32 %v1164, %v1714
    %v1786 = vsub.f32 %v1169, %v1714
    %v1787 = vsub.f32 %v1174, %v1714
    %v1788 = vsub.f32 %v1179, %v1714
    %v1789 = vsub.f32 %v1184, %v1714
    %v1790 = vsub.f32 %v1189, %v1714
    %v1791 = vsub.f32 %v1194, %v1714
    %v1792 = vsub.f32 %v1199, %v1714
    %v1793 = vsub.f32 %v1204, %v1714
    %v1794 = vsub.f32 %v1209, %v1714
    %v1795 = vsub.f32 %v1214, %v1714
    %v1796 = vsub.f32 %v1219, %v1714
    %v1797 = vsub.f32 %v1224, %v1714
    %v1798 = vsub.f32 %v1229, %v1714
    %v1799 = vsub.f32 %v1234, %v1714
    %v1800 = vsub.f32 %v1239, %v1714
    %v1801 = vsub.f32 %v1244, %v1714
    %v1802 = vsub.f32 %v1249, %v1714
    %v1803 = vsub.f32 %v1254, %v1714
    %v1804 = vsub.f32 %v1259, %v1714
    %v1805 = vsub.f32 %v1264, %v1714
    %v1806 = vsub.f32 %v1269, %v1714
    %v1807 = vsub.f32 %v1274, %v1714
    %v1808 = vsub.f32 %v1279, %v1714
    %v1809 = vsub.f32 %v1284, %v1714
    %v1810 = vsub.f32 %v1289, %v1714
    %v1811 = vsub.f32 %v1294, %v1714
    %v1812 = vsub.f32 %v1299, %v1714
    %v1813 = vsub.f32 %v1304, %v1714
    %v1814 = vsub.f32 %v1309, %v1714
    %v1815 = vsub.f32 %v1314, %v1714
    %v1816 = vsub.f32 %v1319, %v1714
    %v1817 = vsub.f32 %v1324, %v1714
    %v1818 = vsub.f32 %v1329, %v1714
    %v1819 = vsub.f32 %v1334, %v1714
    %v1820 = vsub.f32 %v1339, %v1714
    %v1821 = vsub.f32 %v1344, %v1714
    %v1822 = vsub.f32 %v1349, %v1714
    %v1823 = vsub.f32 %v1354, %v1714
    %v1824 = vsub.f32 %v1359, %v1714
    %v1825 = vsub.f32 %v1364, %v1714
    %v1826 = vsub.f32 %v1369, %v1714
    %v1827 = vsub.f32 %v1374, %v1714
    %v1828 = vsub.f32 %v1379, %v1714
    %v1829 = vsub.f32 %v1384, %v1714
    %v1830 = vsub.f32 %v1389, %v1714
    %v1831 = vsub.f32 %v1394, %v1714
    %v1832 = vsub.f32 %v1399, %v1714
    %v1833 = vsub.f32 %v1404, %v1714
    %v1834 = vsub.f32 %v1409, %v1714
    %v1835 = vsub.f32 %v1414, %v1714
    %v1836 = vsub.f32 %v1419, %v1714
    %v1837 = vsub.f32 %v1424, %v1714
    %v1838 = vsub.f32 %v1429, %v1714
    %v1839 = vsub.f32 %v1434, %v1714
    %v1840 = vsub.f32 %v1439, %v1714
    %v1841 = vsub.f32 %v1444, %v1714
    %v1842 = vsub.f32 %v1449, %v1714
    %v1843 = vmul.f32 %v1715, %v1715
    %v1844 = vmul.f32 %v1716, %v1716
    %v1845 = vmul.f32 %v1717, %v1717
    %v1846 = vmul.f32 %v1718, %v1718
    %v1847 = vmul.f32 %v1719, %v1719
    %v1848 = vmul.f32 %v1720, %v1720
    %v1849 = vmul.f32 %v1721, %v1721
    %v1850 = vmul.f32 %v1722, %v1722
    %v1851 = vmul.f32 %v1723, %v1723
    %v1852 = vmul.f32 %v1724, %v1724
    %v1853 = vmul.f32 %v1725, %v1725
    %v1854 = vmul.f32 %v1726, %v1726
    %v1855 = vmul.f32 %v1727, %v1727
    %v1856 = vmul.f32 %v1728, %v1728
    %v1857 = vmul.f32 %v1729, %v1729
    %v1858 = vmul.f32 %v1730, %v1730
    %v1859 = vmul.f32 %v1731, %v1731
    %v1860 = vmul.f32 %v1732, %v1732
    %v1861 = vmul.f32 %v1733, %v1733
    %v1862 = vmul.f32 %v1734, %v1734
    %v1863 = vmul.f32 %v1735, %v1735
    %v1864 = vmul.f32 %v1736, %v1736
    %v1865 = vmul.f32 %v1737, %v1737
    %v1866 = vmul.f32 %v1738, %v1738
    %v1867 = vmul.f32 %v1739, %v1739
    %v1868 = vmul.f32 %v1740, %v1740
    %v1869 = vmul.f32 %v1741, %v1741
    %v1870 = vmul.f32 %v1742, %v1742
    %v1871 = vmul.f32 %v1743, %v1743
    %v1872 = vmul.f32 %v1744, %v1744
    %v1873 = vmul.f32 %v1745, %v1745
    %v1874 = vmul.f32 %v1746, %v1746
    %v1875 = vmul.f32 %v1747, %v1747
    %v1876 = vmul.f32 %v1748, %v1748
    %v1877 = vmul.f32 %v1749, %v1749
    %v1878 = vmul.f32 %v1750, %v1750
    %v1879 = vmul.f32 %v1751, %v1751
    %v1880 = vmul.f32 %v1752, %v1752
    %v1881 = vmul.f32 %v1753, %v1753
    %v1882 = vmul.f32 %v1754, %v1754
    %v1883 = vmul.f32 %v1755, %v1755
    %v1884 = vmul.f32 %v1756, %v1756
    %v1885 = vmul.f32 %v1757, %v1757
    %v1886 = vmul.f32 %v1758, %v1758
    %v1887 = vmul.f32 %v1759, %v1759
    %v1888 = vmul.f32 %v1760, %v1760
    %v1889 = vmul.f32 %v1761, %v1761
    %v1890 = vmul.f32 %v1762, %v1762
    %v1891 = vmul.f32 %v1763, %v1763
    %v1892 = vmul.f32 %v1764, %v1764
    %v1893 = vmul.f32 %v1765, %v1765
    %v1894 = vmul.f32 %v1766, %v1766
    %v1895 = vmul.f32 %v1767, %v1767
    %v1896 = vmul.f32 %v1768, %v1768
    %v1897 = vmul.f32 %v1769, %v1769
    %v1898 = vmul.f32 %v1770, %v1770
    %v1899 = vmul.f32 %v1771, %v1771
    %v1900 = vmul.f32 %v1772, %v1772
    %v1901 = vmul.f32 %v1773, %v1773
    %v1902 = vmul.f32 %v1774, %v1774
    %v1903 = vmul.f32 %v1775, %v1775
    %v1904 = vmul.f32 %v1776, %v1776
    %v1905 = vmul.f32 %v1777, %v1777
    %v1906 = vmul.f32 %v1778, %v1778
    %v1907 = vmul.f32 %v1779, %v1779
    %v1908 = vmul.f32 %v1780, %v1780
    %v1909 = vmul.f32 %v1781, %v1781
    %v1910 = vmul.f32 %v1782, %v1782
    %v1911 = vmul.f32 %v1783, %v1783
    %v1912 = vmul.f32 %v1784, %v1784
    %v1913 = vmul.f32 %v1785, %v1785
    %v1914 = vmul.f32 %v1786, %v1786
    %v1915 = vmul.f32 %v1787, %v1787
    %v1916 = vmul.f32 %v1788, %v1788
    %v1917 = vmul.f32 %v1789, %v1789
    %v1918 = vmul.f32 %v1790, %v1790
    %v1919 = vmul.f32 %v1791, %v1791
    %v1920 = vmul.f32 %v1792, %v1792
    %v1921 = vmul.f32 %v1793, %v1793
    %v1922 = vmul.f32 %v1794, %v1794
    %v1923 = vmul.f32 %v1795, %v1795
    %v1924 = vmul.f32 %v1796, %v1796
    %v1925 = vmul.f32 %v1797, %v1797
    %v1926 = vmul.f32 %v1798, %v1798
    %v1927 = vmul.f32 %v1799, %v1799
    %v1928 = vmul.f32 %v1800, %v1800
    %v1929 = vmul.f32 %v1801, %v1801
    %v1930 = vmul.f32 %v1802, %v1802
    %v1931 = vmul.f32 %v1803, %v1803
    %v1932 = vmul.f32 %v1804, %v1804
    %v1933 = vmul.f32 %v1805, %v1805
    %v1934 = vmul.f32 %v1806, %v1806
    %v1935 = vmul.f32 %v1807, %v1807
    %v1936 = vmul.f32 %v1808, %v1808
    %v1937 = vmul.f32 %v1809, %v1809
    %v1938 = vmul.f32 %v1810, %v1810
    %v1939 = vmul.f32 %v1811, %v1811
    %v1940 = vmul.f32 %v1812, %v1812
    %v1941 = vmul.f32 %v1813, %v1813
    %v1942 = vmul.f32 %v1814, %v1814
    %v1943 = vmul.f32 %v1815, %v1815
    %v1944 = vmul.f32 %v1816, %v1816
    %v1945 = vmul.f32 %v1817, %v1817
    %v1946 = vmul.f32 %v1818, %v1818
    %v1947 = vmul.f32 %v1819, %v1819
    %v1948 = vmul.f32 %v1820, %v1820
    %v1949 = vmul.f32 %v1821, %v1821
    %v1950 = vmul.f32 %v1822, %v1822
    %v1951 = vmul.f32 %v1823, %v1823
    %v1952 = vmul.f32 %v1824, %v1824
    %v1953 = vmul.f32 %v1825, %v1825
    %v1954 = vmul.f32 %v1826, %v1826
    %v1955 = vmul.f32 %v1827, %v1827
    %v1956 = vmul.f32 %v1828, %v1828
    %v1957 = vmul.f32 %v1829, %v1829
    %v1958 = vmul.f32 %v1830, %v1830
    %v1959 = vmul.f32 %v1831, %v1831
    %v1960 = vmul.f32 %v1832, %v1832
    %v1961 = vmul.f32 %v1833, %v1833
    %v1962 = vmul.f32 %v1834, %v1834
    %v1963 = vmul.f32 %v1835, %v1835
    %v1964 = vmul.f32 %v1836, %v1836
    %v1965 = vmul.f32 %v1837, %v1837
    %v1966 = vmul.f32 %v1838, %v1838
    %v1967 = vmul.f32 %v1839, %v1839
    %v1968 = vmul.f32 %v1840, %v1840
    %v1969 = vmul.f32 %v1841, %v1841
    %v1970 = vmul.f32 %v1842, %v1842
    %v1971 = vsel %vm1452, %v1843, 0.0
    %v1972 = vsel %vm1452, %v1844, 0.0
    %v1973 = vadd.f32 %v1971, %v1972
    %v1974 = vsel %vm1452, %v1845, 0.0
    %v1975 = vadd.f32 %v1973, %v1974
    %v1976 = vsel %vm1452, %v1846, 0.0
    %v1977 = vadd.f32 %v1975, %v1976
    %v1978 = vsel %vm1452, %v1847, 0.0
    %v1979 = vadd.f32 %v1977, %v1978
    %v1980 = vsel %vm1452, %v1848, 0.0
    %v1981 = vadd.f32 %v1979, %v1980
    %v1982 = vsel %vm1452, %v1849, 0.0
    %v1983 = vadd.f32 %v1981, %v1982
    %v1984 = vsel %vm1452, %v1850, 0.0
    %v1985 = vadd.f32 %v1983, %v1984
    %v1986 = vsel %vm1452, %v1851, 0.0
    %v1987 = vadd.f32 %v1985, %v1986
    %v1988 = vsel %vm1452, %v1852, 0.0
    %v1989 = vadd.f32 %v1987, %v1988
    %v1990 = vsel %vm1452, %v1853, 0.0
    %v1991 = vadd.f32 %v1989, %v1990
    %v1992 = vsel %vm1452, %v1854, 0.0
    %v1993 = vadd.f32 %v1991, %v1992
    %v1994 = vsel %vm1452, %v1855, 0.0
    %v1995 = vadd.f32 %v1993, %v1994
    %v1996 = vsel %vm1452, %v1856, 0.0
    %v1997 = vadd.f32 %v1995, %v1996
    %v1998 = vsel %vm1452, %v1857, 0.0
    %v1999 = vadd.f32 %v1997, %v1998
    %v2000 = vsel %vm1452, %v1858, 0.0
    %v2001 = vadd.f32 %v1999, %v2000
    %v2002 = vsel %vm1452, %v1859, 0.0
    %v2003 = vadd.f32 %v2001, %v2002
    %v2004 = vsel %vm1452, %v1860, 0.0
    %v2005 = vadd.f32 %v2003, %v2004
    %v2006 = vsel %vm1452, %v1861, 0.0
    %v2007 = vadd.f32 %v2005, %v2006
    %v2008 = vsel %vm1452, %v1862, 0.0
    %v2009 = vadd.f32 %v2007, %v2008
    %v2010 = vsel %vm1452, %v1863, 0.0
    %v2011 = vadd.f32 %v2009, %v2010
    %v2012 = vsel %vm1452, %v1864, 0.0
    %v2013 = vadd.f32 %v2011, %v2012
    %v2014 = vsel %vm1452, %v1865, 0.0
    %v2015 = vadd.f32 %v2013, %v2014
    %v2016 = vsel %vm1452, %v1866, 0.0
    %v2017 = vadd.f32 %v2015, %v2016
    %v2018 = vsel %vm1452, %v1867, 0.0
    %v2019 = vadd.f32 %v2017, %v2018
    %v2020 = vsel %vm1452, %v1868, 0.0
    %v2021 = vadd.f32 %v2019, %v2020
    %v2022 = vsel %vm1452, %v1869, 0.0
    %v2023 = vadd.f32 %v2021, %v2022
    %v2024 = vsel %vm1452, %v1870, 0.0
    %v2025 = vadd.f32 %v2023, %v2024
    %v2026 = vsel %vm1452, %v1871, 0.0
    %v2027 = vadd.f32 %v2025, %v2026
    %v2028 = vsel %vm1452, %v1872, 0.0
    %v2029 = vadd.f32 %v2027, %v2028
    %v2030 = vsel %vm1452, %v1873, 0.0
    %v2031 = vadd.f32 %v2029, %v2030
    %v2032 = vsel %vm1452, %v1874, 0.0
    %v2033 = vadd.f32 %v2031, %v2032
    %v2034 = vsel %vm1452, %v1875, 0.0
    %v2035 = vadd.f32 %v2033, %v2034
    %v2036 = vsel %vm1452, %v1876, 0.0
    %v2037 = vadd.f32 %v2035, %v2036
    %v2038 = vsel %vm1452, %v1877, 0.0
    %v2039 = vadd.f32 %v2037, %v2038
    %v2040 = vsel %vm1452, %v1878, 0.0
    %v2041 = vadd.f32 %v2039, %v2040
    %v2042 = vsel %vm1452, %v1879, 0.0
    %v2043 = vadd.f32 %v2041, %v2042
    %v2044 = vsel %vm1452, %v1880, 0.0
    %v2045 = vadd.f32 %v2043, %v2044
    %v2046 = vsel %vm1452, %v1881, 0.0
    %v2047 = vadd.f32 %v2045, %v2046
    %v2048 = vsel %vm1452, %v1882, 0.0
    %v2049 = vadd.f32 %v2047, %v2048
    %v2050 = vsel %vm1452, %v1883, 0.0
    %v2051 = vadd.f32 %v2049, %v2050
    %v2052 = vsel %vm1452, %v1884, 0.0
    %v2053 = vadd.f32 %v2051, %v2052
    %v2054 = vsel %vm1452, %v1885, 0.0
    %v2055 = vadd.f32 %v2053, %v2054
    %v2056 = vsel %vm1452, %v1886, 0.0
    %v2057 = vadd.f32 %v2055, %v2056
    %v2058 = vsel %vm1452, %v1887, 0.0
    %v2059 = vadd.f32 %v2057, %v2058
    %v2060 = vsel %vm1452, %v1888, 0.0
    %v2061 = vadd.f32 %v2059, %v2060
    %v2062 = vsel %vm1452, %v1889, 0.0
    %v2063 = vadd.f32 %v2061, %v2062
    %v2064 = vsel %vm1452, %v1890, 0.0
    %v2065 = vadd.f32 %v2063, %v2064
    %v2066 = vsel %vm1452, %v1891, 0.0
    %v2067 = vadd.f32 %v2065, %v2066
    %v2068 = vsel %vm1452, %v1892, 0.0
    %v2069 = vadd.f32 %v2067, %v2068
    %v2070 = vsel %vm1452, %v1893, 0.0
    %v2071 = vadd.f32 %v2069, %v2070
    %v2072 = vsel %vm1452, %v1894, 0.0
    %v2073 = vadd.f32 %v2071, %v2072
    %v2074 = vsel %vm1452, %v1895, 0.0
    %v2075 = vadd.f32 %v2073, %v2074
    %v2076 = vsel %vm1452, %v1896, 0.0
    %v2077 = vadd.f32 %v2075, %v2076
    %v2078 = vsel %vm1452, %v1897, 0.0
    %v2079 = vadd.f32 %v2077, %v2078
    %v2080 = vsel %vm1452, %v1898, 0.0
    %v2081 = vadd.f32 %v2079, %v2080
    %v2082 = vsel %vm1452, %v1899, 0.0
    %v2083 = vadd.f32 %v2081, %v2082
    %v2084 = vsel %vm1452, %v1900, 0.0
    %v2085 = vadd.f32 %v2083, %v2084
    %v2086 = vsel %vm1452, %v1901, 0.0
    %v2087 = vadd.f32 %v2085, %v2086
    %v2088 = vsel %vm1452, %v1902, 0.0
    %v2089 = vadd.f32 %v2087, %v2088
    %v2090 = vsel %vm1452, %v1903, 0.0
    %v2091 = vadd.f32 %v2089, %v2090
    %v2092 = vsel %vm1452, %v1904, 0.0
    %v2093 = vadd.f32 %v2091, %v2092
    %v2094 = vsel %vm1452, %v1905, 0.0
    %v2095 = vadd.f32 %v2093, %v2094
    %v2096 = vsel %vm1452, %v1906, 0.0
    %v2097 = vadd.f32 %v2095, %v2096
    %v2098 = vsel %vm1452, %v1907, 0.0
    %v2099 = vadd.f32 %v2097, %v2098
    %v2100 = vsel %vm1452, %v1908, 0.0
    %v2101 = vadd.f32 %v2099, %v2100
    %v2102 = vsel %vm1452, %v1909, 0.0
    %v2103 = vadd.f32 %v2101, %v2102
    %v2104 = vsel %vm1452, %v1910, 0.0
    %v2105 = vadd.f32 %v2103, %v2104
    %v2106 = vsel %vm1452, %v1911, 0.0
    %v2107 = vadd.f32 %v2105, %v2106
    %v2108 = vsel %vm1452, %v1912, 0.0
    %v2109 = vadd.f32 %v2107, %v2108
    %v2110 = vsel %vm1452, %v1913, 0.0
    %v2111 = vadd.f32 %v2109, %v2110
    %v2112 = vsel %vm1452, %v1914, 0.0
    %v2113 = vadd.f32 %v2111, %v2112
    %v2114 = vsel %vm1452, %v1915, 0.0
    %v2115 = vadd.f32 %v2113, %v2114
    %v2116 = vsel %vm1452, %v1916, 0.0
    %v2117 = vadd.f32 %v2115, %v2116
    %v2118 = vsel %vm1452, %v1917, 0.0
    %v2119 = vadd.f32 %v2117, %v2118
    %v2120 = vsel %vm1452, %v1918, 0.0
    %v2121 = vadd.f32 %v2119, %v2120
    %v2122 = vsel %vm1452, %v1919, 0.0
    %v2123 = vadd.f32 %v2121, %v2122
    %v2124 = vsel %vm1452, %v1920, 0.0
    %v2125 = vadd.f32 %v2123, %v2124
    %v2126 = vsel %vm1452, %v1921, 0.0
    %v2127 = vadd.f32 %v2125, %v2126
    %v2128 = vsel %vm1452, %v1922, 0.0
    %v2129 = vadd.f32 %v2127, %v2128
    %v2130 = vsel %vm1452, %v1923, 0.0
    %v2131 = vadd.f32 %v2129, %v2130
    %v2132 = vsel %vm1452, %v1924, 0.0
    %v2133 = vadd.f32 %v2131, %v2132
    %v2134 = vsel %vm1452, %v1925, 0.0
    %v2135 = vadd.f32 %v2133, %v2134
    %v2136 = vsel %vm1452, %v1926, 0.0
    %v2137 = vadd.f32 %v2135, %v2136
    %v2138 = vsel %vm1452, %v1927, 0.0
    %v2139 = vadd.f32 %v2137, %v2138
    %v2140 = vsel %vm1452, %v1928, 0.0
    %v2141 = vadd.f32 %v2139, %v2140
    %v2142 = vsel %vm1452, %v1929, 0.0
    %v2143 = vadd.f32 %v2141, %v2142
    %v2144 = vsel %vm1452, %v1930, 0.0
    %v2145 = vadd.f32 %v2143, %v2144
    %v2146 = vsel %vm1452, %v1931, 0.0
    %v2147 = vadd.f32 %v2145, %v2146
    %v2148 = vsel %vm1452, %v1932, 0.0
    %v2149 = vadd.f32 %v2147, %v2148
    %v2150 = vsel %vm1452, %v1933, 0.0
    %v2151 = vadd.f32 %v2149, %v2150
    %v2152 = vsel %vm1452, %v1934, 0.0
    %v2153 = vadd.f32 %v2151, %v2152
    %v2154 = vsel %vm1452, %v1935, 0.0
    %v2155 = vadd.f32 %v2153, %v2154
    %v2156 = vsel %vm1452, %v1936, 0.0
    %v2157 = vadd.f32 %v2155, %v2156
    %v2158 = vsel %vm1452, %v1937, 0.0
    %v2159 = vadd.f32 %v2157, %v2158
    %v2160 = vsel %vm1452, %v1938, 0.0
    %v2161 = vadd.f32 %v2159, %v2160
    %v2162 = vsel %vm1452, %v1939, 0.0
    %v2163 = vadd.f32 %v2161, %v2162
    %v2164 = vsel %vm1452, %v1940, 0.0
    %v2165 = vadd.f32 %v2163, %v2164
    %v2166 = vsel %vm1452, %v1941, 0.0
    %v2167 = vadd.f32 %v2165, %v2166
    %v2168 = vsel %vm1452, %v1942, 0.0
    %v2169 = vadd.f32 %v2167, %v2168
    %v2170 = vsel %vm1452, %v1943, 0.0
    %v2171 = vadd.f32 %v2169, %v2170
    %v2172 = vsel %vm1452, %v1944, 0.0
    %v2173 = vadd.f32 %v2171, %v2172
    %v2174 = vsel %vm1452, %v1945, 0.0
    %v2175 = vadd.f32 %v2173, %v2174
    %v2176 = vsel %vm1452, %v1946, 0.0
    %v2177 = vadd.f32 %v2175, %v2176
    %v2178 = vsel %vm1452, %v1947, 0.0
    %v2179 = vadd.f32 %v2177, %v2178
    %v2180 = vsel %vm1452, %v1948, 0.0
    %v2181 = vadd.f32 %v2179, %v2180
    %v2182 = vsel %vm1452, %v1949, 0.0
    %v2183 = vadd.f32 %v2181, %v2182
    %v2184 = vsel %vm1452, %v1950, 0.0
    %v2185 = vadd.f32 %v2183, %v2184
    %v2186 = vsel %vm1452, %v1951, 0.0
    %v2187 = vadd.f32 %v2185, %v2186
    %v2188 = vsel %vm1452, %v1952, 0.0
    %v2189 = vadd.f32 %v2187, %v2188
    %v2190 = vsel %vm1452, %v1953, 0.0
    %v2191 = vadd.f32 %v2189, %v2190
    %v2192 = vsel %vm1452, %v1954, 0.0
    %v2193 = vadd.f32 %v2191, %v2192
    %v2194 = vsel %vm1452, %v1955, 0.0
    %v2195 = vadd.f32 %v2193, %v2194
    %v2196 = vsel %vm1452, %v1956, 0.0
    %v2197 = vadd.f32 %v2195, %v2196
    %v2198 = vsel %vm1452, %v1957, 0.0
    %v2199 = vadd.f32 %v2197, %v2198
    %v2200 = vsel %vm1452, %v1958, 0.0
    %v2201 = vadd.f32 %v2199, %v2200
    %v2202 = vsel %vm1452, %v1959, 0.0
    %v2203 = vadd.f32 %v2201, %v2202
    %v2204 = vsel %vm1452, %v1960, 0.0
    %v2205 = vadd.f32 %v2203, %v2204
    %v2206 = vsel %vm1452, %v1961, 0.0
    %v2207 = vadd.f32 %v2205, %v2206
    %v2208 = vsel %vm1452, %v1962, 0.0
    %v2209 = vadd.f32 %v2207, %v2208
    %v2210 = vsel %vm1452, %v1963, 0.0
    %v2211 = vadd.f32 %v2209, %v2210
    %v2212 = vsel %vm1452, %v1964, 0.0
    %v2213 = vadd.f32 %v2211, %v2212
    %v2214 = vsel %vm1452, %v1965, 0.0
    %v2215 = vadd.f32 %v2213, %v2214
    %v2216 = vsel %vm1452, %v1966, 0.0
    %v2217 = vadd.f32 %v2215, %v2216
    %v2218 = vsel %vm1452, %v1967, 0.0
    %v2219 = vadd.f32 %v2217, %v2218
    %v2220 = vsel %vm1452, %v1968, 0.0
    %v2221 = vadd.f32 %v2219, %v2220
    %v2222 = vsel %vm1452, %v1969, 0.0
    %v2223 = vadd.f32 %v2221, %v2222
    %v2224 = vsel %vm1452, %v1970, 0.0
    %v2225 = vadd.f32 %v2223, %v2224
    %v2226 = vrot.slane %v2225, 4
    %v2227 = vadd.f32 %v2225, %v2226
    %v2228 = vrot.slane %v2227, 2
    %v2229 = vadd.f32 %v2227, %v2228
    %v2230 = vrot.slane %v2229, 1
    %v2231 = vadd.f32 %v2229, %v2230
    %v2232 = vmul.f32 %v2231, 0.0009765625
    %v2233 = vadd.f32 %v2232, 1e-05
    %v2234 = vrsqrt.pop %v2233
    %v2235 = vld [vmem:[#allocation4] sm:$0x1]
    %v2236 = vmul.f32 %v2235, %v2234
    %v2238 = vlaneseq
    %v2239 = vshrl.u32 %v2238, 7
    %v2240 = vsub.s32 0, %v2239
    %v2241 = vrot.slane %v2236, %v2240
    %v2243 = vmul.f32 %v1715, %v2241
    %v2244 = vmul.f32 %v1716, %v2241
    %v2245 = vmul.f32 %v1717, %v2241
    %v2246 = vmul.f32 %v1718, %v2241
    %v2247 = vmul.f32 %v1719, %v2241
    %v2248 = vmul.f32 %v1720, %v2241
    %v2249 = vmul.f32 %v1721, %v2241
    %v2250 = vmul.f32 %v1722, %v2241
    %v2251 = vmul.f32 %v1723, %v2241
    %v2252 = vmul.f32 %v1724, %v2241
    %v2253 = vmul.f32 %v1725, %v2241
    %v2254 = vmul.f32 %v1726, %v2241
    %v2255 = vmul.f32 %v1727, %v2241
    %v2256 = vmul.f32 %v1728, %v2241
    %v2257 = vmul.f32 %v1729, %v2241
    %v2258 = vmul.f32 %v1730, %v2241
    %v2259 = vmul.f32 %v1731, %v2241
    %v2260 = vmul.f32 %v1732, %v2241
    %v2261 = vmul.f32 %v1733, %v2241
    %v2262 = vmul.f32 %v1734, %v2241
    %v2263 = vmul.f32 %v1735, %v2241
    %v2264 = vmul.f32 %v1736, %v2241
    %v2265 = vmul.f32 %v1737, %v2241
    %v2266 = vmul.f32 %v1738, %v2241
    %v2267 = vmul.f32 %v1739, %v2241
    %v2268 = vmul.f32 %v1740, %v2241
    %v2269 = vmul.f32 %v1741, %v2241
    %v2270 = vmul.f32 %v1742, %v2241
    %v2271 = vmul.f32 %v1743, %v2241
    %v2272 = vmul.f32 %v1744, %v2241
    %v2273 = vmul.f32 %v1745, %v2241
    %v2274 = vmul.f32 %v1746, %v2241
    %v2275 = vmul.f32 %v1747, %v2241
    %v2276 = vmul.f32 %v1748, %v2241
    %v2277 = vmul.f32 %v1749, %v2241
    %v2278 = vmul.f32 %v1750, %v2241
    %v2279 = vmul.f32 %v1751, %v2241
    %v2280 = vmul.f32 %v1752, %v2241
    %v2281 = vmul.f32 %v1753, %v2241
    %v2282 = vmul.f32 %v1754, %v2241
    %v2283 = vmul.f32 %v1755, %v2241
    %v2284 = vmul.f32 %v1756, %v2241
    %v2285 = vmul.f32 %v1757, %v2241
    %v2286 = vmul.f32 %v1758, %v2241
    %v2287 = vmul.f32 %v1759, %v2241
    %v2288 = vmul.f32 %v1760, %v2241
    %v2289 = vmul.f32 %v1761, %v2241
    %v2290 = vmul.f32 %v1762, %v2241
    %v2291 = vmul.f32 %v1763, %v2241
    %v2292 = vmul.f32 %v1764, %v2241
    %v2293 = vmul.f32 %v1765, %v2241
    %v2294 = vmul.f32 %v1766, %v2241
    %v2295 = vmul.f32 %v1767, %v2241
    %v2296 = vmul.f32 %v1768, %v2241
    %v2297 = vmul.f32 %v1769, %v2241
    %v2298 = vmul.f32 %v1770, %v2241
    %v2299 = vmul.f32 %v1771, %v2241
    %v2300 = vmul.f32 %v1772, %v2241
    %v2301 = vmul.f32 %v1773, %v2241
    %v2302 = vmul.f32 %v1774, %v2241
    %v2303 = vmul.f32 %v1775, %v2241
    %v2304 = vmul.f32 %v1776, %v2241
    %v2305 = vmul.f32 %v1777, %v2241
    %v2306 = vmul.f32 %v1778, %v2241
    %v2307 = vmul.f32 %v1779, %v2241
    %v2308 = vmul.f32 %v1780, %v2241
    %v2309 = vmul.f32 %v1781, %v2241
    %v2310 = vmul.f32 %v1782, %v2241
    %v2311 = vmul.f32 %v1783, %v2241
    %v2312 = vmul.f32 %v1784, %v2241
    %v2313 = vmul.f32 %v1785, %v2241
    %v2314 = vmul.f32 %v1786, %v2241
    %v2315 = vmul.f32 %v1787, %v2241
    %v2316 = vmul.f32 %v1788, %v2241
    %v2317 = vmul.f32 %v1789, %v2241
    %v2318 = vmul.f32 %v1790, %v2241
    %v2319 = vmul.f32 %v1791, %v2241
    %v2320 = vmul.f32 %v1792, %v2241
    %v2321 = vmul.f32 %v1793, %v2241
    %v2322 = vmul.f32 %v1794, %v2241
    %v2323 = vmul.f32 %v1795, %v2241
    %v2324 = vmul.f32 %v1796, %v2241
    %v2325 = vmul.f32 %v1797, %v2241
    %v2326 = vmul.f32 %v1798, %v2241
    %v2327 = vmul.f32 %v1799, %v2241
    %v2328 = vmul.f32 %v1800, %v2241
    %v2329 = vmul.f32 %v1801, %v2241
    %v2330 = vmul.f32 %v1802, %v2241
    %v2331 = vmul.f32 %v1803, %v2241
    %v2332 = vmul.f32 %v1804, %v2241
    %v2333 = vmul.f32 %v1805, %v2241
    %v2334 = vmul.f32 %v1806, %v2241
    %v2335 = vmul.f32 %v1807, %v2241
    %v2336 = vmul.f32 %v1808, %v2241
    %v2337 = vmul.f32 %v1809, %v2241
    %v2338 = vmul.f32 %v1810, %v2241
    %v2339 = vmul.f32 %v1811, %v2241
    %v2340 = vmul.f32 %v1812, %v2241
    %v2341 = vmul.f32 %v1813, %v2241
    %v2342 = vmul.f32 %v1814, %v2241
    %v2343 = vmul.f32 %v1815, %v2241
    %v2344 = vmul.f32 %v1816, %v2241
    %v2345 = vmul.f32 %v1817, %v2241
    %v2346 = vmul.f32 %v1818, %v2241
    %v2347 = vmul.f32 %v1819, %v2241
    %v2348 = vmul.f32 %v1820, %v2241
    %v2349 = vmul.f32 %v1821, %v2241
    %v2350 = vmul.f32 %v1822, %v2241
    %v2351 = vmul.f32 %v1823, %v2241
    %v2352 = vmul.f32 %v1824, %v2241
    %v2353 = vmul.f32 %v1825, %v2241
    %v2354 = vmul.f32 %v1826, %v2241
    %v2355 = vmul.f32 %v1827, %v2241
    %v2356 = vmul.f32 %v1828, %v2241
    %v2357 = vmul.f32 %v1829, %v2241
    %v2358 = vmul.f32 %v1830, %v2241
    %v2359 = vmul.f32 %v1831, %v2241
    %v2360 = vmul.f32 %v1832, %v2241
    %v2361 = vmul.f32 %v1833, %v2241
    %v2362 = vmul.f32 %v1834, %v2241
    %v2363 = vmul.f32 %v1835, %v2241
    %v2364 = vmul.f32 %v1836, %v2241
    %v2365 = vmul.f32 %v1837, %v2241
    %v2366 = vmul.f32 %v1838, %v2241
    %v2367 = vmul.f32 %v1839, %v2241
    %v2368 = vmul.f32 %v1840, %v2241
    %v2369 = vmul.f32 %v1841, %v2241
    %v2370 = vmul.f32 %v1842, %v2241
    %v2371 = vld [vmem:[#allocation6] sm:$0x1]
    %v2373 = vlaneseq
    %v2374 = vshrl.u32 %v2373, 7
    %v2375 = vsub.s32 0, %v2374
    %v2376 = vrot.slane %v2371, %v2375
    %v2378 = vadd.f32 %v2243, %v2376
    %v2379 = vadd.f32 %v2244, %v2376
    %v2380 = vadd.f32 %v2245, %v2376
    %v2381 = vadd.f32 %v2246, %v2376
    %v2382 = vadd.f32 %v2247, %v2376
    %v2383 = vadd.f32 %v2248, %v2376
    %v2384 = vadd.f32 %v2249, %v2376
    %v2385 = vadd.f32 %v2250, %v2376
    %v2386 = vadd.f32 %v2251, %v2376
    %v2387 = vadd.f32 %v2252, %v2376
    %v2388 = vadd.f32 %v2253, %v2376
    %v2389 = vadd.f32 %v2254, %v2376
    %v2390 = vadd.f32 %v2255, %v2376
    %v2391 = vadd.f32 %v2256, %v2376
    %v2392 = vadd.f32 %v2257, %v2376
    %v2393 = vadd.f32 %v2258, %v2376
    %v2394 = vadd.f32 %v2259, %v2376
    %v2395 = vadd.f32 %v2260, %v2376
    %v2396 = vadd.f32 %v2261, %v2376
    %v2397 = vadd.f32 %v2262, %v2376
    %v2398 = vadd.f32 %v2263, %v2376
    %v2399 = vadd.f32 %v2264, %v2376
    %v2400 = vadd.f32 %v2265, %v2376
    %v2401 = vadd.f32 %v2266, %v2376
    %v2402 = vadd.f32 %v2267, %v2376
    %v2403 = vadd.f32 %v2268, %v2376
    %v2404 = vadd.f32 %v2269, %v2376
    %v2405 = vadd.f32 %v2270, %v2376
    %v2406 = vadd.f32 %v2271, %v2376
    %v2407 = vadd.f32 %v2272, %v2376
    %v2408 = vadd.f32 %v2273, %v2376
    %v2409 = vadd.f32 %v2274, %v2376
    %v2410 = vadd.f32 %v2275, %v2376
    %v2411 = vadd.f32 %v2276, %v2376
    %v2412 = vadd.f32 %v2277, %v2376
    %v2413 = vadd.f32 %v2278, %v2376
    %v2414 = vadd.f32 %v2279, %v2376
    %v2415 = vadd.f32 %v2280, %v2376
    %v2416 = vadd.f32 %v2281, %v2376
    %v2417 = vadd.f32 %v2282, %v2376
    %v2418 = vadd.f32 %v2283, %v2376
    %v2419 = vadd.f32 %v2284, %v2376
    %v2420 = vadd.f32 %v2285, %v2376
    %v2421 = vadd.f32 %v2286, %v2376
    %v2422 = vadd.f32 %v2287, %v2376
    %v2423 = vadd.f32 %v2288, %v2376
    %v2424 = vadd.f32 %v2289, %v2376
    %v2425 = vadd.f32 %v2290, %v2376
    %v2426 = vadd.f32 %v2291, %v2376
    %v2427 = vadd.f32 %v2292, %v2376
    %v2428 = vadd.f32 %v2293, %v2376
    %v2429 = vadd.f32 %v2294, %v2376
    %v2430 = vadd.f32 %v2295, %v2376
    %v2431 = vadd.f32 %v2296, %v2376
    %v2432 = vadd.f32 %v2297, %v2376
    %v2433 = vadd.f32 %v2298, %v2376
    %v2434 = vadd.f32 %v2299, %v2376
    %v2435 = vadd.f32 %v2300, %v2376
    %v2436 = vadd.f32 %v2301, %v2376
    %v2437 = vadd.f32 %v2302, %v2376
    %v2438 = vadd.f32 %v2303, %v2376
    %v2439 = vadd.f32 %v2304, %v2376
    %v2440 = vadd.f32 %v2305, %v2376
    %v2441 = vadd.f32 %v2306, %v2376
    %v2442 = vadd.f32 %v2307, %v2376
    %v2443 = vadd.f32 %v2308, %v2376
    %v2444 = vadd.f32 %v2309, %v2376
    %v2445 = vadd.f32 %v2310, %v2376
    %v2446 = vadd.f32 %v2311, %v2376
    %v2447 = vadd.f32 %v2312, %v2376
    %v2448 = vadd.f32 %v2313, %v2376
    %v2449 = vadd.f32 %v2314, %v2376
    %v2450 = vadd.f32 %v2315, %v2376
    %v2451 = vadd.f32 %v2316, %v2376
    %v2452 = vadd.f32 %v2317, %v2376
    %v2453 = vadd.f32 %v2318, %v2376
    %v2454 = vadd.f32 %v2319, %v2376
    %v2455 = vadd.f32 %v2320, %v2376
    %v2456 = vadd.f32 %v2321, %v2376
    %v2457 = vadd.f32 %v2322, %v2376
    %v2458 = vadd.f32 %v2323, %v2376
    %v2459 = vadd.f32 %v2324, %v2376
    %v2460 = vadd.f32 %v2325, %v2376
    %v2461 = vadd.f32 %v2326, %v2376
    %v2462 = vadd.f32 %v2327, %v2376
    %v2463 = vadd.f32 %v2328, %v2376
    %v2464 = vadd.f32 %v2329, %v2376
    %v2465 = vadd.f32 %v2330, %v2376
    %v2466 = vadd.f32 %v2331, %v2376
    %v2467 = vadd.f32 %v2332, %v2376
    %v2468 = vadd.f32 %v2333, %v2376
    %v2469 = vadd.f32 %v2334, %v2376
    %v2470 = vadd.f32 %v2335, %v2376
    %v2471 = vadd.f32 %v2336, %v2376
    %v2472 = vadd.f32 %v2337, %v2376
    %v2473 = vadd.f32 %v2338, %v2376
    %v2474 = vadd.f32 %v2339, %v2376
    %v2475 = vadd.f32 %v2340, %v2376
    %v2476 = vadd.f32 %v2341, %v2376
    %v2477 = vadd.f32 %v2342, %v2376
    %v2478 = vadd.f32 %v2343, %v2376
    %v2479 = vadd.f32 %v2344, %v2376
    %v2480 = vadd.f32 %v2345, %v2376
    %v2481 = vadd.f32 %v2346, %v2376
    %v2482 = vadd.f32 %v2347, %v2376
    %v2483 = vadd.f32 %v2348, %v2376
    %v2484 = vadd.f32 %v2349, %v2376
    %v2485 = vadd.f32 %v2350, %v2376
    %v2486 = vadd.f32 %v2351, %v2376
    %v2487 = vadd.f32 %v2352, %v2376
    %v2488 = vadd.f32 %v2353, %v2376
    %v2489 = vadd.f32 %v2354, %v2376
    %v2490 = vadd.f32 %v2355, %v2376
    %v2491 = vadd.f32 %v2356, %v2376
    %v2492 = vadd.f32 %v2357, %v2376
    %v2493 = vadd.f32 %v2358, %v2376
    %v2494 = vadd.f32 %v2359, %v2376
    %v2495 = vadd.f32 %v2360, %v2376
    %v2496 = vadd.f32 %v2361, %v2376
    %v2497 = vadd.f32 %v2362, %v2376
    %v2498 = vadd.f32 %v2363, %v2376
    %v2499 = vadd.f32 %v2364, %v2376
    %v2500 = vadd.f32 %v2365, %v2376
    %v2501 = vadd.f32 %v2366, %v2376
    %v2502 = vadd.f32 %v2367, %v2376
    %v2503 = vadd.f32 %v2368, %v2376
    %v2504 = vadd.f32 %v2369, %v2376
    %v2505 = vadd.f32 %v2370, %v2376
    %v2506 = vld [vmem:[#allocation7] sm:$0xff]
    %v2507 = vld [vmem:[#allocation7 + $0x8] sm:$0xff]
    %v2508 = vld [vmem:[#allocation7 + $0x10] sm:$0xff]
    %v2509 = vld [vmem:[#allocation7 + $0x18] sm:$0xff]
    %v2510 = vld [vmem:[#allocation7 + $0x20] sm:$0xff]
    %v2511 = vld [vmem:[#allocation7 + $0x28] sm:$0xff]
    %v2512 = vld [vmem:[#allocation7 + $0x30] sm:$0xff]
    %v2513 = vld [vmem:[#allocation7 + $0x38] sm:$0xff]
    %v2514 = vld [vmem:[#allocation7 + $0x40] sm:$0xff]
    %v2515 = vld [vmem:[#allocation7 + $0x48] sm:$0xff]
    %v2516 = vld [vmem:[#allocation7 + $0x50] sm:$0xff]
    %v2517 = vld [vmem:[#allocation7 + $0x58] sm:$0xff]
    %v2518 = vld [vmem:[#allocation7 + $0x60] sm:$0xff]
    %v2519 = vld [vmem:[#allocation7 + $0x68] sm:$0xff]
    %v2520 = vld [vmem:[#allocation7 + $0x70] sm:$0xff]
    %v2521 = vld [vmem:[#allocation7 + $0x78] sm:$0xff]
    %v2522 = vld [vmem:[#allocation7 + $0x80] sm:$0xff]
    %v2523 = vld [vmem:[#allocation7 + $0x88] sm:$0xff]
    %v2524 = vld [vmem:[#allocation7 + $0x90] sm:$0xff]
    %v2525 = vld [vmem:[#allocation7 + $0x98] sm:$0xff]
    %v2526 = vld [vmem:[#allocation7 + $0xa0] sm:$0xff]
    %v2527 = vld [vmem:[#allocation7 + $0xa8] sm:$0xff]
    %v2528 = vld [vmem:[#allocation7 + $0xb0] sm:$0xff]
    %v2529 = vld [vmem:[#allocation7 + $0xb8] sm:$0xff]
    %v2530 = vld [vmem:[#allocation7 + $0xc0] sm:$0xff]
    %v2531 = vld [vmem:[#allocation7 + $0xc8] sm:$0xff]
    %v2532 = vld [vmem:[#allocation7 + $0xd0] sm:$0xff]
    %v2533 = vld [vmem:[#allocation7 + $0xd8] sm:$0xff]
    %v2534 = vld [vmem:[#allocation7 + $0xe0] sm:$0xff]
    %v2535 = vld [vmem:[#allocation7 + $0xe8] sm:$0xff]
    %v2536 = vld [vmem:[#allocation7 + $0xf0] sm:$0xff]
    %v2537 = vld [vmem:[#allocation7 + $0xf8] sm:$0xff]
    %v2538 = vld [vmem:[#allocation7 + $0x100] sm:$0xff]
    %v2539 = vld [vmem:[#allocation7 + $0x108] sm:$0xff]
    %v2540 = vld [vmem:[#allocation7 + $0x110] sm:$0xff]
    %v2541 = vld [vmem:[#allocation7 + $0x118] sm:$0xff]
    %v2542 = vld [vmem:[#allocation7 + $0x120] sm:$0xff]
    %v2543 = vld [vmem:[#allocation7 + $0x128] sm:$0xff]
    %v2544 = vld [vmem:[#allocation7 + $0x130] sm:$0xff]
    %v2545 = vld [vmem:[#allocation7 + $0x138] sm:$0xff]
    %v2546 = vld [vmem:[#allocation7 + $0x140] sm:$0xff]
    %v2547 = vld [vmem:[#allocation7 + $0x148] sm:$0xff]
    %v2548 = vld [vmem:[#allocation7 + $0x150] sm:$0xff]
    %v2549 = vld [vmem:[#allocation7 + $0x158] sm:$0xff]
    %v2550 = vld [vmem:[#allocation7 + $0x160] sm:$0xff]
    %v2551 = vld [vmem:[#allocation7 + $0x168] sm:$0xff]
    %v2552 = vld [vmem:[#allocation7 + $0x170] sm:$0xff]
    %v2553 = vld [vmem:[#allocation7 + $0x178] sm:$0xff]
    %v2554 = vld [vmem:[#allocation7 + $0x180] sm:$0xff]
    %v2555 = vld [vmem:[#allocation7 + $0x188] sm:$0xff]
    %v2556 = vld [vmem:[#allocation7 + $0x190] sm:$0xff]
    %v2557 = vld [vmem:[#allocation7 + $0x198] sm:$0xff]
    %v2558 = vld [vmem:[#allocation7 + $0x1a0] sm:$0xff]
    %v2559 = vld [vmem:[#allocation7 + $0x1a8] sm:$0xff]
    %v2560 = vld [vmem:[#allocation7 + $0x1b0] sm:$0xff]
    %v2561 = vld [vmem:[#allocation7 + $0x1b8] sm:$0xff]
    %v2562 = vld [vmem:[#allocation7 + $0x1c0] sm:$0xff]
    %v2563 = vld [vmem:[#allocation7 + $0x1c8] sm:$0xff]
    %v2564 = vld [vmem:[#allocation7 + $0x1d0] sm:$0xff]
    %v2565 = vld [vmem:[#allocation7 + $0x1d8] sm:$0xff]
    %v2566 = vld [vmem:[#allocation7 + $0x1e0] sm:$0xff]
    %v2567 = vld [vmem:[#allocation7 + $0x1e8] sm:$0xff]
    %v2568 = vld [vmem:[#allocation7 + $0x1f0] sm:$0xff]
    %v2569 = vld [vmem:[#allocation7 + $0x1f8] sm:$0xff]
    %v2570 = vld [vmem:[#allocation7 + $0x200] sm:$0xff]
    %v2571 = vld [vmem:[#allocation7 + $0x208] sm:$0xff]
    %v2572 = vld [vmem:[#allocation7 + $0x210] sm:$0xff]
    %v2573 = vld [vmem:[#allocation7 + $0x218] sm:$0xff]
    %v2574 = vld [vmem:[#allocation7 + $0x220] sm:$0xff]
    %v2575 = vld [vmem:[#allocation7 + $0x228] sm:$0xff]
    %v2576 = vld [vmem:[#allocation7 + $0x230] sm:$0xff]
    %v2577 = vld [vmem:[#allocation7 + $0x238] sm:$0xff]
    %v2578 = vld [vmem:[#allocation7 + $0x240] sm:$0xff]
    %v2579 = vld [vmem:[#allocation7 + $0x248] sm:$0xff]
    %v2580 = vld [vmem:[#allocation7 + $0x250] sm:$0xff]
    %v2581 = vld [vmem:[#allocation7 + $0x258] sm:$0xff]
    %v2582 = vld [vmem:[#allocation7 + $0x260] sm:$0xff]
    %v2583 = vld [vmem:[#allocation7 + $0x268] sm:$0xff]
    %v2584 = vld [vmem:[#allocation7 + $0x270] sm:$0xff]
    %v2585 = vld [vmem:[#allocation7 + $0x278] sm:$0xff]
    %v2586 = vld [vmem:[#allocation7 + $0x280] sm:$0xff]
    %v2587 = vld [vmem:[#allocation7 + $0x288] sm:$0xff]
    %v2588 = vld [vmem:[#allocation7 + $0x290] sm:$0xff]
    %v2589 = vld [vmem:[#allocation7 + $0x298] sm:$0xff]
    %v2590 = vld [vmem:[#allocation7 + $0x2a0] sm:$0xff]
    %v2591 = vld [vmem:[#allocation7 + $0x2a8] sm:$0xff]
    %v2592 = vld [vmem:[#allocation7 + $0x2b0] sm:$0xff]
    %v2593 = vld [vmem:[#allocation7 + $0x2b8] sm:$0xff]
    %v2594 = vld [vmem:[#allocation7 + $0x2c0] sm:$0xff]
    %v2595 = vld [vmem:[#allocation7 + $0x2c8] sm:$0xff]
    %v2596 = vld [vmem:[#allocation7 + $0x2d0] sm:$0xff]
    %v2597 = vld [vmem:[#allocation7 + $0x2d8] sm:$0xff]
    %v2598 = vld [vmem:[#allocation7 + $0x2e0] sm:$0xff]
    %v2599 = vld [vmem:[#allocation7 + $0x2e8] sm:$0xff]
    %v2600 = vld [vmem:[#allocation7 + $0x2f0] sm:$0xff]
    %v2601 = vld [vmem:[#allocation7 + $0x2f8] sm:$0xff]
    %v2602 = vld [vmem:[#allocation7 + $0x300] sm:$0xff]
    %v2603 = vld [vmem:[#allocation7 + $0x308] sm:$0xff]
    %v2604 = vld [vmem:[#allocation7 + $0x310] sm:$0xff]
    %v2605 = vld [vmem:[#allocation7 + $0x318] sm:$0xff]
    %v2606 = vld [vmem:[#allocation7 + $0x320] sm:$0xff]
    %v2607 = vld [vmem:[#allocation7 + $0x328] sm:$0xff]
    %v2608 = vld [vmem:[#allocation7 + $0x330] sm:$0xff]
    %v2609 = vld [vmem:[#allocation7 + $0x338] sm:$0xff]
    %v2610 = vld [vmem:[#allocation7 + $0x340] sm:$0xff]
    %v2611 = vld [vmem:[#allocation7 + $0x348] sm:$0xff]
    %v2612 = vld [vmem:[#allocation7 + $0x350] sm:$0xff]
    %v2613 = vld [vmem:[#allocation7 + $0x358] sm:$0xff]
    %v2614 = vld [vmem:[#allocation7 + $0x360] sm:$0xff]
    %v2615 = vld [vmem:[#allocation7 + $0x368] sm:$0xff]
    %v2616 = vld [vmem:[#allocation7 + $0x370] sm:$0xff]
    %v2617 = vld [vmem:[#allocation7 + $0x378] sm:$0xff]
    %v2618 = vld [vmem:[#allocation7 + $0x380] sm:$0xff]
    %v2619 = vld [vmem:[#allocation7 + $0x388] sm:$0xff]
    %v2620 = vld [vmem:[#allocation7 + $0x390] sm:$0xff]
    %v2621 = vld [vmem:[#allocation7 + $0x398] sm:$0xff]
    %v2622 = vld [vmem:[#allocation7 + $0x3a0] sm:$0xff]
    %v2623 = vld [vmem:[#allocation7 + $0x3a8] sm:$0xff]
    %v2624 = vld [vmem:[#allocation7 + $0x3b0] sm:$0xff]
    %v2625 = vld [vmem:[#allocation7 + $0x3b8] sm:$0xff]
    %v2626 = vld [vmem:[#allocation7 + $0x3c0] sm:$0xff]
    %v2627 = vld [vmem:[#allocation7 + $0x3c8] sm:$0xff]
    %v2628 = vld [vmem:[#allocation7 + $0x3d0] sm:$0xff]
    %v2629 = vld [vmem:[#allocation7 + $0x3d8] sm:$0xff]
    %v2630 = vld [vmem:[#allocation7 + $0x3e0] sm:$0xff]
    %v2631 = vld [vmem:[#allocation7 + $0x3e8] sm:$0xff]
    %v2632 = vld [vmem:[#allocation7 + $0x3f0] sm:$0xff]
    %v2633 = vld [vmem:[#allocation7 + $0x3f8] sm:$0xff]
    %v2634 = vadd.f32 %v2378, %v2506
    %v2635 = vadd.f32 %v2379, %v2507
    %v2636 = vadd.f32 %v2380, %v2508
    %v2637 = vadd.f32 %v2381, %v2509
    %v2638 = vadd.f32 %v2382, %v2510
    %v2639 = vadd.f32 %v2383, %v2511
    %v2640 = vadd.f32 %v2384, %v2512
    %v2641 = vadd.f32 %v2385, %v2513
    %v2642 = vadd.f32 %v2386, %v2514
    %v2643 = vadd.f32 %v2387, %v2515
    %v2644 = vadd.f32 %v2388, %v2516
    %v2645 = vadd.f32 %v2389, %v2517
    %v2646 = vadd.f32 %v2390, %v2518
    %v2647 = vadd.f32 %v2391, %v2519
    %v2648 = vadd.f32 %v2392, %v2520
    %v2649 = vadd.f32 %v2393, %v2521
    %v2650 = vadd.f32 %v2394, %v2522
    %v2651 = vadd.f32 %v2395, %v2523
    %v2652 = vadd.f32 %v2396, %v2524
    %v2653 = vadd.f32 %v2397, %v2525
    %v2654 = vadd.f32 %v2398, %v2526
    %v2655 = vadd.f32 %v2399, %v2527
    %v2656 = vadd.f32 %v2400, %v2528
    %v2657 = vadd.f32 %v2401, %v2529
    %v2658 = vadd.f32 %v2402, %v2530
    %v2659 = vadd.f32 %v2403, %v2531
    %v2660 = vadd.f32 %v2404, %v2532
    %v2661 = vadd.f32 %v2405, %v2533
    %v2662 = vadd.f32 %v2406, %v2534
    %v2663 = vadd.f32 %v2407, %v2535
    %v2664 = vadd.f32 %v2408, %v2536
    %v2665 = vadd.f32 %v2409, %v2537
    %v2666 = vadd.f32 %v2410, %v2538
    %v2667 = vadd.f32 %v2411, %v2539
    %v2668 = vadd.f32 %v2412, %v2540
    %v2669 = vadd.f32 %v2413, %v2541
    %v2670 = vadd.f32 %v2414, %v2542
    %v2671 = vadd.f32 %v2415, %v2543
    %v2672 = vadd.f32 %v2416, %v2544
    %v2673 = vadd.f32 %v2417, %v2545
    %v2674 = vadd.f32 %v2418, %v2546
    %v2675 = vadd.f32 %v2419, %v2547
    %v2676 = vadd.f32 %v2420, %v2548
    %v2677 = vadd.f32 %v2421, %v2549
    %v2678 = vadd.f32 %v2422, %v2550
    %v2679 = vadd.f32 %v2423, %v2551
    %v2680 = vadd.f32 %v2424, %v2552
    %v2681 = vadd.f32 %v2425, %v2553
    %v2682 = vadd.f32 %v2426, %v2554
    %v2683 = vadd.f32 %v2427, %v2555
    %v2684 = vadd.f32 %v2428, %v2556
    %v2685 = vadd.f32 %v2429, %v2557
    %v2686 = vadd.f32 %v2430, %v2558
    %v2687 = vadd.f32 %v2431, %v2559
    %v2688 = vadd.f32 %v2432, %v2560
    %v2689 = vadd.f32 %v2433, %v2561
    %v2690 = vadd.f32 %v2434, %v2562
    %v2691 = vadd.f32 %v2435, %v2563
    %v2692 = vadd.f32 %v2436, %v2564
    %v2693 = vadd.f32 %v2437, %v2565
    %v2694 = vadd.f32 %v2438, %v2566
    %v2695 = vadd.f32 %v2439, %v2567
    %v2696 = vadd.f32 %v2440, %v2568
    %v2697 = vadd.f32 %v2441, %v2569
    %v2698 = vadd.f32 %v2442, %v2570
    %v2699 = vadd.f32 %v2443, %v2571
    %v2700 = vadd.f32 %v2444, %v2572
    %v2701 = vadd.f32 %v2445, %v2573
    %v2702 = vadd.f32 %v2446, %v2574
    %v2703 = vadd.f32 %v2447, %v2575
    %v2704 = vadd.f32 %v2448, %v2576
    %v2705 = vadd.f32 %v2449, %v2577
    %v2706 = vadd.f32 %v2450, %v2578
    %v2707 = vadd.f32 %v2451, %v2579
    %v2708 = vadd.f32 %v2452, %v2580
    %v2709 = vadd.f32 %v2453, %v2581
    %v2710 = vadd.f32 %v2454, %v2582
    %v2711 = vadd.f32 %v2455, %v2583
    %v2712 = vadd.f32 %v2456, %v2584
    %v2713 = vadd.f32 %v2457, %v2585
    %v2714 = vadd.f32 %v2458, %v2586
    %v2715 = vadd.f32 %v2459, %v2587
    %v2716 = vadd.f32 %v2460, %v2588
    %v2717 = vadd.f32 %v2461, %v2589
    %v2718 = vadd.f32 %v2462, %v2590
    %v2719 = vadd.f32 %v2463, %v2591
    %v2720 = vadd.f32 %v2464, %v2592
    %v2721 = vadd.f32 %v2465, %v2593
    %v2722 = vadd.f32 %v2466, %v2594
    %v2723 = vadd.f32 %v2467, %v2595
    %v2724 = vadd.f32 %v2468, %v2596
    %v2725 = vadd.f32 %v2469, %v2597
    %v2726 = vadd.f32 %v2470, %v2598
    %v2727 = vadd.f32 %v2471, %v2599
    %v2728 = vadd.f32 %v2472, %v2600
    %v2729 = vadd.f32 %v2473, %v2601
    %v2730 = vadd.f32 %v2474, %v2602
    %v2731 = vadd.f32 %v2475, %v2603
    %v2732 = vadd.f32 %v2476, %v2604
    %v2733 = vadd.f32 %v2477, %v2605
    %v2734 = vadd.f32 %v2478, %v2606
    %v2735 = vadd.f32 %v2479, %v2607
    %v2736 = vadd.f32 %v2480, %v2608
    %v2737 = vadd.f32 %v2481, %v2609
    %v2738 = vadd.f32 %v2482, %v2610
    %v2739 = vadd.f32 %v2483, %v2611
    %v2740 = vadd.f32 %v2484, %v2612
    %v2741 = vadd.f32 %v2485, %v2613
    %v2742 = vadd.f32 %v2486, %v2614
    %v2743 = vadd.f32 %v2487, %v2615
    %v2744 = vadd.f32 %v2488, %v2616
    %v2745 = vadd.f32 %v2489, %v2617
    %v2746 = vadd.f32 %v2490, %v2618
    %v2747 = vadd.f32 %v2491, %v2619
    %v2748 = vadd.f32 %v2492, %v2620
    %v2749 = vadd.f32 %v2493, %v2621
    %v2750 = vadd.f32 %v2494, %v2622
    %v2751 = vadd.f32 %v2495, %v2623
    %v2752 = vadd.f32 %v2496, %v2624
    %v2753 = vadd.f32 %v2497, %v2625
    %v2754 = vadd.f32 %v2498, %v2626
    %v2755 = vadd.f32 %v2499, %v2627
    %v2756 = vadd.f32 %v2500, %v2628
    %v2757 = vadd.f32 %v2501, %v2629
    %v2758 = vadd.f32 %v2502, %v2630
    %v2759 = vadd.f32 %v2503, %v2631
    %v2760 = vadd.f32 %v2504, %v2632
    %v2761 = vadd.f32 %v2505, %v2633
    %v2762 = vmax.f32 %v2634, 0.0
    %v2763 = vmax.f32 %v2635, 0.0
    %v2764 = vmax.f32 %v2636, 0.0
    %v2765 = vmax.f32 %v2637, 0.0
    %v2766 = vmax.f32 %v2638, 0.0
    %v2767 = vmax.f32 %v2639, 0.0
    %v2768 = vmax.f32 %v2640, 0.0
    %v2769 = vmax.f32 %v2641, 0.0
    %v2770 = vmax.f32 %v2642, 0.0
    %v2771 = vmax.f32 %v2643, 0.0
    %v2772 = vmax.f32 %v2644, 0.0
    %v2773 = vmax.f32 %v2645, 0.0
    %v2774 = vmax.f32 %v2646, 0.0
    %v2775 = vmax.f32 %v2647, 0.0
    %v2776 = vmax.f32 %v2648, 0.0
    %v2777 = vmax.f32 %v2649, 0.0
    %v2778 = vmax.f32 %v2650, 0.0
    %v2779 = vmax.f32 %v2651, 0.0
    %v2780 = vmax.f32 %v2652, 0.0
    %v2781 = vmax.f32 %v2653, 0.0
    %v2782 = vmax.f32 %v2654, 0.0
    %v2783 = vmax.f32 %v2655, 0.0
    %v2784 = vmax.f32 %v2656, 0.0
    %v2785 = vmax.f32 %v2657, 0.0
    %v2786 = vmax.f32 %v2658, 0.0
    %v2787 = vmax.f32 %v2659, 0.0
    %v2788 = vmax.f32 %v2660, 0.0
    %v2789 = vmax.f32 %v2661, 0.0
    %v2790 = vmax.f32 %v2662, 0.0
    %v2791 = vmax.f32 %v2663, 0.0
    %v2792 = vmax.f32 %v2664, 0.0
    %v2793 = vmax.f32 %v2665, 0.0
    %v2794 = vmax.f32 %v2666, 0.0
    %v2795 = vmax.f32 %v2667, 0.0
    %v2796 = vmax.f32 %v2668, 0.0
    %v2797 = vmax.f32 %v2669, 0.0
    %v2798 = vmax.f32 %v2670, 0.0
    %v2799 = vmax.f32 %v2671, 0.0
    %v2800 = vmax.f32 %v2672, 0.0
    %v2801 = vmax.f32 %v2673, 0.0
    %v2802 = vmax.f32 %v2674, 0.0
    %v2803 = vmax.f32 %v2675, 0.0
    %v2804 = vmax.f32 %v2676, 0.0
    %v2805 = vmax.f32 %v2677, 0.0
    %v2806 = vmax.f32 %v2678, 0.0
    %v2807 = vmax.f32 %v2679, 0.0
    %v2808 = vmax.f32 %v2680, 0.0
    %v2809 = vmax.f32 %v2681, 0.0
    %v2810 = vmax.f32 %v2682, 0.0
    %v2811 = vmax.f32 %v2683, 0.0
    %v2812 = vmax.f32 %v2684, 0.0
    %v2813 = vmax.f32 %v2685, 0.0
    %v2814 = vmax.f32 %v2686, 0.0
    %v2815 = vmax.f32 %v2687, 0.0
    %v2816 = vmax.f32 %v2688, 0.0
    %v2817 = vmax.f32 %v2689, 0.0
    %v2818 = vmax.f32 %v2690, 0.0
    %v2819 = vmax.f32 %v2691, 0.0
    %v2820 = vmax.f32 %v2692, 0.0
    %v2821 = vmax.f32 %v2693, 0.0
    %v2822 = vmax.f32 %v2694, 0.0
    %v2823 = vmax.f32 %v2695, 0.0
    %v2824 = vmax.f32 %v2696, 0.0
    %v2825 = vmax.f32 %v2697, 0.0
    %v2826 = vmax.f32 %v2698, 0.0
    %v2827 = vmax.f32 %v2699, 0.0
    %v2828 = vmax.f32 %v2700, 0.0
    %v2829 = vmax.f32 %v2701, 0.0
    %v2830 = vmax.f32 %v2702, 0.0
    %v2831 = vmax.f32 %v2703, 0.0
    %v2832 = vmax.f32 %v2704, 0.0
    %v2833 = vmax.f32 %v2705, 0.0
    %v2834 = vmax.f32 %v2706, 0.0
    %v2835 = vmax.f32 %v2707, 0.0
    %v2836 = vmax.f32 %v2708, 0.0
    %v2837 = vmax.f32 %v2709, 0.0
    %v2838 = vmax.f32 %v2710, 0.0
    %v2839 = vmax.f32 %v2711, 0.0
    %v2840 = vmax.f32 %v2712, 0.0
    %v2841 = vmax.f32 %v2713, 0.0
    %v2842 = vmax.f32 %v2714, 0.0
    %v2843 = vmax.f32 %v2715, 0.0
    %v2844 = vmax.f32 %v2716, 0.0
    %v2845 = vmax.f32 %v2717, 0.0
    %v2846 = vmax.f32 %v2718, 0.0
    %v2847 = vmax.f32 %v2719, 0.0
    %v2848 = vmax.f32 %v2720, 0.0
    %v2849 = vmax.f32 %v2721, 0.0
    %v2850 = vmax.f32 %v2722, 0.0
    %v2851 = vmax.f32 %v2723, 0.0
    %v2852 = vmax.f32 %v2724, 0.0
    %v2853 = vmax.f32 %v2725, 0.0
    %v2854 = vmax.f32 %v2726, 0.0
    %v2855 = vmax.f32 %v2727, 0.0
    %v2856 = vmax.f32 %v2728, 0.0
    %v2857 = vmax.f32 %v2729, 0.0
    %v2858 = vmax.f32 %v2730, 0.0
    %v2859 = vmax.f32 %v2731, 0.0
    %v2860 = vmax.f32 %v2732, 0.0
    %v2861 = vmax.f32 %v2733, 0.0
    %v2862 = vmax.f32 %v2734, 0.0
    %v2863 = vmax.f32 %v2735, 0.0
    %v2864 = vmax.f32 %v2736, 0.0
    %v2865 = vmax.f32 %v2737, 0.0
    %v2866 = vmax.f32 %v2738, 0.0
    %v2867 = vmax.f32 %v2739, 0.0
    %v2868 = vmax.f32 %v2740, 0.0
    %v2869 = vmax.f32 %v2741, 0.0
    %v2870 = vmax.f32 %v2742, 0.0
    %v2871 = vmax.f32 %v2743, 0.0
    %v2872 = vmax.f32 %v2744, 0.0
    %v2873 = vmax.f32 %v2745, 0.0
    %v2874 = vmax.f32 %v2746, 0.0
    %v2875 = vmax.f32 %v2747, 0.0
    %v2876 = vmax.f32 %v2748, 0.0
    %v2877 = vmax.f32 %v2749, 0.0
    %v2878 = vmax.f32 %v2750, 0.0
    %v2879 = vmax.f32 %v2751, 0.0
    %v2880 = vmax.f32 %v2752, 0.0
    %v2881 = vmax.f32 %v2753, 0.0
    %v2882 = vmax.f32 %v2754, 0.0
    %v2883 = vmax.f32 %v2755, 0.0
    %v2884 = vmax.f32 %v2756, 0.0
    %v2885 = vmax.f32 %v2757, 0.0
    %v2886 = vmax.f32 %v2758, 0.0
    %v2887 = vmax.f32 %v2759, 0.0
    %v2888 = vmax.f32 %v2760, 0.0
    %v2889 = vmax.f32 %v2761, 0.0
    %2890 = vst.msk [vmem:[%s6] sm:$0xff] %vm1452, %v2762
    %2891 = vst.msk [vmem:[%s6 + $0x8] sm:$0xff] %vm1452, %v2763
    %2892 = vst.msk [vmem:[%s6 + $0x10] sm:$0xff] %vm1452, %v2764
    %2893 = vst.msk [vmem:[%s6 + $0x18] sm:$0xff] %vm1452, %v2765
    %2894 = vst.msk [vmem:[%s6 + $0x20] sm:$0xff] %vm1452, %v2766
    %2895 = vst.msk [vmem:[%s6 + $0x28] sm:$0xff] %vm1452, %v2767
    %2896 = vst.msk [vmem:[%s6 + $0x30] sm:$0xff] %vm1452, %v2768
    %2897 = vst.msk [vmem:[%s6 + $0x38] sm:$0xff] %vm1452, %v2769
    %2898 = vst.msk [vmem:[%s6 + $0x40] sm:$0xff] %vm1452, %v2770
    %2899 = vst.msk [vmem:[%s6 + $0x48] sm:$0xff] %vm1452, %v2771
    %2900 = vst.msk [vmem:[%s6 + $0x50] sm:$0xff] %vm1452, %v2772
    %2901 = vst.msk [vmem:[%s6 + $0x58] sm:$0xff] %vm1452, %v2773
    %2902 = vst.msk [vmem:[%s6 + $0x60] sm:$0xff] %vm1452, %v2774
    %2903 = vst.msk [vmem:[%s6 + $0x68] sm:$0xff] %vm1452, %v2775
    %2904 = vst.msk [vmem:[%s6 + $0x70] sm:$0xff] %vm1452, %v2776
    %2905 = vst.msk [vmem:[%s6 + $0x78] sm:$0xff] %vm1452, %v2777
    %2906 = vst.msk [vmem:[%s6 + $0x80] sm:$0xff] %vm1452, %v2778
    %2907 = vst.msk [vmem:[%s6 + $0x88] sm:$0xff] %vm1452, %v2779
    %2908 = vst.msk [vmem:[%s6 + $0x90] sm:$0xff] %vm1452, %v2780
    %2909 = vst.msk [vmem:[%s6 + $0x98] sm:$0xff] %vm1452, %v2781
    %2910 = vst.msk [vmem:[%s6 + $0xa0] sm:$0xff] %vm1452, %v2782
    %2911 = vst.msk [vmem:[%s6 + $0xa8] sm:$0xff] %vm1452, %v2783
    %2912 = vst.msk [vmem:[%s6 + $0xb0] sm:$0xff] %vm1452, %v2784
    %2913 = vst.msk [vmem:[%s6 + $0xb8] sm:$0xff] %vm1452, %v2785
    %2914 = vst.msk [vmem:[%s6 + $0xc0] sm:$0xff] %vm1452, %v2786
    %2915 = vst.msk [vmem:[%s6 + $0xc8] sm:$0xff] %vm1452, %v2787
    %2916 = vst.msk [vmem:[%s6 + $0xd0] sm:$0xff] %vm1452, %v2788
    %2917 = vst.msk [vmem:[%s6 + $0xd8] sm:$0xff] %vm1452, %v2789
    %2918 = vst.msk [vmem:[%s6 + $0xe0] sm:$0xff] %vm1452, %v2790
    %2919 = vst.msk [vmem:[%s6 + $0xe8] sm:$0xff] %vm1452, %v2791
    %2920 = vst.msk [vmem:[%s6 + $0xf0] sm:$0xff] %vm1452, %v2792
    %2921 = vst.msk [vmem:[%s6 + $0xf8] sm:$0xff] %vm1452, %v2793
    %2922 = vst.msk [vmem:[%s6 + $0x100] sm:$0xff] %vm1452, %v2794
    %2923 = vst.msk [vmem:[%s6 + $0x108] sm:$0xff] %vm1452, %v2795
    %2924 = vst.msk [vmem:[%s6 + $0x110] sm:$0xff] %vm1452, %v2796
    %2925 = vst.msk [vmem:[%s6 + $0x118] sm:$0xff] %vm1452, %v2797
    %2926 = vst.msk [vmem:[%s6 + $0x120] sm:$0xff] %vm1452, %v2798
    %2927 = vst.msk [vmem:[%s6 + $0x128] sm:$0xff] %vm1452, %v2799
    %2928 = vst.msk [vmem:[%s6 + $0x130] sm:$0xff] %vm1452, %v2800
    %2929 = vst.msk [vmem:[%s6 + $0x138] sm:$0xff] %vm1452, %v2801
    %2930 = vst.msk [vmem:[%s6 + $0x140] sm:$0xff] %vm1452, %v2802
    %2931 = vst.msk [vmem:[%s6 + $0x148] sm:$0xff] %vm1452, %v2803
    %2932 = vst.msk [vmem:[%s6 + $0x150] sm:$0xff] %vm1452, %v2804
    %2933 = vst.msk [vmem:[%s6 + $0x158] sm:$0xff] %vm1452, %v2805
    %2934 = vst.msk [vmem:[%s6 + $0x160] sm:$0xff] %vm1452, %v2806
    %2935 = vst.msk [vmem:[%s6 + $0x168] sm:$0xff] %vm1452, %v2807
    %2936 = vst.msk [vmem:[%s6 + $0x170] sm:$0xff] %vm1452, %v2808
    %2937 = vst.msk [vmem:[%s6 + $0x178] sm:$0xff] %vm1452, %v2809
    %2938 = vst.msk [vmem:[%s6 + $0x180] sm:$0xff] %vm1452, %v2810
    %2939 = vst.msk [vmem:[%s6 + $0x188] sm:$0xff] %vm1452, %v2811
    %2940 = vst.msk [vmem:[%s6 + $0x190] sm:$0xff] %vm1452, %v2812
    %2941 = vst.msk [vmem:[%s6 + $0x198] sm:$0xff] %vm1452, %v2813
    %2942 = vst.msk [vmem:[%s6 + $0x1a0] sm:$0xff] %vm1452, %v2814
    %2943 = vst.msk [vmem:[%s6 + $0x1a8] sm:$0xff] %vm1452, %v2815
    %2944 = vst.msk [vmem:[%s6 + $0x1b0] sm:$0xff] %vm1452, %v2816
    %2945 = vst.msk [vmem:[%s6 + $0x1b8] sm:$0xff] %vm1452, %v2817
    %2946 = vst.msk [vmem:[%s6 + $0x1c0] sm:$0xff] %vm1452, %v2818
    %2947 = vst.msk [vmem:[%s6 + $0x1c8] sm:$0xff] %vm1452, %v2819
    %2948 = vst.msk [vmem:[%s6 + $0x1d0] sm:$0xff] %vm1452, %v2820
    %2949 = vst.msk [vmem:[%s6 + $0x1d8] sm:$0xff] %vm1452, %v2821
    %2950 = vst.msk [vmem:[%s6 + $0x1e0] sm:$0xff] %vm1452, %v2822
    %2951 = vst.msk [vmem:[%s6 + $0x1e8] sm:$0xff] %vm1452, %v2823
    %2952 = vst.msk [vmem:[%s6 + $0x1f0] sm:$0xff] %vm1452, %v2824
    %2953 = vst.msk [vmem:[%s6 + $0x1f8] sm:$0xff] %vm1452, %v2825
    %2954 = vst.msk [vmem:[%s6 + $0x200] sm:$0xff] %vm1452, %v2826
    %2955 = vst.msk [vmem:[%s6 + $0x208] sm:$0xff] %vm1452, %v2827
    %2956 = vst.msk [vmem:[%s6 + $0x210] sm:$0xff] %vm1452, %v2828
    %2957 = vst.msk [vmem:[%s6 + $0x218] sm:$0xff] %vm1452, %v2829
    %2958 = vst.msk [vmem:[%s6 + $0x220] sm:$0xff] %vm1452, %v2830
    %2959 = vst.msk [vmem:[%s6 + $0x228] sm:$0xff] %vm1452, %v2831
    %2960 = vst.msk [vmem:[%s6 + $0x230] sm:$0xff] %vm1452, %v2832
    %2961 = vst.msk [vmem:[%s6 + $0x238] sm:$0xff] %vm1452, %v2833
    %2962 = vst.msk [vmem:[%s6 + $0x240] sm:$0xff] %vm1452, %v2834
    %2963 = vst.msk [vmem:[%s6 + $0x248] sm:$0xff] %vm1452, %v2835
    %2964 = vst.msk [vmem:[%s6 + $0x250] sm:$0xff] %vm1452, %v2836
    %2965 = vst.msk [vmem:[%s6 + $0x258] sm:$0xff] %vm1452, %v2837
    %2966 = vst.msk [vmem:[%s6 + $0x260] sm:$0xff] %vm1452, %v2838
    %2967 = vst.msk [vmem:[%s6 + $0x268] sm:$0xff] %vm1452, %v2839
    %2968 = vst.msk [vmem:[%s6 + $0x270] sm:$0xff] %vm1452, %v2840
    %2969 = vst.msk [vmem:[%s6 + $0x278] sm:$0xff] %vm1452, %v2841
    %2970 = vst.msk [vmem:[%s6 + $0x280] sm:$0xff] %vm1452, %v2842
    %2971 = vst.msk [vmem:[%s6 + $0x288] sm:$0xff] %vm1452, %v2843
    %2972 = vst.msk [vmem:[%s6 + $0x290] sm:$0xff] %vm1452, %v2844
    %2973 = vst.msk [vmem:[%s6 + $0x298] sm:$0xff] %vm1452, %v2845
    %2974 = vst.msk [vmem:[%s6 + $0x2a0] sm:$0xff] %vm1452, %v2846
    %2975 = vst.msk [vmem:[%s6 + $0x2a8] sm:$0xff] %vm1452, %v2847
    %2976 = vst.msk [vmem:[%s6 + $0x2b0] sm:$0xff] %vm1452, %v2848
    %2977 = vst.msk [vmem:[%s6 + $0x2b8] sm:$0xff] %vm1452, %v2849
    %2978 = vst.msk [vmem:[%s6 + $0x2c0] sm:$0xff] %vm1452, %v2850
    %2979 = vst.msk [vmem:[%s6 + $0x2c8] sm:$0xff] %vm1452, %v2851
    %2980 = vst.msk [vmem:[%s6 + $0x2d0] sm:$0xff] %vm1452, %v2852
    %2981 = vst.msk [vmem:[%s6 + $0x2d8] sm:$0xff] %vm1452, %v2853
    %2982 = vst.msk [vmem:[%s6 + $0x2e0] sm:$0xff] %vm1452, %v2854
    %2983 = vst.msk [vmem:[%s6 + $0x2e8] sm:$0xff] %vm1452, %v2855
    %2984 = vst.msk [vmem:[%s6 + $0x2f0] sm:$0xff] %vm1452, %v2856
    %2985 = vst.msk [vmem:[%s6 + $0x2f8] sm:$0xff] %vm1452, %v2857
    %2986 = vst.msk [vmem:[%s6 + $0x300] sm:$0xff] %vm1452, %v2858
    %2987 = vst.msk [vmem:[%s6 + $0x308] sm:$0xff] %vm1452, %v2859
    %2988 = vst.msk [vmem:[%s6 + $0x310] sm:$0xff] %vm1452, %v2860
    %2989 = vst.msk [vmem:[%s6 + $0x318] sm:$0xff] %vm1452, %v2861
    %2990 = vst.msk [vmem:[%s6 + $0x320] sm:$0xff] %vm1452, %v2862
    %2991 = vst.msk [vmem:[%s6 + $0x328] sm:$0xff] %vm1452, %v2863
    %2992 = vst.msk [vmem:[%s6 + $0x330] sm:$0xff] %vm1452, %v2864
    %2993 = vst.msk [vmem:[%s6 + $0x338] sm:$0xff] %vm1452, %v2865
    %2994 = vst.msk [vmem:[%s6 + $0x340] sm:$0xff] %vm1452, %v2866
    %2995 = vst.msk [vmem:[%s6 + $0x348] sm:$0xff] %vm1452, %v2867
    %2996 = vst.msk [vmem:[%s6 + $0x350] sm:$0xff] %vm1452, %v2868
    %2997 = vst.msk [vmem:[%s6 + $0x358] sm:$0xff] %vm1452, %v2869
    %2998 = vst.msk [vmem:[%s6 + $0x360] sm:$0xff] %vm1452, %v2870
    %2999 = vst.msk [vmem:[%s6 + $0x368] sm:$0xff] %vm1452, %v2871
    %3000 = vst.msk [vmem:[%s6 + $0x370] sm:$0xff] %vm1452, %v2872
    %3001 = vst.msk [vmem:[%s6 + $0x378] sm:$0xff] %vm1452, %v2873
    %3002 = vst.msk [vmem:[%s6 + $0x380] sm:$0xff] %vm1452, %v2874
    %3003 = vst.msk [vmem:[%s6 + $0x388] sm:$0xff] %vm1452, %v2875
    %3004 = vst.msk [vmem:[%s6 + $0x390] sm:$0xff] %vm1452, %v2876
    %3005 = vst.msk [vmem:[%s6 + $0x398] sm:$0xff] %vm1452, %v2877
    %3006 = vst.msk [vmem:[%s6 + $0x3a0] sm:$0xff] %vm1452, %v2878
    %3007 = vst.msk [vmem:[%s6 + $0x3a8] sm:$0xff] %vm1452, %v2879
    %3008 = vst.msk [vmem:[%s6 + $0x3b0] sm:$0xff] %vm1452, %v2880
    %3009 = vst.msk [vmem:[%s6 + $0x3b8] sm:$0xff] %vm1452, %v2881
    %3010 = vst.msk [vmem:[%s6 + $0x3c0] sm:$0xff] %vm1452, %v2882
    %3011 = vst.msk [vmem:[%s6 + $0x3c8] sm:$0xff] %vm1452, %v2883
    %3012 = vst.msk [vmem:[%s6 + $0x3d0] sm:$0xff] %vm1452, %v2884
    %3013 = vst.msk [vmem:[%s6 + $0x3d8] sm:$0xff] %vm1452, %v2885
    %3014 = vst.msk [vmem:[%s6 + $0x3e0] sm:$0xff] %vm1452, %v2886
    %3015 = vst.msk [vmem:[%s6 + $0x3e8] sm:$0xff] %vm1452, %v2887
    %3016 = vst.msk [vmem:[%s6 + $0x3f0] sm:$0xff] %vm1452, %v2888
    %3017 = vst.msk [vmem:[%s6 + $0x3f8] sm:$0xff] %vm1452, %v2889
    // Predicated region
    $region42: #{residual_block_3d.3} parent=1 // pred_check
      _
    $region43: #{residual_block_3d.3} parent=1 // pred_check_branch
      %3019 = sbr.rel (0) target = $region45
    $region44: #{residual_block_3d.3} parent=1 // pred_region
      _
    $region45: #{residual_block_3d.3} parent=1 // pred_fallthru
      _
    // Predicated region
    $region46: #{residual_block_3d.3} parent=1 // pred_check
      _
    $region47: #{residual_block_3d.3} parent=1 // pred_check_branch
      %3021 = sbr.rel (0) target = $region49
    $region48: #{residual_block_3d.3} parent=1 // pred_region
      _
    $region49: #{residual_block_3d.3} parent=1 // pred_fallthru
      _
    %3022 = vsyncpa [#allocation3], 1
    %3023 = vsyncpa [#allocation5], 1
    %3024 = vsyncpa [#allocation8], 1

</llo_original>
